<compile_context>
chip_gen: v5e
topology: v5e:2x2
jax: 0.10.0
libtpu: 0.0.40
codegen_flags: <defaults>
</compile_context>

<pallas_src>
import functools

import jax
import jax.numpy as jnp
import numpy as np
from jax.experimental import pallas as pl
from jax.experimental.pallas import tpu as pltpu

BN_EPS = 1e-5          # torch.nn.BatchNorm2d default
LEAKY_SLOPE = 0.01     # torch.nn.LeakyReLU default negative_slope


def _round_up(x, m):
    return (x + m - 1) // m * m


def _build_tap_masks(N, H, W, c_rows):
    """(9, c_rows, N*H*W) f32 validity masks for the 3x3 taps (zero padding).

    Pre-broadcast along the sublane (channel) axis so the kernel only does a
    plain VMEM load + VPU multiply per tap (no in-kernel broadcast_in_dim)."""
    hh = np.arange(H).reshape(H, 1)
    ww = np.arange(W).reshape(1, W)
    ms = []
    for kh in range(3):
        for kw in range(3):
            dh, dw = kh - 1, kw - 1
            valid = ((hh + dh >= 0) & (hh + dh < H) &
                     (ww + dw >= 0) & (ww + dw < W))            # (H, W)
            ms.append(np.broadcast_to(valid, (N, H, W)).reshape(-1))
    m = np.stack(ms).astype(np.float32)                          # (9, P)
    return np.ascontiguousarray(
        np.broadcast_to(m[:, None, :], (9, c_rows, m.shape[-1])))


# ----------------------------------------------------------------------------
# Single fused kernel for the whole FeatureExtract forward pass
# ----------------------------------------------------------------------------
def _make_feature_extract_kernel(N, H, W, taps, cin_pads):
    P = N * H * W
    inv_P = 1.0 / P
    n_layers = len(taps)

    relu = lambda v: jnp.maximum(v, 0.0)
    lrelu = lambda v: jnp.where(v > 0, v, LEAKY_SLOPE * v)

    def conv_bn(x, w_ref, g_ref, b_ref, k, cpad, mask_ref):
        """BN(conv(x)) for one layer via per-tap accumulation.

        x: (Cin_pad, P) f32  ->  (Cout, P) f32.  Only the (Cout, P) f32
        accumulator is kept live — the im2col slab is never materialized."""
        y = None
        for t in range(k * k):
            if k == 1:
                col = x
            else:
                kh, kw = divmod(t, 3)
                d = (kh - 1) * W + (kw - 1)
                if d == 0:
                    col = x
                else:
                    # out[p] = x[p + d]  (zero-padded via the precomputed mask)
                    shifted = pltpu.roll(x, shift=(-d) % P, axis=1)
                    col = shifted * mask_ref[t, :cpad, :]
            contrib = jnp.dot(w_ref[t], col, preferred_element_type=jnp.float32)
            y = contrib if y is None else y + contrib

        # BatchNorm2d, training-mode batch statistics, single pass.
        # TODO(synk): s1 could ride the idle MXU (dot with a ones column) to
        # offload the XLU; kept on the vector path for portability.
        s1 = jnp.sum(y, axis=1, keepdims=True)
        s2 = jnp.sum(y * y, axis=1, keepdims=True)
        mean = s1 * inv_P
        var = jnp.maximum(s2 * inv_P - mean * mean, 0.0)
        scale = g_ref[...] * jax.lax.rsqrt(var + BN_EPS)
        shift = b_ref[...] - mean * scale
        return y * scale + shift

    def kernel(*refs):
        img_ref, mask_ref = refs[0], refs[1]
        pr = refs[2:2 + 3 * n_layers]
        ff_ref, af_ref, fc_ref, ac_ref = refs[2 + 3 * n_layers:]

        def cbn(i, x):
            return conv_bn(x, pr[3 * i], pr[3 * i + 1], pr[3 * i + 2],
                           taps[i], cin_pads[i], mask_ref)

        x = img_ref[...]                         # (Cin_pad, P) f32

        # LowLayer = 2 x (Conv3x3 + BN + ReLU)
        x = relu(cbn(0, x))
        x = relu(cbn(1, x))
        # MiddleLayer = Conv3x3 + BN + ReLU
        x = relu(cbn(2, x))

        # lightWeight1 — store feature/attention maps as soon as produced.
        inp = x
        fm = lrelu(cbn(3, x))                    # conv1(1x1) + BN1 + LeakyReLU
        ff_ref[...] = fm
        x2 = lrelu(cbn(4, fm))                   # conv2(3x3) + BN2 + LeakyReLU
        af_ref[...] = x2                         # full slab; sliced to MF outside
        x = lrelu(inp + cbn(5, x2))              # conv3(1x1) + BN3, residual, LReLU

        # HighLayer = Conv3x3 + BN + ReLU
        x = relu(cbn(6, x))

        # lightWeight2 — conv3/BN3/residual do not feed any FeatureExtract
        # output, so they are removed entirely (not just left to DCE).
        fm2 = lrelu(cbn(7, x))
        fc_ref[...] = fm2
        x2b = lrelu(cbn(8, fm2))
        ac_ref[...] = x2b                        # full slab; sliced to MC outside

    return kernel


# ----------------------------------------------------------------------------
# Public wrapper: NCHW image in, NCHW outputs out
# ----------------------------------------------------------------------------
def feature_extract_forward(image_nchw, params, MF, MC):
    N, Cin, H, W = image_nchw.shape
    P = N * H * W
    cin_pad0 = _round_up(Cin, 8)

    # NCHW -> (Cin_pad, N*H*W): channels on sublanes, batch*spatial on lanes.
    x2d = jnp.transpose(image_nchw, (1, 0, 2, 3)).reshape(Cin, P).astype(jnp.float32)
    x2d = jnp.pad(x2d, ((0, cin_pad0 - Cin), (0, 0)))

    # lightWeight2.conv3 / BN3 + residual are dead w.r.t. FeatureExtract outputs.
    layer_list = [params["low"][0], params["low"][1], params["mid"],
                  params["lw1"]["c1"], params["lw1"]["c2"], params["lw1"]["c3"],
                  params["high"],
                  params["lw2"]["c1"], params["lw2"]["c2"]]

    taps, cin_pads, flat_params = [], [], []
    for lp in layer_list:
        w = lp["w"]                                   # HWIO (KH, KW, Cin, Cout)
        KH, KW, ci, co = w.shape
        assert KH == KW and KH in (1, 3) and co % 8 == 0
        ci_pad = _round_up(ci, 8)
        taps.append(KH)
        cin_pads.append(ci_pad)
        # (T, Cout, Cin_pad): tap t is a clean leading-axis slice in the kernel.
        w_t = jnp.transpose(w.reshape(KH * KW, ci, co), (0, 2, 1))
        w_t = jnp.pad(w_t, ((0, 0), (0, 0), (0, ci_pad - ci))).astype(jnp.float32)
        flat_params += [w_t,
                        lp["gamma"].reshape(co, 1).astype(jnp.float32),
                        lp["beta"].reshape(co, 1).astype(jnp.float32)]

    max_cpad = max(cp for cp, k in zip(cin_pads, taps) if k == 3)
    masks = jnp.asarray(_build_tap_masks(N, H, W, max_cpad))

    c_ff = layer_list[3]["w"].shape[-1]
    c_af = layer_list[4]["w"].shape[-1]
    c_fc = layer_list[7]["w"].shape[-1]
    c_ac = layer_list[8]["w"].shape[-1]

    kernel = _make_feature_extract_kernel(N, H, W, tuple(taps), tuple(cin_pads))
    out_shape = (jax.ShapeDtypeStruct((c_ff, P), jnp.float32),   # FF
                 jax.ShapeDtypeStruct((c_af, P), jnp.float32),   # x2 (-> AF)
                 jax.ShapeDtypeStruct((c_fc, P), jnp.float32),   # FC
                 jax.ShapeDtypeStruct((c_ac, P), jnp.float32))   # x2b (-> AC)

    vmem = pl.BlockSpec(memory_space=pltpu.MemorySpace.VMEM)
    FFt, X2t, FCt, X2Bt = pl.pallas_call(
        kernel,
        out_shape=out_shape,
        in_specs=[vmem] * (2 + len(flat_params)),
        out_specs=(vmem,) * 4,
        compiler_params=pltpu.CompilerParams(vmem_limit_bytes=32 * 1024 * 1024),
    )(x2d, masks, *flat_params)

    # (C, N*H*W) -> NCHW
    def to_nchw(t):
        c = t.shape[0]
        return jnp.transpose(t.reshape(c, N, H, W), (1, 0, 2, 3))

    # TODO(synk): self.upsample (nn.Upsample scale_factor=32) is declared in
    # __init__ but never used in forward(); intentionally omitted.
    FF, AF = to_nchw(FFt), to_nchw(X2t)[:, :MF]
    FC, AC = to_nchw(FCt), to_nchw(X2Bt)[:, :MC]
    return (FF, AF), (FC, AC)


# ----------------------------------------------------------------------------
# Pure-JAX reference (matches the PyTorch module in training-mode BN)
# ----------------------------------------------------------------------------
def _conv_bn_act_ref(x, lp, act):
    w = lp["w"]
    pad = (w.shape[0] - 1) // 2
    y = jax.lax.conv_general_dilated(
        x, w, window_strides=(1, 1), padding=((pad, pad), (pad, pad)),
        dimension_numbers=("NCHW", "HWIO", "NCHW"),
        precision=jax.lax.Precision.HIGHEST)
    mean = y.mean(axis=(0, 2, 3), keepdims=True)
    var = y.var(axis=(0, 2, 3), keepdims=True)
    g = lp["gamma"].reshape(1, -1, 1, 1)
    b = lp["beta"].reshape(1, -1, 1, 1)
    return act((y - mean) * jax.lax.rsqrt(var + BN_EPS) * g + b)


def feature_extract_ref(image, params, MF, MC):
    relu = lambda v: jnp.maximum(v, 0.0)
    lrelu = lambda v: jnp.where(v > 0, v, LEAKY_SLOPE * v)
    ident = lambda v: v
    x = _conv_bn_act_ref(image, params["low"][0], relu)
    x = _conv_bn_act_ref(x, params["low"][1], relu)
    x = _conv_bn_act_ref(x, params["mid"], relu)
    inp = x
    FF = _conv_bn_act_ref(x, params["lw1"]["c1"], lrelu)
    x2 = _conv_bn_act_ref(FF, params["lw1"]["c2"], lrelu)
    AF = x2[:, :MF]
    x = lrelu(inp + _conv_bn_act_ref(x2, params["lw1"]["c3"], ident))
    x = _conv_bn_act_ref(x, params["high"], relu)
    FC = _conv_bn_act_ref(x, params["lw2"]["c1"], lrelu)
    x2b = _conv_bn_act_ref(FC, params["lw2"]["c2"], lrelu)
    AC = x2b[:, :MC]
    return (FF, AF), (FC, AC)


# ----------------------------------------------------------------------------
# Deterministic parameter initialization (synthetic backbone)
# ----------------------------------------------------------------------------
def _init_conv_bn(key, k, cin, cout):
    wk, gk, bk = jax.random.split(key, 3)
    fan_in = k * k * cin
    w = jax.random.normal(wk, (k, k, cin, cout), jnp.float32) / jnp.sqrt(fan_in)
    gamma = 1.0 + 0.1 * jax.random.normal(gk, (cout,), jnp.float32)
    beta = 0.1 * jax.random.normal(bk, (cout,), jnp.float32)
    return {"w": w, "gamma": gamma, "beta": beta}


if __name__ == "__main__":
    key = jax.random.PRNGKey(0)
    N, Cin, H, W = 2, 4, 16, 16
    C_mid, C_high = 16, 32     # channel widths of middle / high stages
    MF, MC = 4, 8              # attention-map channel counts

    keys = jax.random.split(key, 11)
    params = {
        "low": [_init_conv_bn(keys[0], 3, Cin, C_mid),
                _init_conv_bn(keys[1], 3, C_mid, C_mid)],
        "mid": _init_conv_bn(keys[2], 3, C_mid, C_mid),
        "lw1": {"c1": _init_conv_bn(keys[3], 1, C_mid, C_mid),
                "c2": _init_conv_bn(keys[4], 3, C_mid, C_mid),
                "c3": _init_conv_bn(keys[5], 1, C_mid, C_mid)},
        "high": _init_conv_bn(keys[6], 3, C_mid, C_high),
        "lw2": {"c1": _init_conv_bn(keys[7], 1, C_high, C_high),
                "c2": _init_conv_bn(keys[8], 3, C_high, C_high),
                "c3": _init_conv_bn(keys[9], 1, C_high, C_high)},
    }

    image = jax.random.normal(keys[10], (N, Cin, H, W), jnp.float32)

    fwd = jax.jit(functools.partial(feature_extract_forward, MF=MF, MC=MC))
    (FF, AF), (FC, AC) = fwd(image, params)
    jax.block_until_ready((FF, AF, FC, AC))

    assert FF.shape == (N, C_mid, H, W)
    assert AF.shape == (N, MF, H, W)
    assert FC.shape == (N, C_high, H, W)
    assert AC.shape == (N, MC, H, W)

    # Validate against the pure-JAX reference (tolerance covers MXU precision).
    (rFF, rAF), (rFC, rAC) = feature_extract_ref(image, params, MF, MC)
    for got, ref in ((FF, rFF), (AF, rAF), (FC, rFC), (AC, rAC)):
        np.testing.assert_allclose(np.asarray(got), np.asarray(ref),
                                   rtol=2e-2, atol=2e-2)
    print("KERNEL_OK")
</pallas_src>

<mosaic_0001>
module attributes {stable_mosaic.version = 11 : i64} {
  func.func @kernel(%arg0: memref<8x512xf32, #tpu.memory_space<vmem>>, %arg1: memref<9x32x512xf32, #tpu.memory_space<vmem>>, %arg2: memref<9x16x8xf32, #tpu.memory_space<vmem>>, %arg3: memref<16x1xf32, #tpu.memory_space<vmem>>, %arg4: memref<16x1xf32, #tpu.memory_space<vmem>>, %arg5: memref<9x16x16xf32, #tpu.memory_space<vmem>>, %arg6: memref<16x1xf32, #tpu.memory_space<vmem>>, %arg7: memref<16x1xf32, #tpu.memory_space<vmem>>, %arg8: memref<9x16x16xf32, #tpu.memory_space<vmem>>, %arg9: memref<16x1xf32, #tpu.memory_space<vmem>>, %arg10: memref<16x1xf32, #tpu.memory_space<vmem>>, %arg11: memref<1x16x16xf32, #tpu.memory_space<vmem>>, %arg12: memref<16x1xf32, #tpu.memory_space<vmem>>, %arg13: memref<16x1xf32, #tpu.memory_space<vmem>>, %arg14: memref<9x16x16xf32, #tpu.memory_space<vmem>>, %arg15: memref<16x1xf32, #tpu.memory_space<vmem>>, %arg16: memref<16x1xf32, #tpu.memory_space<vmem>>, %arg17: memref<1x16x16xf32, #tpu.memory_space<vmem>>, %arg18: memref<16x1xf32, #tpu.memory_space<vmem>>, %arg19: memref<16x1xf32, #tpu.memory_space<vmem>>, %arg20: memref<9x32x16xf32, #tpu.memory_space<vmem>>, %arg21: memref<32x1xf32, #tpu.memory_space<vmem>>, %arg22: memref<32x1xf32, #tpu.memory_space<vmem>>, %arg23: memref<1x32x32xf32, #tpu.memory_space<vmem>>, %arg24: memref<32x1xf32, #tpu.memory_space<vmem>>, %arg25: memref<32x1xf32, #tpu.memory_space<vmem>>, %arg26: memref<9x32x32xf32, #tpu.memory_space<vmem>>, %arg27: memref<32x1xf32, #tpu.memory_space<vmem>>, %arg28: memref<32x1xf32, #tpu.memory_space<vmem>>, %arg29: memref<16x512xf32, #tpu.memory_space<vmem>>, %arg30: memref<16x512xf32, #tpu.memory_space<vmem>>, %arg31: memref<32x512xf32, #tpu.memory_space<vmem>>, %arg32: memref<32x512xf32, #tpu.memory_space<vmem>>) attributes {dimension_semantics = [], scalar_prefetch = 0 : i64, scratch_operands = 0 : i64, tpu.core_type = #tpu.core_type<tc>} {
    %c0 = arith.constant 0 : index
    %c0_0 = arith.constant 0 : index
    %0 = vector.load %arg0[%c0, %c0_0] : memref<8x512xf32, #tpu.memory_space<vmem>>, vector<8x512xf32>
    %c17_i32 = arith.constant 17 : i32
    %1 = tpu.dynamic_rotate %0 by %c17_i32 dim 1 : vector<8x512xf32>, i32 -> vector<8x512xf32>
    %c0_1 = arith.constant 0 : index
    %c0_2 = arith.constant 0 : index
    %c0_3 = arith.constant 0 : index
    %2 = vector.load %arg1[%c0_1, %c0_2, %c0_3] : memref<9x32x512xf32, #tpu.memory_space<vmem>>, vector<1x8x512xf32>
    %3 = vector.shape_cast %2 : vector<1x8x512xf32> to vector<8x512xf32>
    %4 = arith.mulf %1, %3 : vector<8x512xf32>
    %c0_4 = arith.constant 0 : index
    %c0_5 = arith.constant 0 : index
    %c0_6 = arith.constant 0 : index
    %5 = vector.load %arg2[%c0_4, %c0_5, %c0_6] : memref<9x16x8xf32, #tpu.memory_space<vmem>>, vector<1x16x8xf32>
    %6 = vector.shape_cast %5 : vector<1x16x8xf32> to vector<16x8xf32>
    %cst = arith.constant dense<0.000000e+00> : vector<16x512xf32>
    %7 = tpu.matmul %6, %4, %cst {dimension_numbers = #tpu.dot_dimension_numbers<[1], [0], [0], [1], [0, 0, 1, 1], [], []>} : vector<16x8xf32>, vector<8x512xf32>, vector<16x512xf32> -> vector<16x512xf32>
    %c16_i32 = arith.constant 16 : i32
    %8 = tpu.dynamic_rotate %0 by %c16_i32 dim 1 : vector<8x512xf32>, i32 -> vector<8x512xf32>
    %c1 = arith.constant 1 : index
    %c0_7 = arith.constant 0 : index
    %c0_8 = arith.constant 0 : index
    %9 = vector.load %arg1[%c1, %c0_7, %c0_8] : memref<9x32x512xf32, #tpu.memory_space<vmem>>, vector<1x8x512xf32>
    %10 = vector.shape_cast %9 : vector<1x8x512xf32> to vector<8x512xf32>
    %11 = arith.mulf %8, %10 : vector<8x512xf32>
    %c1_9 = arith.constant 1 : index
    %c0_10 = arith.constant 0 : index
    %c0_11 = arith.constant 0 : index
    %12 = vector.load %arg2[%c1_9, %c0_10, %c0_11] : memref<9x16x8xf32, #tpu.memory_space<vmem>>, vector<1x16x8xf32>
    %13 = vector.shape_cast %12 : vector<1x16x8xf32> to vector<16x8xf32>
    %cst_12 = arith.constant dense<0.000000e+00> : vector<16x512xf32>
    %14 = tpu.matmul %13, %11, %cst_12 {dimension_numbers = #tpu.dot_dimension_numbers<[1], [0], [0], [1], [0, 0, 1, 1], [], []>} : vector<16x8xf32>, vector<8x512xf32>, vector<16x512xf32> -> vector<16x512xf32>
    %15 = arith.addf %7, %14 : vector<16x512xf32>
    %c15_i32 = arith.constant 15 : i32
    %16 = tpu.dynamic_rotate %0 by %c15_i32 dim 1 : vector<8x512xf32>, i32 -> vector<8x512xf32>
    %c2 = arith.constant 2 : index
    %c0_13 = arith.constant 0 : index
    %c0_14 = arith.constant 0 : index
    %17 = vector.load %arg1[%c2, %c0_13, %c0_14] : memref<9x32x512xf32, #tpu.memory_space<vmem>>, vector<1x8x512xf32>
    %18 = vector.shape_cast %17 : vector<1x8x512xf32> to vector<8x512xf32>
    %19 = arith.mulf %16, %18 : vector<8x512xf32>
    %c2_15 = arith.constant 2 : index
    %c0_16 = arith.constant 0 : index
    %c0_17 = arith.constant 0 : index
    %20 = vector.load %arg2[%c2_15, %c0_16, %c0_17] : memref<9x16x8xf32, #tpu.memory_space<vmem>>, vector<1x16x8xf32>
    %21 = vector.shape_cast %20 : vector<1x16x8xf32> to vector<16x8xf32>
    %cst_18 = arith.constant dense<0.000000e+00> : vector<16x512xf32>
    %22 = tpu.matmul %21, %19, %cst_18 {dimension_numbers = #tpu.dot_dimension_numbers<[1], [0], [0], [1], [0, 0, 1, 1], [], []>} : vector<16x8xf32>, vector<8x512xf32>, vector<16x512xf32> -> vector<16x512xf32>
    %23 = arith.addf %15, %22 : vector<16x512xf32>
    %c1_i32 = arith.constant 1 : i32
    %24 = tpu.dynamic_rotate %0 by %c1_i32 dim 1 : vector<8x512xf32>, i32 -> vector<8x512xf32>
    %c3 = arith.constant 3 : index
    %c0_19 = arith.constant 0 : index
    %c0_20 = arith.constant 0 : index
    %25 = vector.load %arg1[%c3, %c0_19, %c0_20] : memref<9x32x512xf32, #tpu.memory_space<vmem>>, vector<1x8x512xf32>
    %26 = vector.shape_cast %25 : vector<1x8x512xf32> to vector<8x512xf32>
    %27 = arith.mulf %24, %26 : vector<8x512xf32>
    %c3_21 = arith.constant 3 : index
    %c0_22 = arith.constant 0 : index
    %c0_23 = arith.constant 0 : index
    %28 = vector.load %arg2[%c3_21, %c0_22, %c0_23] : memref<9x16x8xf32, #tpu.memory_space<vmem>>, vector<1x16x8xf32>
    %29 = vector.shape_cast %28 : vector<1x16x8xf32> to vector<16x8xf32>
    %cst_24 = arith.constant dense<0.000000e+00> : vector<16x512xf32>
    %30 = tpu.matmul %29, %27, %cst_24 {dimension_numbers = #tpu.dot_dimension_numbers<[1], [0], [0], [1], [0, 0, 1, 1], [], []>} : vector<16x8xf32>, vector<8x512xf32>, vector<16x512xf32> -> vector<16x512xf32>
    %31 = arith.addf %23, %30 : vector<16x512xf32>
    %c4 = arith.constant 4 : index
    %c0_25 = arith.constant 0 : index
    %c0_26 = arith.constant 0 : index
    %32 = vector.load %arg2[%c4, %c0_25, %c0_26] : memref<9x16x8xf32, #tpu.memory_space<vmem>>, vector<1x16x8xf32>
    %33 = vector.shape_cast %32 : vector<1x16x8xf32> to vector<16x8xf32>
    %cst_27 = arith.constant dense<0.000000e+00> : vector<16x512xf32>
    %34 = tpu.matmul %33, %0, %cst_27 {dimension_numbers = #tpu.dot_dimension_numbers<[1], [0], [0], [1], [0, 0, 1, 1], [], []>} : vector<16x8xf32>, vector<8x512xf32>, vector<16x512xf32> -> vector<16x512xf32>
    %35 = arith.addf %31, %34 : vector<16x512xf32>
    %c511_i32 = arith.constant 511 : i32
    %36 = tpu.dynamic_rotate %0 by %c511_i32 dim 1 : vector<8x512xf32>, i32 -> vector<8x512xf32>
    %c5 = arith.constant 5 : index
    %c0_28 = arith.constant 0 : index
    %c0_29 = arith.constant 0 : index
    %37 = vector.load %arg1[%c5, %c0_28, %c0_29] : memref<9x32x512xf32, #tpu.memory_space<vmem>>, vector<1x8x512xf32>
    %38 = vector.shape_cast %37 : vector<1x8x512xf32> to vector<8x512xf32>
    %39 = arith.mulf %36, %38 : vector<8x512xf32>
    %c5_30 = arith.constant 5 : index
    %c0_31 = arith.constant 0 : index
    %c0_32 = arith.constant 0 : index
    %40 = vector.load %arg2[%c5_30, %c0_31, %c0_32] : memref<9x16x8xf32, #tpu.memory_space<vmem>>, vector<1x16x8xf32>
    %41 = vector.shape_cast %40 : vector<1x16x8xf32> to vector<16x8xf32>
    %cst_33 = arith.constant dense<0.000000e+00> : vector<16x512xf32>
    %42 = tpu.matmul %41, %39, %cst_33 {dimension_numbers = #tpu.dot_dimension_numbers<[1], [0], [0], [1], [0, 0, 1, 1], [], []>} : vector<16x8xf32>, vector<8x512xf32>, vector<16x512xf32> -> vector<16x512xf32>
    %43 = arith.addf %35, %42 : vector<16x512xf32>
    %c497_i32 = arith.constant 497 : i32
    %44 = tpu.dynamic_rotate %0 by %c497_i32 dim 1 : vector<8x512xf32>, i32 -> vector<8x512xf32>
    %c6 = arith.constant 6 : index
    %c0_34 = arith.constant 0 : index
    %c0_35 = arith.constant 0 : index
    %45 = vector.load %arg1[%c6, %c0_34, %c0_35] : memref<9x32x512xf32, #tpu.memory_space<vmem>>, vector<1x8x512xf32>
    %46 = vector.shape_cast %45 : vector<1x8x512xf32> to vector<8x512xf32>
    %47 = arith.mulf %44, %46 : vector<8x512xf32>
    %c6_36 = arith.constant 6 : index
    %c0_37 = arith.constant 0 : index
    %c0_38 = arith.constant 0 : index
    %48 = vector.load %arg2[%c6_36, %c0_37, %c0_38] : memref<9x16x8xf32, #tpu.memory_space<vmem>>, vector<1x16x8xf32>
    %49 = vector.shape_cast %48 : vector<1x16x8xf32> to vector<16x8xf32>
    %cst_39 = arith.constant dense<0.000000e+00> : vector<16x512xf32>
    %50 = tpu.matmul %49, %47, %cst_39 {dimension_numbers = #tpu.dot_dimension_numbers<[1], [0], [0], [1], [0, 0, 1, 1], [], []>} : vector<16x8xf32>, vector<8x512xf32>, vector<16x512xf32> -> vector<16x512xf32>
    %51 = arith.addf %43, %50 : vector<16x512xf32>
    %c496_i32 = arith.constant 496 : i32
    %52 = tpu.dynamic_rotate %0 by %c496_i32 dim 1 : vector<8x512xf32>, i32 -> vector<8x512xf32>
    %c7 = arith.constant 7 : index
    %c0_40 = arith.constant 0 : index
    %c0_41 = arith.constant 0 : index
    %53 = vector.load %arg1[%c7, %c0_40, %c0_41] : memref<9x32x512xf32, #tpu.memory_space<vmem>>, vector<1x8x512xf32>
    %54 = vector.shape_cast %53 : vector<1x8x512xf32> to vector<8x512xf32>
    %55 = arith.mulf %52, %54 : vector<8x512xf32>
    %c7_42 = arith.constant 7 : index
    %c0_43 = arith.constant 0 : index
    %c0_44 = arith.constant 0 : index
    %56 = vector.load %arg2[%c7_42, %c0_43, %c0_44] : memref<9x16x8xf32, #tpu.memory_space<vmem>>, vector<1x16x8xf32>
    %57 = vector.shape_cast %56 : vector<1x16x8xf32> to vector<16x8xf32>
    %cst_45 = arith.constant dense<0.000000e+00> : vector<16x512xf32>
    %58 = tpu.matmul %57, %55, %cst_45 {dimension_numbers = #tpu.dot_dimension_numbers<[1], [0], [0], [1], [0, 0, 1, 1], [], []>} : vector<16x8xf32>, vector<8x512xf32>, vector<16x512xf32> -> vector<16x512xf32>
    %59 = arith.addf %51, %58 : vector<16x512xf32>
    %c495_i32 = arith.constant 495 : i32
    %60 = tpu.dynamic_rotate %0 by %c495_i32 dim 1 : vector<8x512xf32>, i32 -> vector<8x512xf32>
    %c8 = arith.constant 8 : index
    %c0_46 = arith.constant 0 : index
    %c0_47 = arith.constant 0 : index
    %61 = vector.load %arg1[%c8, %c0_46, %c0_47] : memref<9x32x512xf32, #tpu.memory_space<vmem>>, vector<1x8x512xf32>
    %62 = vector.shape_cast %61 : vector<1x8x512xf32> to vector<8x512xf32>
    %63 = arith.mulf %60, %62 : vector<8x512xf32>
    %c8_48 = arith.constant 8 : index
    %c0_49 = arith.constant 0 : index
    %c0_50 = arith.constant 0 : index
    %64 = vector.load %arg2[%c8_48, %c0_49, %c0_50] : memref<9x16x8xf32, #tpu.memory_space<vmem>>, vector<1x16x8xf32>
    %65 = vector.shape_cast %64 : vector<1x16x8xf32> to vector<16x8xf32>
    %cst_51 = arith.constant dense<0.000000e+00> : vector<16x512xf32>
    %66 = tpu.matmul %65, %63, %cst_51 {dimension_numbers = #tpu.dot_dimension_numbers<[1], [0], [0], [1], [0, 0, 1, 1], [], []>} : vector<16x8xf32>, vector<8x512xf32>, vector<16x512xf32> -> vector<16x512xf32>
    %67 = arith.addf %59, %66 : vector<16x512xf32>
    %cst_52 = arith.constant dense<0.000000e+00> : vector<16xf32>
    %68 = vector.multi_reduction <add>, %67, %cst_52 [1] : vector<16x512xf32> to vector<16xf32>
    %69 = vector.shape_cast %68 : vector<16xf32> to vector<16x1xf32>
    %70 = arith.mulf %67, %67 : vector<16x512xf32>
    %cst_53 = arith.constant dense<0.000000e+00> : vector<16xf32>
    %71 = vector.multi_reduction <add>, %70, %cst_53 [1] : vector<16x512xf32> to vector<16xf32>
    %72 = vector.shape_cast %71 : vector<16xf32> to vector<16x1xf32>
    %cst_54 = arith.constant 0.001953125 : f32
    %73 = vector.broadcast %cst_54 : f32 to vector<16x1xf32>
    %74 = arith.mulf %69, %73 : vector<16x1xf32>
    %cst_55 = arith.constant 0.001953125 : f32
    %75 = vector.broadcast %cst_55 : f32 to vector<16x1xf32>
    %76 = arith.mulf %72, %75 : vector<16x1xf32>
    %77 = arith.mulf %74, %74 : vector<16x1xf32>
    %78 = arith.subf %76, %77 : vector<16x1xf32>
    %cst_56 = arith.constant 0.000000e+00 : f32
    %79 = vector.broadcast %cst_56 : f32 to vector<16x1xf32>
    %80 = arith.maximumf %78, %79 : vector<16x1xf32>
    %c0_57 = arith.constant 0 : index
    %c0_58 = arith.constant 0 : index
    %81 = vector.load %arg3[%c0_57, %c0_58] : memref<16x1xf32, #tpu.memory_space<vmem>>, vector<16x1xf32>
    %cst_59 = arith.constant 9.99999974E-6 : f32
    %82 = vector.broadcast %cst_59 : f32 to vector<16x1xf32>
    %83 = arith.addf %80, %82 : vector<16x1xf32>
    %84 = math.rsqrt %83 : vector<16x1xf32>
    %85 = arith.mulf %81, %84 : vector<16x1xf32>
    %c0_60 = arith.constant 0 : index
    %c0_61 = arith.constant 0 : index
    %86 = vector.load %arg4[%c0_60, %c0_61] : memref<16x1xf32, #tpu.memory_space<vmem>>, vector<16x1xf32>
    %87 = arith.mulf %74, %85 : vector<16x1xf32>
    %88 = arith.subf %86, %87 : vector<16x1xf32>
    %89 = vector.broadcast %85 : vector<16x1xf32> to vector<16x512xf32>
    %90 = arith.mulf %67, %89 : vector<16x512xf32>
    %91 = vector.broadcast %88 : vector<16x1xf32> to vector<16x512xf32>
    %92 = arith.addf %90, %91 : vector<16x512xf32>
    %cst_62 = arith.constant 0.000000e+00 : f32
    %93 = vector.broadcast %cst_62 : f32 to vector<16x512xf32>
    %94 = arith.maximumf %92, %93 : vector<16x512xf32>
    %c17_i32_63 = arith.constant 17 : i32
    %95 = tpu.dynamic_rotate %94 by %c17_i32_63 dim 1 : vector<16x512xf32>, i32 -> vector<16x512xf32>
    %c0_64 = arith.constant 0 : index
    %c0_65 = arith.constant 0 : index
    %c0_66 = arith.constant 0 : index
    %96 = vector.load %arg1[%c0_64, %c0_65, %c0_66] : memref<9x32x512xf32, #tpu.memory_space<vmem>>, vector<1x16x512xf32>
    %97 = vector.shape_cast %96 : vector<1x16x512xf32> to vector<16x512xf32>
    %98 = arith.mulf %95, %97 : vector<16x512xf32>
    %c0_67 = arith.constant 0 : index
    %c0_68 = arith.constant 0 : index
    %c0_69 = arith.constant 0 : index
    %99 = vector.load %arg5[%c0_67, %c0_68, %c0_69] : memref<9x16x16xf32, #tpu.memory_space<vmem>>, vector<1x16x16xf32>
    %100 = vector.shape_cast %99 : vector<1x16x16xf32> to vector<16x16xf32>
    %cst_70 = arith.constant dense<0.000000e+00> : vector<16x512xf32>
    %101 = tpu.matmul %100, %98, %cst_70 {dimension_numbers = #tpu.dot_dimension_numbers<[1], [0], [0], [1], [0, 0, 1, 1], [], []>} : vector<16x16xf32>, vector<16x512xf32>, vector<16x512xf32> -> vector<16x512xf32>
    %c16_i32_71 = arith.constant 16 : i32
    %102 = tpu.dynamic_rotate %94 by %c16_i32_71 dim 1 : vector<16x512xf32>, i32 -> vector<16x512xf32>
    %c1_72 = arith.constant 1 : index
    %c0_73 = arith.constant 0 : index
    %c0_74 = arith.constant 0 : index
    %103 = vector.load %arg1[%c1_72, %c0_73, %c0_74] : memref<9x32x512xf32, #tpu.memory_space<vmem>>, vector<1x16x512xf32>
    %104 = vector.shape_cast %103 : vector<1x16x512xf32> to vector<16x512xf32>
    %105 = arith.mulf %102, %104 : vector<16x512xf32>
    %c1_75 = arith.constant 1 : index
    %c0_76 = arith.constant 0 : index
    %c0_77 = arith.constant 0 : index
    %106 = vector.load %arg5[%c1_75, %c0_76, %c0_77] : memref<9x16x16xf32, #tpu.memory_space<vmem>>, vector<1x16x16xf32>
    %107 = vector.shape_cast %106 : vector<1x16x16xf32> to vector<16x16xf32>
    %cst_78 = arith.constant dense<0.000000e+00> : vector<16x512xf32>
    %108 = tpu.matmul %107, %105, %cst_78 {dimension_numbers = #tpu.dot_dimension_numbers<[1], [0], [0], [1], [0, 0, 1, 1], [], []>} : vector<16x16xf32>, vector<16x512xf32>, vector<16x512xf32> -> vector<16x512xf32>
    %109 = arith.addf %101, %108 : vector<16x512xf32>
    %c15_i32_79 = arith.constant 15 : i32
    %110 = tpu.dynamic_rotate %94 by %c15_i32_79 dim 1 : vector<16x512xf32>, i32 -> vector<16x512xf32>
    %c2_80 = arith.constant 2 : index
    %c0_81 = arith.constant 0 : index
    %c0_82 = arith.constant 0 : index
    %111 = vector.load %arg1[%c2_80, %c0_81, %c0_82] : memref<9x32x512xf32, #tpu.memory_space<vmem>>, vector<1x16x512xf32>
    %112 = vector.shape_cast %111 : vector<1x16x512xf32> to vector<16x512xf32>
    %113 = arith.mulf %110, %112 : vector<16x512xf32>
    %c2_83 = arith.constant 2 : index
    %c0_84 = arith.constant 0 : index
    %c0_85 = arith.constant 0 : index
    %114 = vector.load %arg5[%c2_83, %c0_84, %c0_85] : memref<9x16x16xf32, #tpu.memory_space<vmem>>, vector<1x16x16xf32>
    %115 = vector.shape_cast %114 : vector<1x16x16xf32> to vector<16x16xf32>
    %cst_86 = arith.constant dense<0.000000e+00> : vector<16x512xf32>
    %116 = tpu.matmul %115, %113, %cst_86 {dimension_numbers = #tpu.dot_dimension_numbers<[1], [0], [0], [1], [0, 0, 1, 1], [], []>} : vector<16x16xf32>, vector<16x512xf32>, vector<16x512xf32> -> vector<16x512xf32>
    %117 = arith.addf %109, %116 : vector<16x512xf32>
    %c1_i32_87 = arith.constant 1 : i32
    %118 = tpu.dynamic_rotate %94 by %c1_i32_87 dim 1 : vector<16x512xf32>, i32 -> vector<16x512xf32>
    %c3_88 = arith.constant 3 : index
    %c0_89 = arith.constant 0 : index
    %c0_90 = arith.constant 0 : index
    %119 = vector.load %arg1[%c3_88, %c0_89, %c0_90] : memref<9x32x512xf32, #tpu.memory_space<vmem>>, vector<1x16x512xf32>
    %120 = vector.shape_cast %119 : vector<1x16x512xf32> to vector<16x512xf32>
    %121 = arith.mulf %118, %120 : vector<16x512xf32>
    %c3_91 = arith.constant 3 : index
    %c0_92 = arith.constant 0 : index
    %c0_93 = arith.constant 0 : index
    %122 = vector.load %arg5[%c3_91, %c0_92, %c0_93] : memref<9x16x16xf32, #tpu.memory_space<vmem>>, vector<1x16x16xf32>
    %123 = vector.shape_cast %122 : vector<1x16x16xf32> to vector<16x16xf32>
    %cst_94 = arith.constant dense<0.000000e+00> : vector<16x512xf32>
    %124 = tpu.matmul %123, %121, %cst_94 {dimension_numbers = #tpu.dot_dimension_numbers<[1], [0], [0], [1], [0, 0, 1, 1], [], []>} : vector<16x16xf32>, vector<16x512xf32>, vector<16x512xf32> -> vector<16x512xf32>
    %125 = arith.addf %117, %124 : vector<16x512xf32>
    %c4_95 = arith.constant 4 : index
    %c0_96 = arith.constant 0 : index
    %c0_97 = arith.constant 0 : index
    %126 = vector.load %arg5[%c4_95, %c0_96, %c0_97] : memref<9x16x16xf32, #tpu.memory_space<vmem>>, vector<1x16x16xf32>
    %127 = vector.shape_cast %126 : vector<1x16x16xf32> to vector<16x16xf32>
    %cst_98 = arith.constant dense<0.000000e+00> : vector<16x512xf32>
    %128 = tpu.matmul %127, %94, %cst_98 {dimension_numbers = #tpu.dot_dimension_numbers<[1], [0], [0], [1], [0, 0, 1, 1], [], []>} : vector<16x16xf32>, vector<16x512xf32>, vector<16x512xf32> -> vector<16x512xf32>
    %129 = arith.addf %125, %128 : vector<16x512xf32>
    %c511_i32_99 = arith.constant 511 : i32
    %130 = tpu.dynamic_rotate %94 by %c511_i32_99 dim 1 : vector<16x512xf32>, i32 -> vector<16x512xf32>
    %c5_100 = arith.constant 5 : index
    %c0_101 = arith.constant 0 : index
    %c0_102 = arith.constant 0 : index
    %131 = vector.load %arg1[%c5_100, %c0_101, %c0_102] : memref<9x32x512xf32, #tpu.memory_space<vmem>>, vector<1x16x512xf32>
    %132 = vector.shape_cast %131 : vector<1x16x512xf32> to vector<16x512xf32>
    %133 = arith.mulf %130, %132 : vector<16x512xf32>
    %c5_103 = arith.constant 5 : index
    %c0_104 = arith.constant 0 : index
    %c0_105 = arith.constant 0 : index
    %134 = vector.load %arg5[%c5_103, %c0_104, %c0_105] : memref<9x16x16xf32, #tpu.memory_space<vmem>>, vector<1x16x16xf32>
    %135 = vector.shape_cast %134 : vector<1x16x16xf32> to vector<16x16xf32>
    %cst_106 = arith.constant dense<0.000000e+00> : vector<16x512xf32>
    %136 = tpu.matmul %135, %133, %cst_106 {dimension_numbers = #tpu.dot_dimension_numbers<[1], [0], [0], [1], [0, 0, 1, 1], [], []>} : vector<16x16xf32>, vector<16x512xf32>, vector<16x512xf32> -> vector<16x512xf32>
    %137 = arith.addf %129, %136 : vector<16x512xf32>
    %c497_i32_107 = arith.constant 497 : i32
    %138 = tpu.dynamic_rotate %94 by %c497_i32_107 dim 1 : vector<16x512xf32>, i32 -> vector<16x512xf32>
    %c6_108 = arith.constant 6 : index
    %c0_109 = arith.constant 0 : index
    %c0_110 = arith.constant 0 : index
    %139 = vector.load %arg1[%c6_108, %c0_109, %c0_110] : memref<9x32x512xf32, #tpu.memory_space<vmem>>, vector<1x16x512xf32>
    %140 = vector.shape_cast %139 : vector<1x16x512xf32> to vector<16x512xf32>
    %141 = arith.mulf %138, %140 : vector<16x512xf32>
    %c6_111 = arith.constant 6 : index
    %c0_112 = arith.constant 0 : index
    %c0_113 = arith.constant 0 : index
    %142 = vector.load %arg5[%c6_111, %c0_112, %c0_113] : memref<9x16x16xf32, #tpu.memory_space<vmem>>, vector<1x16x16xf32>
    %143 = vector.shape_cast %142 : vector<1x16x16xf32> to vector<16x16xf32>
    %cst_114 = arith.constant dense<0.000000e+00> : vector<16x512xf32>
    %144 = tpu.matmul %143, %141, %cst_114 {dimension_numbers = #tpu.dot_dimension_numbers<[1], [0], [0], [1], [0, 0, 1, 1], [], []>} : vector<16x16xf32>, vector<16x512xf32>, vector<16x512xf32> -> vector<16x512xf32>
    %145 = arith.addf %137, %144 : vector<16x512xf32>
    %c496_i32_115 = arith.constant 496 : i32
    %146 = tpu.dynamic_rotate %94 by %c496_i32_115 dim 1 : vector<16x512xf32>, i32 -> vector<16x512xf32>
    %c7_116 = arith.constant 7 : index
    %c0_117 = arith.constant 0 : index
    %c0_118 = arith.constant 0 : index
    %147 = vector.load %arg1[%c7_116, %c0_117, %c0_118] : memref<9x32x512xf32, #tpu.memory_space<vmem>>, vector<1x16x512xf32>
    %148 = vector.shape_cast %147 : vector<1x16x512xf32> to vector<16x512xf32>
    %149 = arith.mulf %146, %148 : vector<16x512xf32>
    %c7_119 = arith.constant 7 : index
    %c0_120 = arith.constant 0 : index
    %c0_121 = arith.constant 0 : index
    %150 = vector.load %arg5[%c7_119, %c0_120, %c0_121] : memref<9x16x16xf32, #tpu.memory_space<vmem>>, vector<1x16x16xf32>
    %151 = vector.shape_cast %150 : vector<1x16x16xf32> to vector<16x16xf32>
    %cst_122 = arith.constant dense<0.000000e+00> : vector<16x512xf32>
    %152 = tpu.matmul %151, %149, %cst_122 {dimension_numbers = #tpu.dot_dimension_numbers<[1], [0], [0], [1], [0, 0, 1, 1], [], []>} : vector<16x16xf32>, vector<16x512xf32>, vector<16x512xf32> -> vector<16x512xf32>
    %153 = arith.addf %145, %152 : vector<16x512xf32>
    %c495_i32_123 = arith.constant 495 : i32
    %154 = tpu.dynamic_rotate %94 by %c495_i32_123 dim 1 : vector<16x512xf32>, i32 -> vector<16x512xf32>
    %c8_124 = arith.constant 8 : index
    %c0_125 = arith.constant 0 : index
    %c0_126 = arith.constant 0 : index
    %155 = vector.load %arg1[%c8_124, %c0_125, %c0_126] : memref<9x32x512xf32, #tpu.memory_space<vmem>>, vector<1x16x512xf32>
    %156 = vector.shape_cast %155 : vector<1x16x512xf32> to vector<16x512xf32>
    %157 = arith.mulf %154, %156 : vector<16x512xf32>
    %c8_127 = arith.constant 8 : index
    %c0_128 = arith.constant 0 : index
    %c0_129 = arith.constant 0 : index
    %158 = vector.load %arg5[%c8_127, %c0_128, %c0_129] : memref<9x16x16xf32, #tpu.memory_space<vmem>>, vector<1x16x16xf32>
    %159 = vector.shape_cast %158 : vector<1x16x16xf32> to vector<16x16xf32>
    %cst_130 = arith.constant dense<0.000000e+00> : vector<16x512xf32>
    %160 = tpu.matmul %159, %157, %cst_130 {dimension_numbers = #tpu.dot_dimension_numbers<[1], [0], [0], [1], [0, 0, 1, 1], [], []>} : vector<16x16xf32>, vector<16x512xf32>, vector<16x512xf32> -> vector<16x512xf32>
    %161 = arith.addf %153, %160 : vector<16x512xf32>
    %cst_131 = arith.constant dense<0.000000e+00> : vector<16xf32>
    %162 = vector.multi_reduction <add>, %161, %cst_131 [1] : vector<16x512xf32> to vector<16xf32>
    %163 = vector.shape_cast %162 : vector<16xf32> to vector<16x1xf32>
    %164 = arith.mulf %161, %161 : vector<16x512xf32>
    %cst_132 = arith.constant dense<0.000000e+00> : vector<16xf32>
    %165 = vector.multi_reduction <add>, %164, %cst_132 [1] : vector<16x512xf32> to vector<16xf32>
    %166 = vector.shape_cast %165 : vector<16xf32> to vector<16x1xf32>
    %cst_133 = arith.constant 0.001953125 : f32
    %167 = vector.broadcast %cst_133 : f32 to vector<16x1xf32>
    %168 = arith.mulf %163, %167 : vector<16x1xf32>
    %cst_134 = arith.constant 0.001953125 : f32
    %169 = vector.broadcast %cst_134 : f32 to vector<16x1xf32>
    %170 = arith.mulf %166, %169 : vector<16x1xf32>
    %171 = arith.mulf %168, %168 : vector<16x1xf32>
    %172 = arith.subf %170, %171 : vector<16x1xf32>
    %cst_135 = arith.constant 0.000000e+00 : f32
    %173 = vector.broadcast %cst_135 : f32 to vector<16x1xf32>
    %174 = arith.maximumf %172, %173 : vector<16x1xf32>
    %c0_136 = arith.constant 0 : index
    %c0_137 = arith.constant 0 : index
    %175 = vector.load %arg6[%c0_136, %c0_137] : memref<16x1xf32, #tpu.memory_space<vmem>>, vector<16x1xf32>
    %cst_138 = arith.constant 9.99999974E-6 : f32
    %176 = vector.broadcast %cst_138 : f32 to vector<16x1xf32>
    %177 = arith.addf %174, %176 : vector<16x1xf32>
    %178 = math.rsqrt %177 : vector<16x1xf32>
    %179 = arith.mulf %175, %178 : vector<16x1xf32>
    %c0_139 = arith.constant 0 : index
    %c0_140 = arith.constant 0 : index
    %180 = vector.load %arg7[%c0_139, %c0_140] : memref<16x1xf32, #tpu.memory_space<vmem>>, vector<16x1xf32>
    %181 = arith.mulf %168, %179 : vector<16x1xf32>
    %182 = arith.subf %180, %181 : vector<16x1xf32>
    %183 = vector.broadcast %179 : vector<16x1xf32> to vector<16x512xf32>
    %184 = arith.mulf %161, %183 : vector<16x512xf32>
    %185 = vector.broadcast %182 : vector<16x1xf32> to vector<16x512xf32>
    %186 = arith.addf %184, %185 : vector<16x512xf32>
    %cst_141 = arith.constant 0.000000e+00 : f32
    %187 = vector.broadcast %cst_141 : f32 to vector<16x512xf32>
    %188 = arith.maximumf %186, %187 : vector<16x512xf32>
    %c17_i32_142 = arith.constant 17 : i32
    %189 = tpu.dynamic_rotate %188 by %c17_i32_142 dim 1 : vector<16x512xf32>, i32 -> vector<16x512xf32>
    %c0_143 = arith.constant 0 : index
    %c0_144 = arith.constant 0 : index
    %c0_145 = arith.constant 0 : index
    %190 = vector.load %arg1[%c0_143, %c0_144, %c0_145] : memref<9x32x512xf32, #tpu.memory_space<vmem>>, vector<1x16x512xf32>
    %191 = vector.shape_cast %190 : vector<1x16x512xf32> to vector<16x512xf32>
    %192 = arith.mulf %189, %191 : vector<16x512xf32>
    %c0_146 = arith.constant 0 : index
    %c0_147 = arith.constant 0 : index
    %c0_148 = arith.constant 0 : index
    %193 = vector.load %arg8[%c0_146, %c0_147, %c0_148] : memref<9x16x16xf32, #tpu.memory_space<vmem>>, vector<1x16x16xf32>
    %194 = vector.shape_cast %193 : vector<1x16x16xf32> to vector<16x16xf32>
    %cst_149 = arith.constant dense<0.000000e+00> : vector<16x512xf32>
    %195 = tpu.matmul %194, %192, %cst_149 {dimension_numbers = #tpu.dot_dimension_numbers<[1], [0], [0], [1], [0, 0, 1, 1], [], []>} : vector<16x16xf32>, vector<16x512xf32>, vector<16x512xf32> -> vector<16x512xf32>
    %c16_i32_150 = arith.constant 16 : i32
    %196 = tpu.dynamic_rotate %188 by %c16_i32_150 dim 1 : vector<16x512xf32>, i32 -> vector<16x512xf32>
    %c1_151 = arith.constant 1 : index
    %c0_152 = arith.constant 0 : index
    %c0_153 = arith.constant 0 : index
    %197 = vector.load %arg1[%c1_151, %c0_152, %c0_153] : memref<9x32x512xf32, #tpu.memory_space<vmem>>, vector<1x16x512xf32>
    %198 = vector.shape_cast %197 : vector<1x16x512xf32> to vector<16x512xf32>
    %199 = arith.mulf %196, %198 : vector<16x512xf32>
    %c1_154 = arith.constant 1 : index
    %c0_155 = arith.constant 0 : index
    %c0_156 = arith.constant 0 : index
    %200 = vector.load %arg8[%c1_154, %c0_155, %c0_156] : memref<9x16x16xf32, #tpu.memory_space<vmem>>, vector<1x16x16xf32>
    %201 = vector.shape_cast %200 : vector<1x16x16xf32> to vector<16x16xf32>
    %cst_157 = arith.constant dense<0.000000e+00> : vector<16x512xf32>
    %202 = tpu.matmul %201, %199, %cst_157 {dimension_numbers = #tpu.dot_dimension_numbers<[1], [0], [0], [1], [0, 0, 1, 1], [], []>} : vector<16x16xf32>, vector<16x512xf32>, vector<16x512xf32> -> vector<16x512xf32>
    %203 = arith.addf %195, %202 : vector<16x512xf32>
    %c15_i32_158 = arith.constant 15 : i32
    %204 = tpu.dynamic_rotate %188 by %c15_i32_158 dim 1 : vector<16x512xf32>, i32 -> vector<16x512xf32>
    %c2_159 = arith.constant 2 : index
    %c0_160 = arith.constant 0 : index
    %c0_161 = arith.constant 0 : index
    %205 = vector.load %arg1[%c2_159, %c0_160, %c0_161] : memref<9x32x512xf32, #tpu.memory_space<vmem>>, vector<1x16x512xf32>
    %206 = vector.shape_cast %205 : vector<1x16x512xf32> to vector<16x512xf32>
    %207 = arith.mulf %204, %206 : vector<16x512xf32>
    %c2_162 = arith.constant 2 : index
    %c0_163 = arith.constant 0 : index
    %c0_164 = arith.constant 0 : index
    %208 = vector.load %arg8[%c2_162, %c0_163, %c0_164] : memref<9x16x16xf32, #tpu.memory_space<vmem>>, vector<1x16x16xf32>
    %209 = vector.shape_cast %208 : vector<1x16x16xf32> to vector<16x16xf32>
    %cst_165 = arith.constant dense<0.000000e+00> : vector<16x512xf32>
    %210 = tpu.matmul %209, %207, %cst_165 {dimension_numbers = #tpu.dot_dimension_numbers<[1], [0], [0], [1], [0, 0, 1, 1], [], []>} : vector<16x16xf32>, vector<16x512xf32>, vector<16x512xf32> -> vector<16x512xf32>
    %211 = arith.addf %203, %210 : vector<16x512xf32>
    %c1_i32_166 = arith.constant 1 : i32
    %212 = tpu.dynamic_rotate %188 by %c1_i32_166 dim 1 : vector<16x512xf32>, i32 -> vector<16x512xf32>
    %c3_167 = arith.constant 3 : index
    %c0_168 = arith.constant 0 : index
    %c0_169 = arith.constant 0 : index
    %213 = vector.load %arg1[%c3_167, %c0_168, %c0_169] : memref<9x32x512xf32, #tpu.memory_space<vmem>>, vector<1x16x512xf32>
    %214 = vector.shape_cast %213 : vector<1x16x512xf32> to vector<16x512xf32>
    %215 = arith.mulf %212, %214 : vector<16x512xf32>
    %c3_170 = arith.constant 3 : index
    %c0_171 = arith.constant 0 : index
    %c0_172 = arith.constant 0 : index
    %216 = vector.load %arg8[%c3_170, %c0_171, %c0_172] : memref<9x16x16xf32, #tpu.memory_space<vmem>>, vector<1x16x16xf32>
    %217 = vector.shape_cast %216 : vector<1x16x16xf32> to vector<16x16xf32>
    %cst_173 = arith.constant dense<0.000000e+00> : vector<16x512xf32>
    %218 = tpu.matmul %217, %215, %cst_173 {dimension_numbers = #tpu.dot_dimension_numbers<[1], [0], [0], [1], [0, 0, 1, 1], [], []>} : vector<16x16xf32>, vector<16x512xf32>, vector<16x512xf32> -> vector<16x512xf32>
    %219 = arith.addf %211, %218 : vector<16x512xf32>
    %c4_174 = arith.constant 4 : index
    %c0_175 = arith.constant 0 : index
    %c0_176 = arith.constant 0 : index
    %220 = vector.load %arg8[%c4_174, %c0_175, %c0_176] : memref<9x16x16xf32, #tpu.memory_space<vmem>>, vector<1x16x16xf32>
    %221 = vector.shape_cast %220 : vector<1x16x16xf32> to vector<16x16xf32>
    %cst_177 = arith.constant dense<0.000000e+00> : vector<16x512xf32>
    %222 = tpu.matmul %221, %188, %cst_177 {dimension_numbers = #tpu.dot_dimension_numbers<[1], [0], [0], [1], [0, 0, 1, 1], [], []>} : vector<16x16xf32>, vector<16x512xf32>, vector<16x512xf32> -> vector<16x512xf32>
    %223 = arith.addf %219, %222 : vector<16x512xf32>
    %c511_i32_178 = arith.constant 511 : i32
    %224 = tpu.dynamic_rotate %188 by %c511_i32_178 dim 1 : vector<16x512xf32>, i32 -> vector<16x512xf32>
    %c5_179 = arith.constant 5 : index
    %c0_180 = arith.constant 0 : index
    %c0_181 = arith.constant 0 : index
    %225 = vector.load %arg1[%c5_179, %c0_180, %c0_181] : memref<9x32x512xf32, #tpu.memory_space<vmem>>, vector<1x16x512xf32>
    %226 = vector.shape_cast %225 : vector<1x16x512xf32> to vector<16x512xf32>
    %227 = arith.mulf %224, %226 : vector<16x512xf32>
    %c5_182 = arith.constant 5 : index
    %c0_183 = arith.constant 0 : index
    %c0_184 = arith.constant 0 : index
    %228 = vector.load %arg8[%c5_182, %c0_183, %c0_184] : memref<9x16x16xf32, #tpu.memory_space<vmem>>, vector<1x16x16xf32>
    %229 = vector.shape_cast %228 : vector<1x16x16xf32> to vector<16x16xf32>
    %cst_185 = arith.constant dense<0.000000e+00> : vector<16x512xf32>
    %230 = tpu.matmul %229, %227, %cst_185 {dimension_numbers = #tpu.dot_dimension_numbers<[1], [0], [0], [1], [0, 0, 1, 1], [], []>} : vector<16x16xf32>, vector<16x512xf32>, vector<16x512xf32> -> vector<16x512xf32>
    %231 = arith.addf %223, %230 : vector<16x512xf32>
    %c497_i32_186 = arith.constant 497 : i32
    %232 = tpu.dynamic_rotate %188 by %c497_i32_186 dim 1 : vector<16x512xf32>, i32 -> vector<16x512xf32>
    %c6_187 = arith.constant 6 : index
    %c0_188 = arith.constant 0 : index
    %c0_189 = arith.constant 0 : index
    %233 = vector.load %arg1[%c6_187, %c0_188, %c0_189] : memref<9x32x512xf32, #tpu.memory_space<vmem>>, vector<1x16x512xf32>
    %234 = vector.shape_cast %233 : vector<1x16x512xf32> to vector<16x512xf32>
    %235 = arith.mulf %232, %234 : vector<16x512xf32>
    %c6_190 = arith.constant 6 : index
    %c0_191 = arith.constant 0 : index
    %c0_192 = arith.constant 0 : index
    %236 = vector.load %arg8[%c6_190, %c0_191, %c0_192] : memref<9x16x16xf32, #tpu.memory_space<vmem>>, vector<1x16x16xf32>
    %237 = vector.shape_cast %236 : vector<1x16x16xf32> to vector<16x16xf32>
    %cst_193 = arith.constant dense<0.000000e+00> : vector<16x512xf32>
    %238 = tpu.matmul %237, %235, %cst_193 {dimension_numbers = #tpu.dot_dimension_numbers<[1], [0], [0], [1], [0, 0, 1, 1], [], []>} : vector<16x16xf32>, vector<16x512xf32>, vector<16x512xf32> -> vector<16x512xf32>
    %239 = arith.addf %231, %238 : vector<16x512xf32>
    %c496_i32_194 = arith.constant 496 : i32
    %240 = tpu.dynamic_rotate %188 by %c496_i32_194 dim 1 : vector<16x512xf32>, i32 -> vector<16x512xf32>
    %c7_195 = arith.constant 7 : index
    %c0_196 = arith.constant 0 : index
    %c0_197 = arith.constant 0 : index
    %241 = vector.load %arg1[%c7_195, %c0_196, %c0_197] : memref<9x32x512xf32, #tpu.memory_space<vmem>>, vector<1x16x512xf32>
    %242 = vector.shape_cast %241 : vector<1x16x512xf32> to vector<16x512xf32>
    %243 = arith.mulf %240, %242 : vector<16x512xf32>
    %c7_198 = arith.constant 7 : index
    %c0_199 = arith.constant 0 : index
    %c0_200 = arith.constant 0 : index
    %244 = vector.load %arg8[%c7_198, %c0_199, %c0_200] : memref<9x16x16xf32, #tpu.memory_space<vmem>>, vector<1x16x16xf32>
    %245 = vector.shape_cast %244 : vector<1x16x16xf32> to vector<16x16xf32>
    %cst_201 = arith.constant dense<0.000000e+00> : vector<16x512xf32>
    %246 = tpu.matmul %245, %243, %cst_201 {dimension_numbers = #tpu.dot_dimension_numbers<[1], [0], [0], [1], [0, 0, 1, 1], [], []>} : vector<16x16xf32>, vector<16x512xf32>, vector<16x512xf32> -> vector<16x512xf32>
    %247 = arith.addf %239, %246 : vector<16x512xf32>
    %c495_i32_202 = arith.constant 495 : i32
    %248 = tpu.dynamic_rotate %188 by %c495_i32_202 dim 1 : vector<16x512xf32>, i32 -> vector<16x512xf32>
    %c8_203 = arith.constant 8 : index
    %c0_204 = arith.constant 0 : index
    %c0_205 = arith.constant 0 : index
    %249 = vector.load %arg1[%c8_203, %c0_204, %c0_205] : memref<9x32x512xf32, #tpu.memory_space<vmem>>, vector<1x16x512xf32>
    %250 = vector.shape_cast %249 : vector<1x16x512xf32> to vector<16x512xf32>
    %251 = arith.mulf %248, %250 : vector<16x512xf32>
    %c8_206 = arith.constant 8 : index
    %c0_207 = arith.constant 0 : index
    %c0_208 = arith.constant 0 : index
    %252 = vector.load %arg8[%c8_206, %c0_207, %c0_208] : memref<9x16x16xf32, #tpu.memory_space<vmem>>, vector<1x16x16xf32>
    %253 = vector.shape_cast %252 : vector<1x16x16xf32> to vector<16x16xf32>
    %cst_209 = arith.constant dense<0.000000e+00> : vector<16x512xf32>
    %254 = tpu.matmul %253, %251, %cst_209 {dimension_numbers = #tpu.dot_dimension_numbers<[1], [0], [0], [1], [0, 0, 1, 1], [], []>} : vector<16x16xf32>, vector<16x512xf32>, vector<16x512xf32> -> vector<16x512xf32>
    %255 = arith.addf %247, %254 : vector<16x512xf32>
    %cst_210 = arith.constant dense<0.000000e+00> : vector<16xf32>
    %256 = vector.multi_reduction <add>, %255, %cst_210 [1] : vector<16x512xf32> to vector<16xf32>
    %257 = vector.shape_cast %256 : vector<16xf32> to vector<16x1xf32>
    %258 = arith.mulf %255, %255 : vector<16x512xf32>
    %cst_211 = arith.constant dense<0.000000e+00> : vector<16xf32>
    %259 = vector.multi_reduction <add>, %258, %cst_211 [1] : vector<16x512xf32> to vector<16xf32>
    %260 = vector.shape_cast %259 : vector<16xf32> to vector<16x1xf32>
    %cst_212 = arith.constant 0.001953125 : f32
    %261 = vector.broadcast %cst_212 : f32 to vector<16x1xf32>
    %262 = arith.mulf %257, %261 : vector<16x1xf32>
    %cst_213 = arith.constant 0.001953125 : f32
    %263 = vector.broadcast %cst_213 : f32 to vector<16x1xf32>
    %264 = arith.mulf %260, %263 : vector<16x1xf32>
    %265 = arith.mulf %262, %262 : vector<16x1xf32>
    %266 = arith.subf %264, %265 : vector<16x1xf32>
    %cst_214 = arith.constant 0.000000e+00 : f32
    %267 = vector.broadcast %cst_214 : f32 to vector<16x1xf32>
    %268 = arith.maximumf %266, %267 : vector<16x1xf32>
    %c0_215 = arith.constant 0 : index
    %c0_216 = arith.constant 0 : index
    %269 = vector.load %arg9[%c0_215, %c0_216] : memref<16x1xf32, #tpu.memory_space<vmem>>, vector<16x1xf32>
    %cst_217 = arith.constant 9.99999974E-6 : f32
    %270 = vector.broadcast %cst_217 : f32 to vector<16x1xf32>
    %271 = arith.addf %268, %270 : vector<16x1xf32>
    %272 = math.rsqrt %271 : vector<16x1xf32>
    %273 = arith.mulf %269, %272 : vector<16x1xf32>
    %c0_218 = arith.constant 0 : index
    %c0_219 = arith.constant 0 : index
    %274 = vector.load %arg10[%c0_218, %c0_219] : memref<16x1xf32, #tpu.memory_space<vmem>>, vector<16x1xf32>
    %275 = arith.mulf %262, %273 : vector<16x1xf32>
    %276 = arith.subf %274, %275 : vector<16x1xf32>
    %277 = vector.broadcast %273 : vector<16x1xf32> to vector<16x512xf32>
    %278 = arith.mulf %255, %277 : vector<16x512xf32>
    %279 = vector.broadcast %276 : vector<16x1xf32> to vector<16x512xf32>
    %280 = arith.addf %278, %279 : vector<16x512xf32>
    %cst_220 = arith.constant 0.000000e+00 : f32
    %281 = vector.broadcast %cst_220 : f32 to vector<16x512xf32>
    %282 = arith.maximumf %280, %281 : vector<16x512xf32>
    %c0_221 = arith.constant 0 : index
    %c0_222 = arith.constant 0 : index
    %c0_223 = arith.constant 0 : index
    %283 = vector.load %arg11[%c0_221, %c0_222, %c0_223] : memref<1x16x16xf32, #tpu.memory_space<vmem>>, vector<1x16x16xf32>
    %284 = vector.shape_cast %283 : vector<1x16x16xf32> to vector<16x16xf32>
    %cst_224 = arith.constant dense<0.000000e+00> : vector<16x512xf32>
    %285 = tpu.matmul %284, %282, %cst_224 {dimension_numbers = #tpu.dot_dimension_numbers<[1], [0], [0], [1], [0, 0, 1, 1], [], []>} : vector<16x16xf32>, vector<16x512xf32>, vector<16x512xf32> -> vector<16x512xf32>
    %cst_225 = arith.constant dense<0.000000e+00> : vector<16xf32>
    %286 = vector.multi_reduction <add>, %285, %cst_225 [1] : vector<16x512xf32> to vector<16xf32>
    %287 = vector.shape_cast %286 : vector<16xf32> to vector<16x1xf32>
    %288 = arith.mulf %285, %285 : vector<16x512xf32>
    %cst_226 = arith.constant dense<0.000000e+00> : vector<16xf32>
    %289 = vector.multi_reduction <add>, %288, %cst_226 [1] : vector<16x512xf32> to vector<16xf32>
    %290 = vector.shape_cast %289 : vector<16xf32> to vector<16x1xf32>
    %cst_227 = arith.constant 0.001953125 : f32
    %291 = vector.broadcast %cst_227 : f32 to vector<16x1xf32>
    %292 = arith.mulf %287, %291 : vector<16x1xf32>
    %cst_228 = arith.constant 0.001953125 : f32
    %293 = vector.broadcast %cst_228 : f32 to vector<16x1xf32>
    %294 = arith.mulf %290, %293 : vector<16x1xf32>
    %295 = arith.mulf %292, %292 : vector<16x1xf32>
    %296 = arith.subf %294, %295 : vector<16x1xf32>
    %cst_229 = arith.constant 0.000000e+00 : f32
    %297 = vector.broadcast %cst_229 : f32 to vector<16x1xf32>
    %298 = arith.maximumf %296, %297 : vector<16x1xf32>
    %c0_230 = arith.constant 0 : index
    %c0_231 = arith.constant 0 : index
    %299 = vector.load %arg12[%c0_230, %c0_231] : memref<16x1xf32, #tpu.memory_space<vmem>>, vector<16x1xf32>
    %cst_232 = arith.constant 9.99999974E-6 : f32
    %300 = vector.broadcast %cst_232 : f32 to vector<16x1xf32>
    %301 = arith.addf %298, %300 : vector<16x1xf32>
    %302 = math.rsqrt %301 : vector<16x1xf32>
    %303 = arith.mulf %299, %302 : vector<16x1xf32>
    %c0_233 = arith.constant 0 : index
    %c0_234 = arith.constant 0 : index
    %304 = vector.load %arg13[%c0_233, %c0_234] : memref<16x1xf32, #tpu.memory_space<vmem>>, vector<16x1xf32>
    %305 = arith.mulf %292, %303 : vector<16x1xf32>
    %306 = arith.subf %304, %305 : vector<16x1xf32>
    %307 = vector.broadcast %303 : vector<16x1xf32> to vector<16x512xf32>
    %308 = arith.mulf %285, %307 : vector<16x512xf32>
    %309 = vector.broadcast %306 : vector<16x1xf32> to vector<16x512xf32>
    %310 = arith.addf %308, %309 : vector<16x512xf32>
    %cst_235 = arith.constant 0.000000e+00 : f32
    %311 = vector.broadcast %cst_235 : f32 to vector<16x512xf32>
    %312 = arith.cmpf ogt, %310, %311 : vector<16x512xf32>
    %cst_236 = arith.constant 0.00999999977 : f32
    %313 = vector.broadcast %cst_236 : f32 to vector<16x512xf32>
    %314 = arith.mulf %313, %310 : vector<16x512xf32>
    %315 = arith.select %312, %310, %314 : vector<16x512xi1>, vector<16x512xf32>
    %c0_237 = arith.constant 0 : index
    %c0_238 = arith.constant 0 : index
    %316 = vector.load %arg29[%c0_237, %c0_238] : memref<16x512xf32, #tpu.memory_space<vmem>>, vector<16x512xf32>
    tpu.vector_store %arg29[%c0_237, %c0_238], %315 {strides = array<i32>} : memref<16x512xf32, #tpu.memory_space<vmem>>, vector<16x512xf32>,
    %c17_i32_239 = arith.constant 17 : i32
    %317 = tpu.dynamic_rotate %315 by %c17_i32_239 dim 1 : vector<16x512xf32>, i32 -> vector<16x512xf32>
    %c0_240 = arith.constant 0 : index
    %c0_241 = arith.constant 0 : index
    %c0_242 = arith.constant 0 : index
    %318 = vector.load %arg1[%c0_240, %c0_241, %c0_242] : memref<9x32x512xf32, #tpu.memory_space<vmem>>, vector<1x16x512xf32>
    %319 = vector.shape_cast %318 : vector<1x16x512xf32> to vector<16x512xf32>
    %320 = arith.mulf %317, %319 : vector<16x512xf32>
    %c0_243 = arith.constant 0 : index
    %c0_244 = arith.constant 0 : index
    %c0_245 = arith.constant 0 : index
    %321 = vector.load %arg14[%c0_243, %c0_244, %c0_245] : memref<9x16x16xf32, #tpu.memory_space<vmem>>, vector<1x16x16xf32>
    %322 = vector.shape_cast %321 : vector<1x16x16xf32> to vector<16x16xf32>
    %cst_246 = arith.constant dense<0.000000e+00> : vector<16x512xf32>
    %323 = tpu.matmul %322, %320, %cst_246 {dimension_numbers = #tpu.dot_dimension_numbers<[1], [0], [0], [1], [0, 0, 1, 1], [], []>} : vector<16x16xf32>, vector<16x512xf32>, vector<16x512xf32> -> vector<16x512xf32>
    %c16_i32_247 = arith.constant 16 : i32
    %324 = tpu.dynamic_rotate %315 by %c16_i32_247 dim 1 : vector<16x512xf32>, i32 -> vector<16x512xf32>
    %c1_248 = arith.constant 1 : index
    %c0_249 = arith.constant 0 : index
    %c0_250 = arith.constant 0 : index
    %325 = vector.load %arg1[%c1_248, %c0_249, %c0_250] : memref<9x32x512xf32, #tpu.memory_space<vmem>>, vector<1x16x512xf32>
    %326 = vector.shape_cast %325 : vector<1x16x512xf32> to vector<16x512xf32>
    %327 = arith.mulf %324, %326 : vector<16x512xf32>
    %c1_251 = arith.constant 1 : index
    %c0_252 = arith.constant 0 : index
    %c0_253 = arith.constant 0 : index
    %328 = vector.load %arg14[%c1_251, %c0_252, %c0_253] : memref<9x16x16xf32, #tpu.memory_space<vmem>>, vector<1x16x16xf32>
    %329 = vector.shape_cast %328 : vector<1x16x16xf32> to vector<16x16xf32>
    %cst_254 = arith.constant dense<0.000000e+00> : vector<16x512xf32>
    %330 = tpu.matmul %329, %327, %cst_254 {dimension_numbers = #tpu.dot_dimension_numbers<[1], [0], [0], [1], [0, 0, 1, 1], [], []>} : vector<16x16xf32>, vector<16x512xf32>, vector<16x512xf32> -> vector<16x512xf32>
    %331 = arith.addf %323, %330 : vector<16x512xf32>
    %c15_i32_255 = arith.constant 15 : i32
    %332 = tpu.dynamic_rotate %315 by %c15_i32_255 dim 1 : vector<16x512xf32>, i32 -> vector<16x512xf32>
    %c2_256 = arith.constant 2 : index
    %c0_257 = arith.constant 0 : index
    %c0_258 = arith.constant 0 : index
    %333 = vector.load %arg1[%c2_256, %c0_257, %c0_258] : memref<9x32x512xf32, #tpu.memory_space<vmem>>, vector<1x16x512xf32>
    %334 = vector.shape_cast %333 : vector<1x16x512xf32> to vector<16x512xf32>
    %335 = arith.mulf %332, %334 : vector<16x512xf32>
    %c2_259 = arith.constant 2 : index
    %c0_260 = arith.constant 0 : index
    %c0_261 = arith.constant 0 : index
    %336 = vector.load %arg14[%c2_259, %c0_260, %c0_261] : memref<9x16x16xf32, #tpu.memory_space<vmem>>, vector<1x16x16xf32>
    %337 = vector.shape_cast %336 : vector<1x16x16xf32> to vector<16x16xf32>
    %cst_262 = arith.constant dense<0.000000e+00> : vector<16x512xf32>
    %338 = tpu.matmul %337, %335, %cst_262 {dimension_numbers = #tpu.dot_dimension_numbers<[1], [0], [0], [1], [0, 0, 1, 1], [], []>} : vector<16x16xf32>, vector<16x512xf32>, vector<16x512xf32> -> vector<16x512xf32>
    %339 = arith.addf %331, %338 : vector<16x512xf32>
    %c1_i32_263 = arith.constant 1 : i32
    %340 = tpu.dynamic_rotate %315 by %c1_i32_263 dim 1 : vector<16x512xf32>, i32 -> vector<16x512xf32>
    %c3_264 = arith.constant 3 : index
    %c0_265 = arith.constant 0 : index
    %c0_266 = arith.constant 0 : index
    %341 = vector.load %arg1[%c3_264, %c0_265, %c0_266] : memref<9x32x512xf32, #tpu.memory_space<vmem>>, vector<1x16x512xf32>
    %342 = vector.shape_cast %341 : vector<1x16x512xf32> to vector<16x512xf32>
    %343 = arith.mulf %340, %342 : vector<16x512xf32>
    %c3_267 = arith.constant 3 : index
    %c0_268 = arith.constant 0 : index
    %c0_269 = arith.constant 0 : index
    %344 = vector.load %arg14[%c3_267, %c0_268, %c0_269] : memref<9x16x16xf32, #tpu.memory_space<vmem>>, vector<1x16x16xf32>
    %345 = vector.shape_cast %344 : vector<1x16x16xf32> to vector<16x16xf32>
    %cst_270 = arith.constant dense<0.000000e+00> : vector<16x512xf32>
    %346 = tpu.matmul %345, %343, %cst_270 {dimension_numbers = #tpu.dot_dimension_numbers<[1], [0], [0], [1], [0, 0, 1, 1], [], []>} : vector<16x16xf32>, vector<16x512xf32>, vector<16x512xf32> -> vector<16x512xf32>
    %347 = arith.addf %339, %346 : vector<16x512xf32>
    %c4_271 = arith.constant 4 : index
    %c0_272 = arith.constant 0 : index
    %c0_273 = arith.constant 0 : index
    %348 = vector.load %arg14[%c4_271, %c0_272, %c0_273] : memref<9x16x16xf32, #tpu.memory_space<vmem>>, vector<1x16x16xf32>
    %349 = vector.shape_cast %348 : vector<1x16x16xf32> to vector<16x16xf32>
    %cst_274 = arith.constant dense<0.000000e+00> : vector<16x512xf32>
    %350 = tpu.matmul %349, %315, %cst_274 {dimension_numbers = #tpu.dot_dimension_numbers<[1], [0], [0], [1], [0, 0, 1, 1], [], []>} : vector<16x16xf32>, vector<16x512xf32>, vector<16x512xf32> -> vector<16x512xf32>
    %351 = arith.addf %347, %350 : vector<16x512xf32>
    %c511_i32_275 = arith.constant 511 : i32
    %352 = tpu.dynamic_rotate %315 by %c511_i32_275 dim 1 : vector<16x512xf32>, i32 -> vector<16x512xf32>
    %c5_276 = arith.constant 5 : index
    %c0_277 = arith.constant 0 : index
    %c0_278 = arith.constant 0 : index
    %353 = vector.load %arg1[%c5_276, %c0_277, %c0_278] : memref<9x32x512xf32, #tpu.memory_space<vmem>>, vector<1x16x512xf32>
    %354 = vector.shape_cast %353 : vector<1x16x512xf32> to vector<16x512xf32>
    %355 = arith.mulf %352, %354 : vector<16x512xf32>
    %c5_279 = arith.constant 5 : index
    %c0_280 = arith.constant 0 : index
    %c0_281 = arith.constant 0 : index
    %356 = vector.load %arg14[%c5_279, %c0_280, %c0_281] : memref<9x16x16xf32, #tpu.memory_space<vmem>>, vector<1x16x16xf32>
    %357 = vector.shape_cast %356 : vector<1x16x16xf32> to vector<16x16xf32>
    %cst_282 = arith.constant dense<0.000000e+00> : vector<16x512xf32>
    %358 = tpu.matmul %357, %355, %cst_282 {dimension_numbers = #tpu.dot_dimension_numbers<[1], [0], [0], [1], [0, 0, 1, 1], [], []>} : vector<16x16xf32>, vector<16x512xf32>, vector<16x512xf32> -> vector<16x512xf32>
    %359 = arith.addf %351, %358 : vector<16x512xf32>
    %c497_i32_283 = arith.constant 497 : i32
    %360 = tpu.dynamic_rotate %315 by %c497_i32_283 dim 1 : vector<16x512xf32>, i32 -> vector<16x512xf32>
    %c6_284 = arith.constant 6 : index
    %c0_285 = arith.constant 0 : index
    %c0_286 = arith.constant 0 : index
    %361 = vector.load %arg1[%c6_284, %c0_285, %c0_286] : memref<9x32x512xf32, #tpu.memory_space<vmem>>, vector<1x16x512xf32>
    %362 = vector.shape_cast %361 : vector<1x16x512xf32> to vector<16x512xf32>
    %363 = arith.mulf %360, %362 : vector<16x512xf32>
    %c6_287 = arith.constant 6 : index
    %c0_288 = arith.constant 0 : index
    %c0_289 = arith.constant 0 : index
    %364 = vector.load %arg14[%c6_287, %c0_288, %c0_289] : memref<9x16x16xf32, #tpu.memory_space<vmem>>, vector<1x16x16xf32>
    %365 = vector.shape_cast %364 : vector<1x16x16xf32> to vector<16x16xf32>
    %cst_290 = arith.constant dense<0.000000e+00> : vector<16x512xf32>
    %366 = tpu.matmul %365, %363, %cst_290 {dimension_numbers = #tpu.dot_dimension_numbers<[1], [0], [0], [1], [0, 0, 1, 1], [], []>} : vector<16x16xf32>, vector<16x512xf32>, vector<16x512xf32> -> vector<16x512xf32>
    %367 = arith.addf %359, %366 : vector<16x512xf32>
    %c496_i32_291 = arith.constant 496 : i32
    %368 = tpu.dynamic_rotate %315 by %c496_i32_291 dim 1 : vector<16x512xf32>, i32 -> vector<16x512xf32>
    %c7_292 = arith.constant 7 : index
    %c0_293 = arith.constant 0 : index
    %c0_294 = arith.constant 0 : index
    %369 = vector.load %arg1[%c7_292, %c0_293, %c0_294] : memref<9x32x512xf32, #tpu.memory_space<vmem>>, vector<1x16x512xf32>
    %370 = vector.shape_cast %369 : vector<1x16x512xf32> to vector<16x512xf32>
    %371 = arith.mulf %368, %370 : vector<16x512xf32>
    %c7_295 = arith.constant 7 : index
    %c0_296 = arith.constant 0 : index
    %c0_297 = arith.constant 0 : index
    %372 = vector.load %arg14[%c7_295, %c0_296, %c0_297] : memref<9x16x16xf32, #tpu.memory_space<vmem>>, vector<1x16x16xf32>
    %373 = vector.shape_cast %372 : vector<1x16x16xf32> to vector<16x16xf32>
    %cst_298 = arith.constant dense<0.000000e+00> : vector<16x512xf32>
    %374 = tpu.matmul %373, %371, %cst_298 {dimension_numbers = #tpu.dot_dimension_numbers<[1], [0], [0], [1], [0, 0, 1, 1], [], []>} : vector<16x16xf32>, vector<16x512xf32>, vector<16x512xf32> -> vector<16x512xf32>
    %375 = arith.addf %367, %374 : vector<16x512xf32>
    %c495_i32_299 = arith.constant 495 : i32
    %376 = tpu.dynamic_rotate %315 by %c495_i32_299 dim 1 : vector<16x512xf32>, i32 -> vector<16x512xf32>
    %c8_300 = arith.constant 8 : index
    %c0_301 = arith.constant 0 : index
    %c0_302 = arith.constant 0 : index
    %377 = vector.load %arg1[%c8_300, %c0_301, %c0_302] : memref<9x32x512xf32, #tpu.memory_space<vmem>>, vector<1x16x512xf32>
    %378 = vector.shape_cast %377 : vector<1x16x512xf32> to vector<16x512xf32>
    %379 = arith.mulf %376, %378 : vector<16x512xf32>
    %c8_303 = arith.constant 8 : index
    %c0_304 = arith.constant 0 : index
    %c0_305 = arith.constant 0 : index
    %380 = vector.load %arg14[%c8_303, %c0_304, %c0_305] : memref<9x16x16xf32, #tpu.memory_space<vmem>>, vector<1x16x16xf32>
    %381 = vector.shape_cast %380 : vector<1x16x16xf32> to vector<16x16xf32>
    %cst_306 = arith.constant dense<0.000000e+00> : vector<16x512xf32>
    %382 = tpu.matmul %381, %379, %cst_306 {dimension_numbers = #tpu.dot_dimension_numbers<[1], [0], [0], [1], [0, 0, 1, 1], [], []>} : vector<16x16xf32>, vector<16x512xf32>, vector<16x512xf32> -> vector<16x512xf32>
    %383 = arith.addf %375, %382 : vector<16x512xf32>
    %cst_307 = arith.constant dense<0.000000e+00> : vector<16xf32>
    %384 = vector.multi_reduction <add>, %383, %cst_307 [1] : vector<16x512xf32> to vector<16xf32>
    %385 = vector.shape_cast %384 : vector<16xf32> to vector<16x1xf32>
    %386 = arith.mulf %383, %383 : vector<16x512xf32>
    %cst_308 = arith.constant dense<0.000000e+00> : vector<16xf32>
    %387 = vector.multi_reduction <add>, %386, %cst_308 [1] : vector<16x512xf32> to vector<16xf32>
    %388 = vector.shape_cast %387 : vector<16xf32> to vector<16x1xf32>
    %cst_309 = arith.constant 0.001953125 : f32
    %389 = vector.broadcast %cst_309 : f32 to vector<16x1xf32>
    %390 = arith.mulf %385, %389 : vector<16x1xf32>
    %cst_310 = arith.constant 0.001953125 : f32
    %391 = vector.broadcast %cst_310 : f32 to vector<16x1xf32>
    %392 = arith.mulf %388, %391 : vector<16x1xf32>
    %393 = arith.mulf %390, %390 : vector<16x1xf32>
    %394 = arith.subf %392, %393 : vector<16x1xf32>
    %cst_311 = arith.constant 0.000000e+00 : f32
    %395 = vector.broadcast %cst_311 : f32 to vector<16x1xf32>
    %396 = arith.maximumf %394, %395 : vector<16x1xf32>
    %c0_312 = arith.constant 0 : index
    %c0_313 = arith.constant 0 : index
    %397 = vector.load %arg15[%c0_312, %c0_313] : memref<16x1xf32, #tpu.memory_space<vmem>>, vector<16x1xf32>
    %cst_314 = arith.constant 9.99999974E-6 : f32
    %398 = vector.broadcast %cst_314 : f32 to vector<16x1xf32>
    %399 = arith.addf %396, %398 : vector<16x1xf32>
    %400 = math.rsqrt %399 : vector<16x1xf32>
    %401 = arith.mulf %397, %400 : vector<16x1xf32>
    %c0_315 = arith.constant 0 : index
    %c0_316 = arith.constant 0 : index
    %402 = vector.load %arg16[%c0_315, %c0_316] : memref<16x1xf32, #tpu.memory_space<vmem>>, vector<16x1xf32>
    %403 = arith.mulf %390, %401 : vector<16x1xf32>
    %404 = arith.subf %402, %403 : vector<16x1xf32>
    %405 = vector.broadcast %401 : vector<16x1xf32> to vector<16x512xf32>
    %406 = arith.mulf %383, %405 : vector<16x512xf32>
    %407 = vector.broadcast %404 : vector<16x1xf32> to vector<16x512xf32>
    %408 = arith.addf %406, %407 : vector<16x512xf32>
    %cst_317 = arith.constant 0.000000e+00 : f32
    %409 = vector.broadcast %cst_317 : f32 to vector<16x512xf32>
    %410 = arith.cmpf ogt, %408, %409 : vector<16x512xf32>
    %cst_318 = arith.constant 0.00999999977 : f32
    %411 = vector.broadcast %cst_318 : f32 to vector<16x512xf32>
    %412 = arith.mulf %411, %408 : vector<16x512xf32>
    %413 = arith.select %410, %408, %412 : vector<16x512xi1>, vector<16x512xf32>
    %c0_319 = arith.constant 0 : index
    %c0_320 = arith.constant 0 : index
    %414 = vector.load %arg30[%c0_319, %c0_320] : memref<16x512xf32, #tpu.memory_space<vmem>>, vector<16x512xf32>
    tpu.vector_store %arg30[%c0_319, %c0_320], %413 {strides = array<i32>} : memref<16x512xf32, #tpu.memory_space<vmem>>, vector<16x512xf32>,
    %c0_321 = arith.constant 0 : index
    %c0_322 = arith.constant 0 : index
    %c0_323 = arith.constant 0 : index
    %415 = vector.load %arg17[%c0_321, %c0_322, %c0_323] : memref<1x16x16xf32, #tpu.memory_space<vmem>>, vector<1x16x16xf32>
    %416 = vector.shape_cast %415 : vector<1x16x16xf32> to vector<16x16xf32>
    %cst_324 = arith.constant dense<0.000000e+00> : vector<16x512xf32>
    %417 = tpu.matmul %416, %413, %cst_324 {dimension_numbers = #tpu.dot_dimension_numbers<[1], [0], [0], [1], [0, 0, 1, 1], [], []>} : vector<16x16xf32>, vector<16x512xf32>, vector<16x512xf32> -> vector<16x512xf32>
    %cst_325 = arith.constant dense<0.000000e+00> : vector<16xf32>
    %418 = vector.multi_reduction <add>, %417, %cst_325 [1] : vector<16x512xf32> to vector<16xf32>
    %419 = vector.shape_cast %418 : vector<16xf32> to vector<16x1xf32>
    %420 = arith.mulf %417, %417 : vector<16x512xf32>
    %cst_326 = arith.constant dense<0.000000e+00> : vector<16xf32>
    %421 = vector.multi_reduction <add>, %420, %cst_326 [1] : vector<16x512xf32> to vector<16xf32>
    %422 = vector.shape_cast %421 : vector<16xf32> to vector<16x1xf32>
    %cst_327 = arith.constant 0.001953125 : f32
    %423 = vector.broadcast %cst_327 : f32 to vector<16x1xf32>
    %424 = arith.mulf %419, %423 : vector<16x1xf32>
    %cst_328 = arith.constant 0.001953125 : f32
    %425 = vector.broadcast %cst_328 : f32 to vector<16x1xf32>
    %426 = arith.mulf %422, %425 : vector<16x1xf32>
    %427 = arith.mulf %424, %424 : vector<16x1xf32>
    %428 = arith.subf %426, %427 : vector<16x1xf32>
    %cst_329 = arith.constant 0.000000e+00 : f32
    %429 = vector.broadcast %cst_329 : f32 to vector<16x1xf32>
    %430 = arith.maximumf %428, %429 : vector<16x1xf32>
    %c0_330 = arith.constant 0 : index
    %c0_331 = arith.constant 0 : index
    %431 = vector.load %arg18[%c0_330, %c0_331] : memref<16x1xf32, #tpu.memory_space<vmem>>, vector<16x1xf32>
    %cst_332 = arith.constant 9.99999974E-6 : f32
    %432 = vector.broadcast %cst_332 : f32 to vector<16x1xf32>
    %433 = arith.addf %430, %432 : vector<16x1xf32>
    %434 = math.rsqrt %433 : vector<16x1xf32>
    %435 = arith.mulf %431, %434 : vector<16x1xf32>
    %c0_333 = arith.constant 0 : index
    %c0_334 = arith.constant 0 : index
    %436 = vector.load %arg19[%c0_333, %c0_334] : memref<16x1xf32, #tpu.memory_space<vmem>>, vector<16x1xf32>
    %437 = arith.mulf %424, %435 : vector<16x1xf32>
    %438 = arith.subf %436, %437 : vector<16x1xf32>
    %439 = vector.broadcast %435 : vector<16x1xf32> to vector<16x512xf32>
    %440 = arith.mulf %417, %439 : vector<16x512xf32>
    %441 = vector.broadcast %438 : vector<16x1xf32> to vector<16x512xf32>
    %442 = arith.addf %440, %441 : vector<16x512xf32>
    %443 = arith.addf %282, %442 : vector<16x512xf32>
    %cst_335 = arith.constant 0.000000e+00 : f32
    %444 = vector.broadcast %cst_335 : f32 to vector<16x512xf32>
    %445 = arith.cmpf ogt, %443, %444 : vector<16x512xf32>
    %cst_336 = arith.constant 0.00999999977 : f32
    %446 = vector.broadcast %cst_336 : f32 to vector<16x512xf32>
    %447 = arith.mulf %446, %443 : vector<16x512xf32>
    %448 = arith.select %445, %443, %447 : vector<16x512xi1>, vector<16x512xf32>
    %c17_i32_337 = arith.constant 17 : i32
    %449 = tpu.dynamic_rotate %448 by %c17_i32_337 dim 1 : vector<16x512xf32>, i32 -> vector<16x512xf32>
    %c0_338 = arith.constant 0 : index
    %c0_339 = arith.constant 0 : index
    %c0_340 = arith.constant 0 : index
    %450 = vector.load %arg1[%c0_338, %c0_339, %c0_340] : memref<9x32x512xf32, #tpu.memory_space<vmem>>, vector<1x16x512xf32>
    %451 = vector.shape_cast %450 : vector<1x16x512xf32> to vector<16x512xf32>
    %452 = arith.mulf %449, %451 : vector<16x512xf32>
    %c0_341 = arith.constant 0 : index
    %c0_342 = arith.constant 0 : index
    %c0_343 = arith.constant 0 : index
    %453 = vector.load %arg20[%c0_341, %c0_342, %c0_343] : memref<9x32x16xf32, #tpu.memory_space<vmem>>, vector<1x32x16xf32>
    %454 = vector.shape_cast %453 : vector<1x32x16xf32> to vector<32x16xf32>
    %cst_344 = arith.constant dense<0.000000e+00> : vector<32x512xf32>
    %455 = tpu.matmul %454, %452, %cst_344 {dimension_numbers = #tpu.dot_dimension_numbers<[1], [0], [0], [1], [0, 0, 1, 1], [], []>} : vector<32x16xf32>, vector<16x512xf32>, vector<32x512xf32> -> vector<32x512xf32>
    %c16_i32_345 = arith.constant 16 : i32
    %456 = tpu.dynamic_rotate %448 by %c16_i32_345 dim 1 : vector<16x512xf32>, i32 -> vector<16x512xf32>
    %c1_346 = arith.constant 1 : index
    %c0_347 = arith.constant 0 : index
    %c0_348 = arith.constant 0 : index
    %457 = vector.load %arg1[%c1_346, %c0_347, %c0_348] : memref<9x32x512xf32, #tpu.memory_space<vmem>>, vector<1x16x512xf32>
    %458 = vector.shape_cast %457 : vector<1x16x512xf32> to vector<16x512xf32>
    %459 = arith.mulf %456, %458 : vector<16x512xf32>
    %c1_349 = arith.constant 1 : index
    %c0_350 = arith.constant 0 : index
    %c0_351 = arith.constant 0 : index
    %460 = vector.load %arg20[%c1_349, %c0_350, %c0_351] : memref<9x32x16xf32, #tpu.memory_space<vmem>>, vector<1x32x16xf32>
    %461 = vector.shape_cast %460 : vector<1x32x16xf32> to vector<32x16xf32>
    %cst_352 = arith.constant dense<0.000000e+00> : vector<32x512xf32>
    %462 = tpu.matmul %461, %459, %cst_352 {dimension_numbers = #tpu.dot_dimension_numbers<[1], [0], [0], [1], [0, 0, 1, 1], [], []>} : vector<32x16xf32>, vector<16x512xf32>, vector<32x512xf32> -> vector<32x512xf32>
    %463 = arith.addf %455, %462 : vector<32x512xf32>
    %c15_i32_353 = arith.constant 15 : i32
    %464 = tpu.dynamic_rotate %448 by %c15_i32_353 dim 1 : vector<16x512xf32>, i32 -> vector<16x512xf32>
    %c2_354 = arith.constant 2 : index
    %c0_355 = arith.constant 0 : index
    %c0_356 = arith.constant 0 : index
    %465 = vector.load %arg1[%c2_354, %c0_355, %c0_356] : memref<9x32x512xf32, #tpu.memory_space<vmem>>, vector<1x16x512xf32>
    %466 = vector.shape_cast %465 : vector<1x16x512xf32> to vector<16x512xf32>
    %467 = arith.mulf %464, %466 : vector<16x512xf32>
    %c2_357 = arith.constant 2 : index
    %c0_358 = arith.constant 0 : index
    %c0_359 = arith.constant 0 : index
    %468 = vector.load %arg20[%c2_357, %c0_358, %c0_359] : memref<9x32x16xf32, #tpu.memory_space<vmem>>, vector<1x32x16xf32>
    %469 = vector.shape_cast %468 : vector<1x32x16xf32> to vector<32x16xf32>
    %cst_360 = arith.constant dense<0.000000e+00> : vector<32x512xf32>
    %470 = tpu.matmul %469, %467, %cst_360 {dimension_numbers = #tpu.dot_dimension_numbers<[1], [0], [0], [1], [0, 0, 1, 1], [], []>} : vector<32x16xf32>, vector<16x512xf32>, vector<32x512xf32> -> vector<32x512xf32>
    %471 = arith.addf %463, %470 : vector<32x512xf32>
    %c1_i32_361 = arith.constant 1 : i32
    %472 = tpu.dynamic_rotate %448 by %c1_i32_361 dim 1 : vector<16x512xf32>, i32 -> vector<16x512xf32>
    %c3_362 = arith.constant 3 : index
    %c0_363 = arith.constant 0 : index
    %c0_364 = arith.constant 0 : index
    %473 = vector.load %arg1[%c3_362, %c0_363, %c0_364] : memref<9x32x512xf32, #tpu.memory_space<vmem>>, vector<1x16x512xf32>
    %474 = vector.shape_cast %473 : vector<1x16x512xf32> to vector<16x512xf32>
    %475 = arith.mulf %472, %474 : vector<16x512xf32>
    %c3_365 = arith.constant 3 : index
    %c0_366 = arith.constant 0 : index
    %c0_367 = arith.constant 0 : index
    %476 = vector.load %arg20[%c3_365, %c0_366, %c0_367] : memref<9x32x16xf32, #tpu.memory_space<vmem>>, vector<1x32x16xf32>
    %477 = vector.shape_cast %476 : vector<1x32x16xf32> to vector<32x16xf32>
    %cst_368 = arith.constant dense<0.000000e+00> : vector<32x512xf32>
    %478 = tpu.matmul %477, %475, %cst_368 {dimension_numbers = #tpu.dot_dimension_numbers<[1], [0], [0], [1], [0, 0, 1, 1], [], []>} : vector<32x16xf32>, vector<16x512xf32>, vector<32x512xf32> -> vector<32x512xf32>
    %479 = arith.addf %471, %478 : vector<32x512xf32>
    %c4_369 = arith.constant 4 : index
    %c0_370 = arith.constant 0 : index
    %c0_371 = arith.constant 0 : index
    %480 = vector.load %arg20[%c4_369, %c0_370, %c0_371] : memref<9x32x16xf32, #tpu.memory_space<vmem>>, vector<1x32x16xf32>
    %481 = vector.shape_cast %480 : vector<1x32x16xf32> to vector<32x16xf32>
    %cst_372 = arith.constant dense<0.000000e+00> : vector<32x512xf32>
    %482 = tpu.matmul %481, %448, %cst_372 {dimension_numbers = #tpu.dot_dimension_numbers<[1], [0], [0], [1], [0, 0, 1, 1], [], []>} : vector<32x16xf32>, vector<16x512xf32>, vector<32x512xf32> -> vector<32x512xf32>
    %483 = arith.addf %479, %482 : vector<32x512xf32>
    %c511_i32_373 = arith.constant 511 : i32
    %484 = tpu.dynamic_rotate %448 by %c511_i32_373 dim 1 : vector<16x512xf32>, i32 -> vector<16x512xf32>
    %c5_374 = arith.constant 5 : index
    %c0_375 = arith.constant 0 : index
    %c0_376 = arith.constant 0 : index
    %485 = vector.load %arg1[%c5_374, %c0_375, %c0_376] : memref<9x32x512xf32, #tpu.memory_space<vmem>>, vector<1x16x512xf32>
    %486 = vector.shape_cast %485 : vector<1x16x512xf32> to vector<16x512xf32>
    %487 = arith.mulf %484, %486 : vector<16x512xf32>
    %c5_377 = arith.constant 5 : index
    %c0_378 = arith.constant 0 : index
    %c0_379 = arith.constant 0 : index
    %488 = vector.load %arg20[%c5_377, %c0_378, %c0_379] : memref<9x32x16xf32, #tpu.memory_space<vmem>>, vector<1x32x16xf32>
    %489 = vector.shape_cast %488 : vector<1x32x16xf32> to vector<32x16xf32>
    %cst_380 = arith.constant dense<0.000000e+00> : vector<32x512xf32>
    %490 = tpu.matmul %489, %487, %cst_380 {dimension_numbers = #tpu.dot_dimension_numbers<[1], [0], [0], [1], [0, 0, 1, 1], [], []>} : vector<32x16xf32>, vector<16x512xf32>, vector<32x512xf32> -> vector<32x512xf32>
    %491 = arith.addf %483, %490 : vector<32x512xf32>
    %c497_i32_381 = arith.constant 497 : i32
    %492 = tpu.dynamic_rotate %448 by %c497_i32_381 dim 1 : vector<16x512xf32>, i32 -> vector<16x512xf32>
    %c6_382 = arith.constant 6 : index
    %c0_383 = arith.constant 0 : index
    %c0_384 = arith.constant 0 : index
    %493 = vector.load %arg1[%c6_382, %c0_383, %c0_384] : memref<9x32x512xf32, #tpu.memory_space<vmem>>, vector<1x16x512xf32>
    %494 = vector.shape_cast %493 : vector<1x16x512xf32> to vector<16x512xf32>
    %495 = arith.mulf %492, %494 : vector<16x512xf32>
    %c6_385 = arith.constant 6 : index
    %c0_386 = arith.constant 0 : index
    %c0_387 = arith.constant 0 : index
    %496 = vector.load %arg20[%c6_385, %c0_386, %c0_387] : memref<9x32x16xf32, #tpu.memory_space<vmem>>, vector<1x32x16xf32>
    %497 = vector.shape_cast %496 : vector<1x32x16xf32> to vector<32x16xf32>
    %cst_388 = arith.constant dense<0.000000e+00> : vector<32x512xf32>
    %498 = tpu.matmul %497, %495, %cst_388 {dimension_numbers = #tpu.dot_dimension_numbers<[1], [0], [0], [1], [0, 0, 1, 1], [], []>} : vector<32x16xf32>, vector<16x512xf32>, vector<32x512xf32> -> vector<32x512xf32>
    %499 = arith.addf %491, %498 : vector<32x512xf32>
    %c496_i32_389 = arith.constant 496 : i32
    %500 = tpu.dynamic_rotate %448 by %c496_i32_389 dim 1 : vector<16x512xf32>, i32 -> vector<16x512xf32>
    %c7_390 = arith.constant 7 : index
    %c0_391 = arith.constant 0 : index
    %c0_392 = arith.constant 0 : index
    %501 = vector.load %arg1[%c7_390, %c0_391, %c0_392] : memref<9x32x512xf32, #tpu.memory_space<vmem>>, vector<1x16x512xf32>
    %502 = vector.shape_cast %501 : vector<1x16x512xf32> to vector<16x512xf32>
    %503 = arith.mulf %500, %502 : vector<16x512xf32>
    %c7_393 = arith.constant 7 : index
    %c0_394 = arith.constant 0 : index
    %c0_395 = arith.constant 0 : index
    %504 = vector.load %arg20[%c7_393, %c0_394, %c0_395] : memref<9x32x16xf32, #tpu.memory_space<vmem>>, vector<1x32x16xf32>
    %505 = vector.shape_cast %504 : vector<1x32x16xf32> to vector<32x16xf32>
    %cst_396 = arith.constant dense<0.000000e+00> : vector<32x512xf32>
    %506 = tpu.matmul %505, %503, %cst_396 {dimension_numbers = #tpu.dot_dimension_numbers<[1], [0], [0], [1], [0, 0, 1, 1], [], []>} : vector<32x16xf32>, vector<16x512xf32>, vector<32x512xf32> -> vector<32x512xf32>
    %507 = arith.addf %499, %506 : vector<32x512xf32>
    %c495_i32_397 = arith.constant 495 : i32
    %508 = tpu.dynamic_rotate %448 by %c495_i32_397 dim 1 : vector<16x512xf32>, i32 -> vector<16x512xf32>
    %c8_398 = arith.constant 8 : index
    %c0_399 = arith.constant 0 : index
    %c0_400 = arith.constant 0 : index
    %509 = vector.load %arg1[%c8_398, %c0_399, %c0_400] : memref<9x32x512xf32, #tpu.memory_space<vmem>>, vector<1x16x512xf32>
    %510 = vector.shape_cast %509 : vector<1x16x512xf32> to vector<16x512xf32>
    %511 = arith.mulf %508, %510 : vector<16x512xf32>
    %c8_401 = arith.constant 8 : index
    %c0_402 = arith.constant 0 : index
    %c0_403 = arith.constant 0 : index
    %512 = vector.load %arg20[%c8_401, %c0_402, %c0_403] : memref<9x32x16xf32, #tpu.memory_space<vmem>>, vector<1x32x16xf32>
    %513 = vector.shape_cast %512 : vector<1x32x16xf32> to vector<32x16xf32>
    %cst_404 = arith.constant dense<0.000000e+00> : vector<32x512xf32>
    %514 = tpu.matmul %513, %511, %cst_404 {dimension_numbers = #tpu.dot_dimension_numbers<[1], [0], [0], [1], [0, 0, 1, 1], [], []>} : vector<32x16xf32>, vector<16x512xf32>, vector<32x512xf32> -> vector<32x512xf32>
    %515 = arith.addf %507, %514 : vector<32x512xf32>
    %cst_405 = arith.constant dense<0.000000e+00> : vector<32xf32>
    %516 = vector.multi_reduction <add>, %515, %cst_405 [1] : vector<32x512xf32> to vector<32xf32>
    %517 = vector.shape_cast %516 : vector<32xf32> to vector<32x1xf32>
    %518 = arith.mulf %515, %515 : vector<32x512xf32>
    %cst_406 = arith.constant dense<0.000000e+00> : vector<32xf32>
    %519 = vector.multi_reduction <add>, %518, %cst_406 [1] : vector<32x512xf32> to vector<32xf32>
    %520 = vector.shape_cast %519 : vector<32xf32> to vector<32x1xf32>
    %cst_407 = arith.constant 0.001953125 : f32
    %521 = vector.broadcast %cst_407 : f32 to vector<32x1xf32>
    %522 = arith.mulf %517, %521 : vector<32x1xf32>
    %cst_408 = arith.constant 0.001953125 : f32
    %523 = vector.broadcast %cst_408 : f32 to vector<32x1xf32>
    %524 = arith.mulf %520, %523 : vector<32x1xf32>
    %525 = arith.mulf %522, %522 : vector<32x1xf32>
    %526 = arith.subf %524, %525 : vector<32x1xf32>
    %cst_409 = arith.constant 0.000000e+00 : f32
    %527 = vector.broadcast %cst_409 : f32 to vector<32x1xf32>
    %528 = arith.maximumf %526, %527 : vector<32x1xf32>
    %c0_410 = arith.constant 0 : index
    %c0_411 = arith.constant 0 : index
    %529 = vector.load %arg21[%c0_410, %c0_411] : memref<32x1xf32, #tpu.memory_space<vmem>>, vector<32x1xf32>
    %cst_412 = arith.constant 9.99999974E-6 : f32
    %530 = vector.broadcast %cst_412 : f32 to vector<32x1xf32>
    %531 = arith.addf %528, %530 : vector<32x1xf32>
    %532 = math.rsqrt %531 : vector<32x1xf32>
    %533 = arith.mulf %529, %532 : vector<32x1xf32>
    %c0_413 = arith.constant 0 : index
    %c0_414 = arith.constant 0 : index
    %534 = vector.load %arg22[%c0_413, %c0_414] : memref<32x1xf32, #tpu.memory_space<vmem>>, vector<32x1xf32>
    %535 = arith.mulf %522, %533 : vector<32x1xf32>
    %536 = arith.subf %534, %535 : vector<32x1xf32>
    %537 = vector.broadcast %533 : vector<32x1xf32> to vector<32x512xf32>
    %538 = arith.mulf %515, %537 : vector<32x512xf32>
    %539 = vector.broadcast %536 : vector<32x1xf32> to vector<32x512xf32>
    %540 = arith.addf %538, %539 : vector<32x512xf32>
    %cst_415 = arith.constant 0.000000e+00 : f32
    %541 = vector.broadcast %cst_415 : f32 to vector<32x512xf32>
    %542 = arith.maximumf %540, %541 : vector<32x512xf32>
    %c0_416 = arith.constant 0 : index
    %c0_417 = arith.constant 0 : index
    %c0_418 = arith.constant 0 : index
    %543 = vector.load %arg23[%c0_416, %c0_417, %c0_418] : memref<1x32x32xf32, #tpu.memory_space<vmem>>, vector<1x32x32xf32>
    %544 = vector.shape_cast %543 : vector<1x32x32xf32> to vector<32x32xf32>
    %cst_419 = arith.constant dense<0.000000e+00> : vector<32x512xf32>
    %545 = tpu.matmul %544, %542, %cst_419 {dimension_numbers = #tpu.dot_dimension_numbers<[1], [0], [0], [1], [0, 0, 1, 1], [], []>} : vector<32x32xf32>, vector<32x512xf32>, vector<32x512xf32> -> vector<32x512xf32>
    %cst_420 = arith.constant dense<0.000000e+00> : vector<32xf32>
    %546 = vector.multi_reduction <add>, %545, %cst_420 [1] : vector<32x512xf32> to vector<32xf32>
    %547 = vector.shape_cast %546 : vector<32xf32> to vector<32x1xf32>
    %548 = arith.mulf %545, %545 : vector<32x512xf32>
    %cst_421 = arith.constant dense<0.000000e+00> : vector<32xf32>
    %549 = vector.multi_reduction <add>, %548, %cst_421 [1] : vector<32x512xf32> to vector<32xf32>
    %550 = vector.shape_cast %549 : vector<32xf32> to vector<32x1xf32>
    %cst_422 = arith.constant 0.001953125 : f32
    %551 = vector.broadcast %cst_422 : f32 to vector<32x1xf32>
    %552 = arith.mulf %547, %551 : vector<32x1xf32>
    %cst_423 = arith.constant 0.001953125 : f32
    %553 = vector.broadcast %cst_423 : f32 to vector<32x1xf32>
    %554 = arith.mulf %550, %553 : vector<32x1xf32>
    %555 = arith.mulf %552, %552 : vector<32x1xf32>
    %556 = arith.subf %554, %555 : vector<32x1xf32>
    %cst_424 = arith.constant 0.000000e+00 : f32
    %557 = vector.broadcast %cst_424 : f32 to vector<32x1xf32>
    %558 = arith.maximumf %556, %557 : vector<32x1xf32>
    %c0_425 = arith.constant 0 : index
    %c0_426 = arith.constant 0 : index
    %559 = vector.load %arg24[%c0_425, %c0_426] : memref<32x1xf32, #tpu.memory_space<vmem>>, vector<32x1xf32>
    %cst_427 = arith.constant 9.99999974E-6 : f32
    %560 = vector.broadcast %cst_427 : f32 to vector<32x1xf32>
    %561 = arith.addf %558, %560 : vector<32x1xf32>
    %562 = math.rsqrt %561 : vector<32x1xf32>
    %563 = arith.mulf %559, %562 : vector<32x1xf32>
    %c0_428 = arith.constant 0 : index
    %c0_429 = arith.constant 0 : index
    %564 = vector.load %arg25[%c0_428, %c0_429] : memref<32x1xf32, #tpu.memory_space<vmem>>, vector<32x1xf32>
    %565 = arith.mulf %552, %563 : vector<32x1xf32>
    %566 = arith.subf %564, %565 : vector<32x1xf32>
    %567 = vector.broadcast %563 : vector<32x1xf32> to vector<32x512xf32>
    %568 = arith.mulf %545, %567 : vector<32x512xf32>
    %569 = vector.broadcast %566 : vector<32x1xf32> to vector<32x512xf32>
    %570 = arith.addf %568, %569 : vector<32x512xf32>
    %cst_430 = arith.constant 0.000000e+00 : f32
    %571 = vector.broadcast %cst_430 : f32 to vector<32x512xf32>
    %572 = arith.cmpf ogt, %570, %571 : vector<32x512xf32>
    %cst_431 = arith.constant 0.00999999977 : f32
    %573 = vector.broadcast %cst_431 : f32 to vector<32x512xf32>
    %574 = arith.mulf %573, %570 : vector<32x512xf32>
    %575 = arith.select %572, %570, %574 : vector<32x512xi1>, vector<32x512xf32>
    %c0_432 = arith.constant 0 : index
    %c0_433 = arith.constant 0 : index
    %576 = vector.load %arg31[%c0_432, %c0_433] : memref<32x512xf32, #tpu.memory_space<vmem>>, vector<32x512xf32>
    tpu.vector_store %arg31[%c0_432, %c0_433], %575 {strides = array<i32>} : memref<32x512xf32, #tpu.memory_space<vmem>>, vector<32x512xf32>,
    %c17_i32_434 = arith.constant 17 : i32
    %577 = tpu.dynamic_rotate %575 by %c17_i32_434 dim 1 : vector<32x512xf32>, i32 -> vector<32x512xf32>
    %c0_435 = arith.constant 0 : index
    %c0_436 = arith.constant 0 : index
    %c0_437 = arith.constant 0 : index
    %578 = vector.load %arg1[%c0_435, %c0_436, %c0_437] : memref<9x32x512xf32, #tpu.memory_space<vmem>>, vector<1x32x512xf32>
    %579 = vector.shape_cast %578 : vector<1x32x512xf32> to vector<32x512xf32>
    %580 = arith.mulf %577, %579 : vector<32x512xf32>
    %c0_438 = arith.constant 0 : index
    %c0_439 = arith.constant 0 : index
    %c0_440 = arith.constant 0 : index
    %581 = vector.load %arg26[%c0_438, %c0_439, %c0_440] : memref<9x32x32xf32, #tpu.memory_space<vmem>>, vector<1x32x32xf32>
    %582 = vector.shape_cast %581 : vector<1x32x32xf32> to vector<32x32xf32>
    %cst_441 = arith.constant dense<0.000000e+00> : vector<32x512xf32>
    %583 = tpu.matmul %582, %580, %cst_441 {dimension_numbers = #tpu.dot_dimension_numbers<[1], [0], [0], [1], [0, 0, 1, 1], [], []>} : vector<32x32xf32>, vector<32x512xf32>, vector<32x512xf32> -> vector<32x512xf32>
    %c16_i32_442 = arith.constant 16 : i32
    %584 = tpu.dynamic_rotate %575 by %c16_i32_442 dim 1 : vector<32x512xf32>, i32 -> vector<32x512xf32>
    %c1_443 = arith.constant 1 : index
    %c0_444 = arith.constant 0 : index
    %c0_445 = arith.constant 0 : index
    %585 = vector.load %arg1[%c1_443, %c0_444, %c0_445] : memref<9x32x512xf32, #tpu.memory_space<vmem>>, vector<1x32x512xf32>
    %586 = vector.shape_cast %585 : vector<1x32x512xf32> to vector<32x512xf32>
    %587 = arith.mulf %584, %586 : vector<32x512xf32>
    %c1_446 = arith.constant 1 : index
    %c0_447 = arith.constant 0 : index
    %c0_448 = arith.constant 0 : index
    %588 = vector.load %arg26[%c1_446, %c0_447, %c0_448] : memref<9x32x32xf32, #tpu.memory_space<vmem>>, vector<1x32x32xf32>
    %589 = vector.shape_cast %588 : vector<1x32x32xf32> to vector<32x32xf32>
    %cst_449 = arith.constant dense<0.000000e+00> : vector<32x512xf32>
    %590 = tpu.matmul %589, %587, %cst_449 {dimension_numbers = #tpu.dot_dimension_numbers<[1], [0], [0], [1], [0, 0, 1, 1], [], []>} : vector<32x32xf32>, vector<32x512xf32>, vector<32x512xf32> -> vector<32x512xf32>
    %591 = arith.addf %583, %590 : vector<32x512xf32>
    %c15_i32_450 = arith.constant 15 : i32
    %592 = tpu.dynamic_rotate %575 by %c15_i32_450 dim 1 : vector<32x512xf32>, i32 -> vector<32x512xf32>
    %c2_451 = arith.constant 2 : index
    %c0_452 = arith.constant 0 : index
    %c0_453 = arith.constant 0 : index
    %593 = vector.load %arg1[%c2_451, %c0_452, %c0_453] : memref<9x32x512xf32, #tpu.memory_space<vmem>>, vector<1x32x512xf32>
    %594 = vector.shape_cast %593 : vector<1x32x512xf32> to vector<32x512xf32>
    %595 = arith.mulf %592, %594 : vector<32x512xf32>
    %c2_454 = arith.constant 2 : index
    %c0_455 = arith.constant 0 : index
    %c0_456 = arith.constant 0 : index
    %596 = vector.load %arg26[%c2_454, %c0_455, %c0_456] : memref<9x32x32xf32, #tpu.memory_space<vmem>>, vector<1x32x32xf32>
    %597 = vector.shape_cast %596 : vector<1x32x32xf32> to vector<32x32xf32>
    %cst_457 = arith.constant dense<0.000000e+00> : vector<32x512xf32>
    %598 = tpu.matmul %597, %595, %cst_457 {dimension_numbers = #tpu.dot_dimension_numbers<[1], [0], [0], [1], [0, 0, 1, 1], [], []>} : vector<32x32xf32>, vector<32x512xf32>, vector<32x512xf32> -> vector<32x512xf32>
    %599 = arith.addf %591, %598 : vector<32x512xf32>
    %c1_i32_458 = arith.constant 1 : i32
    %600 = tpu.dynamic_rotate %575 by %c1_i32_458 dim 1 : vector<32x512xf32>, i32 -> vector<32x512xf32>
    %c3_459 = arith.constant 3 : index
    %c0_460 = arith.constant 0 : index
    %c0_461 = arith.constant 0 : index
    %601 = vector.load %arg1[%c3_459, %c0_460, %c0_461] : memref<9x32x512xf32, #tpu.memory_space<vmem>>, vector<1x32x512xf32>
    %602 = vector.shape_cast %601 : vector<1x32x512xf32> to vector<32x512xf32>
    %603 = arith.mulf %600, %602 : vector<32x512xf32>
    %c3_462 = arith.constant 3 : index
    %c0_463 = arith.constant 0 : index
    %c0_464 = arith.constant 0 : index
    %604 = vector.load %arg26[%c3_462, %c0_463, %c0_464] : memref<9x32x32xf32, #tpu.memory_space<vmem>>, vector<1x32x32xf32>
    %605 = vector.shape_cast %604 : vector<1x32x32xf32> to vector<32x32xf32>
    %cst_465 = arith.constant dense<0.000000e+00> : vector<32x512xf32>
    %606 = tpu.matmul %605, %603, %cst_465 {dimension_numbers = #tpu.dot_dimension_numbers<[1], [0], [0], [1], [0, 0, 1, 1], [], []>} : vector<32x32xf32>, vector<32x512xf32>, vector<32x512xf32> -> vector<32x512xf32>
    %607 = arith.addf %599, %606 : vector<32x512xf32>
    %c4_466 = arith.constant 4 : index
    %c0_467 = arith.constant 0 : index
    %c0_468 = arith.constant 0 : index
    %608 = vector.load %arg26[%c4_466, %c0_467, %c0_468] : memref<9x32x32xf32, #tpu.memory_space<vmem>>, vector<1x32x32xf32>
    %609 = vector.shape_cast %608 : vector<1x32x32xf32> to vector<32x32xf32>
    %cst_469 = arith.constant dense<0.000000e+00> : vector<32x512xf32>
    %610 = tpu.matmul %609, %575, %cst_469 {dimension_numbers = #tpu.dot_dimension_numbers<[1], [0], [0], [1], [0, 0, 1, 1], [], []>} : vector<32x32xf32>, vector<32x512xf32>, vector<32x512xf32> -> vector<32x512xf32>
    %611 = arith.addf %607, %610 : vector<32x512xf32>
    %c511_i32_470 = arith.constant 511 : i32
    %612 = tpu.dynamic_rotate %575 by %c511_i32_470 dim 1 : vector<32x512xf32>, i32 -> vector<32x512xf32>
    %c5_471 = arith.constant 5 : index
    %c0_472 = arith.constant 0 : index
    %c0_473 = arith.constant 0 : index
    %613 = vector.load %arg1[%c5_471, %c0_472, %c0_473] : memref<9x32x512xf32, #tpu.memory_space<vmem>>, vector<1x32x512xf32>
    %614 = vector.shape_cast %613 : vector<1x32x512xf32> to vector<32x512xf32>
    %615 = arith.mulf %612, %614 : vector<32x512xf32>
    %c5_474 = arith.constant 5 : index
    %c0_475 = arith.constant 0 : index
    %c0_476 = arith.constant 0 : index
    %616 = vector.load %arg26[%c5_474, %c0_475, %c0_476] : memref<9x32x32xf32, #tpu.memory_space<vmem>>, vector<1x32x32xf32>
    %617 = vector.shape_cast %616 : vector<1x32x32xf32> to vector<32x32xf32>
    %cst_477 = arith.constant dense<0.000000e+00> : vector<32x512xf32>
    %618 = tpu.matmul %617, %615, %cst_477 {dimension_numbers = #tpu.dot_dimension_numbers<[1], [0], [0], [1], [0, 0, 1, 1], [], []>} : vector<32x32xf32>, vector<32x512xf32>, vector<32x512xf32> -> vector<32x512xf32>
    %619 = arith.addf %611, %618 : vector<32x512xf32>
    %c497_i32_478 = arith.constant 497 : i32
    %620 = tpu.dynamic_rotate %575 by %c497_i32_478 dim 1 : vector<32x512xf32>, i32 -> vector<32x512xf32>
    %c6_479 = arith.constant 6 : index
    %c0_480 = arith.constant 0 : index
    %c0_481 = arith.constant 0 : index
    %621 = vector.load %arg1[%c6_479, %c0_480, %c0_481] : memref<9x32x512xf32, #tpu.memory_space<vmem>>, vector<1x32x512xf32>
    %622 = vector.shape_cast %621 : vector<1x32x512xf32> to vector<32x512xf32>
    %623 = arith.mulf %620, %622 : vector<32x512xf32>
    %c6_482 = arith.constant 6 : index
    %c0_483 = arith.constant 0 : index
    %c0_484 = arith.constant 0 : index
    %624 = vector.load %arg26[%c6_482, %c0_483, %c0_484] : memref<9x32x32xf32, #tpu.memory_space<vmem>>, vector<1x32x32xf32>
    %625 = vector.shape_cast %624 : vector<1x32x32xf32> to vector<32x32xf32>
    %cst_485 = arith.constant dense<0.000000e+00> : vector<32x512xf32>
    %626 = tpu.matmul %625, %623, %cst_485 {dimension_numbers = #tpu.dot_dimension_numbers<[1], [0], [0], [1], [0, 0, 1, 1], [], []>} : vector<32x32xf32>, vector<32x512xf32>, vector<32x512xf32> -> vector<32x512xf32>
    %627 = arith.addf %619, %626 : vector<32x512xf32>
    %c496_i32_486 = arith.constant 496 : i32
    %628 = tpu.dynamic_rotate %575 by %c496_i32_486 dim 1 : vector<32x512xf32>, i32 -> vector<32x512xf32>
    %c7_487 = arith.constant 7 : index
    %c0_488 = arith.constant 0 : index
    %c0_489 = arith.constant 0 : index
    %629 = vector.load %arg1[%c7_487, %c0_488, %c0_489] : memref<9x32x512xf32, #tpu.memory_space<vmem>>, vector<1x32x512xf32>
    %630 = vector.shape_cast %629 : vector<1x32x512xf32> to vector<32x512xf32>
    %631 = arith.mulf %628, %630 : vector<32x512xf32>
    %c7_490 = arith.constant 7 : index
    %c0_491 = arith.constant 0 : index
    %c0_492 = arith.constant 0 : index
    %632 = vector.load %arg26[%c7_490, %c0_491, %c0_492] : memref<9x32x32xf32, #tpu.memory_space<vmem>>, vector<1x32x32xf32>
    %633 = vector.shape_cast %632 : vector<1x32x32xf32> to vector<32x32xf32>
    %cst_493 = arith.constant dense<0.000000e+00> : vector<32x512xf32>
    %634 = tpu.matmul %633, %631, %cst_493 {dimension_numbers = #tpu.dot_dimension_numbers<[1], [0], [0], [1], [0, 0, 1, 1], [], []>} : vector<32x32xf32>, vector<32x512xf32>, vector<32x512xf32> -> vector<32x512xf32>
    %635 = arith.addf %627, %634 : vector<32x512xf32>
    %c495_i32_494 = arith.constant 495 : i32
    %636 = tpu.dynamic_rotate %575 by %c495_i32_494 dim 1 : vector<32x512xf32>, i32 -> vector<32x512xf32>
    %c8_495 = arith.constant 8 : index
    %c0_496 = arith.constant 0 : index
    %c0_497 = arith.constant 0 : index
    %637 = vector.load %arg1[%c8_495, %c0_496, %c0_497] : memref<9x32x512xf32, #tpu.memory_space<vmem>>, vector<1x32x512xf32>
    %638 = vector.shape_cast %637 : vector<1x32x512xf32> to vector<32x512xf32>
    %639 = arith.mulf %636, %638 : vector<32x512xf32>
    %c8_498 = arith.constant 8 : index
    %c0_499 = arith.constant 0 : index
    %c0_500 = arith.constant 0 : index
    %640 = vector.load %arg26[%c8_498, %c0_499, %c0_500] : memref<9x32x32xf32, #tpu.memory_space<vmem>>, vector<1x32x32xf32>
    %641 = vector.shape_cast %640 : vector<1x32x32xf32> to vector<32x32xf32>
    %cst_501 = arith.constant dense<0.000000e+00> : vector<32x512xf32>
    %642 = tpu.matmul %641, %639, %cst_501 {dimension_numbers = #tpu.dot_dimension_numbers<[1], [0], [0], [1], [0, 0, 1, 1], [], []>} : vector<32x32xf32>, vector<32x512xf32>, vector<32x512xf32> -> vector<32x512xf32>
    %643 = arith.addf %635, %642 : vector<32x512xf32>
    %cst_502 = arith.constant dense<0.000000e+00> : vector<32xf32>
    %644 = vector.multi_reduction <add>, %643, %cst_502 [1] : vector<32x512xf32> to vector<32xf32>
    %645 = vector.shape_cast %644 : vector<32xf32> to vector<32x1xf32>
    %646 = arith.mulf %643, %643 : vector<32x512xf32>
    %cst_503 = arith.constant dense<0.000000e+00> : vector<32xf32>
    %647 = vector.multi_reduction <add>, %646, %cst_503 [1] : vector<32x512xf32> to vector<32xf32>
    %648 = vector.shape_cast %647 : vector<32xf32> to vector<32x1xf32>
    %cst_504 = arith.constant 0.001953125 : f32
    %649 = vector.broadcast %cst_504 : f32 to vector<32x1xf32>
    %650 = arith.mulf %645, %649 : vector<32x1xf32>
    %cst_505 = arith.constant 0.001953125 : f32
    %651 = vector.broadcast %cst_505 : f32 to vector<32x1xf32>
    %652 = arith.mulf %648, %651 : vector<32x1xf32>
    %653 = arith.mulf %650, %650 : vector<32x1xf32>
    %654 = arith.subf %652, %653 : vector<32x1xf32>
    %cst_506 = arith.constant 0.000000e+00 : f32
    %655 = vector.broadcast %cst_506 : f32 to vector<32x1xf32>
    %656 = arith.maximumf %654, %655 : vector<32x1xf32>
    %c0_507 = arith.constant 0 : index
    %c0_508 = arith.constant 0 : index
    %657 = vector.load %arg27[%c0_507, %c0_508] : memref<32x1xf32, #tpu.memory_space<vmem>>, vector<32x1xf32>
    %cst_509 = arith.constant 9.99999974E-6 : f32
    %658 = vector.broadcast %cst_509 : f32 to vector<32x1xf32>
    %659 = arith.addf %656, %658 : vector<32x1xf32>
    %660 = math.rsqrt %659 : vector<32x1xf32>
    %661 = arith.mulf %657, %660 : vector<32x1xf32>
    %c0_510 = arith.constant 0 : index
    %c0_511 = arith.constant 0 : index
    %662 = vector.load %arg28[%c0_510, %c0_511] : memref<32x1xf32, #tpu.memory_space<vmem>>, vector<32x1xf32>
    %663 = arith.mulf %650, %661 : vector<32x1xf32>
    %664 = arith.subf %662, %663 : vector<32x1xf32>
    %665 = vector.broadcast %661 : vector<32x1xf32> to vector<32x512xf32>
    %666 = arith.mulf %643, %665 : vector<32x512xf32>
    %667 = vector.broadcast %664 : vector<32x1xf32> to vector<32x512xf32>
    %668 = arith.addf %666, %667 : vector<32x512xf32>
    %cst_512 = arith.constant 0.000000e+00 : f32
    %669 = vector.broadcast %cst_512 : f32 to vector<32x512xf32>
    %670 = arith.cmpf ogt, %668, %669 : vector<32x512xf32>
    %cst_513 = arith.constant 0.00999999977 : f32
    %671 = vector.broadcast %cst_513 : f32 to vector<32x512xf32>
    %672 = arith.mulf %671, %668 : vector<32x512xf32>
    %673 = arith.select %670, %668, %672 : vector<32x512xi1>, vector<32x512xf32>
    %c0_514 = arith.constant 0 : index
    %c0_515 = arith.constant 0 : index
    %674 = vector.load %arg32[%c0_514, %c0_515] : memref<32x512xf32, #tpu.memory_space<vmem>>, vector<32x512xf32>
    tpu.vector_store %arg32[%c0_514, %c0_515], %673 {strides = array<i32>} : memref<32x512xf32, #tpu.memory_space<vmem>>, vector<32x512xf32>,
    return
  }
}

</mosaic_0001>

<llo_original>
// kernel: feature_extract_forward.1
$region0: #{feature_extract_forward.1}
  #allocation0 [shape = 'u32[]', space=smem, size = 0x4, offset = 0x4, fixed_abs, tag = 'smem constant byte address 0x4 - core index']
  #allocation1 [shape = 'u32[72,128]{1,0:T(1,128)}', space=vmem, size = 0x9000, scoped, tag = 'internal scratch']
  %s0 = inlined_call_operand.smem [shape: u32[33], index: -1, kind: input, shape index: {}]
  %s1 = sld [smem:[%s0]]
  %s2 = scalar_lea.smem %s0, 1
  %s3 = sld [smem:[%s2]]
  %s4 = scalar_lea.smem %s0, 2
  %s5 = sld [smem:[%s4]]
  %s6 = scalar_lea.smem %s0, 3
  %s7 = sld [smem:[%s6]]
  %s8 = scalar_lea.smem %s0, 4
  %s9 = sld [smem:[%s8]]
  %s10 = scalar_lea.smem %s0, 5
  %s11 = sld [smem:[%s10]]
  %s12 = scalar_lea.smem %s0, 6
  %s13 = sld [smem:[%s12]]
  %s14 = scalar_lea.smem %s0, 7
  %s15 = sld [smem:[%s14]]
  %s16 = scalar_lea.smem %s0, 8
  %s17 = sld [smem:[%s16]]
  %s18 = scalar_lea.smem %s0, 9
  %s19 = sld [smem:[%s18]]
  %s20 = scalar_lea.smem %s0, 10
  %s21 = sld [smem:[%s20]]
  %s22 = scalar_lea.smem %s0, 11
  %s23 = sld [smem:[%s22]]
  %s24 = scalar_lea.smem %s0, 12
  %s25 = sld [smem:[%s24]]
  %s26 = scalar_lea.smem %s0, 13
  %s27 = sld [smem:[%s26]]
  %s28 = scalar_lea.smem %s0, 14
  %s29 = sld [smem:[%s28]]
  %s30 = scalar_lea.smem %s0, 15
  %s31 = sld [smem:[%s30]]
  %s32 = scalar_lea.smem %s0, 16
  %s33 = sld [smem:[%s32]]
  %s34 = scalar_lea.smem %s0, 17
  %s35 = sld [smem:[%s34]]
  %s36 = scalar_lea.smem %s0, 18
  %s37 = sld [smem:[%s36]]
  %s38 = scalar_lea.smem %s0, 19
  %s39 = sld [smem:[%s38]]
  %s40 = scalar_lea.smem %s0, 20
  %s41 = sld [smem:[%s40]]
  %s42 = scalar_lea.smem %s0, 21
  %s43 = sld [smem:[%s42]]
  %s44 = scalar_lea.smem %s0, 22
  %s45 = sld [smem:[%s44]]
  %s46 = scalar_lea.smem %s0, 23
  %s47 = sld [smem:[%s46]]
  %s48 = scalar_lea.smem %s0, 24
  %s49 = sld [smem:[%s48]]
  %s50 = scalar_lea.smem %s0, 25
  %s51 = sld [smem:[%s50]]
  %s52 = scalar_lea.smem %s0, 26
  %s53 = sld [smem:[%s52]]
  %s54 = scalar_lea.smem %s0, 27
  %s55 = sld [smem:[%s54]]
  %s56 = scalar_lea.smem %s0, 28
  %s57 = sld [smem:[%s56]]
  %s58 = scalar_lea.smem %s0, 29
  %s59 = sld [smem:[%s58]]
  %s60 = scalar_lea.smem %s0, 30
  %s61 = sld [smem:[%s60]]
  %s62 = scalar_lea.smem %s0, 31
  %s63 = sld [smem:[%s62]]
  %s64 = scalar_lea.smem %s0, 32
  %s65 = sld [smem:[%s64]]
  %66 = xla_tuple %s59, %s61, %s63, %s65
  %s67 = sld [smem:[#allocation0]]
  $region154: #{feature_extract_forward.1} parent=0
    _
  %s69 = ssub.s32 1, %s67
  %s70 = scalar_select 0, %s69, %s67
  $region1: #{feature_extract_forward.1} parent=0
    #allocation2 [shape = 'u8[589824]{0}', space=vmem, size = 0x90000, scoped, tag = 'input window, operand 1, single buffered']
    #allocation3 [shape = 's32[1]{0}', space=sflag, size = 0x4, scoped, tag = 'scoped memory for feature_extract_forward.1']
    %71 = vsyncpa [#allocation3], 0
    // Predicated region
    $region2: #{feature_extract_forward.1} parent=1 // pred_check
      _
    $region3: #{feature_extract_forward.1} parent=1 // pred_check_branch
      %73 = sbr.rel (0) target = $region5
    $region4: #{feature_extract_forward.1} parent=1 // pred_region
      _
    $region5: #{feature_extract_forward.1} parent=1 // pred_fallthru
      _
    // Predicated region
    $region6: #{feature_extract_forward.1} parent=1 // pred_check
      _
    $region7: #{feature_extract_forward.1} parent=1 // pred_check_branch
      %75 = sbr.rel (0) target = $region9
    $region8: #{feature_extract_forward.1} parent=1 // pred_region
      %77 = vsyncadd [#allocation3], 0
      %s78 = sshll.u32 %s3, 4
      %s79 = int_to_ptr.hbm [resolvable:$true] %s78
      %s80 = sshll.u32 [#allocation2], 4
      %s81 = int_to_ptr.vmem [resolvable:$true] %s80
      %86 = dma.hbm_to_vmem [thread:$0]  %s79, 18432, %s81, [#allocation3], 512, 512, 32
    $region9: #{feature_extract_forward.1} parent=1 // pred_fallthru
      _
    // Predicated region
    $region10: #{feature_extract_forward.1} parent=1 // pred_check
      _
    $region11: #{feature_extract_forward.1} parent=1 // pred_check_branch
      %88 = sbr.rel (0) target = $region13
    $region12: #{feature_extract_forward.1} parent=1 // pred_region
      _
    $region13: #{feature_extract_forward.1} parent=1 // pred_fallthru
      _
    // Predicated region
    $region14: #{feature_extract_forward.1} parent=1 // pred_check
      _
    $region15: #{feature_extract_forward.1} parent=1 // pred_check_branch
      %90 = sbr.rel (0) target = $region17
    $region16: #{feature_extract_forward.1} parent=1 // pred_region
      _
    $region17: #{feature_extract_forward.1} parent=1 // pred_fallthru
      _
    // Predicated region
    $region18: #{feature_extract_forward.1} parent=1 // pred_check
      _
    $region19: #{feature_extract_forward.1} parent=1 // pred_check_branch
      %92 = sbr.rel (0) target = $region21
    $region20: #{feature_extract_forward.1} parent=1 // pred_region
      _
    $region21: #{feature_extract_forward.1} parent=1 // pred_fallthru
      _
    // Predicated region
    $region22: #{feature_extract_forward.1} parent=1 // pred_check
      _
    $region23: #{feature_extract_forward.1} parent=1 // pred_check_branch
      %94 = sbr.rel (0) target = $region25
    $region24: #{feature_extract_forward.1} parent=1 // pred_region
      _
    $region25: #{feature_extract_forward.1} parent=1 // pred_fallthru
      _
    // Predicated region
    $region26: #{feature_extract_forward.1} parent=1 // pred_check
      _
    $region27: #{feature_extract_forward.1} parent=1 // pred_check_branch
      %96 = sbr.rel (0) target = $region29
    $region28: #{feature_extract_forward.1} parent=1 // pred_region
      _
    $region29: #{feature_extract_forward.1} parent=1 // pred_fallthru
      _
    // Predicated region
    $region30: #{feature_extract_forward.1} parent=1 // pred_check
      _
    $region31: #{feature_extract_forward.1} parent=1 // pred_check_branch
      %98 = sbr.rel (0) target = $region33
    $region32: #{feature_extract_forward.1} parent=1 // pred_region
      _
    $region33: #{feature_extract_forward.1} parent=1 // pred_fallthru
      _
    // Predicated region
    $region34: #{feature_extract_forward.1} parent=1 // pred_check
      _
    $region35: #{feature_extract_forward.1} parent=1 // pred_check_branch
      %100 = sbr.rel (0) target = $region37
    $region36: #{feature_extract_forward.1} parent=1 // pred_region
      _
    $region37: #{feature_extract_forward.1} parent=1 // pred_fallthru
      _
    // Predicated region
    $region38: #{feature_extract_forward.1} parent=1 // pred_check
      _
    $region39: #{feature_extract_forward.1} parent=1 // pred_check_branch
      %102 = sbr.rel (0) target = $region41
    $region40: #{feature_extract_forward.1} parent=1 // pred_region
      _
    $region41: #{feature_extract_forward.1} parent=1 // pred_fallthru
      _
    // Predicated region
    $region42: #{feature_extract_forward.1} parent=1 // pred_check
      _
    $region43: #{feature_extract_forward.1} parent=1 // pred_check_branch
      %104 = sbr.rel (0) target = $region45
    $region44: #{feature_extract_forward.1} parent=1 // pred_region
      _
    $region45: #{feature_extract_forward.1} parent=1 // pred_fallthru
      _
    // Predicated region
    $region46: #{feature_extract_forward.1} parent=1 // pred_check
      _
    $region47: #{feature_extract_forward.1} parent=1 // pred_check_branch
      %106 = sbr.rel (0) target = $region49
    $region48: #{feature_extract_forward.1} parent=1 // pred_region
      _
    $region49: #{feature_extract_forward.1} parent=1 // pred_fallthru
      _
    // Predicated region
    $region50: #{feature_extract_forward.1} parent=1 // pred_check
      _
    $region51: #{feature_extract_forward.1} parent=1 // pred_check_branch
      %108 = sbr.rel (0) target = $region53
    $region52: #{feature_extract_forward.1} parent=1 // pred_region
      _
    $region53: #{feature_extract_forward.1} parent=1 // pred_fallthru
      _
    // Predicated region
    $region54: #{feature_extract_forward.1} parent=1 // pred_check
      _
    $region55: #{feature_extract_forward.1} parent=1 // pred_check_branch
      %110 = sbr.rel (0) target = $region57
    $region56: #{feature_extract_forward.1} parent=1 // pred_region
      _
    $region57: #{feature_extract_forward.1} parent=1 // pred_fallthru
      _
    // Predicated region
    $region58: #{feature_extract_forward.1} parent=1 // pred_check
      _
    $region59: #{feature_extract_forward.1} parent=1 // pred_check_branch
      %112 = sbr.rel (0) target = $region61
    $region60: #{feature_extract_forward.1} parent=1 // pred_region
      _
    $region61: #{feature_extract_forward.1} parent=1 // pred_fallthru
      _
    // Predicated region
    $region62: #{feature_extract_forward.1} parent=1 // pred_check
      _
    $region63: #{feature_extract_forward.1} parent=1 // pred_check_branch
      %114 = sbr.rel (0) target = $region65
    $region64: #{feature_extract_forward.1} parent=1 // pred_region
      _
    $region65: #{feature_extract_forward.1} parent=1 // pred_fallthru
      _
    // Predicated region
    $region66: #{feature_extract_forward.1} parent=1 // pred_check
      _
    $region67: #{feature_extract_forward.1} parent=1 // pred_check_branch
      %116 = sbr.rel (0) target = $region69
    $region68: #{feature_extract_forward.1} parent=1 // pred_region
      _
    $region69: #{feature_extract_forward.1} parent=1 // pred_fallthru
      _
    // Predicated region
    $region70: #{feature_extract_forward.1} parent=1 // pred_check
      _
    $region71: #{feature_extract_forward.1} parent=1 // pred_check_branch
      %118 = sbr.rel (0) target = $region73
    $region72: #{feature_extract_forward.1} parent=1 // pred_region
      _
    $region73: #{feature_extract_forward.1} parent=1 // pred_fallthru
      _
    // Predicated region
    $region74: #{feature_extract_forward.1} parent=1 // pred_check
      _
    $region75: #{feature_extract_forward.1} parent=1 // pred_check_branch
      %120 = sbr.rel (0) target = $region77
    $region76: #{feature_extract_forward.1} parent=1 // pred_region
      _
    $region77: #{feature_extract_forward.1} parent=1 // pred_fallthru
      _
    // Predicated region
    $region78: #{feature_extract_forward.1} parent=1 // pred_check
      _
    $region79: #{feature_extract_forward.1} parent=1 // pred_check_branch
      %122 = sbr.rel (0) target = $region81
    $region80: #{feature_extract_forward.1} parent=1 // pred_region
      _
    $region81: #{feature_extract_forward.1} parent=1 // pred_fallthru
      _
    // Predicated region
    $region82: #{feature_extract_forward.1} parent=1 // pred_check
      _
    $region83: #{feature_extract_forward.1} parent=1 // pred_check_branch
      %124 = sbr.rel (0) target = $region85
    $region84: #{feature_extract_forward.1} parent=1 // pred_region
      _
    $region85: #{feature_extract_forward.1} parent=1 // pred_fallthru
      _
    // Predicated region
    $region86: #{feature_extract_forward.1} parent=1 // pred_check
      _
    $region87: #{feature_extract_forward.1} parent=1 // pred_check_branch
      %126 = sbr.rel (0) target = $region89
    $region88: #{feature_extract_forward.1} parent=1 // pred_region
      _
    $region89: #{feature_extract_forward.1} parent=1 // pred_fallthru
      _
    // Predicated region
    $region90: #{feature_extract_forward.1} parent=1 // pred_check
      _
    $region91: #{feature_extract_forward.1} parent=1 // pred_check_branch
      %128 = sbr.rel (0) target = $region93
    $region92: #{feature_extract_forward.1} parent=1 // pred_region
      _
    $region93: #{feature_extract_forward.1} parent=1 // pred_fallthru
      _
    // Predicated region
    $region94: #{feature_extract_forward.1} parent=1 // pred_check
      _
    $region95: #{feature_extract_forward.1} parent=1 // pred_check_branch
      %130 = sbr.rel (0) target = $region97
    $region96: #{feature_extract_forward.1} parent=1 // pred_region
      _
    $region97: #{feature_extract_forward.1} parent=1 // pred_fallthru
      _
    // Predicated region
    $region98: #{feature_extract_forward.1} parent=1 // pred_check
      _
    $region99: #{feature_extract_forward.1} parent=1 // pred_check_branch
      %132 = sbr.rel (0) target = $region101
    $region100: #{feature_extract_forward.1} parent=1 // pred_region
      _
    $region101: #{feature_extract_forward.1} parent=1 // pred_fallthru
      _
    // Predicated region
    $region102: #{feature_extract_forward.1} parent=1 // pred_check
      _
    $region103: #{feature_extract_forward.1} parent=1 // pred_check_branch
      %134 = sbr.rel (0) target = $region105
    $region104: #{feature_extract_forward.1} parent=1 // pred_region
      _
    $region105: #{feature_extract_forward.1} parent=1 // pred_fallthru
      _
    // Predicated region
    $region106: #{feature_extract_forward.1} parent=1 // pred_check
      _
    $region107: #{feature_extract_forward.1} parent=1 // pred_check_branch
      %136 = sbr.rel (0) target = $region109
    $region108: #{feature_extract_forward.1} parent=1 // pred_region
      _
    $region109: #{feature_extract_forward.1} parent=1 // pred_fallthru
      _
    // Predicated region
    $region110: #{feature_extract_forward.1} parent=1 // pred_check
      _
    $region111: #{feature_extract_forward.1} parent=1 // pred_check_branch
      %138 = sbr.rel (0) target = $region113
    $region112: #{feature_extract_forward.1} parent=1 // pred_region
      _
    $region113: #{feature_extract_forward.1} parent=1 // pred_fallthru
      _
    // Predicated region
    $region114: #{feature_extract_forward.1} parent=1 // pred_check
      _
    $region115: #{feature_extract_forward.1} parent=1 // pred_check_branch
      %140 = sbr.rel (0) target = $region117
    $region116: #{feature_extract_forward.1} parent=1 // pred_region
      _
    $region117: #{feature_extract_forward.1} parent=1 // pred_fallthru
      _
    // Predicated region
    $region118: #{feature_extract_forward.1} parent=1 // pred_check
      _
    $region119: #{feature_extract_forward.1} parent=1 // pred_check_branch
      %142 = sbr.rel (0) target = $region121
    $region120: #{feature_extract_forward.1} parent=1 // pred_region
      %144 = dma.done [#allocation3], 18432
    $region121: #{feature_extract_forward.1} parent=1 // pred_fallthru
      _
    %v145 = vld [vmem:[%s1] sm:$0xff]
    %v146 = vld [vmem:[%s1 + $0x8] sm:$0xff]
    %v147 = vld [vmem:[%s1 + $0x10] sm:$0xff]
    %v148 = vld [vmem:[%s1 + $0x18] sm:$0xff]
    %149 = vrot.lane.b32.xlu0 %v145, 17
    %v150 = vpop.permute.xlu0 %149
    %151 = vrot.lane.b32.xlu0 %v146, 17
    %v152 = vpop.permute.xlu0 %151
    %153 = vrot.lane.b32.xlu0 %v147, 17
    %v154 = vpop.permute.xlu0 %153
    %155 = vrot.lane.b32.xlu0 %v148, 17
    %v156 = vpop.permute.xlu0 %155
    %v157 = vlaneseq
    %v158 = vand.u32 %v157, 127
    %vm159 = vcmp.lt.s32.totalorder %v158, 17
    %v160 = vsel %vm159, %v154, %v156
    %v161 = vsel %vm159, %v152, %v154
    %v162 = vsel %vm159, %v150, %v152
    %v163 = vsel %vm159, %v156, %v150
    %v164 = vld [vmem:[#allocation2] sm:$0xff]
    %v165 = vld [vmem:[#allocation2 + $0x8] sm:$0xff]
    %v166 = vld [vmem:[#allocation2 + $0x10] sm:$0xff]
    %v167 = vld [vmem:[#allocation2 + $0x18] sm:$0xff]
    %v168 = vmul.f32 %v163, %v164
    %v169 = vmul.f32 %v162, %v165
    %v170 = vmul.f32 %v161, %v166
    %v171 = vmul.f32 %v160, %v167
    %v172 = vld [vmem:[%s5] sm:$0xff]
    %v173 = vld [vmem:[%s5 + $0x8] sm:$0xff]
    %174 = vrot.lane.b32.xlu0 %v145, 16
    %v175 = vpop.permute.xlu0 %174
    %176 = vrot.lane.b32.xlu0 %v146, 16
    %v177 = vpop.permute.xlu0 %176
    %178 = vrot.lane.b32.xlu0 %v147, 16
    %v179 = vpop.permute.xlu0 %178
    %180 = vrot.lane.b32.xlu0 %v148, 16
    %v181 = vpop.permute.xlu0 %180
    %vm182 = vcmp.lt.s32.totalorder %v158, 16
    %v183 = vsel %vm182, %v179, %v181
    %v184 = vsel %vm182, %v177, %v179
    %v185 = vsel %vm182, %v175, %v177
    %v186 = vsel %vm182, %v181, %v175
    %s187 = scalar_lea.vmem [#allocation2], 128
    %v188 = vld [vmem:[%s187] sm:$0xff]
    %v189 = vld [vmem:[%s187 + $0x8] sm:$0xff]
    %v190 = vld [vmem:[%s187 + $0x10] sm:$0xff]
    %v191 = vld [vmem:[%s187 + $0x18] sm:$0xff]
    %v192 = vmul.f32 %v186, %v188
    %v193 = vmul.f32 %v185, %v189
    %v194 = vmul.f32 %v184, %v190
    %v195 = vmul.f32 %v183, %v191
    %s196 = scalar_lea.vmem %s5, 16
    %v197 = vld [vmem:[%s196] sm:$0xff]
    %v198 = vld [vmem:[%s196 + $0x8] sm:$0xff]
    %vm199 = vcmask 64512
    %v201 = vsel %vm199, %v197, 0
    %v204 = vsel %vm199, %v198, 0
    %206 = vmatpush.msra.mxu0 0.0
    %207 = vmatpush.msra.mxu0 0.0
    %208 = vmatpush.msra.mxu0 0.0
    %209 = vmatpush.msra.mxu0 0.0
    %210 = vmatpush.msra.mxu0 0.0
    %211 = vmatpush.msra.mxu0 0.0
    %212 = vmatpush.msra.mxu0 0.0
    %213 = vmatpush.msra.mxu0 0.0
    %214 = vmatpush.msra.mxu0 0.0
    %215 = vmatpush.msra.mxu0 0.0
    %216 = vmatpush.msra.mxu0 0.0
    %217 = vmatpush.msra.mxu0 0.0
    %218 = vmatpush.msra.mxu0 0.0
    %219 = vmatpush.msra.mxu0 0.0
    %220 = vmatpush.msra.mxu0 0.0
    %221 = vmatpush.msra.mxu0 %v192
    %222 = vmatmul.f32.gmra.mxu0 %v201
    %v223 = vpop.f32.mrf.mxu0
    %v224 = vadd.f32 0.0, %v223
    %225 = vmatmul.f32.gmra.mxu0 %v204
    %v226 = vpop.f32.mrf.mxu0
    %v227 = vadd.f32 0.0, %v226
    %228 = vdwg.mxu0
    %229 = vmatpush.msra.mxu0 0.0
    %230 = vmatpush.msra.mxu0 0.0
    %231 = vmatpush.msra.mxu0 0.0
    %232 = vmatpush.msra.mxu0 0.0
    %233 = vmatpush.msra.mxu0 0.0
    %234 = vmatpush.msra.mxu0 0.0
    %235 = vmatpush.msra.mxu0 0.0
    %236 = vmatpush.msra.mxu0 0.0
    %237 = vmatpush.msra.mxu0 0.0
    %238 = vmatpush.msra.mxu0 0.0
    %239 = vmatpush.msra.mxu0 0.0
    %240 = vmatpush.msra.mxu0 0.0
    %241 = vmatpush.msra.mxu0 0.0
    %242 = vmatpush.msra.mxu0 0.0
    %243 = vmatpush.msra.mxu0 0.0
    %244 = vmatpush.msra.mxu0 %v193
    %245 = vmatmul.f32.gmra.mxu0 %v201
    %v246 = vpop.f32.mrf.mxu0
    %v247 = vadd.f32 0.0, %v246
    %248 = vmatmul.f32.gmra.mxu0 %v204
    %v249 = vpop.f32.mrf.mxu0
    %v250 = vadd.f32 0.0, %v249
    %251 = vdwg.mxu0
    %252 = vmatpush.msra.mxu0 0.0
    %253 = vmatpush.msra.mxu0 0.0
    %254 = vmatpush.msra.mxu0 0.0
    %255 = vmatpush.msra.mxu0 0.0
    %256 = vmatpush.msra.mxu0 0.0
    %257 = vmatpush.msra.mxu0 0.0
    %258 = vmatpush.msra.mxu0 0.0
    %259 = vmatpush.msra.mxu0 0.0
    %260 = vmatpush.msra.mxu0 0.0
    %261 = vmatpush.msra.mxu0 0.0
    %262 = vmatpush.msra.mxu0 0.0
    %263 = vmatpush.msra.mxu0 0.0
    %264 = vmatpush.msra.mxu0 0.0
    %265 = vmatpush.msra.mxu0 0.0
    %266 = vmatpush.msra.mxu0 0.0
    %267 = vmatpush.msra.mxu0 %v194
    %268 = vmatmul.f32.gmra.mxu0 %v201
    %v269 = vpop.f32.mrf.mxu0
    %v270 = vadd.f32 0.0, %v269
    %271 = vmatmul.f32.gmra.mxu0 %v204
    %v272 = vpop.f32.mrf.mxu0
    %v273 = vadd.f32 0.0, %v272
    %274 = vdwg.mxu0
    %275 = vmatpush.msra.mxu0 0.0
    %276 = vmatpush.msra.mxu0 0.0
    %277 = vmatpush.msra.mxu0 0.0
    %278 = vmatpush.msra.mxu0 0.0
    %279 = vmatpush.msra.mxu0 0.0
    %280 = vmatpush.msra.mxu0 0.0
    %281 = vmatpush.msra.mxu0 0.0
    %282 = vmatpush.msra.mxu0 0.0
    %283 = vmatpush.msra.mxu0 0.0
    %284 = vmatpush.msra.mxu0 0.0
    %285 = vmatpush.msra.mxu0 0.0
    %286 = vmatpush.msra.mxu0 0.0
    %287 = vmatpush.msra.mxu0 0.0
    %288 = vmatpush.msra.mxu0 0.0
    %289 = vmatpush.msra.mxu0 0.0
    %290 = vmatpush.msra.mxu0 %v195
    %291 = vmatmul.f32.gmra.mxu0 %v201
    %v292 = vpop.f32.mrf.mxu0
    %v293 = vadd.f32 0.0, %v292
    %294 = vmatmul.f32.gmra.mxu0 %v204
    %v295 = vpop.f32.mrf.mxu0
    %v296 = vadd.f32 0.0, %v295
    %297 = vdwg.mxu0
    %v299 = vsel %vm199, %v172, 0
    %v302 = vsel %vm199, %v173, 0
    %304 = vmatpush.msra.mxu0 0.0
    %305 = vmatpush.msra.mxu0 0.0
    %306 = vmatpush.msra.mxu0 0.0
    %307 = vmatpush.msra.mxu0 0.0
    %308 = vmatpush.msra.mxu0 0.0
    %309 = vmatpush.msra.mxu0 0.0
    %310 = vmatpush.msra.mxu0 0.0
    %311 = vmatpush.msra.mxu0 0.0
    %312 = vmatpush.msra.mxu0 0.0
    %313 = vmatpush.msra.mxu0 0.0
    %314 = vmatpush.msra.mxu0 0.0
    %315 = vmatpush.msra.mxu0 0.0
    %316 = vmatpush.msra.mxu0 0.0
    %317 = vmatpush.msra.mxu0 0.0
    %318 = vmatpush.msra.mxu0 0.0
    %319 = vmatpush.msra.mxu0 %v168
    %320 = vmatmul.f32.gmra.mxu0 %v299
    %v321 = vpop.f32.mrf.mxu0
    %v322 = vadd.f32 %v224, %v321
    %323 = vmatmul.f32.gmra.mxu0 %v302
    %v324 = vpop.f32.mrf.mxu0
    %v325 = vadd.f32 %v227, %v324
    %326 = vdwg.mxu0
    %327 = vmatpush.msra.mxu0 0.0
    %328 = vmatpush.msra.mxu0 0.0
    %329 = vmatpush.msra.mxu0 0.0
    %330 = vmatpush.msra.mxu0 0.0
    %331 = vmatpush.msra.mxu0 0.0
    %332 = vmatpush.msra.mxu0 0.0
    %333 = vmatpush.msra.mxu0 0.0
    %334 = vmatpush.msra.mxu0 0.0
    %335 = vmatpush.msra.mxu0 0.0
    %336 = vmatpush.msra.mxu0 0.0
    %337 = vmatpush.msra.mxu0 0.0
    %338 = vmatpush.msra.mxu0 0.0
    %339 = vmatpush.msra.mxu0 0.0
    %340 = vmatpush.msra.mxu0 0.0
    %341 = vmatpush.msra.mxu0 0.0
    %342 = vmatpush.msra.mxu0 %v169
    %343 = vmatmul.f32.gmra.mxu0 %v299
    %v344 = vpop.f32.mrf.mxu0
    %v345 = vadd.f32 %v247, %v344
    %346 = vmatmul.f32.gmra.mxu0 %v302
    %v347 = vpop.f32.mrf.mxu0
    %v348 = vadd.f32 %v250, %v347
    %349 = vdwg.mxu0
    %350 = vmatpush.msra.mxu0 0.0
    %351 = vmatpush.msra.mxu0 0.0
    %352 = vmatpush.msra.mxu0 0.0
    %353 = vmatpush.msra.mxu0 0.0
    %354 = vmatpush.msra.mxu0 0.0
    %355 = vmatpush.msra.mxu0 0.0
    %356 = vmatpush.msra.mxu0 0.0
    %357 = vmatpush.msra.mxu0 0.0
    %358 = vmatpush.msra.mxu0 0.0
    %359 = vmatpush.msra.mxu0 0.0
    %360 = vmatpush.msra.mxu0 0.0
    %361 = vmatpush.msra.mxu0 0.0
    %362 = vmatpush.msra.mxu0 0.0
    %363 = vmatpush.msra.mxu0 0.0
    %364 = vmatpush.msra.mxu0 0.0
    %365 = vmatpush.msra.mxu0 %v170
    %366 = vmatmul.f32.gmra.mxu0 %v299
    %v367 = vpop.f32.mrf.mxu0
    %v368 = vadd.f32 %v270, %v367
    %369 = vmatmul.f32.gmra.mxu0 %v302
    %v370 = vpop.f32.mrf.mxu0
    %v371 = vadd.f32 %v273, %v370
    %372 = vdwg.mxu0
    %373 = vmatpush.msra.mxu0 0.0
    %374 = vmatpush.msra.mxu0 0.0
    %375 = vmatpush.msra.mxu0 0.0
    %376 = vmatpush.msra.mxu0 0.0
    %377 = vmatpush.msra.mxu0 0.0
    %378 = vmatpush.msra.mxu0 0.0
    %379 = vmatpush.msra.mxu0 0.0
    %380 = vmatpush.msra.mxu0 0.0
    %381 = vmatpush.msra.mxu0 0.0
    %382 = vmatpush.msra.mxu0 0.0
    %383 = vmatpush.msra.mxu0 0.0
    %384 = vmatpush.msra.mxu0 0.0
    %385 = vmatpush.msra.mxu0 0.0
    %386 = vmatpush.msra.mxu0 0.0
    %387 = vmatpush.msra.mxu0 0.0
    %388 = vmatpush.msra.mxu0 %v171
    %389 = vmatmul.f32.gmra.mxu0 %v299
    %v390 = vpop.f32.mrf.mxu0
    %v391 = vadd.f32 %v293, %v390
    %392 = vmatmul.f32.gmra.mxu0 %v302
    %v393 = vpop.f32.mrf.mxu0
    %v394 = vadd.f32 %v296, %v393
    %395 = vdwg.mxu0
    %396 = vrot.lane.b32.xlu0 %v145, 15
    %v397 = vpop.permute.xlu0 %396
    %398 = vrot.lane.b32.xlu0 %v146, 15
    %v399 = vpop.permute.xlu0 %398
    %400 = vrot.lane.b32.xlu0 %v147, 15
    %v401 = vpop.permute.xlu0 %400
    %402 = vrot.lane.b32.xlu0 %v148, 15
    %v403 = vpop.permute.xlu0 %402
    %vm404 = vcmp.lt.s32.totalorder %v158, 15
    %v405 = vsel %vm404, %v401, %v403
    %v406 = vsel %vm404, %v399, %v401
    %v407 = vsel %vm404, %v397, %v399
    %v408 = vsel %vm404, %v403, %v397
    %s409 = scalar_lea.vmem [#allocation2], 256
    %v410 = vld [vmem:[%s409] sm:$0xff]
    %v411 = vld [vmem:[%s409 + $0x8] sm:$0xff]
    %v412 = vld [vmem:[%s409 + $0x10] sm:$0xff]
    %v413 = vld [vmem:[%s409 + $0x18] sm:$0xff]
    %v414 = vmul.f32 %v408, %v410
    %v415 = vmul.f32 %v407, %v411
    %v416 = vmul.f32 %v406, %v412
    %v417 = vmul.f32 %v405, %v413
    %s418 = scalar_lea.vmem %s5, 32
    %v419 = vld [vmem:[%s418] sm:$0xff]
    %v420 = vld [vmem:[%s418 + $0x8] sm:$0xff]
    %v422 = vsel %vm199, %v419, 0
    %v425 = vsel %vm199, %v420, 0
    %427 = vmatpush.msra.mxu0 0.0
    %428 = vmatpush.msra.mxu0 0.0
    %429 = vmatpush.msra.mxu0 0.0
    %430 = vmatpush.msra.mxu0 0.0
    %431 = vmatpush.msra.mxu0 0.0
    %432 = vmatpush.msra.mxu0 0.0
    %433 = vmatpush.msra.mxu0 0.0
    %434 = vmatpush.msra.mxu0 0.0
    %435 = vmatpush.msra.mxu0 0.0
    %436 = vmatpush.msra.mxu0 0.0
    %437 = vmatpush.msra.mxu0 0.0
    %438 = vmatpush.msra.mxu0 0.0
    %439 = vmatpush.msra.mxu0 0.0
    %440 = vmatpush.msra.mxu0 0.0
    %441 = vmatpush.msra.mxu0 0.0
    %442 = vmatpush.msra.mxu0 %v414
    %443 = vmatmul.f32.gmra.mxu0 %v422
    %v444 = vpop.f32.mrf.mxu0
    %v445 = vadd.f32 0.0, %v444
    %446 = vmatmul.f32.gmra.mxu0 %v425
    %v447 = vpop.f32.mrf.mxu0
    %v448 = vadd.f32 0.0, %v447
    %449 = vdwg.mxu0
    %450 = vmatpush.msra.mxu0 0.0
    %451 = vmatpush.msra.mxu0 0.0
    %452 = vmatpush.msra.mxu0 0.0
    %453 = vmatpush.msra.mxu0 0.0
    %454 = vmatpush.msra.mxu0 0.0
    %455 = vmatpush.msra.mxu0 0.0
    %456 = vmatpush.msra.mxu0 0.0
    %457 = vmatpush.msra.mxu0 0.0
    %458 = vmatpush.msra.mxu0 0.0
    %459 = vmatpush.msra.mxu0 0.0
    %460 = vmatpush.msra.mxu0 0.0
    %461 = vmatpush.msra.mxu0 0.0
    %462 = vmatpush.msra.mxu0 0.0
    %463 = vmatpush.msra.mxu0 0.0
    %464 = vmatpush.msra.mxu0 0.0
    %465 = vmatpush.msra.mxu0 %v415
    %466 = vmatmul.f32.gmra.mxu0 %v422
    %v467 = vpop.f32.mrf.mxu0
    %v468 = vadd.f32 0.0, %v467
    %469 = vmatmul.f32.gmra.mxu0 %v425
    %v470 = vpop.f32.mrf.mxu0
    %v471 = vadd.f32 0.0, %v470
    %472 = vdwg.mxu0
    %473 = vmatpush.msra.mxu0 0.0
    %474 = vmatpush.msra.mxu0 0.0
    %475 = vmatpush.msra.mxu0 0.0
    %476 = vmatpush.msra.mxu0 0.0
    %477 = vmatpush.msra.mxu0 0.0
    %478 = vmatpush.msra.mxu0 0.0
    %479 = vmatpush.msra.mxu0 0.0
    %480 = vmatpush.msra.mxu0 0.0
    %481 = vmatpush.msra.mxu0 0.0
    %482 = vmatpush.msra.mxu0 0.0
    %483 = vmatpush.msra.mxu0 0.0
    %484 = vmatpush.msra.mxu0 0.0
    %485 = vmatpush.msra.mxu0 0.0
    %486 = vmatpush.msra.mxu0 0.0
    %487 = vmatpush.msra.mxu0 0.0
    %488 = vmatpush.msra.mxu0 %v416
    %489 = vmatmul.f32.gmra.mxu0 %v422
    %v490 = vpop.f32.mrf.mxu0
    %v491 = vadd.f32 0.0, %v490
    %492 = vmatmul.f32.gmra.mxu0 %v425
    %v493 = vpop.f32.mrf.mxu0
    %v494 = vadd.f32 0.0, %v493
    %495 = vdwg.mxu0
    %496 = vmatpush.msra.mxu0 0.0
    %497 = vmatpush.msra.mxu0 0.0
    %498 = vmatpush.msra.mxu0 0.0
    %499 = vmatpush.msra.mxu0 0.0
    %500 = vmatpush.msra.mxu0 0.0
    %501 = vmatpush.msra.mxu0 0.0
    %502 = vmatpush.msra.mxu0 0.0
    %503 = vmatpush.msra.mxu0 0.0
    %504 = vmatpush.msra.mxu0 0.0
    %505 = vmatpush.msra.mxu0 0.0
    %506 = vmatpush.msra.mxu0 0.0
    %507 = vmatpush.msra.mxu0 0.0
    %508 = vmatpush.msra.mxu0 0.0
    %509 = vmatpush.msra.mxu0 0.0
    %510 = vmatpush.msra.mxu0 0.0
    %511 = vmatpush.msra.mxu0 %v417
    %512 = vmatmul.f32.gmra.mxu0 %v422
    %v513 = vpop.f32.mrf.mxu0
    %v514 = vadd.f32 0.0, %v513
    %515 = vmatmul.f32.gmra.mxu0 %v425
    %v516 = vpop.f32.mrf.mxu0
    %v517 = vadd.f32 0.0, %v516
    %518 = vdwg.mxu0
    %v519 = vadd.f32 %v322, %v445
    %v520 = vadd.f32 %v345, %v468
    %v521 = vadd.f32 %v368, %v491
    %v522 = vadd.f32 %v391, %v514
    %v523 = vadd.f32 %v325, %v448
    %v524 = vadd.f32 %v348, %v471
    %v525 = vadd.f32 %v371, %v494
    %v526 = vadd.f32 %v394, %v517
    %527 = vrot.lane.b32.xlu0 %v145, 1
    %v528 = vpop.permute.xlu0 %527
    %529 = vrot.lane.b32.xlu0 %v146, 1
    %v530 = vpop.permute.xlu0 %529
    %531 = vrot.lane.b32.xlu0 %v147, 1
    %v532 = vpop.permute.xlu0 %531
    %533 = vrot.lane.b32.xlu0 %v148, 1
    %v534 = vpop.permute.xlu0 %533
    %vm535 = vcmp.lt.s32.totalorder %v158, 1
    %v536 = vsel %vm535, %v532, %v534
    %v537 = vsel %vm535, %v530, %v532
    %v538 = vsel %vm535, %v528, %v530
    %v539 = vsel %vm535, %v534, %v528
    %s540 = scalar_lea.vmem [#allocation2], 384
    %v541 = vld [vmem:[%s540] sm:$0xff]
    %v542 = vld [vmem:[%s540 + $0x8] sm:$0xff]
    %v543 = vld [vmem:[%s540 + $0x10] sm:$0xff]
    %v544 = vld [vmem:[%s540 + $0x18] sm:$0xff]
    %v545 = vmul.f32 %v539, %v541
    %v546 = vmul.f32 %v538, %v542
    %v547 = vmul.f32 %v537, %v543
    %v548 = vmul.f32 %v536, %v544
    %s549 = scalar_lea.vmem %s5, 48
    %v550 = vld [vmem:[%s549] sm:$0xff]
    %v551 = vld [vmem:[%s549 + $0x8] sm:$0xff]
    %v553 = vsel %vm199, %v550, 0
    %v556 = vsel %vm199, %v551, 0
    %558 = vmatpush.msra.mxu0 0.0
    %559 = vmatpush.msra.mxu0 0.0
    %560 = vmatpush.msra.mxu0 0.0
    %561 = vmatpush.msra.mxu0 0.0
    %562 = vmatpush.msra.mxu0 0.0
    %563 = vmatpush.msra.mxu0 0.0
    %564 = vmatpush.msra.mxu0 0.0
    %565 = vmatpush.msra.mxu0 0.0
    %566 = vmatpush.msra.mxu0 0.0
    %567 = vmatpush.msra.mxu0 0.0
    %568 = vmatpush.msra.mxu0 0.0
    %569 = vmatpush.msra.mxu0 0.0
    %570 = vmatpush.msra.mxu0 0.0
    %571 = vmatpush.msra.mxu0 0.0
    %572 = vmatpush.msra.mxu0 0.0
    %573 = vmatpush.msra.mxu0 %v545
    %574 = vmatmul.f32.gmra.mxu0 %v553
    %v575 = vpop.f32.mrf.mxu0
    %v576 = vadd.f32 0.0, %v575
    %577 = vmatmul.f32.gmra.mxu0 %v556
    %v578 = vpop.f32.mrf.mxu0
    %v579 = vadd.f32 0.0, %v578
    %580 = vdwg.mxu0
    %581 = vmatpush.msra.mxu0 0.0
    %582 = vmatpush.msra.mxu0 0.0
    %583 = vmatpush.msra.mxu0 0.0
    %584 = vmatpush.msra.mxu0 0.0
    %585 = vmatpush.msra.mxu0 0.0
    %586 = vmatpush.msra.mxu0 0.0
    %587 = vmatpush.msra.mxu0 0.0
    %588 = vmatpush.msra.mxu0 0.0
    %589 = vmatpush.msra.mxu0 0.0
    %590 = vmatpush.msra.mxu0 0.0
    %591 = vmatpush.msra.mxu0 0.0
    %592 = vmatpush.msra.mxu0 0.0
    %593 = vmatpush.msra.mxu0 0.0
    %594 = vmatpush.msra.mxu0 0.0
    %595 = vmatpush.msra.mxu0 0.0
    %596 = vmatpush.msra.mxu0 %v546
    %597 = vmatmul.f32.gmra.mxu0 %v553
    %v598 = vpop.f32.mrf.mxu0
    %v599 = vadd.f32 0.0, %v598
    %600 = vmatmul.f32.gmra.mxu0 %v556
    %v601 = vpop.f32.mrf.mxu0
    %v602 = vadd.f32 0.0, %v601
    %603 = vdwg.mxu0
    %604 = vmatpush.msra.mxu0 0.0
    %605 = vmatpush.msra.mxu0 0.0
    %606 = vmatpush.msra.mxu0 0.0
    %607 = vmatpush.msra.mxu0 0.0
    %608 = vmatpush.msra.mxu0 0.0
    %609 = vmatpush.msra.mxu0 0.0
    %610 = vmatpush.msra.mxu0 0.0
    %611 = vmatpush.msra.mxu0 0.0
    %612 = vmatpush.msra.mxu0 0.0
    %613 = vmatpush.msra.mxu0 0.0
    %614 = vmatpush.msra.mxu0 0.0
    %615 = vmatpush.msra.mxu0 0.0
    %616 = vmatpush.msra.mxu0 0.0
    %617 = vmatpush.msra.mxu0 0.0
    %618 = vmatpush.msra.mxu0 0.0
    %619 = vmatpush.msra.mxu0 %v547
    %620 = vmatmul.f32.gmra.mxu0 %v553
    %v621 = vpop.f32.mrf.mxu0
    %v622 = vadd.f32 0.0, %v621
    %623 = vmatmul.f32.gmra.mxu0 %v556
    %v624 = vpop.f32.mrf.mxu0
    %v625 = vadd.f32 0.0, %v624
    %626 = vdwg.mxu0
    %627 = vmatpush.msra.mxu0 0.0
    %628 = vmatpush.msra.mxu0 0.0
    %629 = vmatpush.msra.mxu0 0.0
    %630 = vmatpush.msra.mxu0 0.0
    %631 = vmatpush.msra.mxu0 0.0
    %632 = vmatpush.msra.mxu0 0.0
    %633 = vmatpush.msra.mxu0 0.0
    %634 = vmatpush.msra.mxu0 0.0
    %635 = vmatpush.msra.mxu0 0.0
    %636 = vmatpush.msra.mxu0 0.0
    %637 = vmatpush.msra.mxu0 0.0
    %638 = vmatpush.msra.mxu0 0.0
    %639 = vmatpush.msra.mxu0 0.0
    %640 = vmatpush.msra.mxu0 0.0
    %641 = vmatpush.msra.mxu0 0.0
    %642 = vmatpush.msra.mxu0 %v548
    %643 = vmatmul.f32.gmra.mxu0 %v553
    %v644 = vpop.f32.mrf.mxu0
    %v645 = vadd.f32 0.0, %v644
    %646 = vmatmul.f32.gmra.mxu0 %v556
    %v647 = vpop.f32.mrf.mxu0
    %v648 = vadd.f32 0.0, %v647
    %649 = vdwg.mxu0
    %v650 = vadd.f32 %v519, %v576
    %v651 = vadd.f32 %v520, %v599
    %v652 = vadd.f32 %v521, %v622
    %v653 = vadd.f32 %v522, %v645
    %v654 = vadd.f32 %v523, %v579
    %v655 = vadd.f32 %v524, %v602
    %v656 = vadd.f32 %v525, %v625
    %v657 = vadd.f32 %v526, %v648
    %s658 = scalar_lea.vmem %s5, 64
    %v659 = vld [vmem:[%s658] sm:$0xff]
    %v660 = vld [vmem:[%s658 + $0x8] sm:$0xff]
    %v662 = vsel %vm199, %v659, 0
    %v665 = vsel %vm199, %v660, 0
    %667 = vmatpush.msra.mxu0 0.0
    %668 = vmatpush.msra.mxu0 0.0
    %669 = vmatpush.msra.mxu0 0.0
    %670 = vmatpush.msra.mxu0 0.0
    %671 = vmatpush.msra.mxu0 0.0
    %672 = vmatpush.msra.mxu0 0.0
    %673 = vmatpush.msra.mxu0 0.0
    %674 = vmatpush.msra.mxu0 0.0
    %675 = vmatpush.msra.mxu0 0.0
    %676 = vmatpush.msra.mxu0 0.0
    %677 = vmatpush.msra.mxu0 0.0
    %678 = vmatpush.msra.mxu0 0.0
    %679 = vmatpush.msra.mxu0 0.0
    %680 = vmatpush.msra.mxu0 0.0
    %681 = vmatpush.msra.mxu0 0.0
    %682 = vmatpush.msra.mxu0 %v145
    %683 = vmatmul.f32.gmra.mxu0 %v662
    %v684 = vpop.f32.mrf.mxu0
    %v685 = vadd.f32 0.0, %v684
    %686 = vmatmul.f32.gmra.mxu0 %v665
    %v687 = vpop.f32.mrf.mxu0
    %v688 = vadd.f32 0.0, %v687
    %689 = vdwg.mxu0
    %690 = vmatpush.msra.mxu0 0.0
    %691 = vmatpush.msra.mxu0 0.0
    %692 = vmatpush.msra.mxu0 0.0
    %693 = vmatpush.msra.mxu0 0.0
    %694 = vmatpush.msra.mxu0 0.0
    %695 = vmatpush.msra.mxu0 0.0
    %696 = vmatpush.msra.mxu0 0.0
    %697 = vmatpush.msra.mxu0 0.0
    %698 = vmatpush.msra.mxu0 0.0
    %699 = vmatpush.msra.mxu0 0.0
    %700 = vmatpush.msra.mxu0 0.0
    %701 = vmatpush.msra.mxu0 0.0
    %702 = vmatpush.msra.mxu0 0.0
    %703 = vmatpush.msra.mxu0 0.0
    %704 = vmatpush.msra.mxu0 0.0
    %705 = vmatpush.msra.mxu0 %v146
    %706 = vmatmul.f32.gmra.mxu0 %v662
    %v707 = vpop.f32.mrf.mxu0
    %v708 = vadd.f32 0.0, %v707
    %709 = vmatmul.f32.gmra.mxu0 %v665
    %v710 = vpop.f32.mrf.mxu0
    %v711 = vadd.f32 0.0, %v710
    %712 = vdwg.mxu0
    %713 = vmatpush.msra.mxu0 0.0
    %714 = vmatpush.msra.mxu0 0.0
    %715 = vmatpush.msra.mxu0 0.0
    %716 = vmatpush.msra.mxu0 0.0
    %717 = vmatpush.msra.mxu0 0.0
    %718 = vmatpush.msra.mxu0 0.0
    %719 = vmatpush.msra.mxu0 0.0
    %720 = vmatpush.msra.mxu0 0.0
    %721 = vmatpush.msra.mxu0 0.0
    %722 = vmatpush.msra.mxu0 0.0
    %723 = vmatpush.msra.mxu0 0.0
    %724 = vmatpush.msra.mxu0 0.0
    %725 = vmatpush.msra.mxu0 0.0
    %726 = vmatpush.msra.mxu0 0.0
    %727 = vmatpush.msra.mxu0 0.0
    %728 = vmatpush.msra.mxu0 %v147
    %729 = vmatmul.f32.gmra.mxu0 %v662
    %v730 = vpop.f32.mrf.mxu0
    %v731 = vadd.f32 0.0, %v730
    %732 = vmatmul.f32.gmra.mxu0 %v665
    %v733 = vpop.f32.mrf.mxu0
    %v734 = vadd.f32 0.0, %v733
    %735 = vdwg.mxu0
    %736 = vmatpush.msra.mxu0 0.0
    %737 = vmatpush.msra.mxu0 0.0
    %738 = vmatpush.msra.mxu0 0.0
    %739 = vmatpush.msra.mxu0 0.0
    %740 = vmatpush.msra.mxu0 0.0
    %741 = vmatpush.msra.mxu0 0.0
    %742 = vmatpush.msra.mxu0 0.0
    %743 = vmatpush.msra.mxu0 0.0
    %744 = vmatpush.msra.mxu0 0.0
    %745 = vmatpush.msra.mxu0 0.0
    %746 = vmatpush.msra.mxu0 0.0
    %747 = vmatpush.msra.mxu0 0.0
    %748 = vmatpush.msra.mxu0 0.0
    %749 = vmatpush.msra.mxu0 0.0
    %750 = vmatpush.msra.mxu0 0.0
    %751 = vmatpush.msra.mxu0 %v148
    %752 = vmatmul.f32.gmra.mxu0 %v662
    %v753 = vpop.f32.mrf.mxu0
    %v754 = vadd.f32 0.0, %v753
    %755 = vmatmul.f32.gmra.mxu0 %v665
    %v756 = vpop.f32.mrf.mxu0
    %v757 = vadd.f32 0.0, %v756
    %758 = vdwg.mxu0
    %v759 = vadd.f32 %v650, %v685
    %v760 = vadd.f32 %v651, %v708
    %v761 = vadd.f32 %v652, %v731
    %v762 = vadd.f32 %v653, %v754
    %v763 = vadd.f32 %v654, %v688
    %v764 = vadd.f32 %v655, %v711
    %v765 = vadd.f32 %v656, %v734
    %v766 = vadd.f32 %v657, %v757
    %767 = vrot.lane.b32.xlu0 %v145, 127
    %v768 = vpop.permute.xlu0 %767
    %769 = vrot.lane.b32.xlu0 %v146, 127
    %v770 = vpop.permute.xlu0 %769
    %771 = vrot.lane.b32.xlu0 %v147, 127
    %v772 = vpop.permute.xlu0 %771
    %773 = vrot.lane.b32.xlu0 %v148, 127
    %v774 = vpop.permute.xlu0 %773
    %vm775 = vcmp.lt.s32.totalorder %v158, 127
    %v776 = vsel %vm775, %v772, %v774
    %v777 = vsel %vm775, %v770, %v772
    %v778 = vsel %vm775, %v768, %v770
    %v779 = vsel %vm775, %v774, %v768
    %s780 = scalar_lea.vmem [#allocation2], 640
    %v781 = vld [vmem:[%s780] sm:$0xff]
    %v782 = vld [vmem:[%s780 + $0x8] sm:$0xff]
    %v783 = vld [vmem:[%s780 + $0x10] sm:$0xff]
    %v784 = vld [vmem:[%s780 + $0x18] sm:$0xff]
    %v785 = vmul.f32 %v778, %v781
    %v786 = vmul.f32 %v777, %v782
    %v787 = vmul.f32 %v776, %v783
    %v788 = vmul.f32 %v779, %v784
    %s789 = scalar_lea.vmem %s5, 80
    %v790 = vld [vmem:[%s789] sm:$0xff]
    %v791 = vld [vmem:[%s789 + $0x8] sm:$0xff]
    %v793 = vsel %vm199, %v790, 0
    %v796 = vsel %vm199, %v791, 0
    %798 = vmatpush.msra.mxu0 0.0
    %799 = vmatpush.msra.mxu0 0.0
    %800 = vmatpush.msra.mxu0 0.0
    %801 = vmatpush.msra.mxu0 0.0
    %802 = vmatpush.msra.mxu0 0.0
    %803 = vmatpush.msra.mxu0 0.0
    %804 = vmatpush.msra.mxu0 0.0
    %805 = vmatpush.msra.mxu0 0.0
    %806 = vmatpush.msra.mxu0 0.0
    %807 = vmatpush.msra.mxu0 0.0
    %808 = vmatpush.msra.mxu0 0.0
    %809 = vmatpush.msra.mxu0 0.0
    %810 = vmatpush.msra.mxu0 0.0
    %811 = vmatpush.msra.mxu0 0.0
    %812 = vmatpush.msra.mxu0 0.0
    %813 = vmatpush.msra.mxu0 %v785
    %814 = vmatmul.f32.gmra.mxu0 %v793
    %v815 = vpop.f32.mrf.mxu0
    %v816 = vadd.f32 0.0, %v815
    %817 = vmatmul.f32.gmra.mxu0 %v796
    %v818 = vpop.f32.mrf.mxu0
    %v819 = vadd.f32 0.0, %v818
    %820 = vdwg.mxu0
    %821 = vmatpush.msra.mxu0 0.0
    %822 = vmatpush.msra.mxu0 0.0
    %823 = vmatpush.msra.mxu0 0.0
    %824 = vmatpush.msra.mxu0 0.0
    %825 = vmatpush.msra.mxu0 0.0
    %826 = vmatpush.msra.mxu0 0.0
    %827 = vmatpush.msra.mxu0 0.0
    %828 = vmatpush.msra.mxu0 0.0
    %829 = vmatpush.msra.mxu0 0.0
    %830 = vmatpush.msra.mxu0 0.0
    %831 = vmatpush.msra.mxu0 0.0
    %832 = vmatpush.msra.mxu0 0.0
    %833 = vmatpush.msra.mxu0 0.0
    %834 = vmatpush.msra.mxu0 0.0
    %835 = vmatpush.msra.mxu0 0.0
    %836 = vmatpush.msra.mxu0 %v786
    %837 = vmatmul.f32.gmra.mxu0 %v793
    %v838 = vpop.f32.mrf.mxu0
    %v839 = vadd.f32 0.0, %v838
    %840 = vmatmul.f32.gmra.mxu0 %v796
    %v841 = vpop.f32.mrf.mxu0
    %v842 = vadd.f32 0.0, %v841
    %843 = vdwg.mxu0
    %844 = vmatpush.msra.mxu0 0.0
    %845 = vmatpush.msra.mxu0 0.0
    %846 = vmatpush.msra.mxu0 0.0
    %847 = vmatpush.msra.mxu0 0.0
    %848 = vmatpush.msra.mxu0 0.0
    %849 = vmatpush.msra.mxu0 0.0
    %850 = vmatpush.msra.mxu0 0.0
    %851 = vmatpush.msra.mxu0 0.0
    %852 = vmatpush.msra.mxu0 0.0
    %853 = vmatpush.msra.mxu0 0.0
    %854 = vmatpush.msra.mxu0 0.0
    %855 = vmatpush.msra.mxu0 0.0
    %856 = vmatpush.msra.mxu0 0.0
    %857 = vmatpush.msra.mxu0 0.0
    %858 = vmatpush.msra.mxu0 0.0
    %859 = vmatpush.msra.mxu0 %v787
    %860 = vmatmul.f32.gmra.mxu0 %v793
    %v861 = vpop.f32.mrf.mxu0
    %v862 = vadd.f32 0.0, %v861
    %863 = vmatmul.f32.gmra.mxu0 %v796
    %v864 = vpop.f32.mrf.mxu0
    %v865 = vadd.f32 0.0, %v864
    %866 = vdwg.mxu0
    %867 = vmatpush.msra.mxu0 0.0
    %868 = vmatpush.msra.mxu0 0.0
    %869 = vmatpush.msra.mxu0 0.0
    %870 = vmatpush.msra.mxu0 0.0
    %871 = vmatpush.msra.mxu0 0.0
    %872 = vmatpush.msra.mxu0 0.0
    %873 = vmatpush.msra.mxu0 0.0
    %874 = vmatpush.msra.mxu0 0.0
    %875 = vmatpush.msra.mxu0 0.0
    %876 = vmatpush.msra.mxu0 0.0
    %877 = vmatpush.msra.mxu0 0.0
    %878 = vmatpush.msra.mxu0 0.0
    %879 = vmatpush.msra.mxu0 0.0
    %880 = vmatpush.msra.mxu0 0.0
    %881 = vmatpush.msra.mxu0 0.0
    %882 = vmatpush.msra.mxu0 %v788
    %883 = vmatmul.f32.gmra.mxu0 %v793
    %v884 = vpop.f32.mrf.mxu0
    %v885 = vadd.f32 0.0, %v884
    %886 = vmatmul.f32.gmra.mxu0 %v796
    %v887 = vpop.f32.mrf.mxu0
    %v888 = vadd.f32 0.0, %v887
    %889 = vdwg.mxu0
    %v890 = vadd.f32 %v759, %v816
    %v891 = vadd.f32 %v760, %v839
    %v892 = vadd.f32 %v761, %v862
    %v893 = vadd.f32 %v762, %v885
    %v894 = vadd.f32 %v763, %v819
    %v895 = vadd.f32 %v764, %v842
    %v896 = vadd.f32 %v765, %v865
    %v897 = vadd.f32 %v766, %v888
    %898 = vrot.lane.b32.xlu0 %v145, 113
    %v899 = vpop.permute.xlu0 %898
    %900 = vrot.lane.b32.xlu0 %v146, 113
    %v901 = vpop.permute.xlu0 %900
    %902 = vrot.lane.b32.xlu0 %v147, 113
    %v903 = vpop.permute.xlu0 %902
    %904 = vrot.lane.b32.xlu0 %v148, 113
    %v905 = vpop.permute.xlu0 %904
    %vm906 = vcmp.lt.s32.totalorder %v158, 113
    %v907 = vsel %vm906, %v903, %v905
    %v908 = vsel %vm906, %v901, %v903
    %v909 = vsel %vm906, %v899, %v901
    %v910 = vsel %vm906, %v905, %v899
    %s911 = scalar_lea.vmem [#allocation2], 768
    %v912 = vld [vmem:[%s911] sm:$0xff]
    %v913 = vld [vmem:[%s911 + $0x8] sm:$0xff]
    %v914 = vld [vmem:[%s911 + $0x10] sm:$0xff]
    %v915 = vld [vmem:[%s911 + $0x18] sm:$0xff]
    %v916 = vmul.f32 %v909, %v912
    %v917 = vmul.f32 %v908, %v913
    %v918 = vmul.f32 %v907, %v914
    %v919 = vmul.f32 %v910, %v915
    %s920 = scalar_lea.vmem %s5, 96
    %v921 = vld [vmem:[%s920] sm:$0xff]
    %v922 = vld [vmem:[%s920 + $0x8] sm:$0xff]
    %v924 = vsel %vm199, %v921, 0
    %v927 = vsel %vm199, %v922, 0
    %929 = vmatpush.msra.mxu0 0.0
    %930 = vmatpush.msra.mxu0 0.0
    %931 = vmatpush.msra.mxu0 0.0
    %932 = vmatpush.msra.mxu0 0.0
    %933 = vmatpush.msra.mxu0 0.0
    %934 = vmatpush.msra.mxu0 0.0
    %935 = vmatpush.msra.mxu0 0.0
    %936 = vmatpush.msra.mxu0 0.0
    %937 = vmatpush.msra.mxu0 0.0
    %938 = vmatpush.msra.mxu0 0.0
    %939 = vmatpush.msra.mxu0 0.0
    %940 = vmatpush.msra.mxu0 0.0
    %941 = vmatpush.msra.mxu0 0.0
    %942 = vmatpush.msra.mxu0 0.0
    %943 = vmatpush.msra.mxu0 0.0
    %944 = vmatpush.msra.mxu0 %v916
    %945 = vmatmul.f32.gmra.mxu0 %v924
    %v946 = vpop.f32.mrf.mxu0
    %v947 = vadd.f32 0.0, %v946
    %948 = vmatmul.f32.gmra.mxu0 %v927
    %v949 = vpop.f32.mrf.mxu0
    %v950 = vadd.f32 0.0, %v949
    %951 = vdwg.mxu0
    %952 = vmatpush.msra.mxu0 0.0
    %953 = vmatpush.msra.mxu0 0.0
    %954 = vmatpush.msra.mxu0 0.0
    %955 = vmatpush.msra.mxu0 0.0
    %956 = vmatpush.msra.mxu0 0.0
    %957 = vmatpush.msra.mxu0 0.0
    %958 = vmatpush.msra.mxu0 0.0
    %959 = vmatpush.msra.mxu0 0.0
    %960 = vmatpush.msra.mxu0 0.0
    %961 = vmatpush.msra.mxu0 0.0
    %962 = vmatpush.msra.mxu0 0.0
    %963 = vmatpush.msra.mxu0 0.0
    %964 = vmatpush.msra.mxu0 0.0
    %965 = vmatpush.msra.mxu0 0.0
    %966 = vmatpush.msra.mxu0 0.0
    %967 = vmatpush.msra.mxu0 %v917
    %968 = vmatmul.f32.gmra.mxu0 %v924
    %v969 = vpop.f32.mrf.mxu0
    %v970 = vadd.f32 0.0, %v969
    %971 = vmatmul.f32.gmra.mxu0 %v927
    %v972 = vpop.f32.mrf.mxu0
    %v973 = vadd.f32 0.0, %v972
    %974 = vdwg.mxu0
    %975 = vmatpush.msra.mxu0 0.0
    %976 = vmatpush.msra.mxu0 0.0
    %977 = vmatpush.msra.mxu0 0.0
    %978 = vmatpush.msra.mxu0 0.0
    %979 = vmatpush.msra.mxu0 0.0
    %980 = vmatpush.msra.mxu0 0.0
    %981 = vmatpush.msra.mxu0 0.0
    %982 = vmatpush.msra.mxu0 0.0
    %983 = vmatpush.msra.mxu0 0.0
    %984 = vmatpush.msra.mxu0 0.0
    %985 = vmatpush.msra.mxu0 0.0
    %986 = vmatpush.msra.mxu0 0.0
    %987 = vmatpush.msra.mxu0 0.0
    %988 = vmatpush.msra.mxu0 0.0
    %989 = vmatpush.msra.mxu0 0.0
    %990 = vmatpush.msra.mxu0 %v918
    %991 = vmatmul.f32.gmra.mxu0 %v924
    %v992 = vpop.f32.mrf.mxu0
    %v993 = vadd.f32 0.0, %v992
    %994 = vmatmul.f32.gmra.mxu0 %v927
    %v995 = vpop.f32.mrf.mxu0
    %v996 = vadd.f32 0.0, %v995
    %997 = vdwg.mxu0
    %998 = vmatpush.msra.mxu0 0.0
    %999 = vmatpush.msra.mxu0 0.0
    %1000 = vmatpush.msra.mxu0 0.0
    %1001 = vmatpush.msra.mxu0 0.0
    %1002 = vmatpush.msra.mxu0 0.0
    %1003 = vmatpush.msra.mxu0 0.0
    %1004 = vmatpush.msra.mxu0 0.0
    %1005 = vmatpush.msra.mxu0 0.0
    %1006 = vmatpush.msra.mxu0 0.0
    %1007 = vmatpush.msra.mxu0 0.0
    %1008 = vmatpush.msra.mxu0 0.0
    %1009 = vmatpush.msra.mxu0 0.0
    %1010 = vmatpush.msra.mxu0 0.0
    %1011 = vmatpush.msra.mxu0 0.0
    %1012 = vmatpush.msra.mxu0 0.0
    %1013 = vmatpush.msra.mxu0 %v919
    %1014 = vmatmul.f32.gmra.mxu0 %v924
    %v1015 = vpop.f32.mrf.mxu0
    %v1016 = vadd.f32 0.0, %v1015
    %1017 = vmatmul.f32.gmra.mxu0 %v927
    %v1018 = vpop.f32.mrf.mxu0
    %v1019 = vadd.f32 0.0, %v1018
    %1020 = vdwg.mxu0
    %v1021 = vadd.f32 %v890, %v947
    %v1022 = vadd.f32 %v891, %v970
    %v1023 = vadd.f32 %v892, %v993
    %v1024 = vadd.f32 %v893, %v1016
    %v1025 = vadd.f32 %v894, %v950
    %v1026 = vadd.f32 %v895, %v973
    %v1027 = vadd.f32 %v896, %v996
    %v1028 = vadd.f32 %v897, %v1019
    %1029 = vrot.lane.b32.xlu0 %v145, 112
    %v1030 = vpop.permute.xlu0 %1029
    %1031 = vrot.lane.b32.xlu0 %v146, 112
    %v1032 = vpop.permute.xlu0 %1031
    %1033 = vrot.lane.b32.xlu0 %v147, 112
    %v1034 = vpop.permute.xlu0 %1033
    %1035 = vrot.lane.b32.xlu0 %v148, 112
    %v1036 = vpop.permute.xlu0 %1035
    %vm1037 = vcmp.lt.s32.totalorder %v158, 112
    %v1038 = vsel %vm1037, %v1034, %v1036
    %v1039 = vsel %vm1037, %v1032, %v1034
    %v1040 = vsel %vm1037, %v1030, %v1032
    %v1041 = vsel %vm1037, %v1036, %v1030
    %s1042 = scalar_lea.vmem [#allocation2], 896
    %v1043 = vld [vmem:[%s1042] sm:$0xff]
    %v1044 = vld [vmem:[%s1042 + $0x8] sm:$0xff]
    %v1045 = vld [vmem:[%s1042 + $0x10] sm:$0xff]
    %v1046 = vld [vmem:[%s1042 + $0x18] sm:$0xff]
    %v1047 = vmul.f32 %v1040, %v1043
    %v1048 = vmul.f32 %v1039, %v1044
    %v1049 = vmul.f32 %v1038, %v1045
    %v1050 = vmul.f32 %v1041, %v1046
    %s1051 = scalar_lea.vmem %s5, 112
    %v1052 = vld [vmem:[%s1051] sm:$0xff]
    %v1053 = vld [vmem:[%s1051 + $0x8] sm:$0xff]
    %v1055 = vsel %vm199, %v1052, 0
    %v1058 = vsel %vm199, %v1053, 0
    %1060 = vmatpush.msra.mxu0 0.0
    %1061 = vmatpush.msra.mxu0 0.0
    %1062 = vmatpush.msra.mxu0 0.0
    %1063 = vmatpush.msra.mxu0 0.0
    %1064 = vmatpush.msra.mxu0 0.0
    %1065 = vmatpush.msra.mxu0 0.0
    %1066 = vmatpush.msra.mxu0 0.0
    %1067 = vmatpush.msra.mxu0 0.0
    %1068 = vmatpush.msra.mxu0 0.0
    %1069 = vmatpush.msra.mxu0 0.0
    %1070 = vmatpush.msra.mxu0 0.0
    %1071 = vmatpush.msra.mxu0 0.0
    %1072 = vmatpush.msra.mxu0 0.0
    %1073 = vmatpush.msra.mxu0 0.0
    %1074 = vmatpush.msra.mxu0 0.0
    %1075 = vmatpush.msra.mxu0 %v1047
    %1076 = vmatmul.f32.gmra.mxu0 %v1055
    %v1077 = vpop.f32.mrf.mxu0
    %v1078 = vadd.f32 0.0, %v1077
    %1079 = vmatmul.f32.gmra.mxu0 %v1058
    %v1080 = vpop.f32.mrf.mxu0
    %v1081 = vadd.f32 0.0, %v1080
    %1082 = vdwg.mxu0
    %1083 = vmatpush.msra.mxu0 0.0
    %1084 = vmatpush.msra.mxu0 0.0
    %1085 = vmatpush.msra.mxu0 0.0
    %1086 = vmatpush.msra.mxu0 0.0
    %1087 = vmatpush.msra.mxu0 0.0
    %1088 = vmatpush.msra.mxu0 0.0
    %1089 = vmatpush.msra.mxu0 0.0
    %1090 = vmatpush.msra.mxu0 0.0
    %1091 = vmatpush.msra.mxu0 0.0
    %1092 = vmatpush.msra.mxu0 0.0
    %1093 = vmatpush.msra.mxu0 0.0
    %1094 = vmatpush.msra.mxu0 0.0
    %1095 = vmatpush.msra.mxu0 0.0
    %1096 = vmatpush.msra.mxu0 0.0
    %1097 = vmatpush.msra.mxu0 0.0
    %1098 = vmatpush.msra.mxu0 %v1048
    %1099 = vmatmul.f32.gmra.mxu0 %v1055
    %v1100 = vpop.f32.mrf.mxu0
    %v1101 = vadd.f32 0.0, %v1100
    %1102 = vmatmul.f32.gmra.mxu0 %v1058
    %v1103 = vpop.f32.mrf.mxu0
    %v1104 = vadd.f32 0.0, %v1103
    %1105 = vdwg.mxu0
    %1106 = vmatpush.msra.mxu0 0.0
    %1107 = vmatpush.msra.mxu0 0.0
    %1108 = vmatpush.msra.mxu0 0.0
    %1109 = vmatpush.msra.mxu0 0.0
    %1110 = vmatpush.msra.mxu0 0.0
    %1111 = vmatpush.msra.mxu0 0.0
    %1112 = vmatpush.msra.mxu0 0.0
    %1113 = vmatpush.msra.mxu0 0.0
    %1114 = vmatpush.msra.mxu0 0.0
    %1115 = vmatpush.msra.mxu0 0.0
    %1116 = vmatpush.msra.mxu0 0.0
    %1117 = vmatpush.msra.mxu0 0.0
    %1118 = vmatpush.msra.mxu0 0.0
    %1119 = vmatpush.msra.mxu0 0.0
    %1120 = vmatpush.msra.mxu0 0.0
    %1121 = vmatpush.msra.mxu0 %v1049
    %1122 = vmatmul.f32.gmra.mxu0 %v1055
    %v1123 = vpop.f32.mrf.mxu0
    %v1124 = vadd.f32 0.0, %v1123
    %1125 = vmatmul.f32.gmra.mxu0 %v1058
    %v1126 = vpop.f32.mrf.mxu0
    %v1127 = vadd.f32 0.0, %v1126
    %1128 = vdwg.mxu0
    %1129 = vmatpush.msra.mxu0 0.0
    %1130 = vmatpush.msra.mxu0 0.0
    %1131 = vmatpush.msra.mxu0 0.0
    %1132 = vmatpush.msra.mxu0 0.0
    %1133 = vmatpush.msra.mxu0 0.0
    %1134 = vmatpush.msra.mxu0 0.0
    %1135 = vmatpush.msra.mxu0 0.0
    %1136 = vmatpush.msra.mxu0 0.0
    %1137 = vmatpush.msra.mxu0 0.0
    %1138 = vmatpush.msra.mxu0 0.0
    %1139 = vmatpush.msra.mxu0 0.0
    %1140 = vmatpush.msra.mxu0 0.0
    %1141 = vmatpush.msra.mxu0 0.0
    %1142 = vmatpush.msra.mxu0 0.0
    %1143 = vmatpush.msra.mxu0 0.0
    %1144 = vmatpush.msra.mxu0 %v1050
    %1145 = vmatmul.f32.gmra.mxu0 %v1055
    %v1146 = vpop.f32.mrf.mxu0
    %v1147 = vadd.f32 0.0, %v1146
    %1148 = vmatmul.f32.gmra.mxu0 %v1058
    %v1149 = vpop.f32.mrf.mxu0
    %v1150 = vadd.f32 0.0, %v1149
    %1151 = vdwg.mxu0
    %v1152 = vadd.f32 %v1021, %v1078
    %v1153 = vadd.f32 %v1022, %v1101
    %v1154 = vadd.f32 %v1023, %v1124
    %v1155 = vadd.f32 %v1024, %v1147
    %v1156 = vadd.f32 %v1025, %v1081
    %v1157 = vadd.f32 %v1026, %v1104
    %v1158 = vadd.f32 %v1027, %v1127
    %v1159 = vadd.f32 %v1028, %v1150
    %1160 = vrot.lane.b32.xlu0 %v145, 111
    %v1161 = vpop.permute.xlu0 %1160
    %1162 = vrot.lane.b32.xlu0 %v146, 111
    %v1163 = vpop.permute.xlu0 %1162
    %1164 = vrot.lane.b32.xlu0 %v147, 111
    %v1165 = vpop.permute.xlu0 %1164
    %1166 = vrot.lane.b32.xlu0 %v148, 111
    %v1167 = vpop.permute.xlu0 %1166
    %vm1168 = vcmp.lt.s32.totalorder %v158, 111
    %v1169 = vsel %vm1168, %v1165, %v1167
    %v1170 = vsel %vm1168, %v1163, %v1165
    %v1171 = vsel %vm1168, %v1161, %v1163
    %v1172 = vsel %vm1168, %v1167, %v1161
    %s1173 = scalar_lea.vmem [#allocation2], 1024
    %v1174 = vld [vmem:[%s1173] sm:$0xff]
    %v1175 = vld [vmem:[%s1173 + $0x8] sm:$0xff]
    %v1176 = vld [vmem:[%s1173 + $0x10] sm:$0xff]
    %v1177 = vld [vmem:[%s1173 + $0x18] sm:$0xff]
    %v1178 = vmul.f32 %v1171, %v1174
    %v1179 = vmul.f32 %v1170, %v1175
    %v1180 = vmul.f32 %v1169, %v1176
    %v1181 = vmul.f32 %v1172, %v1177
    %s1182 = scalar_lea.vmem %s5, 128
    %v1183 = vld [vmem:[%s1182] sm:$0xff]
    %v1184 = vld [vmem:[%s1182 + $0x8] sm:$0xff]
    %v1186 = vsel %vm199, %v1183, 0
    %v1189 = vsel %vm199, %v1184, 0
    %1191 = vmatpush.msra.mxu0 0.0
    %1192 = vmatpush.msra.mxu0 0.0
    %1193 = vmatpush.msra.mxu0 0.0
    %1194 = vmatpush.msra.mxu0 0.0
    %1195 = vmatpush.msra.mxu0 0.0
    %1196 = vmatpush.msra.mxu0 0.0
    %1197 = vmatpush.msra.mxu0 0.0
    %1198 = vmatpush.msra.mxu0 0.0
    %1199 = vmatpush.msra.mxu0 0.0
    %1200 = vmatpush.msra.mxu0 0.0
    %1201 = vmatpush.msra.mxu0 0.0
    %1202 = vmatpush.msra.mxu0 0.0
    %1203 = vmatpush.msra.mxu0 0.0
    %1204 = vmatpush.msra.mxu0 0.0
    %1205 = vmatpush.msra.mxu0 0.0
    %1206 = vmatpush.msra.mxu0 %v1178
    %1207 = vmatmul.f32.gmra.mxu0 %v1186
    %v1208 = vpop.f32.mrf.mxu0
    %v1209 = vadd.f32 0.0, %v1208
    %1210 = vmatmul.f32.gmra.mxu0 %v1189
    %v1211 = vpop.f32.mrf.mxu0
    %v1212 = vadd.f32 0.0, %v1211
    %1213 = vdwg.mxu0
    %1214 = vmatpush.msra.mxu0 0.0
    %1215 = vmatpush.msra.mxu0 0.0
    %1216 = vmatpush.msra.mxu0 0.0
    %1217 = vmatpush.msra.mxu0 0.0
    %1218 = vmatpush.msra.mxu0 0.0
    %1219 = vmatpush.msra.mxu0 0.0
    %1220 = vmatpush.msra.mxu0 0.0
    %1221 = vmatpush.msra.mxu0 0.0
    %1222 = vmatpush.msra.mxu0 0.0
    %1223 = vmatpush.msra.mxu0 0.0
    %1224 = vmatpush.msra.mxu0 0.0
    %1225 = vmatpush.msra.mxu0 0.0
    %1226 = vmatpush.msra.mxu0 0.0
    %1227 = vmatpush.msra.mxu0 0.0
    %1228 = vmatpush.msra.mxu0 0.0
    %1229 = vmatpush.msra.mxu0 %v1179
    %1230 = vmatmul.f32.gmra.mxu0 %v1186
    %v1231 = vpop.f32.mrf.mxu0
    %v1232 = vadd.f32 0.0, %v1231
    %1233 = vmatmul.f32.gmra.mxu0 %v1189
    %v1234 = vpop.f32.mrf.mxu0
    %v1235 = vadd.f32 0.0, %v1234
    %1236 = vdwg.mxu0
    %1237 = vmatpush.msra.mxu0 0.0
    %1238 = vmatpush.msra.mxu0 0.0
    %1239 = vmatpush.msra.mxu0 0.0
    %1240 = vmatpush.msra.mxu0 0.0
    %1241 = vmatpush.msra.mxu0 0.0
    %1242 = vmatpush.msra.mxu0 0.0
    %1243 = vmatpush.msra.mxu0 0.0
    %1244 = vmatpush.msra.mxu0 0.0
    %1245 = vmatpush.msra.mxu0 0.0
    %1246 = vmatpush.msra.mxu0 0.0
    %1247 = vmatpush.msra.mxu0 0.0
    %1248 = vmatpush.msra.mxu0 0.0
    %1249 = vmatpush.msra.mxu0 0.0
    %1250 = vmatpush.msra.mxu0 0.0
    %1251 = vmatpush.msra.mxu0 0.0
    %1252 = vmatpush.msra.mxu0 %v1180
    %1253 = vmatmul.f32.gmra.mxu0 %v1186
    %v1254 = vpop.f32.mrf.mxu0
    %v1255 = vadd.f32 0.0, %v1254
    %1256 = vmatmul.f32.gmra.mxu0 %v1189
    %v1257 = vpop.f32.mrf.mxu0
    %v1258 = vadd.f32 0.0, %v1257
    %1259 = vdwg.mxu0
    %1260 = vmatpush.msra.mxu0 0.0
    %1261 = vmatpush.msra.mxu0 0.0
    %1262 = vmatpush.msra.mxu0 0.0
    %1263 = vmatpush.msra.mxu0 0.0
    %1264 = vmatpush.msra.mxu0 0.0
    %1265 = vmatpush.msra.mxu0 0.0
    %1266 = vmatpush.msra.mxu0 0.0
    %1267 = vmatpush.msra.mxu0 0.0
    %1268 = vmatpush.msra.mxu0 0.0
    %1269 = vmatpush.msra.mxu0 0.0
    %1270 = vmatpush.msra.mxu0 0.0
    %1271 = vmatpush.msra.mxu0 0.0
    %1272 = vmatpush.msra.mxu0 0.0
    %1273 = vmatpush.msra.mxu0 0.0
    %1274 = vmatpush.msra.mxu0 0.0
    %1275 = vmatpush.msra.mxu0 %v1181
    %1276 = vmatmul.f32.gmra.mxu0 %v1186
    %v1277 = vpop.f32.mrf.mxu0
    %v1278 = vadd.f32 0.0, %v1277
    %1279 = vmatmul.f32.gmra.mxu0 %v1189
    %v1280 = vpop.f32.mrf.mxu0
    %v1281 = vadd.f32 0.0, %v1280
    %1282 = vdwg.mxu0
    %v1283 = vadd.f32 %v1152, %v1209
    %v1284 = vadd.f32 %v1153, %v1232
    %v1285 = vadd.f32 %v1154, %v1255
    %v1286 = vadd.f32 %v1155, %v1278
    %v1287 = vadd.f32 %v1156, %v1212
    %v1288 = vadd.f32 %v1157, %v1235
    %v1289 = vadd.f32 %v1158, %v1258
    %v1290 = vadd.f32 %v1159, %v1281
    %v1291 = vadd.f32 %v1283, %v1284
    %v1292 = vadd.f32 %v1291, %v1285
    %v1293 = vadd.f32 %v1292, %v1286
    %1294 = vadd.xlane.f32.xlu0 %v1293
    %v1295 = vpop.xlane.xlu0 %1294
    %v1296 = vadd.f32 %v1287, %v1288
    %v1297 = vadd.f32 %v1296, %v1289
    %v1298 = vadd.f32 %v1297, %v1290
    %1299 = vadd.xlane.f32.xlu0 %v1298
    %v1300 = vpop.xlane.xlu0 %1299
    %v1301 = vmul.f32 %v1283, %v1283
    %v1302 = vmul.f32 %v1284, %v1284
    %v1303 = vmul.f32 %v1285, %v1285
    %v1304 = vmul.f32 %v1286, %v1286
    %v1305 = vmul.f32 %v1287, %v1287
    %v1306 = vmul.f32 %v1288, %v1288
    %v1307 = vmul.f32 %v1289, %v1289
    %v1308 = vmul.f32 %v1290, %v1290
    %v1309 = vadd.f32 %v1301, %v1302
    %v1310 = vadd.f32 %v1309, %v1303
    %v1311 = vadd.f32 %v1310, %v1304
    %1312 = vadd.xlane.f32.xlu0 %v1311
    %v1313 = vpop.xlane.xlu0 %1312
    %v1314 = vadd.f32 %v1305, %v1306
    %v1315 = vadd.f32 %v1314, %v1307
    %v1316 = vadd.f32 %v1315, %v1308
    %1317 = vadd.xlane.f32.xlu0 %v1316
    %v1318 = vpop.xlane.xlu0 %1317
    %v1319 = vmul.f32 %v1295, 0.001953125
    %v1320 = vmul.f32 %v1300, 0.001953125
    %v1321 = vmul.f32 %v1313, 0.001953125
    %v1322 = vmul.f32 %v1318, 0.001953125
    %v1323 = vmul.f32 %v1319, %v1319
    %v1324 = vmul.f32 %v1320, %v1320
    %v1325 = vsub.f32 %v1321, %v1323
    %v1326 = vsub.f32 %v1322, %v1324
    %v1327 = vmax.f32 %v1325, 0.0
    %v1328 = vmax.f32 %v1326, 0.0
    %v1329 = vld [vmem:[%s7] sm:$0xff]
    %v1330 = vld [vmem:[%s7 + $0x8] sm:$0xff]
    %v1331 = vadd.f32 %v1327, 1e-05
    %v1332 = vadd.f32 %v1328, 1e-05
    %v1333 = vrsqrt.pop %v1331
    %v1334 = vmul.f32 %v1333, %v1331
    %v1335 = vmul.f32 %v1334, %v1333
    %v1336 = vmul.f32 0.5, %v1335
    %v1337 = vsub.f32 1.5, %v1336
    %v1338 = vmul.f32 %v1333, %v1337
    %vm1339 = vweird.f32 %v1331
    %vm1340 = vweird.f32 %v1333
    %vm1341 = vmor %vm1339, %vm1340
    %v1342 = vsel %vm1341, %v1333, %v1338
    %v1343 = vrsqrt.pop %v1332
    %v1344 = vmul.f32 %v1343, %v1332
    %v1345 = vmul.f32 %v1344, %v1343
    %v1346 = vmul.f32 0.5, %v1345
    %v1347 = vsub.f32 1.5, %v1346
    %v1348 = vmul.f32 %v1343, %v1347
    %vm1349 = vweird.f32 %v1332
    %vm1350 = vweird.f32 %v1343
    %vm1351 = vmor %vm1349, %vm1350
    %v1352 = vsel %vm1351, %v1343, %v1348
    %v1353 = vmul.f32 %v1329, %v1342
    %v1354 = vmul.f32 %v1330, %v1352
    %v1355 = vld [vmem:[%s9] sm:$0xff]
    %v1356 = vld [vmem:[%s9 + $0x8] sm:$0xff]
    %v1357 = vmul.f32 %v1319, %v1353
    %v1358 = vmul.f32 %v1320, %v1354
    %v1359 = vsub.f32 %v1355, %v1357
    %v1360 = vsub.f32 %v1356, %v1358
    %1362 = vset.pattern.permute.xlu0 0
    %1363 = vperm.xlu0 %1362, %v1353
    %v1364 = vpop.permute.xlu0 %1363
    %1367 = vset.pattern.permute.xlu0 0
    %1368 = vperm.xlu0 %1367, %v1354
    %v1369 = vpop.permute.xlu0 %1368
    %v1371 = vmul.f32 %v1283, %v1364
    %v1372 = vmul.f32 %v1284, %v1364
    %v1373 = vmul.f32 %v1285, %v1364
    %v1374 = vmul.f32 %v1286, %v1364
    %v1375 = vmul.f32 %v1287, %v1369
    %v1376 = vmul.f32 %v1288, %v1369
    %v1377 = vmul.f32 %v1289, %v1369
    %v1378 = vmul.f32 %v1290, %v1369
    %1380 = vset.pattern.permute.xlu0 0
    %1381 = vperm.xlu0 %1380, %v1359
    %v1382 = vpop.permute.xlu0 %1381
    %1385 = vset.pattern.permute.xlu0 0
    %1386 = vperm.xlu0 %1385, %v1360
    %v1387 = vpop.permute.xlu0 %1386
    %v1389 = vadd.f32 %v1371, %v1382
    %v1390 = vadd.f32 %v1372, %v1382
    %v1391 = vadd.f32 %v1373, %v1382
    %v1392 = vadd.f32 %v1374, %v1382
    %v1393 = vadd.f32 %v1375, %v1387
    %v1394 = vadd.f32 %v1376, %v1387
    %v1395 = vadd.f32 %v1377, %v1387
    %v1396 = vadd.f32 %v1378, %v1387
    %v1397 = vmax.f32 %v1389, 0.0
    %v1398 = vmax.f32 %v1390, 0.0
    %v1399 = vmax.f32 %v1391, 0.0
    %v1400 = vmax.f32 %v1392, 0.0
    %v1401 = vmax.f32 %v1393, 0.0
    %v1402 = vmax.f32 %v1394, 0.0
    %v1403 = vmax.f32 %v1395, 0.0
    %v1404 = vmax.f32 %v1396, 0.0
    %1405 = vrot.lane.b32.xlu0 %v1397, 17
    %v1406 = vpop.permute.xlu0 %1405
    %1407 = vrot.lane.b32.xlu0 %v1401, 17
    %v1408 = vpop.permute.xlu0 %1407
    %1409 = vrot.lane.b32.xlu0 %v1398, 17
    %v1410 = vpop.permute.xlu0 %1409
    %1411 = vrot.lane.b32.xlu0 %v1402, 17
    %v1412 = vpop.permute.xlu0 %1411
    %1413 = vrot.lane.b32.xlu0 %v1399, 17
    %v1414 = vpop.permute.xlu0 %1413
    %1415 = vrot.lane.b32.xlu0 %v1403, 17
    %v1416 = vpop.permute.xlu0 %1415
    %1417 = vrot.lane.b32.xlu0 %v1400, 17
    %v1418 = vpop.permute.xlu0 %1417
    %1419 = vrot.lane.b32.xlu0 %v1404, 17
    %v1420 = vpop.permute.xlu0 %1419
    %v1421 = vsel %vm159, %v1414, %v1418
    %v1422 = vsel %vm159, %v1416, %v1420
    %v1423 = vsel %vm159, %v1410, %v1414
    %v1424 = vsel %vm159, %v1412, %v1416
    %v1425 = vsel %vm159, %v1406, %v1410
    %v1426 = vsel %vm159, %v1408, %v1412
    %v1427 = vsel %vm159, %v1418, %v1406
    %v1428 = vsel %vm159, %v1420, %v1408
    %v1429 = vld [vmem:[#allocation2] sm:$0xff]
    %v1430 = vld [vmem:[#allocation2 + $0x8] sm:$0xff]
    %v1431 = vld [vmem:[#allocation2 + $0x10] sm:$0xff]
    %v1432 = vld [vmem:[#allocation2 + $0x18] sm:$0xff]
    %v1433 = vld [vmem:[#allocation2 + $0x20] sm:$0xff]
    %v1434 = vld [vmem:[#allocation2 + $0x28] sm:$0xff]
    %v1435 = vld [vmem:[#allocation2 + $0x30] sm:$0xff]
    %v1436 = vld [vmem:[#allocation2 + $0x38] sm:$0xff]
    %v1437 = vmul.f32 %v1427, %v1429
    %v1438 = vmul.f32 %v1425, %v1430
    %v1439 = vmul.f32 %v1423, %v1431
    %v1440 = vmul.f32 %v1421, %v1432
    %v1441 = vmul.f32 %v1428, %v1433
    %v1442 = vmul.f32 %v1426, %v1434
    %v1443 = vmul.f32 %v1424, %v1435
    %v1444 = vmul.f32 %v1422, %v1436
    %v1445 = vld [vmem:[%s11] sm:$0xff]
    %v1446 = vld [vmem:[%s11 + $0x8] sm:$0xff]
    %1447 = vrot.lane.b32.xlu0 %v1397, 16
    %v1448 = vpop.permute.xlu0 %1447
    %1449 = vrot.lane.b32.xlu0 %v1401, 16
    %v1450 = vpop.permute.xlu0 %1449
    %1451 = vrot.lane.b32.xlu0 %v1398, 16
    %v1452 = vpop.permute.xlu0 %1451
    %1453 = vrot.lane.b32.xlu0 %v1402, 16
    %v1454 = vpop.permute.xlu0 %1453
    %1455 = vrot.lane.b32.xlu0 %v1399, 16
    %v1456 = vpop.permute.xlu0 %1455
    %1457 = vrot.lane.b32.xlu0 %v1403, 16
    %v1458 = vpop.permute.xlu0 %1457
    %1459 = vrot.lane.b32.xlu0 %v1400, 16
    %v1460 = vpop.permute.xlu0 %1459
    %1461 = vrot.lane.b32.xlu0 %v1404, 16
    %v1462 = vpop.permute.xlu0 %1461
    %v1463 = vsel %vm182, %v1456, %v1460
    %v1464 = vsel %vm182, %v1458, %v1462
    %v1465 = vsel %vm182, %v1452, %v1456
    %v1466 = vsel %vm182, %v1454, %v1458
    %v1467 = vsel %vm182, %v1448, %v1452
    %v1468 = vsel %vm182, %v1450, %v1454
    %v1469 = vsel %vm182, %v1460, %v1448
    %v1470 = vsel %vm182, %v1462, %v1450
    %v1471 = vld [vmem:[%s187] sm:$0xff]
    %v1472 = vld [vmem:[%s187 + $0x8] sm:$0xff]
    %v1473 = vld [vmem:[%s187 + $0x10] sm:$0xff]
    %v1474 = vld [vmem:[%s187 + $0x18] sm:$0xff]
    %v1475 = vld [vmem:[%s187 + $0x20] sm:$0xff]
    %v1476 = vld [vmem:[%s187 + $0x28] sm:$0xff]
    %v1477 = vld [vmem:[%s187 + $0x30] sm:$0xff]
    %v1478 = vld [vmem:[%s187 + $0x38] sm:$0xff]
    %v1479 = vmul.f32 %v1469, %v1471
    %v1480 = vmul.f32 %v1467, %v1472
    %v1481 = vmul.f32 %v1465, %v1473
    %v1482 = vmul.f32 %v1463, %v1474
    %v1483 = vmul.f32 %v1470, %v1475
    %v1484 = vmul.f32 %v1468, %v1476
    %v1485 = vmul.f32 %v1466, %v1477
    %v1486 = vmul.f32 %v1464, %v1478
    %s1487 = scalar_lea.vmem %s11, 16
    %v1488 = vld [vmem:[%s1487] sm:$0xff]
    %v1489 = vld [vmem:[%s1487 + $0x8] sm:$0xff]
    %vm1490 = vcmask 130048
    %v1492 = vsel %vm1490, %v1488, 0
    %v1495 = vsel %vm1490, %v1489, 0
    %1497 = vmatpush.msra.mxu0 0.0
    %1498 = vmatpush.msra.mxu0 0.0
    %1499 = vmatpush.msra.mxu0 0.0
    %1500 = vmatpush.msra.mxu0 0.0
    %1501 = vmatpush.msra.mxu0 0.0
    %1502 = vmatpush.msra.mxu0 0.0
    %1503 = vmatpush.msra.mxu0 0.0
    %1504 = vmatpush.msra.mxu0 0.0
    %1505 = vmatpush.msra.mxu0 0.0
    %1506 = vmatpush.msra.mxu0 0.0
    %1507 = vmatpush.msra.mxu0 0.0
    %1508 = vmatpush.msra.mxu0 0.0
    %1509 = vmatpush.msra.mxu0 0.0
    %1510 = vmatpush.msra.mxu0 0.0
    %1511 = vmatpush.msra.mxu0 %v1483
    %1512 = vmatpush.msra.mxu0 %v1479
    %1513 = vmatmul.f32.gmra.mxu0 %v1492
    %v1514 = vpop.f32.mrf.mxu0
    %v1515 = vadd.f32 0.0, %v1514
    %1516 = vmatmul.f32.gmra.mxu0 %v1495
    %v1517 = vpop.f32.mrf.mxu0
    %v1518 = vadd.f32 0.0, %v1517
    %1519 = vdwg.mxu0
    %1520 = vmatpush.msra.mxu0 0.0
    %1521 = vmatpush.msra.mxu0 0.0
    %1522 = vmatpush.msra.mxu0 0.0
    %1523 = vmatpush.msra.mxu0 0.0
    %1524 = vmatpush.msra.mxu0 0.0
    %1525 = vmatpush.msra.mxu0 0.0
    %1526 = vmatpush.msra.mxu0 0.0
    %1527 = vmatpush.msra.mxu0 0.0
    %1528 = vmatpush.msra.mxu0 0.0
    %1529 = vmatpush.msra.mxu0 0.0
    %1530 = vmatpush.msra.mxu0 0.0
    %1531 = vmatpush.msra.mxu0 0.0
    %1532 = vmatpush.msra.mxu0 0.0
    %1533 = vmatpush.msra.mxu0 0.0
    %1534 = vmatpush.msra.mxu0 %v1484
    %1535 = vmatpush.msra.mxu0 %v1480
    %1536 = vmatmul.f32.gmra.mxu0 %v1492
    %v1537 = vpop.f32.mrf.mxu0
    %v1538 = vadd.f32 0.0, %v1537
    %1539 = vmatmul.f32.gmra.mxu0 %v1495
    %v1540 = vpop.f32.mrf.mxu0
    %v1541 = vadd.f32 0.0, %v1540
    %1542 = vdwg.mxu0
    %1543 = vmatpush.msra.mxu0 0.0
    %1544 = vmatpush.msra.mxu0 0.0
    %1545 = vmatpush.msra.mxu0 0.0
    %1546 = vmatpush.msra.mxu0 0.0
    %1547 = vmatpush.msra.mxu0 0.0
    %1548 = vmatpush.msra.mxu0 0.0
    %1549 = vmatpush.msra.mxu0 0.0
    %1550 = vmatpush.msra.mxu0 0.0
    %1551 = vmatpush.msra.mxu0 0.0
    %1552 = vmatpush.msra.mxu0 0.0
    %1553 = vmatpush.msra.mxu0 0.0
    %1554 = vmatpush.msra.mxu0 0.0
    %1555 = vmatpush.msra.mxu0 0.0
    %1556 = vmatpush.msra.mxu0 0.0
    %1557 = vmatpush.msra.mxu0 %v1485
    %1558 = vmatpush.msra.mxu0 %v1481
    %1559 = vmatmul.f32.gmra.mxu0 %v1492
    %v1560 = vpop.f32.mrf.mxu0
    %v1561 = vadd.f32 0.0, %v1560
    %1562 = vmatmul.f32.gmra.mxu0 %v1495
    %v1563 = vpop.f32.mrf.mxu0
    %v1564 = vadd.f32 0.0, %v1563
    %1565 = vdwg.mxu0
    %1566 = vmatpush.msra.mxu0 0.0
    %1567 = vmatpush.msra.mxu0 0.0
    %1568 = vmatpush.msra.mxu0 0.0
    %1569 = vmatpush.msra.mxu0 0.0
    %1570 = vmatpush.msra.mxu0 0.0
    %1571 = vmatpush.msra.mxu0 0.0
    %1572 = vmatpush.msra.mxu0 0.0
    %1573 = vmatpush.msra.mxu0 0.0
    %1574 = vmatpush.msra.mxu0 0.0
    %1575 = vmatpush.msra.mxu0 0.0
    %1576 = vmatpush.msra.mxu0 0.0
    %1577 = vmatpush.msra.mxu0 0.0
    %1578 = vmatpush.msra.mxu0 0.0
    %1579 = vmatpush.msra.mxu0 0.0
    %1580 = vmatpush.msra.mxu0 %v1486
    %1581 = vmatpush.msra.mxu0 %v1482
    %1582 = vmatmul.f32.gmra.mxu0 %v1492
    %v1583 = vpop.f32.mrf.mxu0
    %v1584 = vadd.f32 0.0, %v1583
    %1585 = vmatmul.f32.gmra.mxu0 %v1495
    %v1586 = vpop.f32.mrf.mxu0
    %v1587 = vadd.f32 0.0, %v1586
    %1588 = vdwg.mxu0
    %v1590 = vsel %vm1490, %v1445, 0
    %v1593 = vsel %vm1490, %v1446, 0
    %1595 = vmatpush.msra.mxu0 0.0
    %1596 = vmatpush.msra.mxu0 0.0
    %1597 = vmatpush.msra.mxu0 0.0
    %1598 = vmatpush.msra.mxu0 0.0
    %1599 = vmatpush.msra.mxu0 0.0
    %1600 = vmatpush.msra.mxu0 0.0
    %1601 = vmatpush.msra.mxu0 0.0
    %1602 = vmatpush.msra.mxu0 0.0
    %1603 = vmatpush.msra.mxu0 0.0
    %1604 = vmatpush.msra.mxu0 0.0
    %1605 = vmatpush.msra.mxu0 0.0
    %1606 = vmatpush.msra.mxu0 0.0
    %1607 = vmatpush.msra.mxu0 0.0
    %1608 = vmatpush.msra.mxu0 0.0
    %1609 = vmatpush.msra.mxu0 %v1441
    %1610 = vmatpush.msra.mxu0 %v1437
    %1611 = vmatmul.f32.gmra.mxu0 %v1590
    %v1612 = vpop.f32.mrf.mxu0
    %v1613 = vadd.f32 %v1515, %v1612
    %1614 = vmatmul.f32.gmra.mxu0 %v1593
    %v1615 = vpop.f32.mrf.mxu0
    %v1616 = vadd.f32 %v1518, %v1615
    %1617 = vdwg.mxu0
    %1618 = vmatpush.msra.mxu0 0.0
    %1619 = vmatpush.msra.mxu0 0.0
    %1620 = vmatpush.msra.mxu0 0.0
    %1621 = vmatpush.msra.mxu0 0.0
    %1622 = vmatpush.msra.mxu0 0.0
    %1623 = vmatpush.msra.mxu0 0.0
    %1624 = vmatpush.msra.mxu0 0.0
    %1625 = vmatpush.msra.mxu0 0.0
    %1626 = vmatpush.msra.mxu0 0.0
    %1627 = vmatpush.msra.mxu0 0.0
    %1628 = vmatpush.msra.mxu0 0.0
    %1629 = vmatpush.msra.mxu0 0.0
    %1630 = vmatpush.msra.mxu0 0.0
    %1631 = vmatpush.msra.mxu0 0.0
    %1632 = vmatpush.msra.mxu0 %v1442
    %1633 = vmatpush.msra.mxu0 %v1438
    %1634 = vmatmul.f32.gmra.mxu0 %v1590
    %v1635 = vpop.f32.mrf.mxu0
    %v1636 = vadd.f32 %v1538, %v1635
    %1637 = vmatmul.f32.gmra.mxu0 %v1593
    %v1638 = vpop.f32.mrf.mxu0
    %v1639 = vadd.f32 %v1541, %v1638
    %1640 = vdwg.mxu0
    %1641 = vmatpush.msra.mxu0 0.0
    %1642 = vmatpush.msra.mxu0 0.0
    %1643 = vmatpush.msra.mxu0 0.0
    %1644 = vmatpush.msra.mxu0 0.0
    %1645 = vmatpush.msra.mxu0 0.0
    %1646 = vmatpush.msra.mxu0 0.0
    %1647 = vmatpush.msra.mxu0 0.0
    %1648 = vmatpush.msra.mxu0 0.0
    %1649 = vmatpush.msra.mxu0 0.0
    %1650 = vmatpush.msra.mxu0 0.0
    %1651 = vmatpush.msra.mxu0 0.0
    %1652 = vmatpush.msra.mxu0 0.0
    %1653 = vmatpush.msra.mxu0 0.0
    %1654 = vmatpush.msra.mxu0 0.0
    %1655 = vmatpush.msra.mxu0 %v1443
    %1656 = vmatpush.msra.mxu0 %v1439
    %1657 = vmatmul.f32.gmra.mxu0 %v1590
    %v1658 = vpop.f32.mrf.mxu0
    %v1659 = vadd.f32 %v1561, %v1658
    %1660 = vmatmul.f32.gmra.mxu0 %v1593
    %v1661 = vpop.f32.mrf.mxu0
    %v1662 = vadd.f32 %v1564, %v1661
    %1663 = vdwg.mxu0
    %1664 = vmatpush.msra.mxu0 0.0
    %1665 = vmatpush.msra.mxu0 0.0
    %1666 = vmatpush.msra.mxu0 0.0
    %1667 = vmatpush.msra.mxu0 0.0
    %1668 = vmatpush.msra.mxu0 0.0
    %1669 = vmatpush.msra.mxu0 0.0
    %1670 = vmatpush.msra.mxu0 0.0
    %1671 = vmatpush.msra.mxu0 0.0
    %1672 = vmatpush.msra.mxu0 0.0
    %1673 = vmatpush.msra.mxu0 0.0
    %1674 = vmatpush.msra.mxu0 0.0
    %1675 = vmatpush.msra.mxu0 0.0
    %1676 = vmatpush.msra.mxu0 0.0
    %1677 = vmatpush.msra.mxu0 0.0
    %1678 = vmatpush.msra.mxu0 %v1444
    %1679 = vmatpush.msra.mxu0 %v1440
    %1680 = vmatmul.f32.gmra.mxu0 %v1590
    %v1681 = vpop.f32.mrf.mxu0
    %v1682 = vadd.f32 %v1584, %v1681
    %1683 = vmatmul.f32.gmra.mxu0 %v1593
    %v1684 = vpop.f32.mrf.mxu0
    %v1685 = vadd.f32 %v1587, %v1684
    %1686 = vdwg.mxu0
    %1687 = vrot.lane.b32.xlu0 %v1397, 15
    %v1688 = vpop.permute.xlu0 %1687
    %1689 = vrot.lane.b32.xlu0 %v1401, 15
    %v1690 = vpop.permute.xlu0 %1689
    %1691 = vrot.lane.b32.xlu0 %v1398, 15
    %v1692 = vpop.permute.xlu0 %1691
    %1693 = vrot.lane.b32.xlu0 %v1402, 15
    %v1694 = vpop.permute.xlu0 %1693
    %1695 = vrot.lane.b32.xlu0 %v1399, 15
    %v1696 = vpop.permute.xlu0 %1695
    %1697 = vrot.lane.b32.xlu0 %v1403, 15
    %v1698 = vpop.permute.xlu0 %1697
    %1699 = vrot.lane.b32.xlu0 %v1400, 15
    %v1700 = vpop.permute.xlu0 %1699
    %1701 = vrot.lane.b32.xlu0 %v1404, 15
    %v1702 = vpop.permute.xlu0 %1701
    %v1703 = vsel %vm404, %v1696, %v1700
    %v1704 = vsel %vm404, %v1698, %v1702
    %v1705 = vsel %vm404, %v1692, %v1696
    %v1706 = vsel %vm404, %v1694, %v1698
    %v1707 = vsel %vm404, %v1688, %v1692
    %v1708 = vsel %vm404, %v1690, %v1694
    %v1709 = vsel %vm404, %v1700, %v1688
    %v1710 = vsel %vm404, %v1702, %v1690
    %v1711 = vld [vmem:[%s409] sm:$0xff]
    %v1712 = vld [vmem:[%s409 + $0x8] sm:$0xff]
    %v1713 = vld [vmem:[%s409 + $0x10] sm:$0xff]
    %v1714 = vld [vmem:[%s409 + $0x18] sm:$0xff]
    %v1715 = vld [vmem:[%s409 + $0x20] sm:$0xff]
    %v1716 = vld [vmem:[%s409 + $0x28] sm:$0xff]
    %v1717 = vld [vmem:[%s409 + $0x30] sm:$0xff]
    %v1718 = vld [vmem:[%s409 + $0x38] sm:$0xff]
    %v1719 = vmul.f32 %v1709, %v1711
    %v1720 = vmul.f32 %v1707, %v1712
    %v1721 = vmul.f32 %v1705, %v1713
    %v1722 = vmul.f32 %v1703, %v1714
    %v1723 = vmul.f32 %v1710, %v1715
    %v1724 = vmul.f32 %v1708, %v1716
    %v1725 = vmul.f32 %v1706, %v1717
    %v1726 = vmul.f32 %v1704, %v1718
    %s1727 = scalar_lea.vmem %s11, 32
    %v1728 = vld [vmem:[%s1727] sm:$0xff]
    %v1729 = vld [vmem:[%s1727 + $0x8] sm:$0xff]
    %v1731 = vsel %vm1490, %v1728, 0
    %v1734 = vsel %vm1490, %v1729, 0
    %1736 = vmatpush.msra.mxu0 0.0
    %1737 = vmatpush.msra.mxu0 0.0
    %1738 = vmatpush.msra.mxu0 0.0
    %1739 = vmatpush.msra.mxu0 0.0
    %1740 = vmatpush.msra.mxu0 0.0
    %1741 = vmatpush.msra.mxu0 0.0
    %1742 = vmatpush.msra.mxu0 0.0
    %1743 = vmatpush.msra.mxu0 0.0
    %1744 = vmatpush.msra.mxu0 0.0
    %1745 = vmatpush.msra.mxu0 0.0
    %1746 = vmatpush.msra.mxu0 0.0
    %1747 = vmatpush.msra.mxu0 0.0
    %1748 = vmatpush.msra.mxu0 0.0
    %1749 = vmatpush.msra.mxu0 0.0
    %1750 = vmatpush.msra.mxu0 %v1723
    %1751 = vmatpush.msra.mxu0 %v1719
    %1752 = vmatmul.f32.gmra.mxu0 %v1731
    %v1753 = vpop.f32.mrf.mxu0
    %v1754 = vadd.f32 0.0, %v1753
    %1755 = vmatmul.f32.gmra.mxu0 %v1734
    %v1756 = vpop.f32.mrf.mxu0
    %v1757 = vadd.f32 0.0, %v1756
    %1758 = vdwg.mxu0
    %1759 = vmatpush.msra.mxu0 0.0
    %1760 = vmatpush.msra.mxu0 0.0
    %1761 = vmatpush.msra.mxu0 0.0
    %1762 = vmatpush.msra.mxu0 0.0
    %1763 = vmatpush.msra.mxu0 0.0
    %1764 = vmatpush.msra.mxu0 0.0
    %1765 = vmatpush.msra.mxu0 0.0
    %1766 = vmatpush.msra.mxu0 0.0
    %1767 = vmatpush.msra.mxu0 0.0
    %1768 = vmatpush.msra.mxu0 0.0
    %1769 = vmatpush.msra.mxu0 0.0
    %1770 = vmatpush.msra.mxu0 0.0
    %1771 = vmatpush.msra.mxu0 0.0
    %1772 = vmatpush.msra.mxu0 0.0
    %1773 = vmatpush.msra.mxu0 %v1724
    %1774 = vmatpush.msra.mxu0 %v1720
    %1775 = vmatmul.f32.gmra.mxu0 %v1731
    %v1776 = vpop.f32.mrf.mxu0
    %v1777 = vadd.f32 0.0, %v1776
    %1778 = vmatmul.f32.gmra.mxu0 %v1734
    %v1779 = vpop.f32.mrf.mxu0
    %v1780 = vadd.f32 0.0, %v1779
    %1781 = vdwg.mxu0
    %1782 = vmatpush.msra.mxu0 0.0
    %1783 = vmatpush.msra.mxu0 0.0
    %1784 = vmatpush.msra.mxu0 0.0
    %1785 = vmatpush.msra.mxu0 0.0
    %1786 = vmatpush.msra.mxu0 0.0
    %1787 = vmatpush.msra.mxu0 0.0
    %1788 = vmatpush.msra.mxu0 0.0
    %1789 = vmatpush.msra.mxu0 0.0
    %1790 = vmatpush.msra.mxu0 0.0
    %1791 = vmatpush.msra.mxu0 0.0
    %1792 = vmatpush.msra.mxu0 0.0
    %1793 = vmatpush.msra.mxu0 0.0
    %1794 = vmatpush.msra.mxu0 0.0
    %1795 = vmatpush.msra.mxu0 0.0
    %1796 = vmatpush.msra.mxu0 %v1725
    %1797 = vmatpush.msra.mxu0 %v1721
    %1798 = vmatmul.f32.gmra.mxu0 %v1731
    %v1799 = vpop.f32.mrf.mxu0
    %v1800 = vadd.f32 0.0, %v1799
    %1801 = vmatmul.f32.gmra.mxu0 %v1734
    %v1802 = vpop.f32.mrf.mxu0
    %v1803 = vadd.f32 0.0, %v1802
    %1804 = vdwg.mxu0
    %1805 = vmatpush.msra.mxu0 0.0
    %1806 = vmatpush.msra.mxu0 0.0
    %1807 = vmatpush.msra.mxu0 0.0
    %1808 = vmatpush.msra.mxu0 0.0
    %1809 = vmatpush.msra.mxu0 0.0
    %1810 = vmatpush.msra.mxu0 0.0
    %1811 = vmatpush.msra.mxu0 0.0
    %1812 = vmatpush.msra.mxu0 0.0
    %1813 = vmatpush.msra.mxu0 0.0
    %1814 = vmatpush.msra.mxu0 0.0
    %1815 = vmatpush.msra.mxu0 0.0
    %1816 = vmatpush.msra.mxu0 0.0
    %1817 = vmatpush.msra.mxu0 0.0
    %1818 = vmatpush.msra.mxu0 0.0
    %1819 = vmatpush.msra.mxu0 %v1726
    %1820 = vmatpush.msra.mxu0 %v1722
    %1821 = vmatmul.f32.gmra.mxu0 %v1731
    %v1822 = vpop.f32.mrf.mxu0
    %v1823 = vadd.f32 0.0, %v1822
    %1824 = vmatmul.f32.gmra.mxu0 %v1734
    %v1825 = vpop.f32.mrf.mxu0
    %v1826 = vadd.f32 0.0, %v1825
    %1827 = vdwg.mxu0
    %v1828 = vadd.f32 %v1613, %v1754
    %v1829 = vadd.f32 %v1636, %v1777
    %v1830 = vadd.f32 %v1659, %v1800
    %v1831 = vadd.f32 %v1682, %v1823
    %v1832 = vadd.f32 %v1616, %v1757
    %v1833 = vadd.f32 %v1639, %v1780
    %v1834 = vadd.f32 %v1662, %v1803
    %v1835 = vadd.f32 %v1685, %v1826
    %1836 = vrot.lane.b32.xlu0 %v1397, 1
    %v1837 = vpop.permute.xlu0 %1836
    %1838 = vrot.lane.b32.xlu0 %v1401, 1
    %v1839 = vpop.permute.xlu0 %1838
    %1840 = vrot.lane.b32.xlu0 %v1398, 1
    %v1841 = vpop.permute.xlu0 %1840
    %1842 = vrot.lane.b32.xlu0 %v1402, 1
    %v1843 = vpop.permute.xlu0 %1842
    %1844 = vrot.lane.b32.xlu0 %v1399, 1
    %v1845 = vpop.permute.xlu0 %1844
    %1846 = vrot.lane.b32.xlu0 %v1403, 1
    %v1847 = vpop.permute.xlu0 %1846
    %1848 = vrot.lane.b32.xlu0 %v1400, 1
    %v1849 = vpop.permute.xlu0 %1848
    %1850 = vrot.lane.b32.xlu0 %v1404, 1
    %v1851 = vpop.permute.xlu0 %1850
    %v1852 = vsel %vm535, %v1845, %v1849
    %v1853 = vsel %vm535, %v1847, %v1851
    %v1854 = vsel %vm535, %v1841, %v1845
    %v1855 = vsel %vm535, %v1843, %v1847
    %v1856 = vsel %vm535, %v1837, %v1841
    %v1857 = vsel %vm535, %v1839, %v1843
    %v1858 = vsel %vm535, %v1849, %v1837
    %v1859 = vsel %vm535, %v1851, %v1839
    %v1860 = vld [vmem:[%s540] sm:$0xff]
    %v1861 = vld [vmem:[%s540 + $0x8] sm:$0xff]
    %v1862 = vld [vmem:[%s540 + $0x10] sm:$0xff]
    %v1863 = vld [vmem:[%s540 + $0x18] sm:$0xff]
    %v1864 = vld [vmem:[%s540 + $0x20] sm:$0xff]
    %v1865 = vld [vmem:[%s540 + $0x28] sm:$0xff]
    %v1866 = vld [vmem:[%s540 + $0x30] sm:$0xff]
    %v1867 = vld [vmem:[%s540 + $0x38] sm:$0xff]
    %v1868 = vmul.f32 %v1858, %v1860
    %v1869 = vmul.f32 %v1856, %v1861
    %v1870 = vmul.f32 %v1854, %v1862
    %v1871 = vmul.f32 %v1852, %v1863
    %v1872 = vmul.f32 %v1859, %v1864
    %v1873 = vmul.f32 %v1857, %v1865
    %v1874 = vmul.f32 %v1855, %v1866
    %v1875 = vmul.f32 %v1853, %v1867
    %s1876 = scalar_lea.vmem %s11, 48
    %v1877 = vld [vmem:[%s1876] sm:$0xff]
    %v1878 = vld [vmem:[%s1876 + $0x8] sm:$0xff]
    %v1880 = vsel %vm1490, %v1877, 0
    %v1883 = vsel %vm1490, %v1878, 0
    %1885 = vmatpush.msra.mxu0 0.0
    %1886 = vmatpush.msra.mxu0 0.0
    %1887 = vmatpush.msra.mxu0 0.0
    %1888 = vmatpush.msra.mxu0 0.0
    %1889 = vmatpush.msra.mxu0 0.0
    %1890 = vmatpush.msra.mxu0 0.0
    %1891 = vmatpush.msra.mxu0 0.0
    %1892 = vmatpush.msra.mxu0 0.0
    %1893 = vmatpush.msra.mxu0 0.0
    %1894 = vmatpush.msra.mxu0 0.0
    %1895 = vmatpush.msra.mxu0 0.0
    %1896 = vmatpush.msra.mxu0 0.0
    %1897 = vmatpush.msra.mxu0 0.0
    %1898 = vmatpush.msra.mxu0 0.0
    %1899 = vmatpush.msra.mxu0 %v1872
    %1900 = vmatpush.msra.mxu0 %v1868
    %1901 = vmatmul.f32.gmra.mxu0 %v1880
    %v1902 = vpop.f32.mrf.mxu0
    %v1903 = vadd.f32 0.0, %v1902
    %1904 = vmatmul.f32.gmra.mxu0 %v1883
    %v1905 = vpop.f32.mrf.mxu0
    %v1906 = vadd.f32 0.0, %v1905
    %1907 = vdwg.mxu0
    %1908 = vmatpush.msra.mxu0 0.0
    %1909 = vmatpush.msra.mxu0 0.0
    %1910 = vmatpush.msra.mxu0 0.0
    %1911 = vmatpush.msra.mxu0 0.0
    %1912 = vmatpush.msra.mxu0 0.0
    %1913 = vmatpush.msra.mxu0 0.0
    %1914 = vmatpush.msra.mxu0 0.0
    %1915 = vmatpush.msra.mxu0 0.0
    %1916 = vmatpush.msra.mxu0 0.0
    %1917 = vmatpush.msra.mxu0 0.0
    %1918 = vmatpush.msra.mxu0 0.0
    %1919 = vmatpush.msra.mxu0 0.0
    %1920 = vmatpush.msra.mxu0 0.0
    %1921 = vmatpush.msra.mxu0 0.0
    %1922 = vmatpush.msra.mxu0 %v1873
    %1923 = vmatpush.msra.mxu0 %v1869
    %1924 = vmatmul.f32.gmra.mxu0 %v1880
    %v1925 = vpop.f32.mrf.mxu0
    %v1926 = vadd.f32 0.0, %v1925
    %1927 = vmatmul.f32.gmra.mxu0 %v1883
    %v1928 = vpop.f32.mrf.mxu0
    %v1929 = vadd.f32 0.0, %v1928
    %1930 = vdwg.mxu0
    %1931 = vmatpush.msra.mxu0 0.0
    %1932 = vmatpush.msra.mxu0 0.0
    %1933 = vmatpush.msra.mxu0 0.0
    %1934 = vmatpush.msra.mxu0 0.0
    %1935 = vmatpush.msra.mxu0 0.0
    %1936 = vmatpush.msra.mxu0 0.0
    %1937 = vmatpush.msra.mxu0 0.0
    %1938 = vmatpush.msra.mxu0 0.0
    %1939 = vmatpush.msra.mxu0 0.0
    %1940 = vmatpush.msra.mxu0 0.0
    %1941 = vmatpush.msra.mxu0 0.0
    %1942 = vmatpush.msra.mxu0 0.0
    %1943 = vmatpush.msra.mxu0 0.0
    %1944 = vmatpush.msra.mxu0 0.0
    %1945 = vmatpush.msra.mxu0 %v1874
    %1946 = vmatpush.msra.mxu0 %v1870
    %1947 = vmatmul.f32.gmra.mxu0 %v1880
    %v1948 = vpop.f32.mrf.mxu0
    %v1949 = vadd.f32 0.0, %v1948
    %1950 = vmatmul.f32.gmra.mxu0 %v1883
    %v1951 = vpop.f32.mrf.mxu0
    %v1952 = vadd.f32 0.0, %v1951
    %1953 = vdwg.mxu0
    %1954 = vmatpush.msra.mxu0 0.0
    %1955 = vmatpush.msra.mxu0 0.0
    %1956 = vmatpush.msra.mxu0 0.0
    %1957 = vmatpush.msra.mxu0 0.0
    %1958 = vmatpush.msra.mxu0 0.0
    %1959 = vmatpush.msra.mxu0 0.0
    %1960 = vmatpush.msra.mxu0 0.0
    %1961 = vmatpush.msra.mxu0 0.0
    %1962 = vmatpush.msra.mxu0 0.0
    %1963 = vmatpush.msra.mxu0 0.0
    %1964 = vmatpush.msra.mxu0 0.0
    %1965 = vmatpush.msra.mxu0 0.0
    %1966 = vmatpush.msra.mxu0 0.0
    %1967 = vmatpush.msra.mxu0 0.0
    %1968 = vmatpush.msra.mxu0 %v1875
    %1969 = vmatpush.msra.mxu0 %v1871
    %1970 = vmatmul.f32.gmra.mxu0 %v1880
    %v1971 = vpop.f32.mrf.mxu0
    %v1972 = vadd.f32 0.0, %v1971
    %1973 = vmatmul.f32.gmra.mxu0 %v1883
    %v1974 = vpop.f32.mrf.mxu0
    %v1975 = vadd.f32 0.0, %v1974
    %1976 = vdwg.mxu0
    %v1977 = vadd.f32 %v1828, %v1903
    %v1978 = vadd.f32 %v1829, %v1926
    %v1979 = vadd.f32 %v1830, %v1949
    %v1980 = vadd.f32 %v1831, %v1972
    %v1981 = vadd.f32 %v1832, %v1906
    %v1982 = vadd.f32 %v1833, %v1929
    %v1983 = vadd.f32 %v1834, %v1952
    %v1984 = vadd.f32 %v1835, %v1975
    %s1985 = scalar_lea.vmem %s11, 64
    %v1986 = vld [vmem:[%s1985] sm:$0xff]
    %v1987 = vld [vmem:[%s1985 + $0x8] sm:$0xff]
    %v1989 = vsel %vm1490, %v1986, 0
    %v1992 = vsel %vm1490, %v1987, 0
    %1994 = vmatpush.msra.mxu0 0.0
    %1995 = vmatpush.msra.mxu0 0.0
    %1996 = vmatpush.msra.mxu0 0.0
    %1997 = vmatpush.msra.mxu0 0.0
    %1998 = vmatpush.msra.mxu0 0.0
    %1999 = vmatpush.msra.mxu0 0.0
    %2000 = vmatpush.msra.mxu0 0.0
    %2001 = vmatpush.msra.mxu0 0.0
    %2002 = vmatpush.msra.mxu0 0.0
    %2003 = vmatpush.msra.mxu0 0.0
    %2004 = vmatpush.msra.mxu0 0.0
    %2005 = vmatpush.msra.mxu0 0.0
    %2006 = vmatpush.msra.mxu0 0.0
    %2007 = vmatpush.msra.mxu0 0.0
    %2008 = vmatpush.msra.mxu0 %v1401
    %2009 = vmatpush.msra.mxu0 %v1397
    %2010 = vmatmul.f32.gmra.mxu0 %v1989
    %v2011 = vpop.f32.mrf.mxu0
    %v2012 = vadd.f32 0.0, %v2011
    %2013 = vmatmul.f32.gmra.mxu0 %v1992
    %v2014 = vpop.f32.mrf.mxu0
    %v2015 = vadd.f32 0.0, %v2014
    %2016 = vdwg.mxu0
    %2017 = vmatpush.msra.mxu0 0.0
    %2018 = vmatpush.msra.mxu0 0.0
    %2019 = vmatpush.msra.mxu0 0.0
    %2020 = vmatpush.msra.mxu0 0.0
    %2021 = vmatpush.msra.mxu0 0.0
    %2022 = vmatpush.msra.mxu0 0.0
    %2023 = vmatpush.msra.mxu0 0.0
    %2024 = vmatpush.msra.mxu0 0.0
    %2025 = vmatpush.msra.mxu0 0.0
    %2026 = vmatpush.msra.mxu0 0.0
    %2027 = vmatpush.msra.mxu0 0.0
    %2028 = vmatpush.msra.mxu0 0.0
    %2029 = vmatpush.msra.mxu0 0.0
    %2030 = vmatpush.msra.mxu0 0.0
    %2031 = vmatpush.msra.mxu0 %v1402
    %2032 = vmatpush.msra.mxu0 %v1398
    %2033 = vmatmul.f32.gmra.mxu0 %v1989
    %v2034 = vpop.f32.mrf.mxu0
    %v2035 = vadd.f32 0.0, %v2034
    %2036 = vmatmul.f32.gmra.mxu0 %v1992
    %v2037 = vpop.f32.mrf.mxu0
    %v2038 = vadd.f32 0.0, %v2037
    %2039 = vdwg.mxu0
    %2040 = vmatpush.msra.mxu0 0.0
    %2041 = vmatpush.msra.mxu0 0.0
    %2042 = vmatpush.msra.mxu0 0.0
    %2043 = vmatpush.msra.mxu0 0.0
    %2044 = vmatpush.msra.mxu0 0.0
    %2045 = vmatpush.msra.mxu0 0.0
    %2046 = vmatpush.msra.mxu0 0.0
    %2047 = vmatpush.msra.mxu0 0.0
    %2048 = vmatpush.msra.mxu0 0.0
    %2049 = vmatpush.msra.mxu0 0.0
    %2050 = vmatpush.msra.mxu0 0.0
    %2051 = vmatpush.msra.mxu0 0.0
    %2052 = vmatpush.msra.mxu0 0.0
    %2053 = vmatpush.msra.mxu0 0.0
    %2054 = vmatpush.msra.mxu0 %v1403
    %2055 = vmatpush.msra.mxu0 %v1399
    %2056 = vmatmul.f32.gmra.mxu0 %v1989
    %v2057 = vpop.f32.mrf.mxu0
    %v2058 = vadd.f32 0.0, %v2057
    %2059 = vmatmul.f32.gmra.mxu0 %v1992
    %v2060 = vpop.f32.mrf.mxu0
    %v2061 = vadd.f32 0.0, %v2060
    %2062 = vdwg.mxu0
    %2063 = vmatpush.msra.mxu0 0.0
    %2064 = vmatpush.msra.mxu0 0.0
    %2065 = vmatpush.msra.mxu0 0.0
    %2066 = vmatpush.msra.mxu0 0.0
    %2067 = vmatpush.msra.mxu0 0.0
    %2068 = vmatpush.msra.mxu0 0.0
    %2069 = vmatpush.msra.mxu0 0.0
    %2070 = vmatpush.msra.mxu0 0.0
    %2071 = vmatpush.msra.mxu0 0.0
    %2072 = vmatpush.msra.mxu0 0.0
    %2073 = vmatpush.msra.mxu0 0.0
    %2074 = vmatpush.msra.mxu0 0.0
    %2075 = vmatpush.msra.mxu0 0.0
    %2076 = vmatpush.msra.mxu0 0.0
    %2077 = vmatpush.msra.mxu0 %v1404
    %2078 = vmatpush.msra.mxu0 %v1400
    %2079 = vmatmul.f32.gmra.mxu0 %v1989
    %v2080 = vpop.f32.mrf.mxu0
    %v2081 = vadd.f32 0.0, %v2080
    %2082 = vmatmul.f32.gmra.mxu0 %v1992
    %v2083 = vpop.f32.mrf.mxu0
    %v2084 = vadd.f32 0.0, %v2083
    %2085 = vdwg.mxu0
    %v2086 = vadd.f32 %v1977, %v2012
    %v2087 = vadd.f32 %v1978, %v2035
    %v2088 = vadd.f32 %v1979, %v2058
    %v2089 = vadd.f32 %v1980, %v2081
    %v2090 = vadd.f32 %v1981, %v2015
    %v2091 = vadd.f32 %v1982, %v2038
    %v2092 = vadd.f32 %v1983, %v2061
    %v2093 = vadd.f32 %v1984, %v2084
    %2094 = vrot.lane.b32.xlu0 %v1397, 127
    %v2095 = vpop.permute.xlu0 %2094
    %2096 = vrot.lane.b32.xlu0 %v1401, 127
    %v2097 = vpop.permute.xlu0 %2096
    %2098 = vrot.lane.b32.xlu0 %v1398, 127
    %v2099 = vpop.permute.xlu0 %2098
    %2100 = vrot.lane.b32.xlu0 %v1402, 127
    %v2101 = vpop.permute.xlu0 %2100
    %2102 = vrot.lane.b32.xlu0 %v1399, 127
    %v2103 = vpop.permute.xlu0 %2102
    %2104 = vrot.lane.b32.xlu0 %v1403, 127
    %v2105 = vpop.permute.xlu0 %2104
    %2106 = vrot.lane.b32.xlu0 %v1400, 127
    %v2107 = vpop.permute.xlu0 %2106
    %2108 = vrot.lane.b32.xlu0 %v1404, 127
    %v2109 = vpop.permute.xlu0 %2108
    %v2110 = vsel %vm775, %v2103, %v2107
    %v2111 = vsel %vm775, %v2105, %v2109
    %v2112 = vsel %vm775, %v2099, %v2103
    %v2113 = vsel %vm775, %v2101, %v2105
    %v2114 = vsel %vm775, %v2095, %v2099
    %v2115 = vsel %vm775, %v2097, %v2101
    %v2116 = vsel %vm775, %v2107, %v2095
    %v2117 = vsel %vm775, %v2109, %v2097
    %v2118 = vld [vmem:[%s780] sm:$0xff]
    %v2119 = vld [vmem:[%s780 + $0x8] sm:$0xff]
    %v2120 = vld [vmem:[%s780 + $0x10] sm:$0xff]
    %v2121 = vld [vmem:[%s780 + $0x18] sm:$0xff]
    %v2122 = vld [vmem:[%s780 + $0x20] sm:$0xff]
    %v2123 = vld [vmem:[%s780 + $0x28] sm:$0xff]
    %v2124 = vld [vmem:[%s780 + $0x30] sm:$0xff]
    %v2125 = vld [vmem:[%s780 + $0x38] sm:$0xff]
    %v2126 = vmul.f32 %v2114, %v2118
    %v2127 = vmul.f32 %v2112, %v2119
    %v2128 = vmul.f32 %v2110, %v2120
    %v2129 = vmul.f32 %v2116, %v2121
    %v2130 = vmul.f32 %v2115, %v2122
    %v2131 = vmul.f32 %v2113, %v2123
    %v2132 = vmul.f32 %v2111, %v2124
    %v2133 = vmul.f32 %v2117, %v2125
    %s2134 = scalar_lea.vmem %s11, 80
    %v2135 = vld [vmem:[%s2134] sm:$0xff]
    %v2136 = vld [vmem:[%s2134 + $0x8] sm:$0xff]
    %v2138 = vsel %vm1490, %v2135, 0
    %v2141 = vsel %vm1490, %v2136, 0
    %2143 = vmatpush.msra.mxu0 0.0
    %2144 = vmatpush.msra.mxu0 0.0
    %2145 = vmatpush.msra.mxu0 0.0
    %2146 = vmatpush.msra.mxu0 0.0
    %2147 = vmatpush.msra.mxu0 0.0
    %2148 = vmatpush.msra.mxu0 0.0
    %2149 = vmatpush.msra.mxu0 0.0
    %2150 = vmatpush.msra.mxu0 0.0
    %2151 = vmatpush.msra.mxu0 0.0
    %2152 = vmatpush.msra.mxu0 0.0
    %2153 = vmatpush.msra.mxu0 0.0
    %2154 = vmatpush.msra.mxu0 0.0
    %2155 = vmatpush.msra.mxu0 0.0
    %2156 = vmatpush.msra.mxu0 0.0
    %2157 = vmatpush.msra.mxu0 %v2130
    %2158 = vmatpush.msra.mxu0 %v2126
    %2159 = vmatmul.f32.gmra.mxu0 %v2138
    %v2160 = vpop.f32.mrf.mxu0
    %v2161 = vadd.f32 0.0, %v2160
    %2162 = vmatmul.f32.gmra.mxu0 %v2141
    %v2163 = vpop.f32.mrf.mxu0
    %v2164 = vadd.f32 0.0, %v2163
    %2165 = vdwg.mxu0
    %2166 = vmatpush.msra.mxu0 0.0
    %2167 = vmatpush.msra.mxu0 0.0
    %2168 = vmatpush.msra.mxu0 0.0
    %2169 = vmatpush.msra.mxu0 0.0
    %2170 = vmatpush.msra.mxu0 0.0
    %2171 = vmatpush.msra.mxu0 0.0
    %2172 = vmatpush.msra.mxu0 0.0
    %2173 = vmatpush.msra.mxu0 0.0
    %2174 = vmatpush.msra.mxu0 0.0
    %2175 = vmatpush.msra.mxu0 0.0
    %2176 = vmatpush.msra.mxu0 0.0
    %2177 = vmatpush.msra.mxu0 0.0
    %2178 = vmatpush.msra.mxu0 0.0
    %2179 = vmatpush.msra.mxu0 0.0
    %2180 = vmatpush.msra.mxu0 %v2131
    %2181 = vmatpush.msra.mxu0 %v2127
    %2182 = vmatmul.f32.gmra.mxu0 %v2138
    %v2183 = vpop.f32.mrf.mxu0
    %v2184 = vadd.f32 0.0, %v2183
    %2185 = vmatmul.f32.gmra.mxu0 %v2141
    %v2186 = vpop.f32.mrf.mxu0
    %v2187 = vadd.f32 0.0, %v2186
    %2188 = vdwg.mxu0
    %2189 = vmatpush.msra.mxu0 0.0
    %2190 = vmatpush.msra.mxu0 0.0
    %2191 = vmatpush.msra.mxu0 0.0
    %2192 = vmatpush.msra.mxu0 0.0
    %2193 = vmatpush.msra.mxu0 0.0
    %2194 = vmatpush.msra.mxu0 0.0
    %2195 = vmatpush.msra.mxu0 0.0
    %2196 = vmatpush.msra.mxu0 0.0
    %2197 = vmatpush.msra.mxu0 0.0
    %2198 = vmatpush.msra.mxu0 0.0
    %2199 = vmatpush.msra.mxu0 0.0
    %2200 = vmatpush.msra.mxu0 0.0
    %2201 = vmatpush.msra.mxu0 0.0
    %2202 = vmatpush.msra.mxu0 0.0
    %2203 = vmatpush.msra.mxu0 %v2132
    %2204 = vmatpush.msra.mxu0 %v2128
    %2205 = vmatmul.f32.gmra.mxu0 %v2138
    %v2206 = vpop.f32.mrf.mxu0
    %v2207 = vadd.f32 0.0, %v2206
    %2208 = vmatmul.f32.gmra.mxu0 %v2141
    %v2209 = vpop.f32.mrf.mxu0
    %v2210 = vadd.f32 0.0, %v2209
    %2211 = vdwg.mxu0
    %2212 = vmatpush.msra.mxu0 0.0
    %2213 = vmatpush.msra.mxu0 0.0
    %2214 = vmatpush.msra.mxu0 0.0
    %2215 = vmatpush.msra.mxu0 0.0
    %2216 = vmatpush.msra.mxu0 0.0
    %2217 = vmatpush.msra.mxu0 0.0
    %2218 = vmatpush.msra.mxu0 0.0
    %2219 = vmatpush.msra.mxu0 0.0
    %2220 = vmatpush.msra.mxu0 0.0
    %2221 = vmatpush.msra.mxu0 0.0
    %2222 = vmatpush.msra.mxu0 0.0
    %2223 = vmatpush.msra.mxu0 0.0
    %2224 = vmatpush.msra.mxu0 0.0
    %2225 = vmatpush.msra.mxu0 0.0
    %2226 = vmatpush.msra.mxu0 %v2133
    %2227 = vmatpush.msra.mxu0 %v2129
    %2228 = vmatmul.f32.gmra.mxu0 %v2138
    %v2229 = vpop.f32.mrf.mxu0
    %v2230 = vadd.f32 0.0, %v2229
    %2231 = vmatmul.f32.gmra.mxu0 %v2141
    %v2232 = vpop.f32.mrf.mxu0
    %v2233 = vadd.f32 0.0, %v2232
    %2234 = vdwg.mxu0
    %v2235 = vadd.f32 %v2086, %v2161
    %v2236 = vadd.f32 %v2087, %v2184
    %v2237 = vadd.f32 %v2088, %v2207
    %v2238 = vadd.f32 %v2089, %v2230
    %v2239 = vadd.f32 %v2090, %v2164
    %v2240 = vadd.f32 %v2091, %v2187
    %v2241 = vadd.f32 %v2092, %v2210
    %v2242 = vadd.f32 %v2093, %v2233
    %2243 = vrot.lane.b32.xlu0 %v1397, 113
    %v2244 = vpop.permute.xlu0 %2243
    %2245 = vrot.lane.b32.xlu0 %v1401, 113
    %v2246 = vpop.permute.xlu0 %2245
    %2247 = vrot.lane.b32.xlu0 %v1398, 113
    %v2248 = vpop.permute.xlu0 %2247
    %2249 = vrot.lane.b32.xlu0 %v1402, 113
    %v2250 = vpop.permute.xlu0 %2249
    %2251 = vrot.lane.b32.xlu0 %v1399, 113
    %v2252 = vpop.permute.xlu0 %2251
    %2253 = vrot.lane.b32.xlu0 %v1403, 113
    %v2254 = vpop.permute.xlu0 %2253
    %2255 = vrot.lane.b32.xlu0 %v1400, 113
    %v2256 = vpop.permute.xlu0 %2255
    %2257 = vrot.lane.b32.xlu0 %v1404, 113
    %v2258 = vpop.permute.xlu0 %2257
    %v2259 = vsel %vm906, %v2252, %v2256
    %v2260 = vsel %vm906, %v2254, %v2258
    %v2261 = vsel %vm906, %v2248, %v2252
    %v2262 = vsel %vm906, %v2250, %v2254
    %v2263 = vsel %vm906, %v2244, %v2248
    %v2264 = vsel %vm906, %v2246, %v2250
    %v2265 = vsel %vm906, %v2256, %v2244
    %v2266 = vsel %vm906, %v2258, %v2246
    %v2267 = vld [vmem:[%s911] sm:$0xff]
    %v2268 = vld [vmem:[%s911 + $0x8] sm:$0xff]
    %v2269 = vld [vmem:[%s911 + $0x10] sm:$0xff]
    %v2270 = vld [vmem:[%s911 + $0x18] sm:$0xff]
    %v2271 = vld [vmem:[%s911 + $0x20] sm:$0xff]
    %v2272 = vld [vmem:[%s911 + $0x28] sm:$0xff]
    %v2273 = vld [vmem:[%s911 + $0x30] sm:$0xff]
    %v2274 = vld [vmem:[%s911 + $0x38] sm:$0xff]
    %v2275 = vmul.f32 %v2263, %v2267
    %v2276 = vmul.f32 %v2261, %v2268
    %v2277 = vmul.f32 %v2259, %v2269
    %v2278 = vmul.f32 %v2265, %v2270
    %v2279 = vmul.f32 %v2264, %v2271
    %v2280 = vmul.f32 %v2262, %v2272
    %v2281 = vmul.f32 %v2260, %v2273
    %v2282 = vmul.f32 %v2266, %v2274
    %s2283 = scalar_lea.vmem %s11, 96
    %v2284 = vld [vmem:[%s2283] sm:$0xff]
    %v2285 = vld [vmem:[%s2283 + $0x8] sm:$0xff]
    %v2287 = vsel %vm1490, %v2284, 0
    %v2290 = vsel %vm1490, %v2285, 0
    %2292 = vmatpush.msra.mxu0 0.0
    %2293 = vmatpush.msra.mxu0 0.0
    %2294 = vmatpush.msra.mxu0 0.0
    %2295 = vmatpush.msra.mxu0 0.0
    %2296 = vmatpush.msra.mxu0 0.0
    %2297 = vmatpush.msra.mxu0 0.0
    %2298 = vmatpush.msra.mxu0 0.0
    %2299 = vmatpush.msra.mxu0 0.0
    %2300 = vmatpush.msra.mxu0 0.0
    %2301 = vmatpush.msra.mxu0 0.0
    %2302 = vmatpush.msra.mxu0 0.0
    %2303 = vmatpush.msra.mxu0 0.0
    %2304 = vmatpush.msra.mxu0 0.0
    %2305 = vmatpush.msra.mxu0 0.0
    %2306 = vmatpush.msra.mxu0 %v2279
    %2307 = vmatpush.msra.mxu0 %v2275
    %2308 = vmatmul.f32.gmra.mxu0 %v2287
    %v2309 = vpop.f32.mrf.mxu0
    %v2310 = vadd.f32 0.0, %v2309
    %2311 = vmatmul.f32.gmra.mxu0 %v2290
    %v2312 = vpop.f32.mrf.mxu0
    %v2313 = vadd.f32 0.0, %v2312
    %2314 = vdwg.mxu0
    %2315 = vmatpush.msra.mxu0 0.0
    %2316 = vmatpush.msra.mxu0 0.0
    %2317 = vmatpush.msra.mxu0 0.0
    %2318 = vmatpush.msra.mxu0 0.0
    %2319 = vmatpush.msra.mxu0 0.0
    %2320 = vmatpush.msra.mxu0 0.0
    %2321 = vmatpush.msra.mxu0 0.0
    %2322 = vmatpush.msra.mxu0 0.0
    %2323 = vmatpush.msra.mxu0 0.0
    %2324 = vmatpush.msra.mxu0 0.0
    %2325 = vmatpush.msra.mxu0 0.0
    %2326 = vmatpush.msra.mxu0 0.0
    %2327 = vmatpush.msra.mxu0 0.0
    %2328 = vmatpush.msra.mxu0 0.0
    %2329 = vmatpush.msra.mxu0 %v2280
    %2330 = vmatpush.msra.mxu0 %v2276
    %2331 = vmatmul.f32.gmra.mxu0 %v2287
    %v2332 = vpop.f32.mrf.mxu0
    %v2333 = vadd.f32 0.0, %v2332
    %2334 = vmatmul.f32.gmra.mxu0 %v2290
    %v2335 = vpop.f32.mrf.mxu0
    %v2336 = vadd.f32 0.0, %v2335
    %2337 = vdwg.mxu0
    %2338 = vmatpush.msra.mxu0 0.0
    %2339 = vmatpush.msra.mxu0 0.0
    %2340 = vmatpush.msra.mxu0 0.0
    %2341 = vmatpush.msra.mxu0 0.0
    %2342 = vmatpush.msra.mxu0 0.0
    %2343 = vmatpush.msra.mxu0 0.0
    %2344 = vmatpush.msra.mxu0 0.0
    %2345 = vmatpush.msra.mxu0 0.0
    %2346 = vmatpush.msra.mxu0 0.0
    %2347 = vmatpush.msra.mxu0 0.0
    %2348 = vmatpush.msra.mxu0 0.0
    %2349 = vmatpush.msra.mxu0 0.0
    %2350 = vmatpush.msra.mxu0 0.0
    %2351 = vmatpush.msra.mxu0 0.0
    %2352 = vmatpush.msra.mxu0 %v2281
    %2353 = vmatpush.msra.mxu0 %v2277
    %2354 = vmatmul.f32.gmra.mxu0 %v2287
    %v2355 = vpop.f32.mrf.mxu0
    %v2356 = vadd.f32 0.0, %v2355
    %2357 = vmatmul.f32.gmra.mxu0 %v2290
    %v2358 = vpop.f32.mrf.mxu0
    %v2359 = vadd.f32 0.0, %v2358
    %2360 = vdwg.mxu0
    %2361 = vmatpush.msra.mxu0 0.0
    %2362 = vmatpush.msra.mxu0 0.0
    %2363 = vmatpush.msra.mxu0 0.0
    %2364 = vmatpush.msra.mxu0 0.0
    %2365 = vmatpush.msra.mxu0 0.0
    %2366 = vmatpush.msra.mxu0 0.0
    %2367 = vmatpush.msra.mxu0 0.0
    %2368 = vmatpush.msra.mxu0 0.0
    %2369 = vmatpush.msra.mxu0 0.0
    %2370 = vmatpush.msra.mxu0 0.0
    %2371 = vmatpush.msra.mxu0 0.0
    %2372 = vmatpush.msra.mxu0 0.0
    %2373 = vmatpush.msra.mxu0 0.0
    %2374 = vmatpush.msra.mxu0 0.0
    %2375 = vmatpush.msra.mxu0 %v2282
    %2376 = vmatpush.msra.mxu0 %v2278
    %2377 = vmatmul.f32.gmra.mxu0 %v2287
    %v2378 = vpop.f32.mrf.mxu0
    %v2379 = vadd.f32 0.0, %v2378
    %2380 = vmatmul.f32.gmra.mxu0 %v2290
    %v2381 = vpop.f32.mrf.mxu0
    %v2382 = vadd.f32 0.0, %v2381
    %2383 = vdwg.mxu0
    %v2384 = vadd.f32 %v2235, %v2310
    %v2385 = vadd.f32 %v2236, %v2333
    %v2386 = vadd.f32 %v2237, %v2356
    %v2387 = vadd.f32 %v2238, %v2379
    %v2388 = vadd.f32 %v2239, %v2313
    %v2389 = vadd.f32 %v2240, %v2336
    %v2390 = vadd.f32 %v2241, %v2359
    %v2391 = vadd.f32 %v2242, %v2382
    %2392 = vrot.lane.b32.xlu0 %v1397, 112
    %v2393 = vpop.permute.xlu0 %2392
    %2394 = vrot.lane.b32.xlu0 %v1401, 112
    %v2395 = vpop.permute.xlu0 %2394
    %2396 = vrot.lane.b32.xlu0 %v1398, 112
    %v2397 = vpop.permute.xlu0 %2396
    %2398 = vrot.lane.b32.xlu0 %v1402, 112
    %v2399 = vpop.permute.xlu0 %2398
    %2400 = vrot.lane.b32.xlu0 %v1399, 112
    %v2401 = vpop.permute.xlu0 %2400
    %2402 = vrot.lane.b32.xlu0 %v1403, 112
    %v2403 = vpop.permute.xlu0 %2402
    %2404 = vrot.lane.b32.xlu0 %v1400, 112
    %v2405 = vpop.permute.xlu0 %2404
    %2406 = vrot.lane.b32.xlu0 %v1404, 112
    %v2407 = vpop.permute.xlu0 %2406
    %v2408 = vsel %vm1037, %v2401, %v2405
    %v2409 = vsel %vm1037, %v2403, %v2407
    %v2410 = vsel %vm1037, %v2397, %v2401
    %v2411 = vsel %vm1037, %v2399, %v2403
    %v2412 = vsel %vm1037, %v2393, %v2397
    %v2413 = vsel %vm1037, %v2395, %v2399
    %v2414 = vsel %vm1037, %v2405, %v2393
    %v2415 = vsel %vm1037, %v2407, %v2395
    %v2416 = vld [vmem:[%s1042] sm:$0xff]
    %v2417 = vld [vmem:[%s1042 + $0x8] sm:$0xff]
    %v2418 = vld [vmem:[%s1042 + $0x10] sm:$0xff]
    %v2419 = vld [vmem:[%s1042 + $0x18] sm:$0xff]
    %v2420 = vld [vmem:[%s1042 + $0x20] sm:$0xff]
    %v2421 = vld [vmem:[%s1042 + $0x28] sm:$0xff]
    %v2422 = vld [vmem:[%s1042 + $0x30] sm:$0xff]
    %v2423 = vld [vmem:[%s1042 + $0x38] sm:$0xff]
    %v2424 = vmul.f32 %v2412, %v2416
    %v2425 = vmul.f32 %v2410, %v2417
    %v2426 = vmul.f32 %v2408, %v2418
    %v2427 = vmul.f32 %v2414, %v2419
    %v2428 = vmul.f32 %v2413, %v2420
    %v2429 = vmul.f32 %v2411, %v2421
    %v2430 = vmul.f32 %v2409, %v2422
    %v2431 = vmul.f32 %v2415, %v2423
    %s2432 = scalar_lea.vmem %s11, 112
    %v2433 = vld [vmem:[%s2432] sm:$0xff]
    %v2434 = vld [vmem:[%s2432 + $0x8] sm:$0xff]
    %v2436 = vsel %vm1490, %v2433, 0
    %v2439 = vsel %vm1490, %v2434, 0
    %2441 = vmatpush.msra.mxu0 0.0
    %2442 = vmatpush.msra.mxu0 0.0
    %2443 = vmatpush.msra.mxu0 0.0
    %2444 = vmatpush.msra.mxu0 0.0
    %2445 = vmatpush.msra.mxu0 0.0
    %2446 = vmatpush.msra.mxu0 0.0
    %2447 = vmatpush.msra.mxu0 0.0
    %2448 = vmatpush.msra.mxu0 0.0
    %2449 = vmatpush.msra.mxu0 0.0
    %2450 = vmatpush.msra.mxu0 0.0
    %2451 = vmatpush.msra.mxu0 0.0
    %2452 = vmatpush.msra.mxu0 0.0
    %2453 = vmatpush.msra.mxu0 0.0
    %2454 = vmatpush.msra.mxu0 0.0
    %2455 = vmatpush.msra.mxu0 %v2428
    %2456 = vmatpush.msra.mxu0 %v2424
    %2457 = vmatmul.f32.gmra.mxu0 %v2436
    %v2458 = vpop.f32.mrf.mxu0
    %v2459 = vadd.f32 0.0, %v2458
    %2460 = vmatmul.f32.gmra.mxu0 %v2439
    %v2461 = vpop.f32.mrf.mxu0
    %v2462 = vadd.f32 0.0, %v2461
    %2463 = vdwg.mxu0
    %2464 = vmatpush.msra.mxu0 0.0
    %2465 = vmatpush.msra.mxu0 0.0
    %2466 = vmatpush.msra.mxu0 0.0
    %2467 = vmatpush.msra.mxu0 0.0
    %2468 = vmatpush.msra.mxu0 0.0
    %2469 = vmatpush.msra.mxu0 0.0
    %2470 = vmatpush.msra.mxu0 0.0
    %2471 = vmatpush.msra.mxu0 0.0
    %2472 = vmatpush.msra.mxu0 0.0
    %2473 = vmatpush.msra.mxu0 0.0
    %2474 = vmatpush.msra.mxu0 0.0
    %2475 = vmatpush.msra.mxu0 0.0
    %2476 = vmatpush.msra.mxu0 0.0
    %2477 = vmatpush.msra.mxu0 0.0
    %2478 = vmatpush.msra.mxu0 %v2429
    %2479 = vmatpush.msra.mxu0 %v2425
    %2480 = vmatmul.f32.gmra.mxu0 %v2436
    %v2481 = vpop.f32.mrf.mxu0
    %v2482 = vadd.f32 0.0, %v2481
    %2483 = vmatmul.f32.gmra.mxu0 %v2439
    %v2484 = vpop.f32.mrf.mxu0
    %v2485 = vadd.f32 0.0, %v2484
    %2486 = vdwg.mxu0
    %2487 = vmatpush.msra.mxu0 0.0
    %2488 = vmatpush.msra.mxu0 0.0
    %2489 = vmatpush.msra.mxu0 0.0
    %2490 = vmatpush.msra.mxu0 0.0
    %2491 = vmatpush.msra.mxu0 0.0
    %2492 = vmatpush.msra.mxu0 0.0
    %2493 = vmatpush.msra.mxu0 0.0
    %2494 = vmatpush.msra.mxu0 0.0
    %2495 = vmatpush.msra.mxu0 0.0
    %2496 = vmatpush.msra.mxu0 0.0
    %2497 = vmatpush.msra.mxu0 0.0
    %2498 = vmatpush.msra.mxu0 0.0
    %2499 = vmatpush.msra.mxu0 0.0
    %2500 = vmatpush.msra.mxu0 0.0
    %2501 = vmatpush.msra.mxu0 %v2430
    %2502 = vmatpush.msra.mxu0 %v2426
    %2503 = vmatmul.f32.gmra.mxu0 %v2436
    %v2504 = vpop.f32.mrf.mxu0
    %v2505 = vadd.f32 0.0, %v2504
    %2506 = vmatmul.f32.gmra.mxu0 %v2439
    %v2507 = vpop.f32.mrf.mxu0
    %v2508 = vadd.f32 0.0, %v2507
    %2509 = vdwg.mxu0
    %2510 = vmatpush.msra.mxu0 0.0
    %2511 = vmatpush.msra.mxu0 0.0
    %2512 = vmatpush.msra.mxu0 0.0
    %2513 = vmatpush.msra.mxu0 0.0
    %2514 = vmatpush.msra.mxu0 0.0
    %2515 = vmatpush.msra.mxu0 0.0
    %2516 = vmatpush.msra.mxu0 0.0
    %2517 = vmatpush.msra.mxu0 0.0
    %2518 = vmatpush.msra.mxu0 0.0
    %2519 = vmatpush.msra.mxu0 0.0
    %2520 = vmatpush.msra.mxu0 0.0
    %2521 = vmatpush.msra.mxu0 0.0
    %2522 = vmatpush.msra.mxu0 0.0
    %2523 = vmatpush.msra.mxu0 0.0
    %2524 = vmatpush.msra.mxu0 %v2431
    %2525 = vmatpush.msra.mxu0 %v2427
    %2526 = vmatmul.f32.gmra.mxu0 %v2436
    %v2527 = vpop.f32.mrf.mxu0
    %v2528 = vadd.f32 0.0, %v2527
    %2529 = vmatmul.f32.gmra.mxu0 %v2439
    %v2530 = vpop.f32.mrf.mxu0
    %v2531 = vadd.f32 0.0, %v2530
    %2532 = vdwg.mxu0
    %v2533 = vadd.f32 %v2384, %v2459
    %v2534 = vadd.f32 %v2385, %v2482
    %v2535 = vadd.f32 %v2386, %v2505
    %v2536 = vadd.f32 %v2387, %v2528
    %v2537 = vadd.f32 %v2388, %v2462
    %v2538 = vadd.f32 %v2389, %v2485
    %v2539 = vadd.f32 %v2390, %v2508
    %v2540 = vadd.f32 %v2391, %v2531
    %2541 = vrot.lane.b32.xlu0 %v1397, 111
    %v2542 = vpop.permute.xlu0 %2541
    %2543 = vrot.lane.b32.xlu0 %v1401, 111
    %v2544 = vpop.permute.xlu0 %2543
    %2545 = vrot.lane.b32.xlu0 %v1398, 111
    %v2546 = vpop.permute.xlu0 %2545
    %2547 = vrot.lane.b32.xlu0 %v1402, 111
    %v2548 = vpop.permute.xlu0 %2547
    %2549 = vrot.lane.b32.xlu0 %v1399, 111
    %v2550 = vpop.permute.xlu0 %2549
    %2551 = vrot.lane.b32.xlu0 %v1403, 111
    %v2552 = vpop.permute.xlu0 %2551
    %2553 = vrot.lane.b32.xlu0 %v1400, 111
    %v2554 = vpop.permute.xlu0 %2553
    %2555 = vrot.lane.b32.xlu0 %v1404, 111
    %v2556 = vpop.permute.xlu0 %2555
    %v2557 = vsel %vm1168, %v2550, %v2554
    %v2558 = vsel %vm1168, %v2552, %v2556
    %v2559 = vsel %vm1168, %v2546, %v2550
    %v2560 = vsel %vm1168, %v2548, %v2552
    %v2561 = vsel %vm1168, %v2542, %v2546
    %v2562 = vsel %vm1168, %v2544, %v2548
    %v2563 = vsel %vm1168, %v2554, %v2542
    %v2564 = vsel %vm1168, %v2556, %v2544
    %v2565 = vld [vmem:[%s1173] sm:$0xff]
    %v2566 = vld [vmem:[%s1173 + $0x8] sm:$0xff]
    %v2567 = vld [vmem:[%s1173 + $0x10] sm:$0xff]
    %v2568 = vld [vmem:[%s1173 + $0x18] sm:$0xff]
    %v2569 = vld [vmem:[%s1173 + $0x20] sm:$0xff]
    %v2570 = vld [vmem:[%s1173 + $0x28] sm:$0xff]
    %v2571 = vld [vmem:[%s1173 + $0x30] sm:$0xff]
    %v2572 = vld [vmem:[%s1173 + $0x38] sm:$0xff]
    %v2573 = vmul.f32 %v2561, %v2565
    %v2574 = vmul.f32 %v2559, %v2566
    %v2575 = vmul.f32 %v2557, %v2567
    %v2576 = vmul.f32 %v2563, %v2568
    %v2577 = vmul.f32 %v2562, %v2569
    %v2578 = vmul.f32 %v2560, %v2570
    %v2579 = vmul.f32 %v2558, %v2571
    %v2580 = vmul.f32 %v2564, %v2572
    %s2581 = scalar_lea.vmem %s11, 128
    %v2582 = vld [vmem:[%s2581] sm:$0xff]
    %v2583 = vld [vmem:[%s2581 + $0x8] sm:$0xff]
    %v2585 = vsel %vm1490, %v2582, 0
    %v2588 = vsel %vm1490, %v2583, 0
    %2590 = vmatpush.msra.mxu0 0.0
    %2591 = vmatpush.msra.mxu0 0.0
    %2592 = vmatpush.msra.mxu0 0.0
    %2593 = vmatpush.msra.mxu0 0.0
    %2594 = vmatpush.msra.mxu0 0.0
    %2595 = vmatpush.msra.mxu0 0.0
    %2596 = vmatpush.msra.mxu0 0.0
    %2597 = vmatpush.msra.mxu0 0.0
    %2598 = vmatpush.msra.mxu0 0.0
    %2599 = vmatpush.msra.mxu0 0.0
    %2600 = vmatpush.msra.mxu0 0.0
    %2601 = vmatpush.msra.mxu0 0.0
    %2602 = vmatpush.msra.mxu0 0.0
    %2603 = vmatpush.msra.mxu0 0.0
    %2604 = vmatpush.msra.mxu0 %v2577
    %2605 = vmatpush.msra.mxu0 %v2573
    %2606 = vmatmul.f32.gmra.mxu0 %v2585
    %v2607 = vpop.f32.mrf.mxu0
    %v2608 = vadd.f32 0.0, %v2607
    %2609 = vmatmul.f32.gmra.mxu0 %v2588
    %v2610 = vpop.f32.mrf.mxu0
    %v2611 = vadd.f32 0.0, %v2610
    %2612 = vdwg.mxu0
    %2613 = vmatpush.msra.mxu0 0.0
    %2614 = vmatpush.msra.mxu0 0.0
    %2615 = vmatpush.msra.mxu0 0.0
    %2616 = vmatpush.msra.mxu0 0.0
    %2617 = vmatpush.msra.mxu0 0.0
    %2618 = vmatpush.msra.mxu0 0.0
    %2619 = vmatpush.msra.mxu0 0.0
    %2620 = vmatpush.msra.mxu0 0.0
    %2621 = vmatpush.msra.mxu0 0.0
    %2622 = vmatpush.msra.mxu0 0.0
    %2623 = vmatpush.msra.mxu0 0.0
    %2624 = vmatpush.msra.mxu0 0.0
    %2625 = vmatpush.msra.mxu0 0.0
    %2626 = vmatpush.msra.mxu0 0.0
    %2627 = vmatpush.msra.mxu0 %v2578
    %2628 = vmatpush.msra.mxu0 %v2574
    %2629 = vmatmul.f32.gmra.mxu0 %v2585
    %v2630 = vpop.f32.mrf.mxu0
    %v2631 = vadd.f32 0.0, %v2630
    %2632 = vmatmul.f32.gmra.mxu0 %v2588
    %v2633 = vpop.f32.mrf.mxu0
    %v2634 = vadd.f32 0.0, %v2633
    %2635 = vdwg.mxu0
    %2636 = vmatpush.msra.mxu0 0.0
    %2637 = vmatpush.msra.mxu0 0.0
    %2638 = vmatpush.msra.mxu0 0.0
    %2639 = vmatpush.msra.mxu0 0.0
    %2640 = vmatpush.msra.mxu0 0.0
    %2641 = vmatpush.msra.mxu0 0.0
    %2642 = vmatpush.msra.mxu0 0.0
    %2643 = vmatpush.msra.mxu0 0.0
    %2644 = vmatpush.msra.mxu0 0.0
    %2645 = vmatpush.msra.mxu0 0.0
    %2646 = vmatpush.msra.mxu0 0.0
    %2647 = vmatpush.msra.mxu0 0.0
    %2648 = vmatpush.msra.mxu0 0.0
    %2649 = vmatpush.msra.mxu0 0.0
    %2650 = vmatpush.msra.mxu0 %v2579
    %2651 = vmatpush.msra.mxu0 %v2575
    %2652 = vmatmul.f32.gmra.mxu0 %v2585
    %v2653 = vpop.f32.mrf.mxu0
    %v2654 = vadd.f32 0.0, %v2653
    %2655 = vmatmul.f32.gmra.mxu0 %v2588
    %v2656 = vpop.f32.mrf.mxu0
    %v2657 = vadd.f32 0.0, %v2656
    %2658 = vdwg.mxu0
    %2659 = vmatpush.msra.mxu0 0.0
    %2660 = vmatpush.msra.mxu0 0.0
    %2661 = vmatpush.msra.mxu0 0.0
    %2662 = vmatpush.msra.mxu0 0.0
    %2663 = vmatpush.msra.mxu0 0.0
    %2664 = vmatpush.msra.mxu0 0.0
    %2665 = vmatpush.msra.mxu0 0.0
    %2666 = vmatpush.msra.mxu0 0.0
    %2667 = vmatpush.msra.mxu0 0.0
    %2668 = vmatpush.msra.mxu0 0.0
    %2669 = vmatpush.msra.mxu0 0.0
    %2670 = vmatpush.msra.mxu0 0.0
    %2671 = vmatpush.msra.mxu0 0.0
    %2672 = vmatpush.msra.mxu0 0.0
    %2673 = vmatpush.msra.mxu0 %v2580
    %2674 = vmatpush.msra.mxu0 %v2576
    %2675 = vmatmul.f32.gmra.mxu0 %v2585
    %v2676 = vpop.f32.mrf.mxu0
    %v2677 = vadd.f32 0.0, %v2676
    %2678 = vmatmul.f32.gmra.mxu0 %v2588
    %v2679 = vpop.f32.mrf.mxu0
    %v2680 = vadd.f32 0.0, %v2679
    %2681 = vdwg.mxu0
    %v2682 = vadd.f32 %v2533, %v2608
    %v2683 = vadd.f32 %v2534, %v2631
    %v2684 = vadd.f32 %v2535, %v2654
    %v2685 = vadd.f32 %v2536, %v2677
    %v2686 = vadd.f32 %v2537, %v2611
    %v2687 = vadd.f32 %v2538, %v2634
    %v2688 = vadd.f32 %v2539, %v2657
    %v2689 = vadd.f32 %v2540, %v2680
    %v2690 = vadd.f32 %v2682, %v2683
    %v2691 = vadd.f32 %v2690, %v2684
    %v2692 = vadd.f32 %v2691, %v2685
    %2693 = vadd.xlane.f32.xlu0 %v2692
    %v2694 = vpop.xlane.xlu0 %2693
    %v2695 = vadd.f32 %v2686, %v2687
    %v2696 = vadd.f32 %v2695, %v2688
    %v2697 = vadd.f32 %v2696, %v2689
    %2698 = vadd.xlane.f32.xlu0 %v2697
    %v2699 = vpop.xlane.xlu0 %2698
    %v2700 = vmul.f32 %v2682, %v2682
    %v2701 = vmul.f32 %v2683, %v2683
    %v2702 = vmul.f32 %v2684, %v2684
    %v2703 = vmul.f32 %v2685, %v2685
    %v2704 = vmul.f32 %v2686, %v2686
    %v2705 = vmul.f32 %v2687, %v2687
    %v2706 = vmul.f32 %v2688, %v2688
    %v2707 = vmul.f32 %v2689, %v2689
    %v2708 = vadd.f32 %v2700, %v2701
    %v2709 = vadd.f32 %v2708, %v2702
    %v2710 = vadd.f32 %v2709, %v2703
    %2711 = vadd.xlane.f32.xlu0 %v2710
    %v2712 = vpop.xlane.xlu0 %2711
    %v2713 = vadd.f32 %v2704, %v2705
    %v2714 = vadd.f32 %v2713, %v2706
    %v2715 = vadd.f32 %v2714, %v2707
    %2716 = vadd.xlane.f32.xlu0 %v2715
    %v2717 = vpop.xlane.xlu0 %2716
    %v2718 = vmul.f32 %v2694, 0.001953125
    %v2719 = vmul.f32 %v2699, 0.001953125
    %v2720 = vmul.f32 %v2712, 0.001953125
    %v2721 = vmul.f32 %v2717, 0.001953125
    %v2722 = vmul.f32 %v2718, %v2718
    %v2723 = vmul.f32 %v2719, %v2719
    %v2724 = vsub.f32 %v2720, %v2722
    %v2725 = vsub.f32 %v2721, %v2723
    %v2726 = vmax.f32 %v2724, 0.0
    %v2727 = vmax.f32 %v2725, 0.0
    %v2728 = vld [vmem:[%s13] sm:$0xff]
    %v2729 = vld [vmem:[%s13 + $0x8] sm:$0xff]
    %v2730 = vadd.f32 %v2726, 1e-05
    %v2731 = vadd.f32 %v2727, 1e-05
    %v2732 = vrsqrt.pop %v2730
    %v2733 = vmul.f32 %v2732, %v2730
    %v2734 = vmul.f32 %v2733, %v2732
    %v2735 = vmul.f32 0.5, %v2734
    %v2736 = vsub.f32 1.5, %v2735
    %v2737 = vmul.f32 %v2732, %v2736
    %vm2738 = vweird.f32 %v2730
    %vm2739 = vweird.f32 %v2732
    %vm2740 = vmor %vm2738, %vm2739
    %v2741 = vsel %vm2740, %v2732, %v2737
    %v2742 = vrsqrt.pop %v2731
    %v2743 = vmul.f32 %v2742, %v2731
    %v2744 = vmul.f32 %v2743, %v2742
    %v2745 = vmul.f32 0.5, %v2744
    %v2746 = vsub.f32 1.5, %v2745
    %v2747 = vmul.f32 %v2742, %v2746
    %vm2748 = vweird.f32 %v2731
    %vm2749 = vweird.f32 %v2742
    %vm2750 = vmor %vm2748, %vm2749
    %v2751 = vsel %vm2750, %v2742, %v2747
    %v2752 = vmul.f32 %v2728, %v2741
    %v2753 = vmul.f32 %v2729, %v2751
    %v2754 = vld [vmem:[%s15] sm:$0xff]
    %v2755 = vld [vmem:[%s15 + $0x8] sm:$0xff]
    %v2756 = vmul.f32 %v2718, %v2752
    %v2757 = vmul.f32 %v2719, %v2753
    %v2758 = vsub.f32 %v2754, %v2756
    %v2759 = vsub.f32 %v2755, %v2757
    %2761 = vset.pattern.permute.xlu0 0
    %2762 = vperm.xlu0 %2761, %v2752
    %v2763 = vpop.permute.xlu0 %2762
    %2766 = vset.pattern.permute.xlu0 0
    %2767 = vperm.xlu0 %2766, %v2753
    %v2768 = vpop.permute.xlu0 %2767
    %v2770 = vmul.f32 %v2682, %v2763
    %v2771 = vmul.f32 %v2683, %v2763
    %v2772 = vmul.f32 %v2684, %v2763
    %v2773 = vmul.f32 %v2685, %v2763
    %v2774 = vmul.f32 %v2686, %v2768
    %v2775 = vmul.f32 %v2687, %v2768
    %v2776 = vmul.f32 %v2688, %v2768
    %v2777 = vmul.f32 %v2689, %v2768
    %2779 = vset.pattern.permute.xlu0 0
    %2780 = vperm.xlu0 %2779, %v2758
    %v2781 = vpop.permute.xlu0 %2780
    %2784 = vset.pattern.permute.xlu0 0
    %2785 = vperm.xlu0 %2784, %v2759
    %v2786 = vpop.permute.xlu0 %2785
    %v2788 = vadd.f32 %v2770, %v2781
    %v2789 = vadd.f32 %v2771, %v2781
    %v2790 = vadd.f32 %v2772, %v2781
    %v2791 = vadd.f32 %v2773, %v2781
    %v2792 = vadd.f32 %v2774, %v2786
    %v2793 = vadd.f32 %v2775, %v2786
    %v2794 = vadd.f32 %v2776, %v2786
    %v2795 = vadd.f32 %v2777, %v2786
    %v2796 = vmax.f32 %v2788, 0.0
    %v2797 = vmax.f32 %v2789, 0.0
    %v2798 = vmax.f32 %v2790, 0.0
    %v2799 = vmax.f32 %v2791, 0.0
    %v2800 = vmax.f32 %v2792, 0.0
    %v2801 = vmax.f32 %v2793, 0.0
    %v2802 = vmax.f32 %v2794, 0.0
    %v2803 = vmax.f32 %v2795, 0.0
    %2804 = vrot.lane.b32.xlu0 %v2796, 17
    %v2805 = vpop.permute.xlu0 %2804
    %2806 = vrot.lane.b32.xlu0 %v2800, 17
    %v2807 = vpop.permute.xlu0 %2806
    %2808 = vrot.lane.b32.xlu0 %v2797, 17
    %v2809 = vpop.permute.xlu0 %2808
    %2810 = vrot.lane.b32.xlu0 %v2801, 17
    %v2811 = vpop.permute.xlu0 %2810
    %2812 = vrot.lane.b32.xlu0 %v2798, 17
    %v2813 = vpop.permute.xlu0 %2812
    %2814 = vrot.lane.b32.xlu0 %v2802, 17
    %v2815 = vpop.permute.xlu0 %2814
    %2816 = vrot.lane.b32.xlu0 %v2799, 17
    %v2817 = vpop.permute.xlu0 %2816
    %2818 = vrot.lane.b32.xlu0 %v2803, 17
    %v2819 = vpop.permute.xlu0 %2818
    %v2820 = vsel %vm159, %v2813, %v2817
    %v2821 = vsel %vm159, %v2815, %v2819
    %v2822 = vsel %vm159, %v2809, %v2813
    %v2823 = vsel %vm159, %v2811, %v2815
    %v2824 = vsel %vm159, %v2805, %v2809
    %v2825 = vsel %vm159, %v2807, %v2811
    %v2826 = vsel %vm159, %v2817, %v2805
    %v2827 = vsel %vm159, %v2819, %v2807
    %v2828 = vmul.f32 %v2826, %v1429
    %v2829 = vmul.f32 %v2824, %v1430
    %v2830 = vmul.f32 %v2822, %v1431
    %v2831 = vmul.f32 %v2820, %v1432
    %v2832 = vmul.f32 %v2827, %v1433
    %v2833 = vmul.f32 %v2825, %v1434
    %v2834 = vmul.f32 %v2823, %v1435
    %v2835 = vmul.f32 %v2821, %v1436
    %v2836 = vld [vmem:[%s17] sm:$0xff]
    %v2837 = vld [vmem:[%s17 + $0x8] sm:$0xff]
    %2838 = vrot.lane.b32.xlu0 %v2796, 16
    %v2839 = vpop.permute.xlu0 %2838
    %2840 = vrot.lane.b32.xlu0 %v2800, 16
    %v2841 = vpop.permute.xlu0 %2840
    %2842 = vrot.lane.b32.xlu0 %v2797, 16
    %v2843 = vpop.permute.xlu0 %2842
    %2844 = vrot.lane.b32.xlu0 %v2801, 16
    %v2845 = vpop.permute.xlu0 %2844
    %2846 = vrot.lane.b32.xlu0 %v2798, 16
    %v2847 = vpop.permute.xlu0 %2846
    %2848 = vrot.lane.b32.xlu0 %v2802, 16
    %v2849 = vpop.permute.xlu0 %2848
    %2850 = vrot.lane.b32.xlu0 %v2799, 16
    %v2851 = vpop.permute.xlu0 %2850
    %2852 = vrot.lane.b32.xlu0 %v2803, 16
    %v2853 = vpop.permute.xlu0 %2852
    %v2854 = vsel %vm182, %v2847, %v2851
    %v2855 = vsel %vm182, %v2849, %v2853
    %v2856 = vsel %vm182, %v2843, %v2847
    %v2857 = vsel %vm182, %v2845, %v2849
    %v2858 = vsel %vm182, %v2839, %v2843
    %v2859 = vsel %vm182, %v2841, %v2845
    %v2860 = vsel %vm182, %v2851, %v2839
    %v2861 = vsel %vm182, %v2853, %v2841
    %v2862 = vmul.f32 %v2860, %v1471
    %v2863 = vmul.f32 %v2858, %v1472
    %v2864 = vmul.f32 %v2856, %v1473
    %v2865 = vmul.f32 %v2854, %v1474
    %v2866 = vmul.f32 %v2861, %v1475
    %v2867 = vmul.f32 %v2859, %v1476
    %v2868 = vmul.f32 %v2857, %v1477
    %v2869 = vmul.f32 %v2855, %v1478
    %s2870 = scalar_lea.vmem %s17, 16
    %v2871 = vld [vmem:[%s2870] sm:$0xff]
    %v2872 = vld [vmem:[%s2870 + $0x8] sm:$0xff]
    %v2874 = vsel %vm1490, %v2871, 0
    %v2877 = vsel %vm1490, %v2872, 0
    %2879 = vmatpush.msra.mxu0 0.0
    %2880 = vmatpush.msra.mxu0 0.0
    %2881 = vmatpush.msra.mxu0 0.0
    %2882 = vmatpush.msra.mxu0 0.0
    %2883 = vmatpush.msra.mxu0 0.0
    %2884 = vmatpush.msra.mxu0 0.0
    %2885 = vmatpush.msra.mxu0 0.0
    %2886 = vmatpush.msra.mxu0 0.0
    %2887 = vmatpush.msra.mxu0 0.0
    %2888 = vmatpush.msra.mxu0 0.0
    %2889 = vmatpush.msra.mxu0 0.0
    %2890 = vmatpush.msra.mxu0 0.0
    %2891 = vmatpush.msra.mxu0 0.0
    %2892 = vmatpush.msra.mxu0 0.0
    %2893 = vmatpush.msra.mxu0 %v2866
    %2894 = vmatpush.msra.mxu0 %v2862
    %2895 = vmatmul.f32.gmra.mxu0 %v2874
    %v2896 = vpop.f32.mrf.mxu0
    %v2897 = vadd.f32 0.0, %v2896
    %2898 = vmatmul.f32.gmra.mxu0 %v2877
    %v2899 = vpop.f32.mrf.mxu0
    %v2900 = vadd.f32 0.0, %v2899
    %2901 = vdwg.mxu0
    %2902 = vmatpush.msra.mxu0 0.0
    %2903 = vmatpush.msra.mxu0 0.0
    %2904 = vmatpush.msra.mxu0 0.0
    %2905 = vmatpush.msra.mxu0 0.0
    %2906 = vmatpush.msra.mxu0 0.0
    %2907 = vmatpush.msra.mxu0 0.0
    %2908 = vmatpush.msra.mxu0 0.0
    %2909 = vmatpush.msra.mxu0 0.0
    %2910 = vmatpush.msra.mxu0 0.0
    %2911 = vmatpush.msra.mxu0 0.0
    %2912 = vmatpush.msra.mxu0 0.0
    %2913 = vmatpush.msra.mxu0 0.0
    %2914 = vmatpush.msra.mxu0 0.0
    %2915 = vmatpush.msra.mxu0 0.0
    %2916 = vmatpush.msra.mxu0 %v2867
    %2917 = vmatpush.msra.mxu0 %v2863
    %2918 = vmatmul.f32.gmra.mxu0 %v2874
    %v2919 = vpop.f32.mrf.mxu0
    %v2920 = vadd.f32 0.0, %v2919
    %2921 = vmatmul.f32.gmra.mxu0 %v2877
    %v2922 = vpop.f32.mrf.mxu0
    %v2923 = vadd.f32 0.0, %v2922
    %2924 = vdwg.mxu0
    %2925 = vmatpush.msra.mxu0 0.0
    %2926 = vmatpush.msra.mxu0 0.0
    %2927 = vmatpush.msra.mxu0 0.0
    %2928 = vmatpush.msra.mxu0 0.0
    %2929 = vmatpush.msra.mxu0 0.0
    %2930 = vmatpush.msra.mxu0 0.0
    %2931 = vmatpush.msra.mxu0 0.0
    %2932 = vmatpush.msra.mxu0 0.0
    %2933 = vmatpush.msra.mxu0 0.0
    %2934 = vmatpush.msra.mxu0 0.0
    %2935 = vmatpush.msra.mxu0 0.0
    %2936 = vmatpush.msra.mxu0 0.0
    %2937 = vmatpush.msra.mxu0 0.0
    %2938 = vmatpush.msra.mxu0 0.0
    %2939 = vmatpush.msra.mxu0 %v2868
    %2940 = vmatpush.msra.mxu0 %v2864
    %2941 = vmatmul.f32.gmra.mxu0 %v2874
    %v2942 = vpop.f32.mrf.mxu0
    %v2943 = vadd.f32 0.0, %v2942
    %2944 = vmatmul.f32.gmra.mxu0 %v2877
    %v2945 = vpop.f32.mrf.mxu0
    %v2946 = vadd.f32 0.0, %v2945
    %2947 = vdwg.mxu0
    %2948 = vmatpush.msra.mxu0 0.0
    %2949 = vmatpush.msra.mxu0 0.0
    %2950 = vmatpush.msra.mxu0 0.0
    %2951 = vmatpush.msra.mxu0 0.0
    %2952 = vmatpush.msra.mxu0 0.0
    %2953 = vmatpush.msra.mxu0 0.0
    %2954 = vmatpush.msra.mxu0 0.0
    %2955 = vmatpush.msra.mxu0 0.0
    %2956 = vmatpush.msra.mxu0 0.0
    %2957 = vmatpush.msra.mxu0 0.0
    %2958 = vmatpush.msra.mxu0 0.0
    %2959 = vmatpush.msra.mxu0 0.0
    %2960 = vmatpush.msra.mxu0 0.0
    %2961 = vmatpush.msra.mxu0 0.0
    %2962 = vmatpush.msra.mxu0 %v2869
    %2963 = vmatpush.msra.mxu0 %v2865
    %2964 = vmatmul.f32.gmra.mxu0 %v2874
    %v2965 = vpop.f32.mrf.mxu0
    %v2966 = vadd.f32 0.0, %v2965
    %2967 = vmatmul.f32.gmra.mxu0 %v2877
    %v2968 = vpop.f32.mrf.mxu0
    %v2969 = vadd.f32 0.0, %v2968
    %2970 = vdwg.mxu0
    %v2972 = vsel %vm1490, %v2836, 0
    %v2975 = vsel %vm1490, %v2837, 0
    %2977 = vmatpush.msra.mxu0 0.0
    %2978 = vmatpush.msra.mxu0 0.0
    %2979 = vmatpush.msra.mxu0 0.0
    %2980 = vmatpush.msra.mxu0 0.0
    %2981 = vmatpush.msra.mxu0 0.0
    %2982 = vmatpush.msra.mxu0 0.0
    %2983 = vmatpush.msra.mxu0 0.0
    %2984 = vmatpush.msra.mxu0 0.0
    %2985 = vmatpush.msra.mxu0 0.0
    %2986 = vmatpush.msra.mxu0 0.0
    %2987 = vmatpush.msra.mxu0 0.0
    %2988 = vmatpush.msra.mxu0 0.0
    %2989 = vmatpush.msra.mxu0 0.0
    %2990 = vmatpush.msra.mxu0 0.0
    %2991 = vmatpush.msra.mxu0 %v2832
    %2992 = vmatpush.msra.mxu0 %v2828
    %2993 = vmatmul.f32.gmra.mxu0 %v2972
    %v2994 = vpop.f32.mrf.mxu0
    %v2995 = vadd.f32 %v2897, %v2994
    %2996 = vmatmul.f32.gmra.mxu0 %v2975
    %v2997 = vpop.f32.mrf.mxu0
    %v2998 = vadd.f32 %v2900, %v2997
    %2999 = vdwg.mxu0
    %3000 = vmatpush.msra.mxu0 0.0
    %3001 = vmatpush.msra.mxu0 0.0
    %3002 = vmatpush.msra.mxu0 0.0
    %3003 = vmatpush.msra.mxu0 0.0
    %3004 = vmatpush.msra.mxu0 0.0
    %3005 = vmatpush.msra.mxu0 0.0
    %3006 = vmatpush.msra.mxu0 0.0
    %3007 = vmatpush.msra.mxu0 0.0
    %3008 = vmatpush.msra.mxu0 0.0
    %3009 = vmatpush.msra.mxu0 0.0
    %3010 = vmatpush.msra.mxu0 0.0
    %3011 = vmatpush.msra.mxu0 0.0
    %3012 = vmatpush.msra.mxu0 0.0
    %3013 = vmatpush.msra.mxu0 0.0
    %3014 = vmatpush.msra.mxu0 %v2833
    %3015 = vmatpush.msra.mxu0 %v2829
    %3016 = vmatmul.f32.gmra.mxu0 %v2972
    %v3017 = vpop.f32.mrf.mxu0
    %v3018 = vadd.f32 %v2920, %v3017
    %3019 = vmatmul.f32.gmra.mxu0 %v2975
    %v3020 = vpop.f32.mrf.mxu0
    %v3021 = vadd.f32 %v2923, %v3020
    %3022 = vdwg.mxu0
    %3023 = vmatpush.msra.mxu0 0.0
    %3024 = vmatpush.msra.mxu0 0.0
    %3025 = vmatpush.msra.mxu0 0.0
    %3026 = vmatpush.msra.mxu0 0.0
    %3027 = vmatpush.msra.mxu0 0.0
    %3028 = vmatpush.msra.mxu0 0.0
    %3029 = vmatpush.msra.mxu0 0.0
    %3030 = vmatpush.msra.mxu0 0.0
    %3031 = vmatpush.msra.mxu0 0.0
    %3032 = vmatpush.msra.mxu0 0.0
    %3033 = vmatpush.msra.mxu0 0.0
    %3034 = vmatpush.msra.mxu0 0.0
    %3035 = vmatpush.msra.mxu0 0.0
    %3036 = vmatpush.msra.mxu0 0.0
    %3037 = vmatpush.msra.mxu0 %v2834
    %3038 = vmatpush.msra.mxu0 %v2830
    %3039 = vmatmul.f32.gmra.mxu0 %v2972
    %v3040 = vpop.f32.mrf.mxu0
    %v3041 = vadd.f32 %v2943, %v3040
    %3042 = vmatmul.f32.gmra.mxu0 %v2975
    %v3043 = vpop.f32.mrf.mxu0
    %v3044 = vadd.f32 %v2946, %v3043
    %3045 = vdwg.mxu0
    %3046 = vmatpush.msra.mxu0 0.0
    %3047 = vmatpush.msra.mxu0 0.0
    %3048 = vmatpush.msra.mxu0 0.0
    %3049 = vmatpush.msra.mxu0 0.0
    %3050 = vmatpush.msra.mxu0 0.0
    %3051 = vmatpush.msra.mxu0 0.0
    %3052 = vmatpush.msra.mxu0 0.0
    %3053 = vmatpush.msra.mxu0 0.0
    %3054 = vmatpush.msra.mxu0 0.0
    %3055 = vmatpush.msra.mxu0 0.0
    %3056 = vmatpush.msra.mxu0 0.0
    %3057 = vmatpush.msra.mxu0 0.0
    %3058 = vmatpush.msra.mxu0 0.0
    %3059 = vmatpush.msra.mxu0 0.0
    %3060 = vmatpush.msra.mxu0 %v2835
    %3061 = vmatpush.msra.mxu0 %v2831
    %3062 = vmatmul.f32.gmra.mxu0 %v2972
    %v3063 = vpop.f32.mrf.mxu0
    %v3064 = vadd.f32 %v2966, %v3063
    %3065 = vmatmul.f32.gmra.mxu0 %v2975
    %v3066 = vpop.f32.mrf.mxu0
    %v3067 = vadd.f32 %v2969, %v3066
    %3068 = vdwg.mxu0
    %3069 = vrot.lane.b32.xlu0 %v2796, 15
    %v3070 = vpop.permute.xlu0 %3069
    %3071 = vrot.lane.b32.xlu0 %v2800, 15
    %v3072 = vpop.permute.xlu0 %3071
    %3073 = vrot.lane.b32.xlu0 %v2797, 15
    %v3074 = vpop.permute.xlu0 %3073
    %3075 = vrot.lane.b32.xlu0 %v2801, 15
    %v3076 = vpop.permute.xlu0 %3075
    %3077 = vrot.lane.b32.xlu0 %v2798, 15
    %v3078 = vpop.permute.xlu0 %3077
    %3079 = vrot.lane.b32.xlu0 %v2802, 15
    %v3080 = vpop.permute.xlu0 %3079
    %3081 = vrot.lane.b32.xlu0 %v2799, 15
    %v3082 = vpop.permute.xlu0 %3081
    %3083 = vrot.lane.b32.xlu0 %v2803, 15
    %v3084 = vpop.permute.xlu0 %3083
    %v3085 = vsel %vm404, %v3078, %v3082
    %v3086 = vsel %vm404, %v3080, %v3084
    %v3087 = vsel %vm404, %v3074, %v3078
    %v3088 = vsel %vm404, %v3076, %v3080
    %v3089 = vsel %vm404, %v3070, %v3074
    %v3090 = vsel %vm404, %v3072, %v3076
    %v3091 = vsel %vm404, %v3082, %v3070
    %v3092 = vsel %vm404, %v3084, %v3072
    %v3093 = vmul.f32 %v3091, %v1711
    %v3094 = vmul.f32 %v3089, %v1712
    %v3095 = vmul.f32 %v3087, %v1713
    %v3096 = vmul.f32 %v3085, %v1714
    %v3097 = vmul.f32 %v3092, %v1715
    %v3098 = vmul.f32 %v3090, %v1716
    %v3099 = vmul.f32 %v3088, %v1717
    %v3100 = vmul.f32 %v3086, %v1718
    %s3101 = scalar_lea.vmem %s17, 32
    %v3102 = vld [vmem:[%s3101] sm:$0xff]
    %v3103 = vld [vmem:[%s3101 + $0x8] sm:$0xff]
    %v3105 = vsel %vm1490, %v3102, 0
    %v3108 = vsel %vm1490, %v3103, 0
    %3110 = vmatpush.msra.mxu0 0.0
    %3111 = vmatpush.msra.mxu0 0.0
    %3112 = vmatpush.msra.mxu0 0.0
    %3113 = vmatpush.msra.mxu0 0.0
    %3114 = vmatpush.msra.mxu0 0.0
    %3115 = vmatpush.msra.mxu0 0.0
    %3116 = vmatpush.msra.mxu0 0.0
    %3117 = vmatpush.msra.mxu0 0.0
    %3118 = vmatpush.msra.mxu0 0.0
    %3119 = vmatpush.msra.mxu0 0.0
    %3120 = vmatpush.msra.mxu0 0.0
    %3121 = vmatpush.msra.mxu0 0.0
    %3122 = vmatpush.msra.mxu0 0.0
    %3123 = vmatpush.msra.mxu0 0.0
    %3124 = vmatpush.msra.mxu0 %v3097
    %3125 = vmatpush.msra.mxu0 %v3093
    %3126 = vmatmul.f32.gmra.mxu0 %v3105
    %v3127 = vpop.f32.mrf.mxu0
    %v3128 = vadd.f32 0.0, %v3127
    %3129 = vmatmul.f32.gmra.mxu0 %v3108
    %v3130 = vpop.f32.mrf.mxu0
    %v3131 = vadd.f32 0.0, %v3130
    %3132 = vdwg.mxu0
    %3133 = vmatpush.msra.mxu0 0.0
    %3134 = vmatpush.msra.mxu0 0.0
    %3135 = vmatpush.msra.mxu0 0.0
    %3136 = vmatpush.msra.mxu0 0.0
    %3137 = vmatpush.msra.mxu0 0.0
    %3138 = vmatpush.msra.mxu0 0.0
    %3139 = vmatpush.msra.mxu0 0.0
    %3140 = vmatpush.msra.mxu0 0.0
    %3141 = vmatpush.msra.mxu0 0.0
    %3142 = vmatpush.msra.mxu0 0.0
    %3143 = vmatpush.msra.mxu0 0.0
    %3144 = vmatpush.msra.mxu0 0.0
    %3145 = vmatpush.msra.mxu0 0.0
    %3146 = vmatpush.msra.mxu0 0.0
    %3147 = vmatpush.msra.mxu0 %v3098
    %3148 = vmatpush.msra.mxu0 %v3094
    %3149 = vmatmul.f32.gmra.mxu0 %v3105
    %v3150 = vpop.f32.mrf.mxu0
    %v3151 = vadd.f32 0.0, %v3150
    %3152 = vmatmul.f32.gmra.mxu0 %v3108
    %v3153 = vpop.f32.mrf.mxu0
    %v3154 = vadd.f32 0.0, %v3153
    %3155 = vdwg.mxu0
    %3156 = vmatpush.msra.mxu0 0.0
    %3157 = vmatpush.msra.mxu0 0.0
    %3158 = vmatpush.msra.mxu0 0.0
    %3159 = vmatpush.msra.mxu0 0.0
    %3160 = vmatpush.msra.mxu0 0.0
    %3161 = vmatpush.msra.mxu0 0.0
    %3162 = vmatpush.msra.mxu0 0.0
    %3163 = vmatpush.msra.mxu0 0.0
    %3164 = vmatpush.msra.mxu0 0.0
    %3165 = vmatpush.msra.mxu0 0.0
    %3166 = vmatpush.msra.mxu0 0.0
    %3167 = vmatpush.msra.mxu0 0.0
    %3168 = vmatpush.msra.mxu0 0.0
    %3169 = vmatpush.msra.mxu0 0.0
    %3170 = vmatpush.msra.mxu0 %v3099
    %3171 = vmatpush.msra.mxu0 %v3095
    %3172 = vmatmul.f32.gmra.mxu0 %v3105
    %v3173 = vpop.f32.mrf.mxu0
    %v3174 = vadd.f32 0.0, %v3173
    %3175 = vmatmul.f32.gmra.mxu0 %v3108
    %v3176 = vpop.f32.mrf.mxu0
    %v3177 = vadd.f32 0.0, %v3176
    %3178 = vdwg.mxu0
    %3179 = vmatpush.msra.mxu0 0.0
    %3180 = vmatpush.msra.mxu0 0.0
    %3181 = vmatpush.msra.mxu0 0.0
    %3182 = vmatpush.msra.mxu0 0.0
    %3183 = vmatpush.msra.mxu0 0.0
    %3184 = vmatpush.msra.mxu0 0.0
    %3185 = vmatpush.msra.mxu0 0.0
    %3186 = vmatpush.msra.mxu0 0.0
    %3187 = vmatpush.msra.mxu0 0.0
    %3188 = vmatpush.msra.mxu0 0.0
    %3189 = vmatpush.msra.mxu0 0.0
    %3190 = vmatpush.msra.mxu0 0.0
    %3191 = vmatpush.msra.mxu0 0.0
    %3192 = vmatpush.msra.mxu0 0.0
    %3193 = vmatpush.msra.mxu0 %v3100
    %3194 = vmatpush.msra.mxu0 %v3096
    %3195 = vmatmul.f32.gmra.mxu0 %v3105
    %v3196 = vpop.f32.mrf.mxu0
    %v3197 = vadd.f32 0.0, %v3196
    %3198 = vmatmul.f32.gmra.mxu0 %v3108
    %v3199 = vpop.f32.mrf.mxu0
    %v3200 = vadd.f32 0.0, %v3199
    %3201 = vdwg.mxu0
    %v3202 = vadd.f32 %v2995, %v3128
    %v3203 = vadd.f32 %v3018, %v3151
    %v3204 = vadd.f32 %v3041, %v3174
    %v3205 = vadd.f32 %v3064, %v3197
    %v3206 = vadd.f32 %v2998, %v3131
    %v3207 = vadd.f32 %v3021, %v3154
    %v3208 = vadd.f32 %v3044, %v3177
    %v3209 = vadd.f32 %v3067, %v3200
    %3210 = vrot.lane.b32.xlu0 %v2796, 1
    %v3211 = vpop.permute.xlu0 %3210
    %3212 = vrot.lane.b32.xlu0 %v2800, 1
    %v3213 = vpop.permute.xlu0 %3212
    %3214 = vrot.lane.b32.xlu0 %v2797, 1
    %v3215 = vpop.permute.xlu0 %3214
    %3216 = vrot.lane.b32.xlu0 %v2801, 1
    %v3217 = vpop.permute.xlu0 %3216
    %3218 = vrot.lane.b32.xlu0 %v2798, 1
    %v3219 = vpop.permute.xlu0 %3218
    %3220 = vrot.lane.b32.xlu0 %v2802, 1
    %v3221 = vpop.permute.xlu0 %3220
    %3222 = vrot.lane.b32.xlu0 %v2799, 1
    %v3223 = vpop.permute.xlu0 %3222
    %3224 = vrot.lane.b32.xlu0 %v2803, 1
    %v3225 = vpop.permute.xlu0 %3224
    %v3226 = vsel %vm535, %v3219, %v3223
    %v3227 = vsel %vm535, %v3221, %v3225
    %v3228 = vsel %vm535, %v3215, %v3219
    %v3229 = vsel %vm535, %v3217, %v3221
    %v3230 = vsel %vm535, %v3211, %v3215
    %v3231 = vsel %vm535, %v3213, %v3217
    %v3232 = vsel %vm535, %v3223, %v3211
    %v3233 = vsel %vm535, %v3225, %v3213
    %v3234 = vmul.f32 %v3232, %v1860
    %v3235 = vmul.f32 %v3230, %v1861
    %v3236 = vmul.f32 %v3228, %v1862
    %v3237 = vmul.f32 %v3226, %v1863
    %v3238 = vmul.f32 %v3233, %v1864
    %v3239 = vmul.f32 %v3231, %v1865
    %v3240 = vmul.f32 %v3229, %v1866
    %v3241 = vmul.f32 %v3227, %v1867
    %s3242 = scalar_lea.vmem %s17, 48
    %v3243 = vld [vmem:[%s3242] sm:$0xff]
    %v3244 = vld [vmem:[%s3242 + $0x8] sm:$0xff]
    %v3246 = vsel %vm1490, %v3243, 0
    %v3249 = vsel %vm1490, %v3244, 0
    %3251 = vmatpush.msra.mxu0 0.0
    %3252 = vmatpush.msra.mxu0 0.0
    %3253 = vmatpush.msra.mxu0 0.0
    %3254 = vmatpush.msra.mxu0 0.0
    %3255 = vmatpush.msra.mxu0 0.0
    %3256 = vmatpush.msra.mxu0 0.0
    %3257 = vmatpush.msra.mxu0 0.0
    %3258 = vmatpush.msra.mxu0 0.0
    %3259 = vmatpush.msra.mxu0 0.0
    %3260 = vmatpush.msra.mxu0 0.0
    %3261 = vmatpush.msra.mxu0 0.0
    %3262 = vmatpush.msra.mxu0 0.0
    %3263 = vmatpush.msra.mxu0 0.0
    %3264 = vmatpush.msra.mxu0 0.0
    %3265 = vmatpush.msra.mxu0 %v3238
    %3266 = vmatpush.msra.mxu0 %v3234
    %3267 = vmatmul.f32.gmra.mxu0 %v3246
    %v3268 = vpop.f32.mrf.mxu0
    %v3269 = vadd.f32 0.0, %v3268
    %3270 = vmatmul.f32.gmra.mxu0 %v3249
    %v3271 = vpop.f32.mrf.mxu0
    %v3272 = vadd.f32 0.0, %v3271
    %3273 = vdwg.mxu0
    %3274 = vmatpush.msra.mxu0 0.0
    %3275 = vmatpush.msra.mxu0 0.0
    %3276 = vmatpush.msra.mxu0 0.0
    %3277 = vmatpush.msra.mxu0 0.0
    %3278 = vmatpush.msra.mxu0 0.0
    %3279 = vmatpush.msra.mxu0 0.0
    %3280 = vmatpush.msra.mxu0 0.0
    %3281 = vmatpush.msra.mxu0 0.0
    %3282 = vmatpush.msra.mxu0 0.0
    %3283 = vmatpush.msra.mxu0 0.0
    %3284 = vmatpush.msra.mxu0 0.0
    %3285 = vmatpush.msra.mxu0 0.0
    %3286 = vmatpush.msra.mxu0 0.0
    %3287 = vmatpush.msra.mxu0 0.0
    %3288 = vmatpush.msra.mxu0 %v3239
    %3289 = vmatpush.msra.mxu0 %v3235
    %3290 = vmatmul.f32.gmra.mxu0 %v3246
    %v3291 = vpop.f32.mrf.mxu0
    %v3292 = vadd.f32 0.0, %v3291
    %3293 = vmatmul.f32.gmra.mxu0 %v3249
    %v3294 = vpop.f32.mrf.mxu0
    %v3295 = vadd.f32 0.0, %v3294
    %3296 = vdwg.mxu0
    %3297 = vmatpush.msra.mxu0 0.0
    %3298 = vmatpush.msra.mxu0 0.0
    %3299 = vmatpush.msra.mxu0 0.0
    %3300 = vmatpush.msra.mxu0 0.0
    %3301 = vmatpush.msra.mxu0 0.0
    %3302 = vmatpush.msra.mxu0 0.0
    %3303 = vmatpush.msra.mxu0 0.0
    %3304 = vmatpush.msra.mxu0 0.0
    %3305 = vmatpush.msra.mxu0 0.0
    %3306 = vmatpush.msra.mxu0 0.0
    %3307 = vmatpush.msra.mxu0 0.0
    %3308 = vmatpush.msra.mxu0 0.0
    %3309 = vmatpush.msra.mxu0 0.0
    %3310 = vmatpush.msra.mxu0 0.0
    %3311 = vmatpush.msra.mxu0 %v3240
    %3312 = vmatpush.msra.mxu0 %v3236
    %3313 = vmatmul.f32.gmra.mxu0 %v3246
    %v3314 = vpop.f32.mrf.mxu0
    %v3315 = vadd.f32 0.0, %v3314
    %3316 = vmatmul.f32.gmra.mxu0 %v3249
    %v3317 = vpop.f32.mrf.mxu0
    %v3318 = vadd.f32 0.0, %v3317
    %3319 = vdwg.mxu0
    %3320 = vmatpush.msra.mxu0 0.0
    %3321 = vmatpush.msra.mxu0 0.0
    %3322 = vmatpush.msra.mxu0 0.0
    %3323 = vmatpush.msra.mxu0 0.0
    %3324 = vmatpush.msra.mxu0 0.0
    %3325 = vmatpush.msra.mxu0 0.0
    %3326 = vmatpush.msra.mxu0 0.0
    %3327 = vmatpush.msra.mxu0 0.0
    %3328 = vmatpush.msra.mxu0 0.0
    %3329 = vmatpush.msra.mxu0 0.0
    %3330 = vmatpush.msra.mxu0 0.0
    %3331 = vmatpush.msra.mxu0 0.0
    %3332 = vmatpush.msra.mxu0 0.0
    %3333 = vmatpush.msra.mxu0 0.0
    %3334 = vmatpush.msra.mxu0 %v3241
    %3335 = vmatpush.msra.mxu0 %v3237
    %3336 = vmatmul.f32.gmra.mxu0 %v3246
    %v3337 = vpop.f32.mrf.mxu0
    %v3338 = vadd.f32 0.0, %v3337
    %3339 = vmatmul.f32.gmra.mxu0 %v3249
    %v3340 = vpop.f32.mrf.mxu0
    %v3341 = vadd.f32 0.0, %v3340
    %3342 = vdwg.mxu0
    %v3343 = vadd.f32 %v3202, %v3269
    %v3344 = vadd.f32 %v3203, %v3292
    %v3345 = vadd.f32 %v3204, %v3315
    %v3346 = vadd.f32 %v3205, %v3338
    %v3347 = vadd.f32 %v3206, %v3272
    %v3348 = vadd.f32 %v3207, %v3295
    %v3349 = vadd.f32 %v3208, %v3318
    %v3350 = vadd.f32 %v3209, %v3341
    %s3351 = scalar_lea.vmem %s17, 64
    %v3352 = vld [vmem:[%s3351] sm:$0xff]
    %v3353 = vld [vmem:[%s3351 + $0x8] sm:$0xff]
    %v3355 = vsel %vm1490, %v3352, 0
    %v3358 = vsel %vm1490, %v3353, 0
    %3360 = vmatpush.msra.mxu0 0.0
    %3361 = vmatpush.msra.mxu0 0.0
    %3362 = vmatpush.msra.mxu0 0.0
    %3363 = vmatpush.msra.mxu0 0.0
    %3364 = vmatpush.msra.mxu0 0.0
    %3365 = vmatpush.msra.mxu0 0.0
    %3366 = vmatpush.msra.mxu0 0.0
    %3367 = vmatpush.msra.mxu0 0.0
    %3368 = vmatpush.msra.mxu0 0.0
    %3369 = vmatpush.msra.mxu0 0.0
    %3370 = vmatpush.msra.mxu0 0.0
    %3371 = vmatpush.msra.mxu0 0.0
    %3372 = vmatpush.msra.mxu0 0.0
    %3373 = vmatpush.msra.mxu0 0.0
    %3374 = vmatpush.msra.mxu0 %v2800
    %3375 = vmatpush.msra.mxu0 %v2796
    %3376 = vmatmul.f32.gmra.mxu0 %v3355
    %v3377 = vpop.f32.mrf.mxu0
    %v3378 = vadd.f32 0.0, %v3377
    %3379 = vmatmul.f32.gmra.mxu0 %v3358
    %v3380 = vpop.f32.mrf.mxu0
    %v3381 = vadd.f32 0.0, %v3380
    %3382 = vdwg.mxu0
    %3383 = vmatpush.msra.mxu0 0.0
    %3384 = vmatpush.msra.mxu0 0.0
    %3385 = vmatpush.msra.mxu0 0.0
    %3386 = vmatpush.msra.mxu0 0.0
    %3387 = vmatpush.msra.mxu0 0.0
    %3388 = vmatpush.msra.mxu0 0.0
    %3389 = vmatpush.msra.mxu0 0.0
    %3390 = vmatpush.msra.mxu0 0.0
    %3391 = vmatpush.msra.mxu0 0.0
    %3392 = vmatpush.msra.mxu0 0.0
    %3393 = vmatpush.msra.mxu0 0.0
    %3394 = vmatpush.msra.mxu0 0.0
    %3395 = vmatpush.msra.mxu0 0.0
    %3396 = vmatpush.msra.mxu0 0.0
    %3397 = vmatpush.msra.mxu0 %v2801
    %3398 = vmatpush.msra.mxu0 %v2797
    %3399 = vmatmul.f32.gmra.mxu0 %v3355
    %v3400 = vpop.f32.mrf.mxu0
    %v3401 = vadd.f32 0.0, %v3400
    %3402 = vmatmul.f32.gmra.mxu0 %v3358
    %v3403 = vpop.f32.mrf.mxu0
    %v3404 = vadd.f32 0.0, %v3403
    %3405 = vdwg.mxu0
    %3406 = vmatpush.msra.mxu0 0.0
    %3407 = vmatpush.msra.mxu0 0.0
    %3408 = vmatpush.msra.mxu0 0.0
    %3409 = vmatpush.msra.mxu0 0.0
    %3410 = vmatpush.msra.mxu0 0.0
    %3411 = vmatpush.msra.mxu0 0.0
    %3412 = vmatpush.msra.mxu0 0.0
    %3413 = vmatpush.msra.mxu0 0.0
    %3414 = vmatpush.msra.mxu0 0.0
    %3415 = vmatpush.msra.mxu0 0.0
    %3416 = vmatpush.msra.mxu0 0.0
    %3417 = vmatpush.msra.mxu0 0.0
    %3418 = vmatpush.msra.mxu0 0.0
    %3419 = vmatpush.msra.mxu0 0.0
    %3420 = vmatpush.msra.mxu0 %v2802
    %3421 = vmatpush.msra.mxu0 %v2798
    %3422 = vmatmul.f32.gmra.mxu0 %v3355
    %v3423 = vpop.f32.mrf.mxu0
    %v3424 = vadd.f32 0.0, %v3423
    %3425 = vmatmul.f32.gmra.mxu0 %v3358
    %v3426 = vpop.f32.mrf.mxu0
    %v3427 = vadd.f32 0.0, %v3426
    %3428 = vdwg.mxu0
    %3429 = vmatpush.msra.mxu0 0.0
    %3430 = vmatpush.msra.mxu0 0.0
    %3431 = vmatpush.msra.mxu0 0.0
    %3432 = vmatpush.msra.mxu0 0.0
    %3433 = vmatpush.msra.mxu0 0.0
    %3434 = vmatpush.msra.mxu0 0.0
    %3435 = vmatpush.msra.mxu0 0.0
    %3436 = vmatpush.msra.mxu0 0.0
    %3437 = vmatpush.msra.mxu0 0.0
    %3438 = vmatpush.msra.mxu0 0.0
    %3439 = vmatpush.msra.mxu0 0.0
    %3440 = vmatpush.msra.mxu0 0.0
    %3441 = vmatpush.msra.mxu0 0.0
    %3442 = vmatpush.msra.mxu0 0.0
    %3443 = vmatpush.msra.mxu0 %v2803
    %3444 = vmatpush.msra.mxu0 %v2799
    %3445 = vmatmul.f32.gmra.mxu0 %v3355
    %v3446 = vpop.f32.mrf.mxu0
    %v3447 = vadd.f32 0.0, %v3446
    %3448 = vmatmul.f32.gmra.mxu0 %v3358
    %v3449 = vpop.f32.mrf.mxu0
    %v3450 = vadd.f32 0.0, %v3449
    %3451 = vdwg.mxu0
    %v3452 = vadd.f32 %v3343, %v3378
    %v3453 = vadd.f32 %v3344, %v3401
    %v3454 = vadd.f32 %v3345, %v3424
    %v3455 = vadd.f32 %v3346, %v3447
    %v3456 = vadd.f32 %v3347, %v3381
    %v3457 = vadd.f32 %v3348, %v3404
    %v3458 = vadd.f32 %v3349, %v3427
    %v3459 = vadd.f32 %v3350, %v3450
    %3460 = vrot.lane.b32.xlu0 %v2796, 127
    %v3461 = vpop.permute.xlu0 %3460
    %3462 = vrot.lane.b32.xlu0 %v2800, 127
    %v3463 = vpop.permute.xlu0 %3462
    %3464 = vrot.lane.b32.xlu0 %v2797, 127
    %v3465 = vpop.permute.xlu0 %3464
    %3466 = vrot.lane.b32.xlu0 %v2801, 127
    %v3467 = vpop.permute.xlu0 %3466
    %3468 = vrot.lane.b32.xlu0 %v2798, 127
    %v3469 = vpop.permute.xlu0 %3468
    %3470 = vrot.lane.b32.xlu0 %v2802, 127
    %v3471 = vpop.permute.xlu0 %3470
    %3472 = vrot.lane.b32.xlu0 %v2799, 127
    %v3473 = vpop.permute.xlu0 %3472
    %3474 = vrot.lane.b32.xlu0 %v2803, 127
    %v3475 = vpop.permute.xlu0 %3474
    %v3476 = vsel %vm775, %v3469, %v3473
    %v3477 = vsel %vm775, %v3471, %v3475
    %v3478 = vsel %vm775, %v3465, %v3469
    %v3479 = vsel %vm775, %v3467, %v3471
    %v3480 = vsel %vm775, %v3461, %v3465
    %v3481 = vsel %vm775, %v3463, %v3467
    %v3482 = vsel %vm775, %v3473, %v3461
    %v3483 = vsel %vm775, %v3475, %v3463
    %v3484 = vmul.f32 %v3480, %v2118
    %v3485 = vmul.f32 %v3478, %v2119
    %v3486 = vmul.f32 %v3476, %v2120
    %v3487 = vmul.f32 %v3482, %v2121
    %v3488 = vmul.f32 %v3481, %v2122
    %v3489 = vmul.f32 %v3479, %v2123
    %v3490 = vmul.f32 %v3477, %v2124
    %v3491 = vmul.f32 %v3483, %v2125
    %s3492 = scalar_lea.vmem %s17, 80
    %v3493 = vld [vmem:[%s3492] sm:$0xff]
    %v3494 = vld [vmem:[%s3492 + $0x8] sm:$0xff]
    %v3496 = vsel %vm1490, %v3493, 0
    %v3499 = vsel %vm1490, %v3494, 0
    %3501 = vmatpush.msra.mxu0 0.0
    %3502 = vmatpush.msra.mxu0 0.0
    %3503 = vmatpush.msra.mxu0 0.0
    %3504 = vmatpush.msra.mxu0 0.0
    %3505 = vmatpush.msra.mxu0 0.0
    %3506 = vmatpush.msra.mxu0 0.0
    %3507 = vmatpush.msra.mxu0 0.0
    %3508 = vmatpush.msra.mxu0 0.0
    %3509 = vmatpush.msra.mxu0 0.0
    %3510 = vmatpush.msra.mxu0 0.0
    %3511 = vmatpush.msra.mxu0 0.0
    %3512 = vmatpush.msra.mxu0 0.0
    %3513 = vmatpush.msra.mxu0 0.0
    %3514 = vmatpush.msra.mxu0 0.0
    %3515 = vmatpush.msra.mxu0 %v3488
    %3516 = vmatpush.msra.mxu0 %v3484
    %3517 = vmatmul.f32.gmra.mxu0 %v3496
    %v3518 = vpop.f32.mrf.mxu0
    %v3519 = vadd.f32 0.0, %v3518
    %3520 = vmatmul.f32.gmra.mxu0 %v3499
    %v3521 = vpop.f32.mrf.mxu0
    %v3522 = vadd.f32 0.0, %v3521
    %3523 = vdwg.mxu0
    %3524 = vmatpush.msra.mxu0 0.0
    %3525 = vmatpush.msra.mxu0 0.0
    %3526 = vmatpush.msra.mxu0 0.0
    %3527 = vmatpush.msra.mxu0 0.0
    %3528 = vmatpush.msra.mxu0 0.0
    %3529 = vmatpush.msra.mxu0 0.0
    %3530 = vmatpush.msra.mxu0 0.0
    %3531 = vmatpush.msra.mxu0 0.0
    %3532 = vmatpush.msra.mxu0 0.0
    %3533 = vmatpush.msra.mxu0 0.0
    %3534 = vmatpush.msra.mxu0 0.0
    %3535 = vmatpush.msra.mxu0 0.0
    %3536 = vmatpush.msra.mxu0 0.0
    %3537 = vmatpush.msra.mxu0 0.0
    %3538 = vmatpush.msra.mxu0 %v3489
    %3539 = vmatpush.msra.mxu0 %v3485
    %3540 = vmatmul.f32.gmra.mxu0 %v3496
    %v3541 = vpop.f32.mrf.mxu0
    %v3542 = vadd.f32 0.0, %v3541
    %3543 = vmatmul.f32.gmra.mxu0 %v3499
    %v3544 = vpop.f32.mrf.mxu0
    %v3545 = vadd.f32 0.0, %v3544
    %3546 = vdwg.mxu0
    %3547 = vmatpush.msra.mxu0 0.0
    %3548 = vmatpush.msra.mxu0 0.0
    %3549 = vmatpush.msra.mxu0 0.0
    %3550 = vmatpush.msra.mxu0 0.0
    %3551 = vmatpush.msra.mxu0 0.0
    %3552 = vmatpush.msra.mxu0 0.0
    %3553 = vmatpush.msra.mxu0 0.0
    %3554 = vmatpush.msra.mxu0 0.0
    %3555 = vmatpush.msra.mxu0 0.0
    %3556 = vmatpush.msra.mxu0 0.0
    %3557 = vmatpush.msra.mxu0 0.0
    %3558 = vmatpush.msra.mxu0 0.0
    %3559 = vmatpush.msra.mxu0 0.0
    %3560 = vmatpush.msra.mxu0 0.0
    %3561 = vmatpush.msra.mxu0 %v3490
    %3562 = vmatpush.msra.mxu0 %v3486
    %3563 = vmatmul.f32.gmra.mxu0 %v3496
    %v3564 = vpop.f32.mrf.mxu0
    %v3565 = vadd.f32 0.0, %v3564
    %3566 = vmatmul.f32.gmra.mxu0 %v3499
    %v3567 = vpop.f32.mrf.mxu0
    %v3568 = vadd.f32 0.0, %v3567
    %3569 = vdwg.mxu0
    %3570 = vmatpush.msra.mxu0 0.0
    %3571 = vmatpush.msra.mxu0 0.0
    %3572 = vmatpush.msra.mxu0 0.0
    %3573 = vmatpush.msra.mxu0 0.0
    %3574 = vmatpush.msra.mxu0 0.0
    %3575 = vmatpush.msra.mxu0 0.0
    %3576 = vmatpush.msra.mxu0 0.0
    %3577 = vmatpush.msra.mxu0 0.0
    %3578 = vmatpush.msra.mxu0 0.0
    %3579 = vmatpush.msra.mxu0 0.0
    %3580 = vmatpush.msra.mxu0 0.0
    %3581 = vmatpush.msra.mxu0 0.0
    %3582 = vmatpush.msra.mxu0 0.0
    %3583 = vmatpush.msra.mxu0 0.0
    %3584 = vmatpush.msra.mxu0 %v3491
    %3585 = vmatpush.msra.mxu0 %v3487
    %3586 = vmatmul.f32.gmra.mxu0 %v3496
    %v3587 = vpop.f32.mrf.mxu0
    %v3588 = vadd.f32 0.0, %v3587
    %3589 = vmatmul.f32.gmra.mxu0 %v3499
    %v3590 = vpop.f32.mrf.mxu0
    %v3591 = vadd.f32 0.0, %v3590
    %3592 = vdwg.mxu0
    %v3593 = vadd.f32 %v3452, %v3519
    %v3594 = vadd.f32 %v3453, %v3542
    %v3595 = vadd.f32 %v3454, %v3565
    %v3596 = vadd.f32 %v3455, %v3588
    %v3597 = vadd.f32 %v3456, %v3522
    %v3598 = vadd.f32 %v3457, %v3545
    %v3599 = vadd.f32 %v3458, %v3568
    %v3600 = vadd.f32 %v3459, %v3591
    %3601 = vrot.lane.b32.xlu0 %v2796, 113
    %v3602 = vpop.permute.xlu0 %3601
    %3603 = vrot.lane.b32.xlu0 %v2800, 113
    %v3604 = vpop.permute.xlu0 %3603
    %3605 = vrot.lane.b32.xlu0 %v2797, 113
    %v3606 = vpop.permute.xlu0 %3605
    %3607 = vrot.lane.b32.xlu0 %v2801, 113
    %v3608 = vpop.permute.xlu0 %3607
    %3609 = vrot.lane.b32.xlu0 %v2798, 113
    %v3610 = vpop.permute.xlu0 %3609
    %3611 = vrot.lane.b32.xlu0 %v2802, 113
    %v3612 = vpop.permute.xlu0 %3611
    %3613 = vrot.lane.b32.xlu0 %v2799, 113
    %v3614 = vpop.permute.xlu0 %3613
    %3615 = vrot.lane.b32.xlu0 %v2803, 113
    %v3616 = vpop.permute.xlu0 %3615
    %v3617 = vsel %vm906, %v3610, %v3614
    %v3618 = vsel %vm906, %v3612, %v3616
    %v3619 = vsel %vm906, %v3606, %v3610
    %v3620 = vsel %vm906, %v3608, %v3612
    %v3621 = vsel %vm906, %v3602, %v3606
    %v3622 = vsel %vm906, %v3604, %v3608
    %v3623 = vsel %vm906, %v3614, %v3602
    %v3624 = vsel %vm906, %v3616, %v3604
    %v3625 = vmul.f32 %v3621, %v2267
    %v3626 = vmul.f32 %v3619, %v2268
    %v3627 = vmul.f32 %v3617, %v2269
    %v3628 = vmul.f32 %v3623, %v2270
    %v3629 = vmul.f32 %v3622, %v2271
    %v3630 = vmul.f32 %v3620, %v2272
    %v3631 = vmul.f32 %v3618, %v2273
    %v3632 = vmul.f32 %v3624, %v2274
    %s3633 = scalar_lea.vmem %s17, 96
    %v3634 = vld [vmem:[%s3633] sm:$0xff]
    %v3635 = vld [vmem:[%s3633 + $0x8] sm:$0xff]
    %v3637 = vsel %vm1490, %v3634, 0
    %v3640 = vsel %vm1490, %v3635, 0
    %3642 = vmatpush.msra.mxu0 0.0
    %3643 = vmatpush.msra.mxu0 0.0
    %3644 = vmatpush.msra.mxu0 0.0
    %3645 = vmatpush.msra.mxu0 0.0
    %3646 = vmatpush.msra.mxu0 0.0
    %3647 = vmatpush.msra.mxu0 0.0
    %3648 = vmatpush.msra.mxu0 0.0
    %3649 = vmatpush.msra.mxu0 0.0
    %3650 = vmatpush.msra.mxu0 0.0
    %3651 = vmatpush.msra.mxu0 0.0
    %3652 = vmatpush.msra.mxu0 0.0
    %3653 = vmatpush.msra.mxu0 0.0
    %3654 = vmatpush.msra.mxu0 0.0
    %3655 = vmatpush.msra.mxu0 0.0
    %3656 = vmatpush.msra.mxu0 %v3629
    %3657 = vmatpush.msra.mxu0 %v3625
    %3658 = vmatmul.f32.gmra.mxu0 %v3637
    %v3659 = vpop.f32.mrf.mxu0
    %v3660 = vadd.f32 0.0, %v3659
    %3661 = vmatmul.f32.gmra.mxu0 %v3640
    %v3662 = vpop.f32.mrf.mxu0
    %v3663 = vadd.f32 0.0, %v3662
    %3664 = vdwg.mxu0
    %3665 = vmatpush.msra.mxu0 0.0
    %3666 = vmatpush.msra.mxu0 0.0
    %3667 = vmatpush.msra.mxu0 0.0
    %3668 = vmatpush.msra.mxu0 0.0
    %3669 = vmatpush.msra.mxu0 0.0
    %3670 = vmatpush.msra.mxu0 0.0
    %3671 = vmatpush.msra.mxu0 0.0
    %3672 = vmatpush.msra.mxu0 0.0
    %3673 = vmatpush.msra.mxu0 0.0
    %3674 = vmatpush.msra.mxu0 0.0
    %3675 = vmatpush.msra.mxu0 0.0
    %3676 = vmatpush.msra.mxu0 0.0
    %3677 = vmatpush.msra.mxu0 0.0
    %3678 = vmatpush.msra.mxu0 0.0
    %3679 = vmatpush.msra.mxu0 %v3630
    %3680 = vmatpush.msra.mxu0 %v3626
    %3681 = vmatmul.f32.gmra.mxu0 %v3637
    %v3682 = vpop.f32.mrf.mxu0
    %v3683 = vadd.f32 0.0, %v3682
    %3684 = vmatmul.f32.gmra.mxu0 %v3640
    %v3685 = vpop.f32.mrf.mxu0
    %v3686 = vadd.f32 0.0, %v3685
    %3687 = vdwg.mxu0
    %3688 = vmatpush.msra.mxu0 0.0
    %3689 = vmatpush.msra.mxu0 0.0
    %3690 = vmatpush.msra.mxu0 0.0
    %3691 = vmatpush.msra.mxu0 0.0
    %3692 = vmatpush.msra.mxu0 0.0
    %3693 = vmatpush.msra.mxu0 0.0
    %3694 = vmatpush.msra.mxu0 0.0
    %3695 = vmatpush.msra.mxu0 0.0
    %3696 = vmatpush.msra.mxu0 0.0
    %3697 = vmatpush.msra.mxu0 0.0
    %3698 = vmatpush.msra.mxu0 0.0
    %3699 = vmatpush.msra.mxu0 0.0
    %3700 = vmatpush.msra.mxu0 0.0
    %3701 = vmatpush.msra.mxu0 0.0
    %3702 = vmatpush.msra.mxu0 %v3631
    %3703 = vmatpush.msra.mxu0 %v3627
    %3704 = vmatmul.f32.gmra.mxu0 %v3637
    %v3705 = vpop.f32.mrf.mxu0
    %v3706 = vadd.f32 0.0, %v3705
    %3707 = vmatmul.f32.gmra.mxu0 %v3640
    %v3708 = vpop.f32.mrf.mxu0
    %v3709 = vadd.f32 0.0, %v3708
    %3710 = vdwg.mxu0
    %3711 = vmatpush.msra.mxu0 0.0
    %3712 = vmatpush.msra.mxu0 0.0
    %3713 = vmatpush.msra.mxu0 0.0
    %3714 = vmatpush.msra.mxu0 0.0
    %3715 = vmatpush.msra.mxu0 0.0
    %3716 = vmatpush.msra.mxu0 0.0
    %3717 = vmatpush.msra.mxu0 0.0
    %3718 = vmatpush.msra.mxu0 0.0
    %3719 = vmatpush.msra.mxu0 0.0
    %3720 = vmatpush.msra.mxu0 0.0
    %3721 = vmatpush.msra.mxu0 0.0
    %3722 = vmatpush.msra.mxu0 0.0
    %3723 = vmatpush.msra.mxu0 0.0
    %3724 = vmatpush.msra.mxu0 0.0
    %3725 = vmatpush.msra.mxu0 %v3632
    %3726 = vmatpush.msra.mxu0 %v3628
    %3727 = vmatmul.f32.gmra.mxu0 %v3637
    %v3728 = vpop.f32.mrf.mxu0
    %v3729 = vadd.f32 0.0, %v3728
    %3730 = vmatmul.f32.gmra.mxu0 %v3640
    %v3731 = vpop.f32.mrf.mxu0
    %v3732 = vadd.f32 0.0, %v3731
    %3733 = vdwg.mxu0
    %v3734 = vadd.f32 %v3593, %v3660
    %v3735 = vadd.f32 %v3594, %v3683
    %v3736 = vadd.f32 %v3595, %v3706
    %v3737 = vadd.f32 %v3596, %v3729
    %v3738 = vadd.f32 %v3597, %v3663
    %v3739 = vadd.f32 %v3598, %v3686
    %v3740 = vadd.f32 %v3599, %v3709
    %v3741 = vadd.f32 %v3600, %v3732
    %3742 = vrot.lane.b32.xlu0 %v2796, 112
    %v3743 = vpop.permute.xlu0 %3742
    %3744 = vrot.lane.b32.xlu0 %v2800, 112
    %v3745 = vpop.permute.xlu0 %3744
    %3746 = vrot.lane.b32.xlu0 %v2797, 112
    %v3747 = vpop.permute.xlu0 %3746
    %3748 = vrot.lane.b32.xlu0 %v2801, 112
    %v3749 = vpop.permute.xlu0 %3748
    %3750 = vrot.lane.b32.xlu0 %v2798, 112
    %v3751 = vpop.permute.xlu0 %3750
    %3752 = vrot.lane.b32.xlu0 %v2802, 112
    %v3753 = vpop.permute.xlu0 %3752
    %3754 = vrot.lane.b32.xlu0 %v2799, 112
    %v3755 = vpop.permute.xlu0 %3754
    %3756 = vrot.lane.b32.xlu0 %v2803, 112
    %v3757 = vpop.permute.xlu0 %3756
    %v3758 = vsel %vm1037, %v3751, %v3755
    %v3759 = vsel %vm1037, %v3753, %v3757
    %v3760 = vsel %vm1037, %v3747, %v3751
    %v3761 = vsel %vm1037, %v3749, %v3753
    %v3762 = vsel %vm1037, %v3743, %v3747
    %v3763 = vsel %vm1037, %v3745, %v3749
    %v3764 = vsel %vm1037, %v3755, %v3743
    %v3765 = vsel %vm1037, %v3757, %v3745
    %v3766 = vmul.f32 %v3762, %v2416
    %v3767 = vmul.f32 %v3760, %v2417
    %v3768 = vmul.f32 %v3758, %v2418
    %v3769 = vmul.f32 %v3764, %v2419
    %v3770 = vmul.f32 %v3763, %v2420
    %v3771 = vmul.f32 %v3761, %v2421
    %v3772 = vmul.f32 %v3759, %v2422
    %v3773 = vmul.f32 %v3765, %v2423
    %s3774 = scalar_lea.vmem %s17, 112
    %v3775 = vld [vmem:[%s3774] sm:$0xff]
    %v3776 = vld [vmem:[%s3774 + $0x8] sm:$0xff]
    %v3778 = vsel %vm1490, %v3775, 0
    %v3781 = vsel %vm1490, %v3776, 0
    %3783 = vmatpush.msra.mxu0 0.0
    %3784 = vmatpush.msra.mxu0 0.0
    %3785 = vmatpush.msra.mxu0 0.0
    %3786 = vmatpush.msra.mxu0 0.0
    %3787 = vmatpush.msra.mxu0 0.0
    %3788 = vmatpush.msra.mxu0 0.0
    %3789 = vmatpush.msra.mxu0 0.0
    %3790 = vmatpush.msra.mxu0 0.0
    %3791 = vmatpush.msra.mxu0 0.0
    %3792 = vmatpush.msra.mxu0 0.0
    %3793 = vmatpush.msra.mxu0 0.0
    %3794 = vmatpush.msra.mxu0 0.0
    %3795 = vmatpush.msra.mxu0 0.0
    %3796 = vmatpush.msra.mxu0 0.0
    %3797 = vmatpush.msra.mxu0 %v3770
    %3798 = vmatpush.msra.mxu0 %v3766
    %3799 = vmatmul.f32.gmra.mxu0 %v3778
    %v3800 = vpop.f32.mrf.mxu0
    %v3801 = vadd.f32 0.0, %v3800
    %3802 = vmatmul.f32.gmra.mxu0 %v3781
    %v3803 = vpop.f32.mrf.mxu0
    %v3804 = vadd.f32 0.0, %v3803
    %3805 = vdwg.mxu0
    %3806 = vmatpush.msra.mxu0 0.0
    %3807 = vmatpush.msra.mxu0 0.0
    %3808 = vmatpush.msra.mxu0 0.0
    %3809 = vmatpush.msra.mxu0 0.0
    %3810 = vmatpush.msra.mxu0 0.0
    %3811 = vmatpush.msra.mxu0 0.0
    %3812 = vmatpush.msra.mxu0 0.0
    %3813 = vmatpush.msra.mxu0 0.0
    %3814 = vmatpush.msra.mxu0 0.0
    %3815 = vmatpush.msra.mxu0 0.0
    %3816 = vmatpush.msra.mxu0 0.0
    %3817 = vmatpush.msra.mxu0 0.0
    %3818 = vmatpush.msra.mxu0 0.0
    %3819 = vmatpush.msra.mxu0 0.0
    %3820 = vmatpush.msra.mxu0 %v3771
    %3821 = vmatpush.msra.mxu0 %v3767
    %3822 = vmatmul.f32.gmra.mxu0 %v3778
    %v3823 = vpop.f32.mrf.mxu0
    %v3824 = vadd.f32 0.0, %v3823
    %3825 = vmatmul.f32.gmra.mxu0 %v3781
    %v3826 = vpop.f32.mrf.mxu0
    %v3827 = vadd.f32 0.0, %v3826
    %3828 = vdwg.mxu0
    %3829 = vmatpush.msra.mxu0 0.0
    %3830 = vmatpush.msra.mxu0 0.0
    %3831 = vmatpush.msra.mxu0 0.0
    %3832 = vmatpush.msra.mxu0 0.0
    %3833 = vmatpush.msra.mxu0 0.0
    %3834 = vmatpush.msra.mxu0 0.0
    %3835 = vmatpush.msra.mxu0 0.0
    %3836 = vmatpush.msra.mxu0 0.0
    %3837 = vmatpush.msra.mxu0 0.0
    %3838 = vmatpush.msra.mxu0 0.0
    %3839 = vmatpush.msra.mxu0 0.0
    %3840 = vmatpush.msra.mxu0 0.0
    %3841 = vmatpush.msra.mxu0 0.0
    %3842 = vmatpush.msra.mxu0 0.0
    %3843 = vmatpush.msra.mxu0 %v3772
    %3844 = vmatpush.msra.mxu0 %v3768
    %3845 = vmatmul.f32.gmra.mxu0 %v3778
    %v3846 = vpop.f32.mrf.mxu0
    %v3847 = vadd.f32 0.0, %v3846
    %3848 = vmatmul.f32.gmra.mxu0 %v3781
    %v3849 = vpop.f32.mrf.mxu0
    %v3850 = vadd.f32 0.0, %v3849
    %3851 = vdwg.mxu0
    %3852 = vmatpush.msra.mxu0 0.0
    %3853 = vmatpush.msra.mxu0 0.0
    %3854 = vmatpush.msra.mxu0 0.0
    %3855 = vmatpush.msra.mxu0 0.0
    %3856 = vmatpush.msra.mxu0 0.0
    %3857 = vmatpush.msra.mxu0 0.0
    %3858 = vmatpush.msra.mxu0 0.0
    %3859 = vmatpush.msra.mxu0 0.0
    %3860 = vmatpush.msra.mxu0 0.0
    %3861 = vmatpush.msra.mxu0 0.0
    %3862 = vmatpush.msra.mxu0 0.0
    %3863 = vmatpush.msra.mxu0 0.0
    %3864 = vmatpush.msra.mxu0 0.0
    %3865 = vmatpush.msra.mxu0 0.0
    %3866 = vmatpush.msra.mxu0 %v3773
    %3867 = vmatpush.msra.mxu0 %v3769
    %3868 = vmatmul.f32.gmra.mxu0 %v3778
    %v3869 = vpop.f32.mrf.mxu0
    %v3870 = vadd.f32 0.0, %v3869
    %3871 = vmatmul.f32.gmra.mxu0 %v3781
    %v3872 = vpop.f32.mrf.mxu0
    %v3873 = vadd.f32 0.0, %v3872
    %3874 = vdwg.mxu0
    %v3875 = vadd.f32 %v3734, %v3801
    %v3876 = vadd.f32 %v3735, %v3824
    %v3877 = vadd.f32 %v3736, %v3847
    %v3878 = vadd.f32 %v3737, %v3870
    %v3879 = vadd.f32 %v3738, %v3804
    %v3880 = vadd.f32 %v3739, %v3827
    %v3881 = vadd.f32 %v3740, %v3850
    %v3882 = vadd.f32 %v3741, %v3873
    %3883 = vrot.lane.b32.xlu0 %v2796, 111
    %v3884 = vpop.permute.xlu0 %3883
    %3885 = vrot.lane.b32.xlu0 %v2800, 111
    %v3886 = vpop.permute.xlu0 %3885
    %3887 = vrot.lane.b32.xlu0 %v2797, 111
    %v3888 = vpop.permute.xlu0 %3887
    %3889 = vrot.lane.b32.xlu0 %v2801, 111
    %v3890 = vpop.permute.xlu0 %3889
    %3891 = vrot.lane.b32.xlu0 %v2798, 111
    %v3892 = vpop.permute.xlu0 %3891
    %3893 = vrot.lane.b32.xlu0 %v2802, 111
    %v3894 = vpop.permute.xlu0 %3893
    %3895 = vrot.lane.b32.xlu0 %v2799, 111
    %v3896 = vpop.permute.xlu0 %3895
    %3897 = vrot.lane.b32.xlu0 %v2803, 111
    %v3898 = vpop.permute.xlu0 %3897
    %v3899 = vsel %vm1168, %v3892, %v3896
    %v3900 = vsel %vm1168, %v3894, %v3898
    %v3901 = vsel %vm1168, %v3888, %v3892
    %v3902 = vsel %vm1168, %v3890, %v3894
    %v3903 = vsel %vm1168, %v3884, %v3888
    %v3904 = vsel %vm1168, %v3886, %v3890
    %v3905 = vsel %vm1168, %v3896, %v3884
    %v3906 = vsel %vm1168, %v3898, %v3886
    %v3907 = vmul.f32 %v3903, %v2565
    %v3908 = vmul.f32 %v3901, %v2566
    %v3909 = vmul.f32 %v3899, %v2567
    %v3910 = vmul.f32 %v3905, %v2568
    %v3911 = vmul.f32 %v3904, %v2569
    %v3912 = vmul.f32 %v3902, %v2570
    %v3913 = vmul.f32 %v3900, %v2571
    %v3914 = vmul.f32 %v3906, %v2572
    %s3915 = scalar_lea.vmem %s17, 128
    %v3916 = vld [vmem:[%s3915] sm:$0xff]
    %v3917 = vld [vmem:[%s3915 + $0x8] sm:$0xff]
    %v3919 = vsel %vm1490, %v3916, 0
    %v3922 = vsel %vm1490, %v3917, 0
    %3924 = vmatpush.msra.mxu0 0.0
    %3925 = vmatpush.msra.mxu0 0.0
    %3926 = vmatpush.msra.mxu0 0.0
    %3927 = vmatpush.msra.mxu0 0.0
    %3928 = vmatpush.msra.mxu0 0.0
    %3929 = vmatpush.msra.mxu0 0.0
    %3930 = vmatpush.msra.mxu0 0.0
    %3931 = vmatpush.msra.mxu0 0.0
    %3932 = vmatpush.msra.mxu0 0.0
    %3933 = vmatpush.msra.mxu0 0.0
    %3934 = vmatpush.msra.mxu0 0.0
    %3935 = vmatpush.msra.mxu0 0.0
    %3936 = vmatpush.msra.mxu0 0.0
    %3937 = vmatpush.msra.mxu0 0.0
    %3938 = vmatpush.msra.mxu0 %v3911
    %3939 = vmatpush.msra.mxu0 %v3907
    %3940 = vmatmul.f32.gmra.mxu0 %v3919
    %v3941 = vpop.f32.mrf.mxu0
    %v3942 = vadd.f32 0.0, %v3941
    %3943 = vmatmul.f32.gmra.mxu0 %v3922
    %v3944 = vpop.f32.mrf.mxu0
    %v3945 = vadd.f32 0.0, %v3944
    %3946 = vdwg.mxu0
    %3947 = vmatpush.msra.mxu0 0.0
    %3948 = vmatpush.msra.mxu0 0.0
    %3949 = vmatpush.msra.mxu0 0.0
    %3950 = vmatpush.msra.mxu0 0.0
    %3951 = vmatpush.msra.mxu0 0.0
    %3952 = vmatpush.msra.mxu0 0.0
    %3953 = vmatpush.msra.mxu0 0.0
    %3954 = vmatpush.msra.mxu0 0.0
    %3955 = vmatpush.msra.mxu0 0.0
    %3956 = vmatpush.msra.mxu0 0.0
    %3957 = vmatpush.msra.mxu0 0.0
    %3958 = vmatpush.msra.mxu0 0.0
    %3959 = vmatpush.msra.mxu0 0.0
    %3960 = vmatpush.msra.mxu0 0.0
    %3961 = vmatpush.msra.mxu0 %v3912
    %3962 = vmatpush.msra.mxu0 %v3908
    %3963 = vmatmul.f32.gmra.mxu0 %v3919
    %v3964 = vpop.f32.mrf.mxu0
    %v3965 = vadd.f32 0.0, %v3964
    %3966 = vmatmul.f32.gmra.mxu0 %v3922
    %v3967 = vpop.f32.mrf.mxu0
    %v3968 = vadd.f32 0.0, %v3967
    %3969 = vdwg.mxu0
    %3970 = vmatpush.msra.mxu0 0.0
    %3971 = vmatpush.msra.mxu0 0.0
    %3972 = vmatpush.msra.mxu0 0.0
    %3973 = vmatpush.msra.mxu0 0.0
    %3974 = vmatpush.msra.mxu0 0.0
    %3975 = vmatpush.msra.mxu0 0.0
    %3976 = vmatpush.msra.mxu0 0.0
    %3977 = vmatpush.msra.mxu0 0.0
    %3978 = vmatpush.msra.mxu0 0.0
    %3979 = vmatpush.msra.mxu0 0.0
    %3980 = vmatpush.msra.mxu0 0.0
    %3981 = vmatpush.msra.mxu0 0.0
    %3982 = vmatpush.msra.mxu0 0.0
    %3983 = vmatpush.msra.mxu0 0.0
    %3984 = vmatpush.msra.mxu0 %v3913
    %3985 = vmatpush.msra.mxu0 %v3909
    %3986 = vmatmul.f32.gmra.mxu0 %v3919
    %v3987 = vpop.f32.mrf.mxu0
    %v3988 = vadd.f32 0.0, %v3987
    %3989 = vmatmul.f32.gmra.mxu0 %v3922
    %v3990 = vpop.f32.mrf.mxu0
    %v3991 = vadd.f32 0.0, %v3990
    %3992 = vdwg.mxu0
    %3993 = vmatpush.msra.mxu0 0.0
    %3994 = vmatpush.msra.mxu0 0.0
    %3995 = vmatpush.msra.mxu0 0.0
    %3996 = vmatpush.msra.mxu0 0.0
    %3997 = vmatpush.msra.mxu0 0.0
    %3998 = vmatpush.msra.mxu0 0.0
    %3999 = vmatpush.msra.mxu0 0.0
    %4000 = vmatpush.msra.mxu0 0.0
    %4001 = vmatpush.msra.mxu0 0.0
    %4002 = vmatpush.msra.mxu0 0.0
    %4003 = vmatpush.msra.mxu0 0.0
    %4004 = vmatpush.msra.mxu0 0.0
    %4005 = vmatpush.msra.mxu0 0.0
    %4006 = vmatpush.msra.mxu0 0.0
    %4007 = vmatpush.msra.mxu0 %v3914
    %4008 = vmatpush.msra.mxu0 %v3910
    %4009 = vmatmul.f32.gmra.mxu0 %v3919
    %v4010 = vpop.f32.mrf.mxu0
    %v4011 = vadd.f32 0.0, %v4010
    %4012 = vmatmul.f32.gmra.mxu0 %v3922
    %v4013 = vpop.f32.mrf.mxu0
    %v4014 = vadd.f32 0.0, %v4013
    %4015 = vdwg.mxu0
    %v4016 = vadd.f32 %v3875, %v3942
    %v4017 = vadd.f32 %v3876, %v3965
    %v4018 = vadd.f32 %v3877, %v3988
    %v4019 = vadd.f32 %v3878, %v4011
    %v4020 = vadd.f32 %v3879, %v3945
    %v4021 = vadd.f32 %v3880, %v3968
    %v4022 = vadd.f32 %v3881, %v3991
    %v4023 = vadd.f32 %v3882, %v4014
    %v4024 = vadd.f32 %v4016, %v4017
    %v4025 = vadd.f32 %v4024, %v4018
    %v4026 = vadd.f32 %v4025, %v4019
    %4027 = vadd.xlane.f32.xlu0 %v4026
    %v4028 = vpop.xlane.xlu0 %4027
    %v4029 = vadd.f32 %v4020, %v4021
    %v4030 = vadd.f32 %v4029, %v4022
    %v4031 = vadd.f32 %v4030, %v4023
    %4032 = vadd.xlane.f32.xlu0 %v4031
    %v4033 = vpop.xlane.xlu0 %4032
    %v4034 = vmul.f32 %v4016, %v4016
    %v4035 = vmul.f32 %v4017, %v4017
    %v4036 = vmul.f32 %v4018, %v4018
    %v4037 = vmul.f32 %v4019, %v4019
    %v4038 = vmul.f32 %v4020, %v4020
    %v4039 = vmul.f32 %v4021, %v4021
    %v4040 = vmul.f32 %v4022, %v4022
    %v4041 = vmul.f32 %v4023, %v4023
    %v4042 = vadd.f32 %v4034, %v4035
    %v4043 = vadd.f32 %v4042, %v4036
    %v4044 = vadd.f32 %v4043, %v4037
    %4045 = vadd.xlane.f32.xlu0 %v4044
    %v4046 = vpop.xlane.xlu0 %4045
    %v4047 = vadd.f32 %v4038, %v4039
    %v4048 = vadd.f32 %v4047, %v4040
    %v4049 = vadd.f32 %v4048, %v4041
    %4050 = vadd.xlane.f32.xlu0 %v4049
    %v4051 = vpop.xlane.xlu0 %4050
    %v4052 = vmul.f32 %v4028, 0.001953125
    %v4053 = vmul.f32 %v4033, 0.001953125
    %v4054 = vmul.f32 %v4046, 0.001953125
    %v4055 = vmul.f32 %v4051, 0.001953125
    %v4056 = vmul.f32 %v4052, %v4052
    %v4057 = vmul.f32 %v4053, %v4053
    %v4058 = vsub.f32 %v4054, %v4056
    %v4059 = vsub.f32 %v4055, %v4057
    %v4060 = vmax.f32 %v4058, 0.0
    %v4061 = vmax.f32 %v4059, 0.0
    %v4062 = vld [vmem:[%s19] sm:$0xff]
    %v4063 = vld [vmem:[%s19 + $0x8] sm:$0xff]
    %v4064 = vadd.f32 %v4060, 1e-05
    %v4065 = vadd.f32 %v4061, 1e-05
    %v4066 = vrsqrt.pop %v4064
    %v4067 = vmul.f32 %v4066, %v4064
    %v4068 = vmul.f32 %v4067, %v4066
    %v4069 = vmul.f32 0.5, %v4068
    %v4070 = vsub.f32 1.5, %v4069
    %v4071 = vmul.f32 %v4066, %v4070
    %vm4072 = vweird.f32 %v4064
    %vm4073 = vweird.f32 %v4066
    %vm4074 = vmor %vm4072, %vm4073
    %v4075 = vsel %vm4074, %v4066, %v4071
    %v4076 = vrsqrt.pop %v4065
    %v4077 = vmul.f32 %v4076, %v4065
    %v4078 = vmul.f32 %v4077, %v4076
    %v4079 = vmul.f32 0.5, %v4078
    %v4080 = vsub.f32 1.5, %v4079
    %v4081 = vmul.f32 %v4076, %v4080
    %vm4082 = vweird.f32 %v4065
    %vm4083 = vweird.f32 %v4076
    %vm4084 = vmor %vm4082, %vm4083
    %v4085 = vsel %vm4084, %v4076, %v4081
    %v4086 = vmul.f32 %v4062, %v4075
    %v4087 = vmul.f32 %v4063, %v4085
    %v4088 = vld [vmem:[%s21] sm:$0xff]
    %v4089 = vld [vmem:[%s21 + $0x8] sm:$0xff]
    %v4090 = vmul.f32 %v4052, %v4086
    %v4091 = vmul.f32 %v4053, %v4087
    %v4092 = vsub.f32 %v4088, %v4090
    %v4093 = vsub.f32 %v4089, %v4091
    %4095 = vset.pattern.permute.xlu0 0
    %4096 = vperm.xlu0 %4095, %v4086
    %v4097 = vpop.permute.xlu0 %4096
    %4100 = vset.pattern.permute.xlu0 0
    %4101 = vperm.xlu0 %4100, %v4087
    %v4102 = vpop.permute.xlu0 %4101
    %v4104 = vmul.f32 %v4016, %v4097
    %v4105 = vmul.f32 %v4017, %v4097
    %v4106 = vmul.f32 %v4018, %v4097
    %v4107 = vmul.f32 %v4019, %v4097
    %v4108 = vmul.f32 %v4020, %v4102
    %v4109 = vmul.f32 %v4021, %v4102
    %v4110 = vmul.f32 %v4022, %v4102
    %v4111 = vmul.f32 %v4023, %v4102
    %4113 = vset.pattern.permute.xlu0 0
    %4114 = vperm.xlu0 %4113, %v4092
    %v4115 = vpop.permute.xlu0 %4114
    %4118 = vset.pattern.permute.xlu0 0
    %4119 = vperm.xlu0 %4118, %v4093
    %v4120 = vpop.permute.xlu0 %4119
    %v4122 = vadd.f32 %v4104, %v4115
    %v4123 = vadd.f32 %v4105, %v4115
    %v4124 = vadd.f32 %v4106, %v4115
    %v4125 = vadd.f32 %v4107, %v4115
    %v4126 = vadd.f32 %v4108, %v4120
    %v4127 = vadd.f32 %v4109, %v4120
    %v4128 = vadd.f32 %v4110, %v4120
    %v4129 = vadd.f32 %v4111, %v4120
    %v4130 = vmax.f32 %v4122, 0.0
    %v4131 = vmax.f32 %v4123, 0.0
    %v4132 = vmax.f32 %v4124, 0.0
    %v4133 = vmax.f32 %v4125, 0.0
    %v4134 = vmax.f32 %v4126, 0.0
    %v4135 = vmax.f32 %v4127, 0.0
    %v4136 = vmax.f32 %v4128, 0.0
    %v4137 = vmax.f32 %v4129, 0.0
    %v4138 = vld [vmem:[%s23] sm:$0xff]
    %v4139 = vld [vmem:[%s23 + $0x8] sm:$0xff]
    %v4141 = vsel %vm1490, %v4138, 0
    %v4144 = vsel %vm1490, %v4139, 0
    %4146 = vmatpush.msra.mxu0 0.0
    %4147 = vmatpush.msra.mxu0 0.0
    %4148 = vmatpush.msra.mxu0 0.0
    %4149 = vmatpush.msra.mxu0 0.0
    %4150 = vmatpush.msra.mxu0 0.0
    %4151 = vmatpush.msra.mxu0 0.0
    %4152 = vmatpush.msra.mxu0 0.0
    %4153 = vmatpush.msra.mxu0 0.0
    %4154 = vmatpush.msra.mxu0 0.0
    %4155 = vmatpush.msra.mxu0 0.0
    %4156 = vmatpush.msra.mxu0 0.0
    %4157 = vmatpush.msra.mxu0 0.0
    %4158 = vmatpush.msra.mxu0 0.0
    %4159 = vmatpush.msra.mxu0 0.0
    %4160 = vmatpush.msra.mxu0 %v4134
    %4161 = vmatpush.msra.mxu0 %v4130
    %4162 = vmatmul.f32.gmra.mxu0 %v4141
    %v4163 = vpop.f32.mrf.mxu0
    %v4164 = vadd.f32 0.0, %v4163
    %4165 = vmatmul.f32.gmra.mxu0 %v4144
    %v4166 = vpop.f32.mrf.mxu0
    %v4167 = vadd.f32 0.0, %v4166
    %4168 = vdwg.mxu0
    %4169 = vmatpush.msra.mxu0 0.0
    %4170 = vmatpush.msra.mxu0 0.0
    %4171 = vmatpush.msra.mxu0 0.0
    %4172 = vmatpush.msra.mxu0 0.0
    %4173 = vmatpush.msra.mxu0 0.0
    %4174 = vmatpush.msra.mxu0 0.0
    %4175 = vmatpush.msra.mxu0 0.0
    %4176 = vmatpush.msra.mxu0 0.0
    %4177 = vmatpush.msra.mxu0 0.0
    %4178 = vmatpush.msra.mxu0 0.0
    %4179 = vmatpush.msra.mxu0 0.0
    %4180 = vmatpush.msra.mxu0 0.0
    %4181 = vmatpush.msra.mxu0 0.0
    %4182 = vmatpush.msra.mxu0 0.0
    %4183 = vmatpush.msra.mxu0 %v4135
    %4184 = vmatpush.msra.mxu0 %v4131
    %4185 = vmatmul.f32.gmra.mxu0 %v4141
    %v4186 = vpop.f32.mrf.mxu0
    %v4187 = vadd.f32 0.0, %v4186
    %4188 = vmatmul.f32.gmra.mxu0 %v4144
    %v4189 = vpop.f32.mrf.mxu0
    %v4190 = vadd.f32 0.0, %v4189
    %4191 = vdwg.mxu0
    %4192 = vmatpush.msra.mxu0 0.0
    %4193 = vmatpush.msra.mxu0 0.0
    %4194 = vmatpush.msra.mxu0 0.0
    %4195 = vmatpush.msra.mxu0 0.0
    %4196 = vmatpush.msra.mxu0 0.0
    %4197 = vmatpush.msra.mxu0 0.0
    %4198 = vmatpush.msra.mxu0 0.0
    %4199 = vmatpush.msra.mxu0 0.0
    %4200 = vmatpush.msra.mxu0 0.0
    %4201 = vmatpush.msra.mxu0 0.0
    %4202 = vmatpush.msra.mxu0 0.0
    %4203 = vmatpush.msra.mxu0 0.0
    %4204 = vmatpush.msra.mxu0 0.0
    %4205 = vmatpush.msra.mxu0 0.0
    %4206 = vmatpush.msra.mxu0 %v4136
    %4207 = vmatpush.msra.mxu0 %v4132
    %4208 = vmatmul.f32.gmra.mxu0 %v4141
    %v4209 = vpop.f32.mrf.mxu0
    %v4210 = vadd.f32 0.0, %v4209
    %4211 = vmatmul.f32.gmra.mxu0 %v4144
    %v4212 = vpop.f32.mrf.mxu0
    %v4213 = vadd.f32 0.0, %v4212
    %4214 = vdwg.mxu0
    %4215 = vmatpush.msra.mxu0 0.0
    %4216 = vmatpush.msra.mxu0 0.0
    %4217 = vmatpush.msra.mxu0 0.0
    %4218 = vmatpush.msra.mxu0 0.0
    %4219 = vmatpush.msra.mxu0 0.0
    %4220 = vmatpush.msra.mxu0 0.0
    %4221 = vmatpush.msra.mxu0 0.0
    %4222 = vmatpush.msra.mxu0 0.0
    %4223 = vmatpush.msra.mxu0 0.0
    %4224 = vmatpush.msra.mxu0 0.0
    %4225 = vmatpush.msra.mxu0 0.0
    %4226 = vmatpush.msra.mxu0 0.0
    %4227 = vmatpush.msra.mxu0 0.0
    %4228 = vmatpush.msra.mxu0 0.0
    %4229 = vmatpush.msra.mxu0 %v4137
    %4230 = vmatpush.msra.mxu0 %v4133
    %4231 = vmatmul.f32.gmra.mxu0 %v4141
    %v4232 = vpop.f32.mrf.mxu0
    %v4233 = vadd.f32 0.0, %v4232
    %4234 = vmatmul.f32.gmra.mxu0 %v4144
    %v4235 = vpop.f32.mrf.mxu0
    %v4236 = vadd.f32 0.0, %v4235
    %4237 = vdwg.mxu0
    %v4238 = vadd.f32 %v4164, %v4187
    %v4239 = vadd.f32 %v4238, %v4210
    %v4240 = vadd.f32 %v4239, %v4233
    %4241 = vadd.xlane.f32.xlu0 %v4240
    %v4242 = vpop.xlane.xlu0 %4241
    %v4243 = vadd.f32 %v4167, %v4190
    %v4244 = vadd.f32 %v4243, %v4213
    %v4245 = vadd.f32 %v4244, %v4236
    %4246 = vadd.xlane.f32.xlu0 %v4245
    %v4247 = vpop.xlane.xlu0 %4246
    %v4248 = vmul.f32 %v4164, %v4164
    %v4249 = vmul.f32 %v4187, %v4187
    %v4250 = vmul.f32 %v4210, %v4210
    %v4251 = vmul.f32 %v4233, %v4233
    %v4252 = vmul.f32 %v4167, %v4167
    %v4253 = vmul.f32 %v4190, %v4190
    %v4254 = vmul.f32 %v4213, %v4213
    %v4255 = vmul.f32 %v4236, %v4236
    %v4256 = vadd.f32 %v4248, %v4249
    %v4257 = vadd.f32 %v4256, %v4250
    %v4258 = vadd.f32 %v4257, %v4251
    %4259 = vadd.xlane.f32.xlu0 %v4258
    %v4260 = vpop.xlane.xlu0 %4259
    %v4261 = vadd.f32 %v4252, %v4253
    %v4262 = vadd.f32 %v4261, %v4254
    %v4263 = vadd.f32 %v4262, %v4255
    %4264 = vadd.xlane.f32.xlu0 %v4263
    %v4265 = vpop.xlane.xlu0 %4264
    %v4266 = vmul.f32 %v4242, 0.001953125
    %v4267 = vmul.f32 %v4247, 0.001953125
    %v4268 = vmul.f32 %v4260, 0.001953125
    %v4269 = vmul.f32 %v4265, 0.001953125
    %v4270 = vmul.f32 %v4266, %v4266
    %v4271 = vmul.f32 %v4267, %v4267
    %v4272 = vsub.f32 %v4268, %v4270
    %v4273 = vsub.f32 %v4269, %v4271
    %v4274 = vmax.f32 %v4272, 0.0
    %v4275 = vmax.f32 %v4273, 0.0
    %v4276 = vld [vmem:[%s25] sm:$0xff]
    %v4277 = vld [vmem:[%s25 + $0x8] sm:$0xff]
    %v4278 = vadd.f32 %v4274, 1e-05
    %v4279 = vadd.f32 %v4275, 1e-05
    %v4280 = vrsqrt.pop %v4278
    %v4281 = vmul.f32 %v4280, %v4278
    %v4282 = vmul.f32 %v4281, %v4280
    %v4283 = vmul.f32 0.5, %v4282
    %v4284 = vsub.f32 1.5, %v4283
    %v4285 = vmul.f32 %v4280, %v4284
    %vm4286 = vweird.f32 %v4278
    %vm4287 = vweird.f32 %v4280
    %vm4288 = vmor %vm4286, %vm4287
    %v4289 = vsel %vm4288, %v4280, %v4285
    %v4290 = vrsqrt.pop %v4279
    %v4291 = vmul.f32 %v4290, %v4279
    %v4292 = vmul.f32 %v4291, %v4290
    %v4293 = vmul.f32 0.5, %v4292
    %v4294 = vsub.f32 1.5, %v4293
    %v4295 = vmul.f32 %v4290, %v4294
    %vm4296 = vweird.f32 %v4279
    %vm4297 = vweird.f32 %v4290
    %vm4298 = vmor %vm4296, %vm4297
    %v4299 = vsel %vm4298, %v4290, %v4295
    %v4300 = vmul.f32 %v4276, %v4289
    %v4301 = vmul.f32 %v4277, %v4299
    %v4302 = vld [vmem:[%s27] sm:$0xff]
    %v4303 = vld [vmem:[%s27 + $0x8] sm:$0xff]
    %v4304 = vmul.f32 %v4266, %v4300
    %v4305 = vmul.f32 %v4267, %v4301
    %v4306 = vsub.f32 %v4302, %v4304
    %v4307 = vsub.f32 %v4303, %v4305
    %4309 = vset.pattern.permute.xlu0 0
    %4310 = vperm.xlu0 %4309, %v4300
    %v4311 = vpop.permute.xlu0 %4310
    %4314 = vset.pattern.permute.xlu0 0
    %4315 = vperm.xlu0 %4314, %v4301
    %v4316 = vpop.permute.xlu0 %4315
    %v4318 = vmul.f32 %v4164, %v4311
    %v4319 = vmul.f32 %v4187, %v4311
    %v4320 = vmul.f32 %v4210, %v4311
    %v4321 = vmul.f32 %v4233, %v4311
    %v4322 = vmul.f32 %v4167, %v4316
    %v4323 = vmul.f32 %v4190, %v4316
    %v4324 = vmul.f32 %v4213, %v4316
    %v4325 = vmul.f32 %v4236, %v4316
    %4327 = vset.pattern.permute.xlu0 0
    %4328 = vperm.xlu0 %4327, %v4306
    %v4329 = vpop.permute.xlu0 %4328
    %4332 = vset.pattern.permute.xlu0 0
    %4333 = vperm.xlu0 %4332, %v4307
    %v4334 = vpop.permute.xlu0 %4333
    %v4336 = vadd.f32 %v4318, %v4329
    %v4337 = vadd.f32 %v4319, %v4329
    %v4338 = vadd.f32 %v4320, %v4329
    %v4339 = vadd.f32 %v4321, %v4329
    %v4340 = vadd.f32 %v4322, %v4334
    %v4341 = vadd.f32 %v4323, %v4334
    %v4342 = vadd.f32 %v4324, %v4334
    %v4343 = vadd.f32 %v4325, %v4334
    %vm4344 = vcmp.gt.f32.partialorder %v4336, 0.0
    %vm4345 = vcmp.gt.f32.partialorder %v4337, 0.0
    %vm4346 = vcmp.gt.f32.partialorder %v4338, 0.0
    %vm4347 = vcmp.gt.f32.partialorder %v4339, 0.0
    %vm4348 = vcmp.gt.f32.partialorder %v4340, 0.0
    %vm4349 = vcmp.gt.f32.partialorder %v4341, 0.0
    %vm4350 = vcmp.gt.f32.partialorder %v4342, 0.0
    %vm4351 = vcmp.gt.f32.partialorder %v4343, 0.0
    %v4352 = vmul.f32 %v4336, 0.01
    %v4353 = vmul.f32 %v4337, 0.01
    %v4354 = vmul.f32 %v4338, 0.01
    %v4355 = vmul.f32 %v4339, 0.01
    %v4356 = vmul.f32 %v4340, 0.01
    %v4357 = vmul.f32 %v4341, 0.01
    %v4358 = vmul.f32 %v4342, 0.01
    %v4359 = vmul.f32 %v4343, 0.01
    %v4360 = vsel %vm4344, %v4336, %v4352
    %v4361 = vsel %vm4345, %v4337, %v4353
    %v4362 = vsel %vm4346, %v4338, %v4354
    %v4363 = vsel %vm4347, %v4339, %v4355
    %v4364 = vsel %vm4348, %v4340, %v4356
    %v4365 = vsel %vm4349, %v4341, %v4357
    %v4366 = vsel %vm4350, %v4342, %v4358
    %v4367 = vsel %vm4351, %v4343, %v4359
    %4368 = vst [vmem:[%s59] sm:$0xff] %v4360
    %4369 = vst [vmem:[%s59 + $0x8] sm:$0xff] %v4361
    %4370 = vst [vmem:[%s59 + $0x10] sm:$0xff] %v4362
    %4371 = vst [vmem:[%s59 + $0x18] sm:$0xff] %v4363
    %4372 = vst [vmem:[%s59 + $0x20] sm:$0xff] %v4364
    %4373 = vst [vmem:[%s59 + $0x28] sm:$0xff] %v4365
    %4374 = vst [vmem:[%s59 + $0x30] sm:$0xff] %v4366
    %4375 = vst [vmem:[%s59 + $0x38] sm:$0xff] %v4367
    %4376 = vrot.lane.b32.xlu0 %v4360, 17
    %v4377 = vpop.permute.xlu0 %4376
    %4378 = vrot.lane.b32.xlu0 %v4364, 17
    %v4379 = vpop.permute.xlu0 %4378
    %4380 = vrot.lane.b32.xlu0 %v4361, 17
    %v4381 = vpop.permute.xlu0 %4380
    %4382 = vrot.lane.b32.xlu0 %v4365, 17
    %v4383 = vpop.permute.xlu0 %4382
    %4384 = vrot.lane.b32.xlu0 %v4362, 17
    %v4385 = vpop.permute.xlu0 %4384
    %4386 = vrot.lane.b32.xlu0 %v4366, 17
    %v4387 = vpop.permute.xlu0 %4386
    %4388 = vrot.lane.b32.xlu0 %v4363, 17
    %v4389 = vpop.permute.xlu0 %4388
    %4390 = vrot.lane.b32.xlu0 %v4367, 17
    %v4391 = vpop.permute.xlu0 %4390
    %v4392 = vsel %vm159, %v4385, %v4389
    %v4393 = vsel %vm159, %v4387, %v4391
    %v4394 = vsel %vm159, %v4381, %v4385
    %v4395 = vsel %vm159, %v4383, %v4387
    %v4396 = vsel %vm159, %v4377, %v4381
    %v4397 = vsel %vm159, %v4379, %v4383
    %v4398 = vsel %vm159, %v4389, %v4377
    %v4399 = vsel %vm159, %v4391, %v4379
    %v4400 = vld [vmem:[#allocation2] sm:$0xff]
    %v4401 = vld [vmem:[#allocation2 + $0x8] sm:$0xff]
    %v4402 = vld [vmem:[#allocation2 + $0x10] sm:$0xff]
    %v4403 = vld [vmem:[#allocation2 + $0x18] sm:$0xff]
    %v4404 = vld [vmem:[#allocation2 + $0x20] sm:$0xff]
    %v4405 = vld [vmem:[#allocation2 + $0x28] sm:$0xff]
    %v4406 = vld [vmem:[#allocation2 + $0x30] sm:$0xff]
    %v4407 = vld [vmem:[#allocation2 + $0x38] sm:$0xff]
    %v4408 = vmul.f32 %v4398, %v4400
    %v4409 = vmul.f32 %v4396, %v4401
    %v4410 = vmul.f32 %v4394, %v4402
    %v4411 = vmul.f32 %v4392, %v4403
    %v4412 = vmul.f32 %v4399, %v4404
    %v4413 = vmul.f32 %v4397, %v4405
    %v4414 = vmul.f32 %v4395, %v4406
    %v4415 = vmul.f32 %v4393, %v4407
    %v4416 = vld [vmem:[%s29] sm:$0xff]
    %v4417 = vld [vmem:[%s29 + $0x8] sm:$0xff]
    %4418 = vrot.lane.b32.xlu0 %v4360, 16
    %v4419 = vpop.permute.xlu0 %4418
    %4420 = vrot.lane.b32.xlu0 %v4364, 16
    %v4421 = vpop.permute.xlu0 %4420
    %4422 = vrot.lane.b32.xlu0 %v4361, 16
    %v4423 = vpop.permute.xlu0 %4422
    %4424 = vrot.lane.b32.xlu0 %v4365, 16
    %v4425 = vpop.permute.xlu0 %4424
    %4426 = vrot.lane.b32.xlu0 %v4362, 16
    %v4427 = vpop.permute.xlu0 %4426
    %4428 = vrot.lane.b32.xlu0 %v4366, 16
    %v4429 = vpop.permute.xlu0 %4428
    %4430 = vrot.lane.b32.xlu0 %v4363, 16
    %v4431 = vpop.permute.xlu0 %4430
    %4432 = vrot.lane.b32.xlu0 %v4367, 16
    %v4433 = vpop.permute.xlu0 %4432
    %v4434 = vsel %vm182, %v4427, %v4431
    %v4435 = vsel %vm182, %v4429, %v4433
    %v4436 = vsel %vm182, %v4423, %v4427
    %v4437 = vsel %vm182, %v4425, %v4429
    %v4438 = vsel %vm182, %v4419, %v4423
    %v4439 = vsel %vm182, %v4421, %v4425
    %v4440 = vsel %vm182, %v4431, %v4419
    %v4441 = vsel %vm182, %v4433, %v4421
    %v4442 = vld [vmem:[%s187] sm:$0xff]
    %v4443 = vld [vmem:[%s187 + $0x8] sm:$0xff]
    %v4444 = vld [vmem:[%s187 + $0x10] sm:$0xff]
    %v4445 = vld [vmem:[%s187 + $0x18] sm:$0xff]
    %v4446 = vld [vmem:[%s187 + $0x20] sm:$0xff]
    %v4447 = vld [vmem:[%s187 + $0x28] sm:$0xff]
    %v4448 = vld [vmem:[%s187 + $0x30] sm:$0xff]
    %v4449 = vld [vmem:[%s187 + $0x38] sm:$0xff]
    %v4450 = vmul.f32 %v4440, %v4442
    %v4451 = vmul.f32 %v4438, %v4443
    %v4452 = vmul.f32 %v4436, %v4444
    %v4453 = vmul.f32 %v4434, %v4445
    %v4454 = vmul.f32 %v4441, %v4446
    %v4455 = vmul.f32 %v4439, %v4447
    %v4456 = vmul.f32 %v4437, %v4448
    %v4457 = vmul.f32 %v4435, %v4449
    %s4458 = scalar_lea.vmem %s29, 16
    %v4459 = vld [vmem:[%s4458] sm:$0xff]
    %v4460 = vld [vmem:[%s4458 + $0x8] sm:$0xff]
    %v4462 = vsel %vm1490, %v4459, 0
    %v4465 = vsel %vm1490, %v4460, 0
    %4467 = vmatpush.msra.mxu0 0.0
    %4468 = vmatpush.msra.mxu0 0.0
    %4469 = vmatpush.msra.mxu0 0.0
    %4470 = vmatpush.msra.mxu0 0.0
    %4471 = vmatpush.msra.mxu0 0.0
    %4472 = vmatpush.msra.mxu0 0.0
    %4473 = vmatpush.msra.mxu0 0.0
    %4474 = vmatpush.msra.mxu0 0.0
    %4475 = vmatpush.msra.mxu0 0.0
    %4476 = vmatpush.msra.mxu0 0.0
    %4477 = vmatpush.msra.mxu0 0.0
    %4478 = vmatpush.msra.mxu0 0.0
    %4479 = vmatpush.msra.mxu0 0.0
    %4480 = vmatpush.msra.mxu0 0.0
    %4481 = vmatpush.msra.mxu0 %v4454
    %4482 = vmatpush.msra.mxu0 %v4450
    %4483 = vmatmul.f32.gmra.mxu0 %v4462
    %v4484 = vpop.f32.mrf.mxu0
    %v4485 = vadd.f32 0.0, %v4484
    %4486 = vmatmul.f32.gmra.mxu0 %v4465
    %v4487 = vpop.f32.mrf.mxu0
    %v4488 = vadd.f32 0.0, %v4487
    %4489 = vdwg.mxu0
    %4490 = vmatpush.msra.mxu0 0.0
    %4491 = vmatpush.msra.mxu0 0.0
    %4492 = vmatpush.msra.mxu0 0.0
    %4493 = vmatpush.msra.mxu0 0.0
    %4494 = vmatpush.msra.mxu0 0.0
    %4495 = vmatpush.msra.mxu0 0.0
    %4496 = vmatpush.msra.mxu0 0.0
    %4497 = vmatpush.msra.mxu0 0.0
    %4498 = vmatpush.msra.mxu0 0.0
    %4499 = vmatpush.msra.mxu0 0.0
    %4500 = vmatpush.msra.mxu0 0.0
    %4501 = vmatpush.msra.mxu0 0.0
    %4502 = vmatpush.msra.mxu0 0.0
    %4503 = vmatpush.msra.mxu0 0.0
    %4504 = vmatpush.msra.mxu0 %v4455
    %4505 = vmatpush.msra.mxu0 %v4451
    %4506 = vmatmul.f32.gmra.mxu0 %v4462
    %v4507 = vpop.f32.mrf.mxu0
    %v4508 = vadd.f32 0.0, %v4507
    %4509 = vmatmul.f32.gmra.mxu0 %v4465
    %v4510 = vpop.f32.mrf.mxu0
    %v4511 = vadd.f32 0.0, %v4510
    %4512 = vdwg.mxu0
    %4513 = vmatpush.msra.mxu0 0.0
    %4514 = vmatpush.msra.mxu0 0.0
    %4515 = vmatpush.msra.mxu0 0.0
    %4516 = vmatpush.msra.mxu0 0.0
    %4517 = vmatpush.msra.mxu0 0.0
    %4518 = vmatpush.msra.mxu0 0.0
    %4519 = vmatpush.msra.mxu0 0.0
    %4520 = vmatpush.msra.mxu0 0.0
    %4521 = vmatpush.msra.mxu0 0.0
    %4522 = vmatpush.msra.mxu0 0.0
    %4523 = vmatpush.msra.mxu0 0.0
    %4524 = vmatpush.msra.mxu0 0.0
    %4525 = vmatpush.msra.mxu0 0.0
    %4526 = vmatpush.msra.mxu0 0.0
    %4527 = vmatpush.msra.mxu0 %v4456
    %4528 = vmatpush.msra.mxu0 %v4452
    %4529 = vmatmul.f32.gmra.mxu0 %v4462
    %v4530 = vpop.f32.mrf.mxu0
    %v4531 = vadd.f32 0.0, %v4530
    %4532 = vmatmul.f32.gmra.mxu0 %v4465
    %v4533 = vpop.f32.mrf.mxu0
    %v4534 = vadd.f32 0.0, %v4533
    %4535 = vdwg.mxu0
    %4536 = vmatpush.msra.mxu0 0.0
    %4537 = vmatpush.msra.mxu0 0.0
    %4538 = vmatpush.msra.mxu0 0.0
    %4539 = vmatpush.msra.mxu0 0.0
    %4540 = vmatpush.msra.mxu0 0.0
    %4541 = vmatpush.msra.mxu0 0.0
    %4542 = vmatpush.msra.mxu0 0.0
    %4543 = vmatpush.msra.mxu0 0.0
    %4544 = vmatpush.msra.mxu0 0.0
    %4545 = vmatpush.msra.mxu0 0.0
    %4546 = vmatpush.msra.mxu0 0.0
    %4547 = vmatpush.msra.mxu0 0.0
    %4548 = vmatpush.msra.mxu0 0.0
    %4549 = vmatpush.msra.mxu0 0.0
    %4550 = vmatpush.msra.mxu0 %v4457
    %4551 = vmatpush.msra.mxu0 %v4453
    %4552 = vmatmul.f32.gmra.mxu0 %v4462
    %v4553 = vpop.f32.mrf.mxu0
    %v4554 = vadd.f32 0.0, %v4553
    %4555 = vmatmul.f32.gmra.mxu0 %v4465
    %v4556 = vpop.f32.mrf.mxu0
    %v4557 = vadd.f32 0.0, %v4556
    %4558 = vdwg.mxu0
    %v4560 = vsel %vm1490, %v4416, 0
    %v4563 = vsel %vm1490, %v4417, 0
    %4565 = vmatpush.msra.mxu0 0.0
    %4566 = vmatpush.msra.mxu0 0.0
    %4567 = vmatpush.msra.mxu0 0.0
    %4568 = vmatpush.msra.mxu0 0.0
    %4569 = vmatpush.msra.mxu0 0.0
    %4570 = vmatpush.msra.mxu0 0.0
    %4571 = vmatpush.msra.mxu0 0.0
    %4572 = vmatpush.msra.mxu0 0.0
    %4573 = vmatpush.msra.mxu0 0.0
    %4574 = vmatpush.msra.mxu0 0.0
    %4575 = vmatpush.msra.mxu0 0.0
    %4576 = vmatpush.msra.mxu0 0.0
    %4577 = vmatpush.msra.mxu0 0.0
    %4578 = vmatpush.msra.mxu0 0.0
    %4579 = vmatpush.msra.mxu0 %v4412
    %4580 = vmatpush.msra.mxu0 %v4408
    %4581 = vmatmul.f32.gmra.mxu0 %v4560
    %v4582 = vpop.f32.mrf.mxu0
    %v4583 = vadd.f32 %v4485, %v4582
    %4584 = vmatmul.f32.gmra.mxu0 %v4563
    %v4585 = vpop.f32.mrf.mxu0
    %v4586 = vadd.f32 %v4488, %v4585
    %4587 = vdwg.mxu0
    %4588 = vmatpush.msra.mxu0 0.0
    %4589 = vmatpush.msra.mxu0 0.0
    %4590 = vmatpush.msra.mxu0 0.0
    %4591 = vmatpush.msra.mxu0 0.0
    %4592 = vmatpush.msra.mxu0 0.0
    %4593 = vmatpush.msra.mxu0 0.0
    %4594 = vmatpush.msra.mxu0 0.0
    %4595 = vmatpush.msra.mxu0 0.0
    %4596 = vmatpush.msra.mxu0 0.0
    %4597 = vmatpush.msra.mxu0 0.0
    %4598 = vmatpush.msra.mxu0 0.0
    %4599 = vmatpush.msra.mxu0 0.0
    %4600 = vmatpush.msra.mxu0 0.0
    %4601 = vmatpush.msra.mxu0 0.0
    %4602 = vmatpush.msra.mxu0 %v4413
    %4603 = vmatpush.msra.mxu0 %v4409
    %4604 = vmatmul.f32.gmra.mxu0 %v4560
    %v4605 = vpop.f32.mrf.mxu0
    %v4606 = vadd.f32 %v4508, %v4605
    %4607 = vmatmul.f32.gmra.mxu0 %v4563
    %v4608 = vpop.f32.mrf.mxu0
    %v4609 = vadd.f32 %v4511, %v4608
    %4610 = vdwg.mxu0
    %4611 = vmatpush.msra.mxu0 0.0
    %4612 = vmatpush.msra.mxu0 0.0
    %4613 = vmatpush.msra.mxu0 0.0
    %4614 = vmatpush.msra.mxu0 0.0
    %4615 = vmatpush.msra.mxu0 0.0
    %4616 = vmatpush.msra.mxu0 0.0
    %4617 = vmatpush.msra.mxu0 0.0
    %4618 = vmatpush.msra.mxu0 0.0
    %4619 = vmatpush.msra.mxu0 0.0
    %4620 = vmatpush.msra.mxu0 0.0
    %4621 = vmatpush.msra.mxu0 0.0
    %4622 = vmatpush.msra.mxu0 0.0
    %4623 = vmatpush.msra.mxu0 0.0
    %4624 = vmatpush.msra.mxu0 0.0
    %4625 = vmatpush.msra.mxu0 %v4414
    %4626 = vmatpush.msra.mxu0 %v4410
    %4627 = vmatmul.f32.gmra.mxu0 %v4560
    %v4628 = vpop.f32.mrf.mxu0
    %v4629 = vadd.f32 %v4531, %v4628
    %4630 = vmatmul.f32.gmra.mxu0 %v4563
    %v4631 = vpop.f32.mrf.mxu0
    %v4632 = vadd.f32 %v4534, %v4631
    %4633 = vdwg.mxu0
    %4634 = vmatpush.msra.mxu0 0.0
    %4635 = vmatpush.msra.mxu0 0.0
    %4636 = vmatpush.msra.mxu0 0.0
    %4637 = vmatpush.msra.mxu0 0.0
    %4638 = vmatpush.msra.mxu0 0.0
    %4639 = vmatpush.msra.mxu0 0.0
    %4640 = vmatpush.msra.mxu0 0.0
    %4641 = vmatpush.msra.mxu0 0.0
    %4642 = vmatpush.msra.mxu0 0.0
    %4643 = vmatpush.msra.mxu0 0.0
    %4644 = vmatpush.msra.mxu0 0.0
    %4645 = vmatpush.msra.mxu0 0.0
    %4646 = vmatpush.msra.mxu0 0.0
    %4647 = vmatpush.msra.mxu0 0.0
    %4648 = vmatpush.msra.mxu0 %v4415
    %4649 = vmatpush.msra.mxu0 %v4411
    %4650 = vmatmul.f32.gmra.mxu0 %v4560
    %v4651 = vpop.f32.mrf.mxu0
    %v4652 = vadd.f32 %v4554, %v4651
    %4653 = vmatmul.f32.gmra.mxu0 %v4563
    %v4654 = vpop.f32.mrf.mxu0
    %v4655 = vadd.f32 %v4557, %v4654
    %4656 = vdwg.mxu0
    %4657 = vrot.lane.b32.xlu0 %v4360, 15
    %v4658 = vpop.permute.xlu0 %4657
    %4659 = vrot.lane.b32.xlu0 %v4364, 15
    %v4660 = vpop.permute.xlu0 %4659
    %4661 = vrot.lane.b32.xlu0 %v4361, 15
    %v4662 = vpop.permute.xlu0 %4661
    %4663 = vrot.lane.b32.xlu0 %v4365, 15
    %v4664 = vpop.permute.xlu0 %4663
    %4665 = vrot.lane.b32.xlu0 %v4362, 15
    %v4666 = vpop.permute.xlu0 %4665
    %4667 = vrot.lane.b32.xlu0 %v4366, 15
    %v4668 = vpop.permute.xlu0 %4667
    %4669 = vrot.lane.b32.xlu0 %v4363, 15
    %v4670 = vpop.permute.xlu0 %4669
    %4671 = vrot.lane.b32.xlu0 %v4367, 15
    %v4672 = vpop.permute.xlu0 %4671
    %v4673 = vsel %vm404, %v4666, %v4670
    %v4674 = vsel %vm404, %v4668, %v4672
    %v4675 = vsel %vm404, %v4662, %v4666
    %v4676 = vsel %vm404, %v4664, %v4668
    %v4677 = vsel %vm404, %v4658, %v4662
    %v4678 = vsel %vm404, %v4660, %v4664
    %v4679 = vsel %vm404, %v4670, %v4658
    %v4680 = vsel %vm404, %v4672, %v4660
    %v4681 = vld [vmem:[%s409] sm:$0xff]
    %v4682 = vld [vmem:[%s409 + $0x8] sm:$0xff]
    %v4683 = vld [vmem:[%s409 + $0x10] sm:$0xff]
    %v4684 = vld [vmem:[%s409 + $0x18] sm:$0xff]
    %v4685 = vld [vmem:[%s409 + $0x20] sm:$0xff]
    %v4686 = vld [vmem:[%s409 + $0x28] sm:$0xff]
    %v4687 = vld [vmem:[%s409 + $0x30] sm:$0xff]
    %v4688 = vld [vmem:[%s409 + $0x38] sm:$0xff]
    %v4689 = vmul.f32 %v4679, %v4681
    %v4690 = vmul.f32 %v4677, %v4682
    %v4691 = vmul.f32 %v4675, %v4683
    %v4692 = vmul.f32 %v4673, %v4684
    %v4693 = vmul.f32 %v4680, %v4685
    %v4694 = vmul.f32 %v4678, %v4686
    %v4695 = vmul.f32 %v4676, %v4687
    %v4696 = vmul.f32 %v4674, %v4688
    %s4697 = scalar_lea.vmem %s29, 32
    %v4698 = vld [vmem:[%s4697] sm:$0xff]
    %v4699 = vld [vmem:[%s4697 + $0x8] sm:$0xff]
    %v4701 = vsel %vm1490, %v4698, 0
    %v4704 = vsel %vm1490, %v4699, 0
    %4706 = vmatpush.msra.mxu0 0.0
    %4707 = vmatpush.msra.mxu0 0.0
    %4708 = vmatpush.msra.mxu0 0.0
    %4709 = vmatpush.msra.mxu0 0.0
    %4710 = vmatpush.msra.mxu0 0.0
    %4711 = vmatpush.msra.mxu0 0.0
    %4712 = vmatpush.msra.mxu0 0.0
    %4713 = vmatpush.msra.mxu0 0.0
    %4714 = vmatpush.msra.mxu0 0.0
    %4715 = vmatpush.msra.mxu0 0.0
    %4716 = vmatpush.msra.mxu0 0.0
    %4717 = vmatpush.msra.mxu0 0.0
    %4718 = vmatpush.msra.mxu0 0.0
    %4719 = vmatpush.msra.mxu0 0.0
    %4720 = vmatpush.msra.mxu0 %v4693
    %4721 = vmatpush.msra.mxu0 %v4689
    %4722 = vmatmul.f32.gmra.mxu0 %v4701
    %v4723 = vpop.f32.mrf.mxu0
    %v4724 = vadd.f32 0.0, %v4723
    %4725 = vmatmul.f32.gmra.mxu0 %v4704
    %v4726 = vpop.f32.mrf.mxu0
    %v4727 = vadd.f32 0.0, %v4726
    %4728 = vdwg.mxu0
    %4729 = vmatpush.msra.mxu0 0.0
    %4730 = vmatpush.msra.mxu0 0.0
    %4731 = vmatpush.msra.mxu0 0.0
    %4732 = vmatpush.msra.mxu0 0.0
    %4733 = vmatpush.msra.mxu0 0.0
    %4734 = vmatpush.msra.mxu0 0.0
    %4735 = vmatpush.msra.mxu0 0.0
    %4736 = vmatpush.msra.mxu0 0.0
    %4737 = vmatpush.msra.mxu0 0.0
    %4738 = vmatpush.msra.mxu0 0.0
    %4739 = vmatpush.msra.mxu0 0.0
    %4740 = vmatpush.msra.mxu0 0.0
    %4741 = vmatpush.msra.mxu0 0.0
    %4742 = vmatpush.msra.mxu0 0.0
    %4743 = vmatpush.msra.mxu0 %v4694
    %4744 = vmatpush.msra.mxu0 %v4690
    %4745 = vmatmul.f32.gmra.mxu0 %v4701
    %v4746 = vpop.f32.mrf.mxu0
    %v4747 = vadd.f32 0.0, %v4746
    %4748 = vmatmul.f32.gmra.mxu0 %v4704
    %v4749 = vpop.f32.mrf.mxu0
    %v4750 = vadd.f32 0.0, %v4749
    %4751 = vdwg.mxu0
    %4752 = vmatpush.msra.mxu0 0.0
    %4753 = vmatpush.msra.mxu0 0.0
    %4754 = vmatpush.msra.mxu0 0.0
    %4755 = vmatpush.msra.mxu0 0.0
    %4756 = vmatpush.msra.mxu0 0.0
    %4757 = vmatpush.msra.mxu0 0.0
    %4758 = vmatpush.msra.mxu0 0.0
    %4759 = vmatpush.msra.mxu0 0.0
    %4760 = vmatpush.msra.mxu0 0.0
    %4761 = vmatpush.msra.mxu0 0.0
    %4762 = vmatpush.msra.mxu0 0.0
    %4763 = vmatpush.msra.mxu0 0.0
    %4764 = vmatpush.msra.mxu0 0.0
    %4765 = vmatpush.msra.mxu0 0.0
    %4766 = vmatpush.msra.mxu0 %v4695
    %4767 = vmatpush.msra.mxu0 %v4691
    %4768 = vmatmul.f32.gmra.mxu0 %v4701
    %v4769 = vpop.f32.mrf.mxu0
    %v4770 = vadd.f32 0.0, %v4769
    %4771 = vmatmul.f32.gmra.mxu0 %v4704
    %v4772 = vpop.f32.mrf.mxu0
    %v4773 = vadd.f32 0.0, %v4772
    %4774 = vdwg.mxu0
    %4775 = vmatpush.msra.mxu0 0.0
    %4776 = vmatpush.msra.mxu0 0.0
    %4777 = vmatpush.msra.mxu0 0.0
    %4778 = vmatpush.msra.mxu0 0.0
    %4779 = vmatpush.msra.mxu0 0.0
    %4780 = vmatpush.msra.mxu0 0.0
    %4781 = vmatpush.msra.mxu0 0.0
    %4782 = vmatpush.msra.mxu0 0.0
    %4783 = vmatpush.msra.mxu0 0.0
    %4784 = vmatpush.msra.mxu0 0.0
    %4785 = vmatpush.msra.mxu0 0.0
    %4786 = vmatpush.msra.mxu0 0.0
    %4787 = vmatpush.msra.mxu0 0.0
    %4788 = vmatpush.msra.mxu0 0.0
    %4789 = vmatpush.msra.mxu0 %v4696
    %4790 = vmatpush.msra.mxu0 %v4692
    %4791 = vmatmul.f32.gmra.mxu0 %v4701
    %v4792 = vpop.f32.mrf.mxu0
    %v4793 = vadd.f32 0.0, %v4792
    %4794 = vmatmul.f32.gmra.mxu0 %v4704
    %v4795 = vpop.f32.mrf.mxu0
    %v4796 = vadd.f32 0.0, %v4795
    %4797 = vdwg.mxu0
    %v4798 = vadd.f32 %v4583, %v4724
    %v4799 = vadd.f32 %v4606, %v4747
    %v4800 = vadd.f32 %v4629, %v4770
    %v4801 = vadd.f32 %v4652, %v4793
    %v4802 = vadd.f32 %v4586, %v4727
    %v4803 = vadd.f32 %v4609, %v4750
    %v4804 = vadd.f32 %v4632, %v4773
    %v4805 = vadd.f32 %v4655, %v4796
    %4806 = vrot.lane.b32.xlu0 %v4360, 1
    %v4807 = vpop.permute.xlu0 %4806
    %4808 = vrot.lane.b32.xlu0 %v4364, 1
    %v4809 = vpop.permute.xlu0 %4808
    %4810 = vrot.lane.b32.xlu0 %v4361, 1
    %v4811 = vpop.permute.xlu0 %4810
    %4812 = vrot.lane.b32.xlu0 %v4365, 1
    %v4813 = vpop.permute.xlu0 %4812
    %4814 = vrot.lane.b32.xlu0 %v4362, 1
    %v4815 = vpop.permute.xlu0 %4814
    %4816 = vrot.lane.b32.xlu0 %v4366, 1
    %v4817 = vpop.permute.xlu0 %4816
    %4818 = vrot.lane.b32.xlu0 %v4363, 1
    %v4819 = vpop.permute.xlu0 %4818
    %4820 = vrot.lane.b32.xlu0 %v4367, 1
    %v4821 = vpop.permute.xlu0 %4820
    %v4822 = vsel %vm535, %v4815, %v4819
    %v4823 = vsel %vm535, %v4817, %v4821
    %v4824 = vsel %vm535, %v4811, %v4815
    %v4825 = vsel %vm535, %v4813, %v4817
    %v4826 = vsel %vm535, %v4807, %v4811
    %v4827 = vsel %vm535, %v4809, %v4813
    %v4828 = vsel %vm535, %v4819, %v4807
    %v4829 = vsel %vm535, %v4821, %v4809
    %v4830 = vld [vmem:[%s540] sm:$0xff]
    %v4831 = vld [vmem:[%s540 + $0x8] sm:$0xff]
    %v4832 = vld [vmem:[%s540 + $0x10] sm:$0xff]
    %v4833 = vld [vmem:[%s540 + $0x18] sm:$0xff]
    %v4834 = vld [vmem:[%s540 + $0x20] sm:$0xff]
    %v4835 = vld [vmem:[%s540 + $0x28] sm:$0xff]
    %v4836 = vld [vmem:[%s540 + $0x30] sm:$0xff]
    %v4837 = vld [vmem:[%s540 + $0x38] sm:$0xff]
    %v4838 = vmul.f32 %v4828, %v4830
    %v4839 = vmul.f32 %v4826, %v4831
    %v4840 = vmul.f32 %v4824, %v4832
    %v4841 = vmul.f32 %v4822, %v4833
    %v4842 = vmul.f32 %v4829, %v4834
    %v4843 = vmul.f32 %v4827, %v4835
    %v4844 = vmul.f32 %v4825, %v4836
    %v4845 = vmul.f32 %v4823, %v4837
    %s4846 = scalar_lea.vmem %s29, 48
    %v4847 = vld [vmem:[%s4846] sm:$0xff]
    %v4848 = vld [vmem:[%s4846 + $0x8] sm:$0xff]
    %v4850 = vsel %vm1490, %v4847, 0
    %v4853 = vsel %vm1490, %v4848, 0
    %4855 = vmatpush.msra.mxu0 0.0
    %4856 = vmatpush.msra.mxu0 0.0
    %4857 = vmatpush.msra.mxu0 0.0
    %4858 = vmatpush.msra.mxu0 0.0
    %4859 = vmatpush.msra.mxu0 0.0
    %4860 = vmatpush.msra.mxu0 0.0
    %4861 = vmatpush.msra.mxu0 0.0
    %4862 = vmatpush.msra.mxu0 0.0
    %4863 = vmatpush.msra.mxu0 0.0
    %4864 = vmatpush.msra.mxu0 0.0
    %4865 = vmatpush.msra.mxu0 0.0
    %4866 = vmatpush.msra.mxu0 0.0
    %4867 = vmatpush.msra.mxu0 0.0
    %4868 = vmatpush.msra.mxu0 0.0
    %4869 = vmatpush.msra.mxu0 %v4842
    %4870 = vmatpush.msra.mxu0 %v4838
    %4871 = vmatmul.f32.gmra.mxu0 %v4850
    %v4872 = vpop.f32.mrf.mxu0
    %v4873 = vadd.f32 0.0, %v4872
    %4874 = vmatmul.f32.gmra.mxu0 %v4853
    %v4875 = vpop.f32.mrf.mxu0
    %v4876 = vadd.f32 0.0, %v4875
    %4877 = vdwg.mxu0
    %4878 = vmatpush.msra.mxu0 0.0
    %4879 = vmatpush.msra.mxu0 0.0
    %4880 = vmatpush.msra.mxu0 0.0
    %4881 = vmatpush.msra.mxu0 0.0
    %4882 = vmatpush.msra.mxu0 0.0
    %4883 = vmatpush.msra.mxu0 0.0
    %4884 = vmatpush.msra.mxu0 0.0
    %4885 = vmatpush.msra.mxu0 0.0
    %4886 = vmatpush.msra.mxu0 0.0
    %4887 = vmatpush.msra.mxu0 0.0
    %4888 = vmatpush.msra.mxu0 0.0
    %4889 = vmatpush.msra.mxu0 0.0
    %4890 = vmatpush.msra.mxu0 0.0
    %4891 = vmatpush.msra.mxu0 0.0
    %4892 = vmatpush.msra.mxu0 %v4843
    %4893 = vmatpush.msra.mxu0 %v4839
    %4894 = vmatmul.f32.gmra.mxu0 %v4850
    %v4895 = vpop.f32.mrf.mxu0
    %v4896 = vadd.f32 0.0, %v4895
    %4897 = vmatmul.f32.gmra.mxu0 %v4853
    %v4898 = vpop.f32.mrf.mxu0
    %v4899 = vadd.f32 0.0, %v4898
    %4900 = vdwg.mxu0
    %4901 = vmatpush.msra.mxu0 0.0
    %4902 = vmatpush.msra.mxu0 0.0
    %4903 = vmatpush.msra.mxu0 0.0
    %4904 = vmatpush.msra.mxu0 0.0
    %4905 = vmatpush.msra.mxu0 0.0
    %4906 = vmatpush.msra.mxu0 0.0
    %4907 = vmatpush.msra.mxu0 0.0
    %4908 = vmatpush.msra.mxu0 0.0
    %4909 = vmatpush.msra.mxu0 0.0
    %4910 = vmatpush.msra.mxu0 0.0
    %4911 = vmatpush.msra.mxu0 0.0
    %4912 = vmatpush.msra.mxu0 0.0
    %4913 = vmatpush.msra.mxu0 0.0
    %4914 = vmatpush.msra.mxu0 0.0
    %4915 = vmatpush.msra.mxu0 %v4844
    %4916 = vmatpush.msra.mxu0 %v4840
    %4917 = vmatmul.f32.gmra.mxu0 %v4850
    %v4918 = vpop.f32.mrf.mxu0
    %v4919 = vadd.f32 0.0, %v4918
    %4920 = vmatmul.f32.gmra.mxu0 %v4853
    %v4921 = vpop.f32.mrf.mxu0
    %v4922 = vadd.f32 0.0, %v4921
    %4923 = vdwg.mxu0
    %4924 = vmatpush.msra.mxu0 0.0
    %4925 = vmatpush.msra.mxu0 0.0
    %4926 = vmatpush.msra.mxu0 0.0
    %4927 = vmatpush.msra.mxu0 0.0
    %4928 = vmatpush.msra.mxu0 0.0
    %4929 = vmatpush.msra.mxu0 0.0
    %4930 = vmatpush.msra.mxu0 0.0
    %4931 = vmatpush.msra.mxu0 0.0
    %4932 = vmatpush.msra.mxu0 0.0
    %4933 = vmatpush.msra.mxu0 0.0
    %4934 = vmatpush.msra.mxu0 0.0
    %4935 = vmatpush.msra.mxu0 0.0
    %4936 = vmatpush.msra.mxu0 0.0
    %4937 = vmatpush.msra.mxu0 0.0
    %4938 = vmatpush.msra.mxu0 %v4845
    %4939 = vmatpush.msra.mxu0 %v4841
    %4940 = vmatmul.f32.gmra.mxu0 %v4850
    %v4941 = vpop.f32.mrf.mxu0
    %v4942 = vadd.f32 0.0, %v4941
    %4943 = vmatmul.f32.gmra.mxu0 %v4853
    %v4944 = vpop.f32.mrf.mxu0
    %v4945 = vadd.f32 0.0, %v4944
    %4946 = vdwg.mxu0
    %v4947 = vadd.f32 %v4798, %v4873
    %v4948 = vadd.f32 %v4799, %v4896
    %v4949 = vadd.f32 %v4800, %v4919
    %v4950 = vadd.f32 %v4801, %v4942
    %v4951 = vadd.f32 %v4802, %v4876
    %v4952 = vadd.f32 %v4803, %v4899
    %v4953 = vadd.f32 %v4804, %v4922
    %v4954 = vadd.f32 %v4805, %v4945
    %s4955 = scalar_lea.vmem %s29, 64
    %v4956 = vld [vmem:[%s4955] sm:$0xff]
    %v4957 = vld [vmem:[%s4955 + $0x8] sm:$0xff]
    %v4959 = vsel %vm1490, %v4956, 0
    %v4962 = vsel %vm1490, %v4957, 0
    %4964 = vmatpush.msra.mxu0 0.0
    %4965 = vmatpush.msra.mxu0 0.0
    %4966 = vmatpush.msra.mxu0 0.0
    %4967 = vmatpush.msra.mxu0 0.0
    %4968 = vmatpush.msra.mxu0 0.0
    %4969 = vmatpush.msra.mxu0 0.0
    %4970 = vmatpush.msra.mxu0 0.0
    %4971 = vmatpush.msra.mxu0 0.0
    %4972 = vmatpush.msra.mxu0 0.0
    %4973 = vmatpush.msra.mxu0 0.0
    %4974 = vmatpush.msra.mxu0 0.0
    %4975 = vmatpush.msra.mxu0 0.0
    %4976 = vmatpush.msra.mxu0 0.0
    %4977 = vmatpush.msra.mxu0 0.0
    %4978 = vmatpush.msra.mxu0 %v4364
    %4979 = vmatpush.msra.mxu0 %v4360
    %4980 = vmatmul.f32.gmra.mxu0 %v4959
    %v4981 = vpop.f32.mrf.mxu0
    %v4982 = vadd.f32 0.0, %v4981
    %4983 = vmatmul.f32.gmra.mxu0 %v4962
    %v4984 = vpop.f32.mrf.mxu0
    %v4985 = vadd.f32 0.0, %v4984
    %4986 = vdwg.mxu0
    %4987 = vmatpush.msra.mxu0 0.0
    %4988 = vmatpush.msra.mxu0 0.0
    %4989 = vmatpush.msra.mxu0 0.0
    %4990 = vmatpush.msra.mxu0 0.0
    %4991 = vmatpush.msra.mxu0 0.0
    %4992 = vmatpush.msra.mxu0 0.0
    %4993 = vmatpush.msra.mxu0 0.0
    %4994 = vmatpush.msra.mxu0 0.0
    %4995 = vmatpush.msra.mxu0 0.0
    %4996 = vmatpush.msra.mxu0 0.0
    %4997 = vmatpush.msra.mxu0 0.0
    %4998 = vmatpush.msra.mxu0 0.0
    %4999 = vmatpush.msra.mxu0 0.0
    %5000 = vmatpush.msra.mxu0 0.0
    %5001 = vmatpush.msra.mxu0 %v4365
    %5002 = vmatpush.msra.mxu0 %v4361
    %5003 = vmatmul.f32.gmra.mxu0 %v4959
    %v5004 = vpop.f32.mrf.mxu0
    %v5005 = vadd.f32 0.0, %v5004
    %5006 = vmatmul.f32.gmra.mxu0 %v4962
    %v5007 = vpop.f32.mrf.mxu0
    %v5008 = vadd.f32 0.0, %v5007
    %5009 = vdwg.mxu0
    %5010 = vmatpush.msra.mxu0 0.0
    %5011 = vmatpush.msra.mxu0 0.0
    %5012 = vmatpush.msra.mxu0 0.0
    %5013 = vmatpush.msra.mxu0 0.0
    %5014 = vmatpush.msra.mxu0 0.0
    %5015 = vmatpush.msra.mxu0 0.0
    %5016 = vmatpush.msra.mxu0 0.0
    %5017 = vmatpush.msra.mxu0 0.0
    %5018 = vmatpush.msra.mxu0 0.0
    %5019 = vmatpush.msra.mxu0 0.0
    %5020 = vmatpush.msra.mxu0 0.0
    %5021 = vmatpush.msra.mxu0 0.0
    %5022 = vmatpush.msra.mxu0 0.0
    %5023 = vmatpush.msra.mxu0 0.0
    %5024 = vmatpush.msra.mxu0 %v4366
    %5025 = vmatpush.msra.mxu0 %v4362
    %5026 = vmatmul.f32.gmra.mxu0 %v4959
    %v5027 = vpop.f32.mrf.mxu0
    %v5028 = vadd.f32 0.0, %v5027
    %5029 = vmatmul.f32.gmra.mxu0 %v4962
    %v5030 = vpop.f32.mrf.mxu0
    %v5031 = vadd.f32 0.0, %v5030
    %5032 = vdwg.mxu0
    %5033 = vmatpush.msra.mxu0 0.0
    %5034 = vmatpush.msra.mxu0 0.0
    %5035 = vmatpush.msra.mxu0 0.0
    %5036 = vmatpush.msra.mxu0 0.0
    %5037 = vmatpush.msra.mxu0 0.0
    %5038 = vmatpush.msra.mxu0 0.0
    %5039 = vmatpush.msra.mxu0 0.0
    %5040 = vmatpush.msra.mxu0 0.0
    %5041 = vmatpush.msra.mxu0 0.0
    %5042 = vmatpush.msra.mxu0 0.0
    %5043 = vmatpush.msra.mxu0 0.0
    %5044 = vmatpush.msra.mxu0 0.0
    %5045 = vmatpush.msra.mxu0 0.0
    %5046 = vmatpush.msra.mxu0 0.0
    %5047 = vmatpush.msra.mxu0 %v4367
    %5048 = vmatpush.msra.mxu0 %v4363
    %5049 = vmatmul.f32.gmra.mxu0 %v4959
    %v5050 = vpop.f32.mrf.mxu0
    %v5051 = vadd.f32 0.0, %v5050
    %5052 = vmatmul.f32.gmra.mxu0 %v4962
    %v5053 = vpop.f32.mrf.mxu0
    %v5054 = vadd.f32 0.0, %v5053
    %5055 = vdwg.mxu0
    %v5056 = vadd.f32 %v4947, %v4982
    %v5057 = vadd.f32 %v4948, %v5005
    %v5058 = vadd.f32 %v4949, %v5028
    %v5059 = vadd.f32 %v4950, %v5051
    %v5060 = vadd.f32 %v4951, %v4985
    %v5061 = vadd.f32 %v4952, %v5008
    %v5062 = vadd.f32 %v4953, %v5031
    %v5063 = vadd.f32 %v4954, %v5054
    %5064 = vrot.lane.b32.xlu0 %v4360, 127
    %v5065 = vpop.permute.xlu0 %5064
    %5066 = vrot.lane.b32.xlu0 %v4364, 127
    %v5067 = vpop.permute.xlu0 %5066
    %5068 = vrot.lane.b32.xlu0 %v4361, 127
    %v5069 = vpop.permute.xlu0 %5068
    %5070 = vrot.lane.b32.xlu0 %v4365, 127
    %v5071 = vpop.permute.xlu0 %5070
    %5072 = vrot.lane.b32.xlu0 %v4362, 127
    %v5073 = vpop.permute.xlu0 %5072
    %5074 = vrot.lane.b32.xlu0 %v4366, 127
    %v5075 = vpop.permute.xlu0 %5074
    %5076 = vrot.lane.b32.xlu0 %v4363, 127
    %v5077 = vpop.permute.xlu0 %5076
    %5078 = vrot.lane.b32.xlu0 %v4367, 127
    %v5079 = vpop.permute.xlu0 %5078
    %v5080 = vsel %vm775, %v5073, %v5077
    %v5081 = vsel %vm775, %v5075, %v5079
    %v5082 = vsel %vm775, %v5069, %v5073
    %v5083 = vsel %vm775, %v5071, %v5075
    %v5084 = vsel %vm775, %v5065, %v5069
    %v5085 = vsel %vm775, %v5067, %v5071
    %v5086 = vsel %vm775, %v5077, %v5065
    %v5087 = vsel %vm775, %v5079, %v5067
    %v5088 = vld [vmem:[%s780] sm:$0xff]
    %v5089 = vld [vmem:[%s780 + $0x8] sm:$0xff]
    %v5090 = vld [vmem:[%s780 + $0x10] sm:$0xff]
    %v5091 = vld [vmem:[%s780 + $0x18] sm:$0xff]
    %v5092 = vld [vmem:[%s780 + $0x20] sm:$0xff]
    %v5093 = vld [vmem:[%s780 + $0x28] sm:$0xff]
    %v5094 = vld [vmem:[%s780 + $0x30] sm:$0xff]
    %v5095 = vld [vmem:[%s780 + $0x38] sm:$0xff]
    %v5096 = vmul.f32 %v5084, %v5088
    %v5097 = vmul.f32 %v5082, %v5089
    %v5098 = vmul.f32 %v5080, %v5090
    %v5099 = vmul.f32 %v5086, %v5091
    %v5100 = vmul.f32 %v5085, %v5092
    %v5101 = vmul.f32 %v5083, %v5093
    %v5102 = vmul.f32 %v5081, %v5094
    %v5103 = vmul.f32 %v5087, %v5095
    %s5104 = scalar_lea.vmem %s29, 80
    %v5105 = vld [vmem:[%s5104] sm:$0xff]
    %v5106 = vld [vmem:[%s5104 + $0x8] sm:$0xff]
    %v5108 = vsel %vm1490, %v5105, 0
    %v5111 = vsel %vm1490, %v5106, 0
    %5113 = vmatpush.msra.mxu0 0.0
    %5114 = vmatpush.msra.mxu0 0.0
    %5115 = vmatpush.msra.mxu0 0.0
    %5116 = vmatpush.msra.mxu0 0.0
    %5117 = vmatpush.msra.mxu0 0.0
    %5118 = vmatpush.msra.mxu0 0.0
    %5119 = vmatpush.msra.mxu0 0.0
    %5120 = vmatpush.msra.mxu0 0.0
    %5121 = vmatpush.msra.mxu0 0.0
    %5122 = vmatpush.msra.mxu0 0.0
    %5123 = vmatpush.msra.mxu0 0.0
    %5124 = vmatpush.msra.mxu0 0.0
    %5125 = vmatpush.msra.mxu0 0.0
    %5126 = vmatpush.msra.mxu0 0.0
    %5127 = vmatpush.msra.mxu0 %v5100
    %5128 = vmatpush.msra.mxu0 %v5096
    %5129 = vmatmul.f32.gmra.mxu0 %v5108
    %v5130 = vpop.f32.mrf.mxu0
    %v5131 = vadd.f32 0.0, %v5130
    %5132 = vmatmul.f32.gmra.mxu0 %v5111
    %v5133 = vpop.f32.mrf.mxu0
    %v5134 = vadd.f32 0.0, %v5133
    %5135 = vdwg.mxu0
    %5136 = vmatpush.msra.mxu0 0.0
    %5137 = vmatpush.msra.mxu0 0.0
    %5138 = vmatpush.msra.mxu0 0.0
    %5139 = vmatpush.msra.mxu0 0.0
    %5140 = vmatpush.msra.mxu0 0.0
    %5141 = vmatpush.msra.mxu0 0.0
    %5142 = vmatpush.msra.mxu0 0.0
    %5143 = vmatpush.msra.mxu0 0.0
    %5144 = vmatpush.msra.mxu0 0.0
    %5145 = vmatpush.msra.mxu0 0.0
    %5146 = vmatpush.msra.mxu0 0.0
    %5147 = vmatpush.msra.mxu0 0.0
    %5148 = vmatpush.msra.mxu0 0.0
    %5149 = vmatpush.msra.mxu0 0.0
    %5150 = vmatpush.msra.mxu0 %v5101
    %5151 = vmatpush.msra.mxu0 %v5097
    %5152 = vmatmul.f32.gmra.mxu0 %v5108
    %v5153 = vpop.f32.mrf.mxu0
    %v5154 = vadd.f32 0.0, %v5153
    %5155 = vmatmul.f32.gmra.mxu0 %v5111
    %v5156 = vpop.f32.mrf.mxu0
    %v5157 = vadd.f32 0.0, %v5156
    %5158 = vdwg.mxu0
    %5159 = vmatpush.msra.mxu0 0.0
    %5160 = vmatpush.msra.mxu0 0.0
    %5161 = vmatpush.msra.mxu0 0.0
    %5162 = vmatpush.msra.mxu0 0.0
    %5163 = vmatpush.msra.mxu0 0.0
    %5164 = vmatpush.msra.mxu0 0.0
    %5165 = vmatpush.msra.mxu0 0.0
    %5166 = vmatpush.msra.mxu0 0.0
    %5167 = vmatpush.msra.mxu0 0.0
    %5168 = vmatpush.msra.mxu0 0.0
    %5169 = vmatpush.msra.mxu0 0.0
    %5170 = vmatpush.msra.mxu0 0.0
    %5171 = vmatpush.msra.mxu0 0.0
    %5172 = vmatpush.msra.mxu0 0.0
    %5173 = vmatpush.msra.mxu0 %v5102
    %5174 = vmatpush.msra.mxu0 %v5098
    %5175 = vmatmul.f32.gmra.mxu0 %v5108
    %v5176 = vpop.f32.mrf.mxu0
    %v5177 = vadd.f32 0.0, %v5176
    %5178 = vmatmul.f32.gmra.mxu0 %v5111
    %v5179 = vpop.f32.mrf.mxu0
    %v5180 = vadd.f32 0.0, %v5179
    %5181 = vdwg.mxu0
    %5182 = vmatpush.msra.mxu0 0.0
    %5183 = vmatpush.msra.mxu0 0.0
    %5184 = vmatpush.msra.mxu0 0.0
    %5185 = vmatpush.msra.mxu0 0.0
    %5186 = vmatpush.msra.mxu0 0.0
    %5187 = vmatpush.msra.mxu0 0.0
    %5188 = vmatpush.msra.mxu0 0.0
    %5189 = vmatpush.msra.mxu0 0.0
    %5190 = vmatpush.msra.mxu0 0.0
    %5191 = vmatpush.msra.mxu0 0.0
    %5192 = vmatpush.msra.mxu0 0.0
    %5193 = vmatpush.msra.mxu0 0.0
    %5194 = vmatpush.msra.mxu0 0.0
    %5195 = vmatpush.msra.mxu0 0.0
    %5196 = vmatpush.msra.mxu0 %v5103
    %5197 = vmatpush.msra.mxu0 %v5099
    %5198 = vmatmul.f32.gmra.mxu0 %v5108
    %v5199 = vpop.f32.mrf.mxu0
    %v5200 = vadd.f32 0.0, %v5199
    %5201 = vmatmul.f32.gmra.mxu0 %v5111
    %v5202 = vpop.f32.mrf.mxu0
    %v5203 = vadd.f32 0.0, %v5202
    %5204 = vdwg.mxu0
    %v5205 = vadd.f32 %v5056, %v5131
    %v5206 = vadd.f32 %v5057, %v5154
    %v5207 = vadd.f32 %v5058, %v5177
    %v5208 = vadd.f32 %v5059, %v5200
    %v5209 = vadd.f32 %v5060, %v5134
    %v5210 = vadd.f32 %v5061, %v5157
    %v5211 = vadd.f32 %v5062, %v5180
    %v5212 = vadd.f32 %v5063, %v5203
    %5213 = vrot.lane.b32.xlu0 %v4360, 113
    %v5214 = vpop.permute.xlu0 %5213
    %5215 = vrot.lane.b32.xlu0 %v4364, 113
    %v5216 = vpop.permute.xlu0 %5215
    %5217 = vrot.lane.b32.xlu0 %v4361, 113
    %v5218 = vpop.permute.xlu0 %5217
    %5219 = vrot.lane.b32.xlu0 %v4365, 113
    %v5220 = vpop.permute.xlu0 %5219
    %5221 = vrot.lane.b32.xlu0 %v4362, 113
    %v5222 = vpop.permute.xlu0 %5221
    %5223 = vrot.lane.b32.xlu0 %v4366, 113
    %v5224 = vpop.permute.xlu0 %5223
    %5225 = vrot.lane.b32.xlu0 %v4363, 113
    %v5226 = vpop.permute.xlu0 %5225
    %5227 = vrot.lane.b32.xlu0 %v4367, 113
    %v5228 = vpop.permute.xlu0 %5227
    %v5229 = vsel %vm906, %v5222, %v5226
    %v5230 = vsel %vm906, %v5224, %v5228
    %v5231 = vsel %vm906, %v5218, %v5222
    %v5232 = vsel %vm906, %v5220, %v5224
    %v5233 = vsel %vm906, %v5214, %v5218
    %v5234 = vsel %vm906, %v5216, %v5220
    %v5235 = vsel %vm906, %v5226, %v5214
    %v5236 = vsel %vm906, %v5228, %v5216
    %v5237 = vld [vmem:[%s911] sm:$0xff]
    %v5238 = vld [vmem:[%s911 + $0x8] sm:$0xff]
    %v5239 = vld [vmem:[%s911 + $0x10] sm:$0xff]
    %v5240 = vld [vmem:[%s911 + $0x18] sm:$0xff]
    %v5241 = vld [vmem:[%s911 + $0x20] sm:$0xff]
    %v5242 = vld [vmem:[%s911 + $0x28] sm:$0xff]
    %v5243 = vld [vmem:[%s911 + $0x30] sm:$0xff]
    %v5244 = vld [vmem:[%s911 + $0x38] sm:$0xff]
    %v5245 = vmul.f32 %v5233, %v5237
    %v5246 = vmul.f32 %v5231, %v5238
    %v5247 = vmul.f32 %v5229, %v5239
    %v5248 = vmul.f32 %v5235, %v5240
    %v5249 = vmul.f32 %v5234, %v5241
    %v5250 = vmul.f32 %v5232, %v5242
    %v5251 = vmul.f32 %v5230, %v5243
    %v5252 = vmul.f32 %v5236, %v5244
    %s5253 = scalar_lea.vmem %s29, 96
    %v5254 = vld [vmem:[%s5253] sm:$0xff]
    %v5255 = vld [vmem:[%s5253 + $0x8] sm:$0xff]
    %v5257 = vsel %vm1490, %v5254, 0
    %v5260 = vsel %vm1490, %v5255, 0
    %5262 = vmatpush.msra.mxu0 0.0
    %5263 = vmatpush.msra.mxu0 0.0
    %5264 = vmatpush.msra.mxu0 0.0
    %5265 = vmatpush.msra.mxu0 0.0
    %5266 = vmatpush.msra.mxu0 0.0
    %5267 = vmatpush.msra.mxu0 0.0
    %5268 = vmatpush.msra.mxu0 0.0
    %5269 = vmatpush.msra.mxu0 0.0
    %5270 = vmatpush.msra.mxu0 0.0
    %5271 = vmatpush.msra.mxu0 0.0
    %5272 = vmatpush.msra.mxu0 0.0
    %5273 = vmatpush.msra.mxu0 0.0
    %5274 = vmatpush.msra.mxu0 0.0
    %5275 = vmatpush.msra.mxu0 0.0
    %5276 = vmatpush.msra.mxu0 %v5249
    %5277 = vmatpush.msra.mxu0 %v5245
    %5278 = vmatmul.f32.gmra.mxu0 %v5257
    %v5279 = vpop.f32.mrf.mxu0
    %v5280 = vadd.f32 0.0, %v5279
    %5281 = vmatmul.f32.gmra.mxu0 %v5260
    %v5282 = vpop.f32.mrf.mxu0
    %v5283 = vadd.f32 0.0, %v5282
    %5284 = vdwg.mxu0
    %5285 = vmatpush.msra.mxu0 0.0
    %5286 = vmatpush.msra.mxu0 0.0
    %5287 = vmatpush.msra.mxu0 0.0
    %5288 = vmatpush.msra.mxu0 0.0
    %5289 = vmatpush.msra.mxu0 0.0
    %5290 = vmatpush.msra.mxu0 0.0
    %5291 = vmatpush.msra.mxu0 0.0
    %5292 = vmatpush.msra.mxu0 0.0
    %5293 = vmatpush.msra.mxu0 0.0
    %5294 = vmatpush.msra.mxu0 0.0
    %5295 = vmatpush.msra.mxu0 0.0
    %5296 = vmatpush.msra.mxu0 0.0
    %5297 = vmatpush.msra.mxu0 0.0
    %5298 = vmatpush.msra.mxu0 0.0
    %5299 = vmatpush.msra.mxu0 %v5250
    %5300 = vmatpush.msra.mxu0 %v5246
    %5301 = vmatmul.f32.gmra.mxu0 %v5257
    %v5302 = vpop.f32.mrf.mxu0
    %v5303 = vadd.f32 0.0, %v5302
    %5304 = vmatmul.f32.gmra.mxu0 %v5260
    %v5305 = vpop.f32.mrf.mxu0
    %v5306 = vadd.f32 0.0, %v5305
    %5307 = vdwg.mxu0
    %5308 = vmatpush.msra.mxu0 0.0
    %5309 = vmatpush.msra.mxu0 0.0
    %5310 = vmatpush.msra.mxu0 0.0
    %5311 = vmatpush.msra.mxu0 0.0
    %5312 = vmatpush.msra.mxu0 0.0
    %5313 = vmatpush.msra.mxu0 0.0
    %5314 = vmatpush.msra.mxu0 0.0
    %5315 = vmatpush.msra.mxu0 0.0
    %5316 = vmatpush.msra.mxu0 0.0
    %5317 = vmatpush.msra.mxu0 0.0
    %5318 = vmatpush.msra.mxu0 0.0
    %5319 = vmatpush.msra.mxu0 0.0
    %5320 = vmatpush.msra.mxu0 0.0
    %5321 = vmatpush.msra.mxu0 0.0
    %5322 = vmatpush.msra.mxu0 %v5251
    %5323 = vmatpush.msra.mxu0 %v5247
    %5324 = vmatmul.f32.gmra.mxu0 %v5257
    %v5325 = vpop.f32.mrf.mxu0
    %v5326 = vadd.f32 0.0, %v5325
    %5327 = vmatmul.f32.gmra.mxu0 %v5260
    %v5328 = vpop.f32.mrf.mxu0
    %v5329 = vadd.f32 0.0, %v5328
    %5330 = vdwg.mxu0
    %5331 = vmatpush.msra.mxu0 0.0
    %5332 = vmatpush.msra.mxu0 0.0
    %5333 = vmatpush.msra.mxu0 0.0
    %5334 = vmatpush.msra.mxu0 0.0
    %5335 = vmatpush.msra.mxu0 0.0
    %5336 = vmatpush.msra.mxu0 0.0
    %5337 = vmatpush.msra.mxu0 0.0
    %5338 = vmatpush.msra.mxu0 0.0
    %5339 = vmatpush.msra.mxu0 0.0
    %5340 = vmatpush.msra.mxu0 0.0
    %5341 = vmatpush.msra.mxu0 0.0
    %5342 = vmatpush.msra.mxu0 0.0
    %5343 = vmatpush.msra.mxu0 0.0
    %5344 = vmatpush.msra.mxu0 0.0
    %5345 = vmatpush.msra.mxu0 %v5252
    %5346 = vmatpush.msra.mxu0 %v5248
    %5347 = vmatmul.f32.gmra.mxu0 %v5257
    %v5348 = vpop.f32.mrf.mxu0
    %v5349 = vadd.f32 0.0, %v5348
    %5350 = vmatmul.f32.gmra.mxu0 %v5260
    %v5351 = vpop.f32.mrf.mxu0
    %v5352 = vadd.f32 0.0, %v5351
    %5353 = vdwg.mxu0
    %v5354 = vadd.f32 %v5205, %v5280
    %v5355 = vadd.f32 %v5206, %v5303
    %v5356 = vadd.f32 %v5207, %v5326
    %v5357 = vadd.f32 %v5208, %v5349
    %v5358 = vadd.f32 %v5209, %v5283
    %v5359 = vadd.f32 %v5210, %v5306
    %v5360 = vadd.f32 %v5211, %v5329
    %v5361 = vadd.f32 %v5212, %v5352
    %5362 = vrot.lane.b32.xlu0 %v4360, 112
    %v5363 = vpop.permute.xlu0 %5362
    %5364 = vrot.lane.b32.xlu0 %v4364, 112
    %v5365 = vpop.permute.xlu0 %5364
    %5366 = vrot.lane.b32.xlu0 %v4361, 112
    %v5367 = vpop.permute.xlu0 %5366
    %5368 = vrot.lane.b32.xlu0 %v4365, 112
    %v5369 = vpop.permute.xlu0 %5368
    %5370 = vrot.lane.b32.xlu0 %v4362, 112
    %v5371 = vpop.permute.xlu0 %5370
    %5372 = vrot.lane.b32.xlu0 %v4366, 112
    %v5373 = vpop.permute.xlu0 %5372
    %5374 = vrot.lane.b32.xlu0 %v4363, 112
    %v5375 = vpop.permute.xlu0 %5374
    %5376 = vrot.lane.b32.xlu0 %v4367, 112
    %v5377 = vpop.permute.xlu0 %5376
    %v5378 = vsel %vm1037, %v5371, %v5375
    %v5379 = vsel %vm1037, %v5373, %v5377
    %v5380 = vsel %vm1037, %v5367, %v5371
    %v5381 = vsel %vm1037, %v5369, %v5373
    %v5382 = vsel %vm1037, %v5363, %v5367
    %v5383 = vsel %vm1037, %v5365, %v5369
    %v5384 = vsel %vm1037, %v5375, %v5363
    %v5385 = vsel %vm1037, %v5377, %v5365
    %v5386 = vld [vmem:[%s1042] sm:$0xff]
    %v5387 = vld [vmem:[%s1042 + $0x8] sm:$0xff]
    %v5388 = vld [vmem:[%s1042 + $0x10] sm:$0xff]
    %v5389 = vld [vmem:[%s1042 + $0x18] sm:$0xff]
    %v5390 = vld [vmem:[%s1042 + $0x20] sm:$0xff]
    %v5391 = vld [vmem:[%s1042 + $0x28] sm:$0xff]
    %v5392 = vld [vmem:[%s1042 + $0x30] sm:$0xff]
    %v5393 = vld [vmem:[%s1042 + $0x38] sm:$0xff]
    %v5394 = vmul.f32 %v5382, %v5386
    %v5395 = vmul.f32 %v5380, %v5387
    %v5396 = vmul.f32 %v5378, %v5388
    %v5397 = vmul.f32 %v5384, %v5389
    %v5398 = vmul.f32 %v5383, %v5390
    %v5399 = vmul.f32 %v5381, %v5391
    %v5400 = vmul.f32 %v5379, %v5392
    %v5401 = vmul.f32 %v5385, %v5393
    %s5402 = scalar_lea.vmem %s29, 112
    %v5403 = vld [vmem:[%s5402] sm:$0xff]
    %v5404 = vld [vmem:[%s5402 + $0x8] sm:$0xff]
    %v5406 = vsel %vm1490, %v5403, 0
    %v5409 = vsel %vm1490, %v5404, 0
    %5411 = vmatpush.msra.mxu0 0.0
    %5412 = vmatpush.msra.mxu0 0.0
    %5413 = vmatpush.msra.mxu0 0.0
    %5414 = vmatpush.msra.mxu0 0.0
    %5415 = vmatpush.msra.mxu0 0.0
    %5416 = vmatpush.msra.mxu0 0.0
    %5417 = vmatpush.msra.mxu0 0.0
    %5418 = vmatpush.msra.mxu0 0.0
    %5419 = vmatpush.msra.mxu0 0.0
    %5420 = vmatpush.msra.mxu0 0.0
    %5421 = vmatpush.msra.mxu0 0.0
    %5422 = vmatpush.msra.mxu0 0.0
    %5423 = vmatpush.msra.mxu0 0.0
    %5424 = vmatpush.msra.mxu0 0.0
    %5425 = vmatpush.msra.mxu0 %v5398
    %5426 = vmatpush.msra.mxu0 %v5394
    %5427 = vmatmul.f32.gmra.mxu0 %v5406
    %v5428 = vpop.f32.mrf.mxu0
    %v5429 = vadd.f32 0.0, %v5428
    %5430 = vmatmul.f32.gmra.mxu0 %v5409
    %v5431 = vpop.f32.mrf.mxu0
    %v5432 = vadd.f32 0.0, %v5431
    %5433 = vdwg.mxu0
    %5434 = vmatpush.msra.mxu0 0.0
    %5435 = vmatpush.msra.mxu0 0.0
    %5436 = vmatpush.msra.mxu0 0.0
    %5437 = vmatpush.msra.mxu0 0.0
    %5438 = vmatpush.msra.mxu0 0.0
    %5439 = vmatpush.msra.mxu0 0.0
    %5440 = vmatpush.msra.mxu0 0.0
    %5441 = vmatpush.msra.mxu0 0.0
    %5442 = vmatpush.msra.mxu0 0.0
    %5443 = vmatpush.msra.mxu0 0.0
    %5444 = vmatpush.msra.mxu0 0.0
    %5445 = vmatpush.msra.mxu0 0.0
    %5446 = vmatpush.msra.mxu0 0.0
    %5447 = vmatpush.msra.mxu0 0.0
    %5448 = vmatpush.msra.mxu0 %v5399
    %5449 = vmatpush.msra.mxu0 %v5395
    %5450 = vmatmul.f32.gmra.mxu0 %v5406
    %v5451 = vpop.f32.mrf.mxu0
    %v5452 = vadd.f32 0.0, %v5451
    %5453 = vmatmul.f32.gmra.mxu0 %v5409
    %v5454 = vpop.f32.mrf.mxu0
    %v5455 = vadd.f32 0.0, %v5454
    %5456 = vdwg.mxu0
    %5457 = vmatpush.msra.mxu0 0.0
    %5458 = vmatpush.msra.mxu0 0.0
    %5459 = vmatpush.msra.mxu0 0.0
    %5460 = vmatpush.msra.mxu0 0.0
    %5461 = vmatpush.msra.mxu0 0.0
    %5462 = vmatpush.msra.mxu0 0.0
    %5463 = vmatpush.msra.mxu0 0.0
    %5464 = vmatpush.msra.mxu0 0.0
    %5465 = vmatpush.msra.mxu0 0.0
    %5466 = vmatpush.msra.mxu0 0.0
    %5467 = vmatpush.msra.mxu0 0.0
    %5468 = vmatpush.msra.mxu0 0.0
    %5469 = vmatpush.msra.mxu0 0.0
    %5470 = vmatpush.msra.mxu0 0.0
    %5471 = vmatpush.msra.mxu0 %v5400
    %5472 = vmatpush.msra.mxu0 %v5396
    %5473 = vmatmul.f32.gmra.mxu0 %v5406
    %v5474 = vpop.f32.mrf.mxu0
    %v5475 = vadd.f32 0.0, %v5474
    %5476 = vmatmul.f32.gmra.mxu0 %v5409
    %v5477 = vpop.f32.mrf.mxu0
    %v5478 = vadd.f32 0.0, %v5477
    %5479 = vdwg.mxu0
    %5480 = vmatpush.msra.mxu0 0.0
    %5481 = vmatpush.msra.mxu0 0.0
    %5482 = vmatpush.msra.mxu0 0.0
    %5483 = vmatpush.msra.mxu0 0.0
    %5484 = vmatpush.msra.mxu0 0.0
    %5485 = vmatpush.msra.mxu0 0.0
    %5486 = vmatpush.msra.mxu0 0.0
    %5487 = vmatpush.msra.mxu0 0.0
    %5488 = vmatpush.msra.mxu0 0.0
    %5489 = vmatpush.msra.mxu0 0.0
    %5490 = vmatpush.msra.mxu0 0.0
    %5491 = vmatpush.msra.mxu0 0.0
    %5492 = vmatpush.msra.mxu0 0.0
    %5493 = vmatpush.msra.mxu0 0.0
    %5494 = vmatpush.msra.mxu0 %v5401
    %5495 = vmatpush.msra.mxu0 %v5397
    %5496 = vmatmul.f32.gmra.mxu0 %v5406
    %v5497 = vpop.f32.mrf.mxu0
    %v5498 = vadd.f32 0.0, %v5497
    %5499 = vmatmul.f32.gmra.mxu0 %v5409
    %v5500 = vpop.f32.mrf.mxu0
    %v5501 = vadd.f32 0.0, %v5500
    %5502 = vdwg.mxu0
    %v5503 = vadd.f32 %v5354, %v5429
    %v5504 = vadd.f32 %v5355, %v5452
    %v5505 = vadd.f32 %v5356, %v5475
    %v5506 = vadd.f32 %v5357, %v5498
    %v5507 = vadd.f32 %v5358, %v5432
    %v5508 = vadd.f32 %v5359, %v5455
    %v5509 = vadd.f32 %v5360, %v5478
    %v5510 = vadd.f32 %v5361, %v5501
    %5511 = vrot.lane.b32.xlu0 %v4360, 111
    %v5512 = vpop.permute.xlu0 %5511
    %5513 = vrot.lane.b32.xlu0 %v4364, 111
    %v5514 = vpop.permute.xlu0 %5513
    %5515 = vrot.lane.b32.xlu0 %v4361, 111
    %v5516 = vpop.permute.xlu0 %5515
    %5517 = vrot.lane.b32.xlu0 %v4365, 111
    %v5518 = vpop.permute.xlu0 %5517
    %5519 = vrot.lane.b32.xlu0 %v4362, 111
    %v5520 = vpop.permute.xlu0 %5519
    %5521 = vrot.lane.b32.xlu0 %v4366, 111
    %v5522 = vpop.permute.xlu0 %5521
    %5523 = vrot.lane.b32.xlu0 %v4363, 111
    %v5524 = vpop.permute.xlu0 %5523
    %5525 = vrot.lane.b32.xlu0 %v4367, 111
    %v5526 = vpop.permute.xlu0 %5525
    %v5527 = vsel %vm1168, %v5520, %v5524
    %v5528 = vsel %vm1168, %v5522, %v5526
    %v5529 = vsel %vm1168, %v5516, %v5520
    %v5530 = vsel %vm1168, %v5518, %v5522
    %v5531 = vsel %vm1168, %v5512, %v5516
    %v5532 = vsel %vm1168, %v5514, %v5518
    %v5533 = vsel %vm1168, %v5524, %v5512
    %v5534 = vsel %vm1168, %v5526, %v5514
    %v5535 = vld [vmem:[%s1173] sm:$0xff]
    %v5536 = vld [vmem:[%s1173 + $0x8] sm:$0xff]
    %v5537 = vld [vmem:[%s1173 + $0x10] sm:$0xff]
    %v5538 = vld [vmem:[%s1173 + $0x18] sm:$0xff]
    %v5539 = vld [vmem:[%s1173 + $0x20] sm:$0xff]
    %v5540 = vld [vmem:[%s1173 + $0x28] sm:$0xff]
    %v5541 = vld [vmem:[%s1173 + $0x30] sm:$0xff]
    %v5542 = vld [vmem:[%s1173 + $0x38] sm:$0xff]
    %v5543 = vmul.f32 %v5531, %v5535
    %v5544 = vmul.f32 %v5529, %v5536
    %v5545 = vmul.f32 %v5527, %v5537
    %v5546 = vmul.f32 %v5533, %v5538
    %v5547 = vmul.f32 %v5532, %v5539
    %v5548 = vmul.f32 %v5530, %v5540
    %v5549 = vmul.f32 %v5528, %v5541
    %v5550 = vmul.f32 %v5534, %v5542
    %s5551 = scalar_lea.vmem %s29, 128
    %v5552 = vld [vmem:[%s5551] sm:$0xff]
    %v5553 = vld [vmem:[%s5551 + $0x8] sm:$0xff]
    %v5555 = vsel %vm1490, %v5552, 0
    %v5558 = vsel %vm1490, %v5553, 0
    %5560 = vmatpush.msra.mxu0 0.0
    %5561 = vmatpush.msra.mxu0 0.0
    %5562 = vmatpush.msra.mxu0 0.0
    %5563 = vmatpush.msra.mxu0 0.0
    %5564 = vmatpush.msra.mxu0 0.0
    %5565 = vmatpush.msra.mxu0 0.0
    %5566 = vmatpush.msra.mxu0 0.0
    %5567 = vmatpush.msra.mxu0 0.0
    %5568 = vmatpush.msra.mxu0 0.0
    %5569 = vmatpush.msra.mxu0 0.0
    %5570 = vmatpush.msra.mxu0 0.0
    %5571 = vmatpush.msra.mxu0 0.0
    %5572 = vmatpush.msra.mxu0 0.0
    %5573 = vmatpush.msra.mxu0 0.0
    %5574 = vmatpush.msra.mxu0 %v5547
    %5575 = vmatpush.msra.mxu0 %v5543
    %5576 = vmatmul.f32.gmra.mxu0 %v5555
    %v5577 = vpop.f32.mrf.mxu0
    %v5578 = vadd.f32 0.0, %v5577
    %5579 = vmatmul.f32.gmra.mxu0 %v5558
    %v5580 = vpop.f32.mrf.mxu0
    %v5581 = vadd.f32 0.0, %v5580
    %5582 = vdwg.mxu0
    %5583 = vmatpush.msra.mxu0 0.0
    %5584 = vmatpush.msra.mxu0 0.0
    %5585 = vmatpush.msra.mxu0 0.0
    %5586 = vmatpush.msra.mxu0 0.0
    %5587 = vmatpush.msra.mxu0 0.0
    %5588 = vmatpush.msra.mxu0 0.0
    %5589 = vmatpush.msra.mxu0 0.0
    %5590 = vmatpush.msra.mxu0 0.0
    %5591 = vmatpush.msra.mxu0 0.0
    %5592 = vmatpush.msra.mxu0 0.0
    %5593 = vmatpush.msra.mxu0 0.0
    %5594 = vmatpush.msra.mxu0 0.0
    %5595 = vmatpush.msra.mxu0 0.0
    %5596 = vmatpush.msra.mxu0 0.0
    %5597 = vmatpush.msra.mxu0 %v5548
    %5598 = vmatpush.msra.mxu0 %v5544
    %5599 = vmatmul.f32.gmra.mxu0 %v5555
    %v5600 = vpop.f32.mrf.mxu0
    %v5601 = vadd.f32 0.0, %v5600
    %5602 = vmatmul.f32.gmra.mxu0 %v5558
    %v5603 = vpop.f32.mrf.mxu0
    %v5604 = vadd.f32 0.0, %v5603
    %5605 = vdwg.mxu0
    %5606 = vmatpush.msra.mxu0 0.0
    %5607 = vmatpush.msra.mxu0 0.0
    %5608 = vmatpush.msra.mxu0 0.0
    %5609 = vmatpush.msra.mxu0 0.0
    %5610 = vmatpush.msra.mxu0 0.0
    %5611 = vmatpush.msra.mxu0 0.0
    %5612 = vmatpush.msra.mxu0 0.0
    %5613 = vmatpush.msra.mxu0 0.0
    %5614 = vmatpush.msra.mxu0 0.0
    %5615 = vmatpush.msra.mxu0 0.0
    %5616 = vmatpush.msra.mxu0 0.0
    %5617 = vmatpush.msra.mxu0 0.0
    %5618 = vmatpush.msra.mxu0 0.0
    %5619 = vmatpush.msra.mxu0 0.0
    %5620 = vmatpush.msra.mxu0 %v5549
    %5621 = vmatpush.msra.mxu0 %v5545
    %5622 = vmatmul.f32.gmra.mxu0 %v5555
    %v5623 = vpop.f32.mrf.mxu0
    %v5624 = vadd.f32 0.0, %v5623
    %5625 = vmatmul.f32.gmra.mxu0 %v5558
    %v5626 = vpop.f32.mrf.mxu0
    %v5627 = vadd.f32 0.0, %v5626
    %5628 = vdwg.mxu0
    %5629 = vmatpush.msra.mxu0 0.0
    %5630 = vmatpush.msra.mxu0 0.0
    %5631 = vmatpush.msra.mxu0 0.0
    %5632 = vmatpush.msra.mxu0 0.0
    %5633 = vmatpush.msra.mxu0 0.0
    %5634 = vmatpush.msra.mxu0 0.0
    %5635 = vmatpush.msra.mxu0 0.0
    %5636 = vmatpush.msra.mxu0 0.0
    %5637 = vmatpush.msra.mxu0 0.0
    %5638 = vmatpush.msra.mxu0 0.0
    %5639 = vmatpush.msra.mxu0 0.0
    %5640 = vmatpush.msra.mxu0 0.0
    %5641 = vmatpush.msra.mxu0 0.0
    %5642 = vmatpush.msra.mxu0 0.0
    %5643 = vmatpush.msra.mxu0 %v5550
    %5644 = vmatpush.msra.mxu0 %v5546
    %5645 = vmatmul.f32.gmra.mxu0 %v5555
    %v5646 = vpop.f32.mrf.mxu0
    %v5647 = vadd.f32 0.0, %v5646
    %5648 = vmatmul.f32.gmra.mxu0 %v5558
    %v5649 = vpop.f32.mrf.mxu0
    %v5650 = vadd.f32 0.0, %v5649
    %5651 = vdwg.mxu0
    %v5652 = vadd.f32 %v5503, %v5578
    %v5653 = vadd.f32 %v5504, %v5601
    %v5654 = vadd.f32 %v5505, %v5624
    %v5655 = vadd.f32 %v5506, %v5647
    %v5656 = vadd.f32 %v5507, %v5581
    %v5657 = vadd.f32 %v5508, %v5604
    %v5658 = vadd.f32 %v5509, %v5627
    %v5659 = vadd.f32 %v5510, %v5650
    %v5660 = vadd.f32 %v5652, %v5653
    %v5661 = vadd.f32 %v5660, %v5654
    %v5662 = vadd.f32 %v5661, %v5655
    %5663 = vadd.xlane.f32.xlu0 %v5662
    %v5664 = vpop.xlane.xlu0 %5663
    %v5665 = vadd.f32 %v5656, %v5657
    %v5666 = vadd.f32 %v5665, %v5658
    %v5667 = vadd.f32 %v5666, %v5659
    %5668 = vadd.xlane.f32.xlu0 %v5667
    %v5669 = vpop.xlane.xlu0 %5668
    %v5670 = vmul.f32 %v5652, %v5652
    %v5671 = vmul.f32 %v5653, %v5653
    %v5672 = vmul.f32 %v5654, %v5654
    %v5673 = vmul.f32 %v5655, %v5655
    %v5674 = vmul.f32 %v5656, %v5656
    %v5675 = vmul.f32 %v5657, %v5657
    %v5676 = vmul.f32 %v5658, %v5658
    %v5677 = vmul.f32 %v5659, %v5659
    %v5678 = vadd.f32 %v5670, %v5671
    %v5679 = vadd.f32 %v5678, %v5672
    %v5680 = vadd.f32 %v5679, %v5673
    %5681 = vadd.xlane.f32.xlu0 %v5680
    %v5682 = vpop.xlane.xlu0 %5681
    %v5683 = vadd.f32 %v5674, %v5675
    %v5684 = vadd.f32 %v5683, %v5676
    %v5685 = vadd.f32 %v5684, %v5677
    %5686 = vadd.xlane.f32.xlu0 %v5685
    %v5687 = vpop.xlane.xlu0 %5686
    %v5688 = vmul.f32 %v5664, 0.001953125
    %v5689 = vmul.f32 %v5669, 0.001953125
    %v5690 = vmul.f32 %v5682, 0.001953125
    %v5691 = vmul.f32 %v5687, 0.001953125
    %v5692 = vmul.f32 %v5688, %v5688
    %v5693 = vmul.f32 %v5689, %v5689
    %v5694 = vsub.f32 %v5690, %v5692
    %v5695 = vsub.f32 %v5691, %v5693
    %v5696 = vmax.f32 %v5694, 0.0
    %v5697 = vmax.f32 %v5695, 0.0
    %v5698 = vld [vmem:[%s31] sm:$0xff]
    %v5699 = vld [vmem:[%s31 + $0x8] sm:$0xff]
    %v5700 = vadd.f32 %v5696, 1e-05
    %v5701 = vadd.f32 %v5697, 1e-05
    %v5702 = vrsqrt.pop %v5700
    %v5703 = vmul.f32 %v5702, %v5700
    %v5704 = vmul.f32 %v5703, %v5702
    %v5705 = vmul.f32 0.5, %v5704
    %v5706 = vsub.f32 1.5, %v5705
    %v5707 = vmul.f32 %v5702, %v5706
    %vm5708 = vweird.f32 %v5700
    %vm5709 = vweird.f32 %v5702
    %vm5710 = vmor %vm5708, %vm5709
    %v5711 = vsel %vm5710, %v5702, %v5707
    %v5712 = vrsqrt.pop %v5701
    %v5713 = vmul.f32 %v5712, %v5701
    %v5714 = vmul.f32 %v5713, %v5712
    %v5715 = vmul.f32 0.5, %v5714
    %v5716 = vsub.f32 1.5, %v5715
    %v5717 = vmul.f32 %v5712, %v5716
    %vm5718 = vweird.f32 %v5701
    %vm5719 = vweird.f32 %v5712
    %vm5720 = vmor %vm5718, %vm5719
    %v5721 = vsel %vm5720, %v5712, %v5717
    %v5722 = vmul.f32 %v5698, %v5711
    %v5723 = vmul.f32 %v5699, %v5721
    %v5724 = vld [vmem:[%s33] sm:$0xff]
    %v5725 = vld [vmem:[%s33 + $0x8] sm:$0xff]
    %v5726 = vmul.f32 %v5688, %v5722
    %v5727 = vmul.f32 %v5689, %v5723
    %v5728 = vsub.f32 %v5724, %v5726
    %v5729 = vsub.f32 %v5725, %v5727
    %5731 = vset.pattern.permute.xlu0 0
    %5732 = vperm.xlu0 %5731, %v5722
    %v5733 = vpop.permute.xlu0 %5732
    %5736 = vset.pattern.permute.xlu0 0
    %5737 = vperm.xlu0 %5736, %v5723
    %v5738 = vpop.permute.xlu0 %5737
    %v5740 = vmul.f32 %v5652, %v5733
    %v5741 = vmul.f32 %v5653, %v5733
    %v5742 = vmul.f32 %v5654, %v5733
    %v5743 = vmul.f32 %v5655, %v5733
    %v5744 = vmul.f32 %v5656, %v5738
    %v5745 = vmul.f32 %v5657, %v5738
    %v5746 = vmul.f32 %v5658, %v5738
    %v5747 = vmul.f32 %v5659, %v5738
    %5749 = vset.pattern.permute.xlu0 0
    %5750 = vperm.xlu0 %5749, %v5728
    %v5751 = vpop.permute.xlu0 %5750
    %5754 = vset.pattern.permute.xlu0 0
    %5755 = vperm.xlu0 %5754, %v5729
    %v5756 = vpop.permute.xlu0 %5755
    %v5758 = vadd.f32 %v5740, %v5751
    %v5759 = vadd.f32 %v5741, %v5751
    %v5760 = vadd.f32 %v5742, %v5751
    %v5761 = vadd.f32 %v5743, %v5751
    %v5762 = vadd.f32 %v5744, %v5756
    %v5763 = vadd.f32 %v5745, %v5756
    %v5764 = vadd.f32 %v5746, %v5756
    %v5765 = vadd.f32 %v5747, %v5756
    %vm5766 = vcmp.gt.f32.partialorder %v5758, 0.0
    %vm5767 = vcmp.gt.f32.partialorder %v5759, 0.0
    %vm5768 = vcmp.gt.f32.partialorder %v5760, 0.0
    %vm5769 = vcmp.gt.f32.partialorder %v5761, 0.0
    %vm5770 = vcmp.gt.f32.partialorder %v5762, 0.0
    %vm5771 = vcmp.gt.f32.partialorder %v5763, 0.0
    %vm5772 = vcmp.gt.f32.partialorder %v5764, 0.0
    %vm5773 = vcmp.gt.f32.partialorder %v5765, 0.0
    %v5774 = vmul.f32 %v5758, 0.01
    %v5775 = vmul.f32 %v5759, 0.01
    %v5776 = vmul.f32 %v5760, 0.01
    %v5777 = vmul.f32 %v5761, 0.01
    %v5778 = vmul.f32 %v5762, 0.01
    %v5779 = vmul.f32 %v5763, 0.01
    %v5780 = vmul.f32 %v5764, 0.01
    %v5781 = vmul.f32 %v5765, 0.01
    %v5782 = vsel %vm5766, %v5758, %v5774
    %v5783 = vsel %vm5767, %v5759, %v5775
    %v5784 = vsel %vm5768, %v5760, %v5776
    %v5785 = vsel %vm5769, %v5761, %v5777
    %v5786 = vsel %vm5770, %v5762, %v5778
    %v5787 = vsel %vm5771, %v5763, %v5779
    %v5788 = vsel %vm5772, %v5764, %v5780
    %v5789 = vsel %vm5773, %v5765, %v5781
    %5790 = vst [vmem:[%s61] sm:$0xff] %v5782
    %5791 = vst [vmem:[%s61 + $0x8] sm:$0xff] %v5783
    %5792 = vst [vmem:[%s61 + $0x10] sm:$0xff] %v5784
    %5793 = vst [vmem:[%s61 + $0x18] sm:$0xff] %v5785
    %5794 = vst [vmem:[%s61 + $0x20] sm:$0xff] %v5786
    %5795 = vst [vmem:[%s61 + $0x28] sm:$0xff] %v5787
    %5796 = vst [vmem:[%s61 + $0x30] sm:$0xff] %v5788
    %5797 = vst [vmem:[%s61 + $0x38] sm:$0xff] %v5789
    %v5798 = vld [vmem:[%s35] sm:$0xff]
    %v5799 = vld [vmem:[%s35 + $0x8] sm:$0xff]
    %v5801 = vsel %vm1490, %v5798, 0
    %v5804 = vsel %vm1490, %v5799, 0
    %5806 = vmatpush.msra.mxu0 0.0
    %5807 = vmatpush.msra.mxu0 0.0
    %5808 = vmatpush.msra.mxu0 0.0
    %5809 = vmatpush.msra.mxu0 0.0
    %5810 = vmatpush.msra.mxu0 0.0
    %5811 = vmatpush.msra.mxu0 0.0
    %5812 = vmatpush.msra.mxu0 0.0
    %5813 = vmatpush.msra.mxu0 0.0
    %5814 = vmatpush.msra.mxu0 0.0
    %5815 = vmatpush.msra.mxu0 0.0
    %5816 = vmatpush.msra.mxu0 0.0
    %5817 = vmatpush.msra.mxu0 0.0
    %5818 = vmatpush.msra.mxu0 0.0
    %5819 = vmatpush.msra.mxu0 0.0
    %5820 = vmatpush.msra.mxu0 %v5786
    %5821 = vmatpush.msra.mxu0 %v5782
    %5822 = vmatmul.f32.gmra.mxu0 %v5801
    %v5823 = vpop.f32.mrf.mxu0
    %v5824 = vadd.f32 0.0, %v5823
    %5825 = vmatmul.f32.gmra.mxu0 %v5804
    %v5826 = vpop.f32.mrf.mxu0
    %v5827 = vadd.f32 0.0, %v5826
    %5828 = vdwg.mxu0
    %5829 = vmatpush.msra.mxu0 0.0
    %5830 = vmatpush.msra.mxu0 0.0
    %5831 = vmatpush.msra.mxu0 0.0
    %5832 = vmatpush.msra.mxu0 0.0
    %5833 = vmatpush.msra.mxu0 0.0
    %5834 = vmatpush.msra.mxu0 0.0
    %5835 = vmatpush.msra.mxu0 0.0
    %5836 = vmatpush.msra.mxu0 0.0
    %5837 = vmatpush.msra.mxu0 0.0
    %5838 = vmatpush.msra.mxu0 0.0
    %5839 = vmatpush.msra.mxu0 0.0
    %5840 = vmatpush.msra.mxu0 0.0
    %5841 = vmatpush.msra.mxu0 0.0
    %5842 = vmatpush.msra.mxu0 0.0
    %5843 = vmatpush.msra.mxu0 %v5787
    %5844 = vmatpush.msra.mxu0 %v5783
    %5845 = vmatmul.f32.gmra.mxu0 %v5801
    %v5846 = vpop.f32.mrf.mxu0
    %v5847 = vadd.f32 0.0, %v5846
    %5848 = vmatmul.f32.gmra.mxu0 %v5804
    %v5849 = vpop.f32.mrf.mxu0
    %v5850 = vadd.f32 0.0, %v5849
    %5851 = vdwg.mxu0
    %5852 = vmatpush.msra.mxu0 0.0
    %5853 = vmatpush.msra.mxu0 0.0
    %5854 = vmatpush.msra.mxu0 0.0
    %5855 = vmatpush.msra.mxu0 0.0
    %5856 = vmatpush.msra.mxu0 0.0
    %5857 = vmatpush.msra.mxu0 0.0
    %5858 = vmatpush.msra.mxu0 0.0
    %5859 = vmatpush.msra.mxu0 0.0
    %5860 = vmatpush.msra.mxu0 0.0
    %5861 = vmatpush.msra.mxu0 0.0
    %5862 = vmatpush.msra.mxu0 0.0
    %5863 = vmatpush.msra.mxu0 0.0
    %5864 = vmatpush.msra.mxu0 0.0
    %5865 = vmatpush.msra.mxu0 0.0
    %5866 = vmatpush.msra.mxu0 %v5788
    %5867 = vmatpush.msra.mxu0 %v5784
    %5868 = vmatmul.f32.gmra.mxu0 %v5801
    %v5869 = vpop.f32.mrf.mxu0
    %v5870 = vadd.f32 0.0, %v5869
    %5871 = vmatmul.f32.gmra.mxu0 %v5804
    %v5872 = vpop.f32.mrf.mxu0
    %v5873 = vadd.f32 0.0, %v5872
    %5874 = vdwg.mxu0
    %5875 = vmatpush.msra.mxu0 0.0
    %5876 = vmatpush.msra.mxu0 0.0
    %5877 = vmatpush.msra.mxu0 0.0
    %5878 = vmatpush.msra.mxu0 0.0
    %5879 = vmatpush.msra.mxu0 0.0
    %5880 = vmatpush.msra.mxu0 0.0
    %5881 = vmatpush.msra.mxu0 0.0
    %5882 = vmatpush.msra.mxu0 0.0
    %5883 = vmatpush.msra.mxu0 0.0
    %5884 = vmatpush.msra.mxu0 0.0
    %5885 = vmatpush.msra.mxu0 0.0
    %5886 = vmatpush.msra.mxu0 0.0
    %5887 = vmatpush.msra.mxu0 0.0
    %5888 = vmatpush.msra.mxu0 0.0
    %5889 = vmatpush.msra.mxu0 %v5789
    %5890 = vmatpush.msra.mxu0 %v5785
    %5891 = vmatmul.f32.gmra.mxu0 %v5801
    %v5892 = vpop.f32.mrf.mxu0
    %v5893 = vadd.f32 0.0, %v5892
    %5894 = vmatmul.f32.gmra.mxu0 %v5804
    %v5895 = vpop.f32.mrf.mxu0
    %v5896 = vadd.f32 0.0, %v5895
    %5897 = vdwg.mxu0
    %v5898 = vadd.f32 %v5824, %v5847
    %v5899 = vadd.f32 %v5898, %v5870
    %v5900 = vadd.f32 %v5899, %v5893
    %5901 = vadd.xlane.f32.xlu0 %v5900
    %v5902 = vpop.xlane.xlu0 %5901
    %v5903 = vadd.f32 %v5827, %v5850
    %v5904 = vadd.f32 %v5903, %v5873
    %v5905 = vadd.f32 %v5904, %v5896
    %5906 = vadd.xlane.f32.xlu0 %v5905
    %v5907 = vpop.xlane.xlu0 %5906
    %v5908 = vmul.f32 %v5824, %v5824
    %v5909 = vmul.f32 %v5847, %v5847
    %v5910 = vmul.f32 %v5870, %v5870
    %v5911 = vmul.f32 %v5893, %v5893
    %v5912 = vmul.f32 %v5827, %v5827
    %v5913 = vmul.f32 %v5850, %v5850
    %v5914 = vmul.f32 %v5873, %v5873
    %v5915 = vmul.f32 %v5896, %v5896
    %v5916 = vadd.f32 %v5908, %v5909
    %v5917 = vadd.f32 %v5916, %v5910
    %v5918 = vadd.f32 %v5917, %v5911
    %5919 = vadd.xlane.f32.xlu0 %v5918
    %v5920 = vpop.xlane.xlu0 %5919
    %v5921 = vadd.f32 %v5912, %v5913
    %v5922 = vadd.f32 %v5921, %v5914
    %v5923 = vadd.f32 %v5922, %v5915
    %5924 = vadd.xlane.f32.xlu0 %v5923
    %v5925 = vpop.xlane.xlu0 %5924
    %v5926 = vmul.f32 %v5902, 0.001953125
    %v5927 = vmul.f32 %v5907, 0.001953125
    %v5928 = vmul.f32 %v5920, 0.001953125
    %v5929 = vmul.f32 %v5925, 0.001953125
    %v5930 = vmul.f32 %v5926, %v5926
    %v5931 = vmul.f32 %v5927, %v5927
    %v5932 = vsub.f32 %v5928, %v5930
    %v5933 = vsub.f32 %v5929, %v5931
    %v5934 = vmax.f32 %v5932, 0.0
    %v5935 = vmax.f32 %v5933, 0.0
    %v5936 = vld [vmem:[%s37] sm:$0xff]
    %v5937 = vld [vmem:[%s37 + $0x8] sm:$0xff]
    %v5938 = vadd.f32 %v5934, 1e-05
    %v5939 = vadd.f32 %v5935, 1e-05
    %v5940 = vrsqrt.pop %v5938
    %v5941 = vmul.f32 %v5940, %v5938
    %v5942 = vmul.f32 %v5941, %v5940
    %v5943 = vmul.f32 0.5, %v5942
    %v5944 = vsub.f32 1.5, %v5943
    %v5945 = vmul.f32 %v5940, %v5944
    %vm5946 = vweird.f32 %v5938
    %vm5947 = vweird.f32 %v5940
    %vm5948 = vmor %vm5946, %vm5947
    %v5949 = vsel %vm5948, %v5940, %v5945
    %v5950 = vrsqrt.pop %v5939
    %v5951 = vmul.f32 %v5950, %v5939
    %v5952 = vmul.f32 %v5951, %v5950
    %v5953 = vmul.f32 0.5, %v5952
    %v5954 = vsub.f32 1.5, %v5953
    %v5955 = vmul.f32 %v5950, %v5954
    %vm5956 = vweird.f32 %v5939
    %vm5957 = vweird.f32 %v5950
    %vm5958 = vmor %vm5956, %vm5957
    %v5959 = vsel %vm5958, %v5950, %v5955
    %v5960 = vmul.f32 %v5936, %v5949
    %v5961 = vmul.f32 %v5937, %v5959
    %v5962 = vld [vmem:[%s39] sm:$0xff]
    %v5963 = vld [vmem:[%s39 + $0x8] sm:$0xff]
    %v5964 = vmul.f32 %v5926, %v5960
    %v5965 = vmul.f32 %v5927, %v5961
    %v5966 = vsub.f32 %v5962, %v5964
    %v5967 = vsub.f32 %v5963, %v5965
    %5969 = vset.pattern.permute.xlu0 0
    %5970 = vperm.xlu0 %5969, %v5960
    %v5971 = vpop.permute.xlu0 %5970
    %5974 = vset.pattern.permute.xlu0 0
    %5975 = vperm.xlu0 %5974, %v5961
    %v5976 = vpop.permute.xlu0 %5975
    %v5978 = vmul.f32 %v5824, %v5971
    %v5979 = vmul.f32 %v5847, %v5971
    %v5980 = vmul.f32 %v5870, %v5971
    %v5981 = vmul.f32 %v5893, %v5971
    %v5982 = vmul.f32 %v5827, %v5976
    %v5983 = vmul.f32 %v5850, %v5976
    %v5984 = vmul.f32 %v5873, %v5976
    %v5985 = vmul.f32 %v5896, %v5976
    %5987 = vset.pattern.permute.xlu0 0
    %5988 = vperm.xlu0 %5987, %v5966
    %v5989 = vpop.permute.xlu0 %5988
    %5992 = vset.pattern.permute.xlu0 0
    %5993 = vperm.xlu0 %5992, %v5967
    %v5994 = vpop.permute.xlu0 %5993
    %v5996 = vadd.f32 %v5978, %v5989
    %v5997 = vadd.f32 %v5979, %v5989
    %v5998 = vadd.f32 %v5980, %v5989
    %v5999 = vadd.f32 %v5981, %v5989
    %v6000 = vadd.f32 %v5982, %v5994
    %v6001 = vadd.f32 %v5983, %v5994
    %v6002 = vadd.f32 %v5984, %v5994
    %v6003 = vadd.f32 %v5985, %v5994
    %v6004 = vadd.f32 %v4130, %v5996
    %v6005 = vadd.f32 %v4131, %v5997
    %v6006 = vadd.f32 %v4132, %v5998
    %v6007 = vadd.f32 %v4133, %v5999
    %v6008 = vadd.f32 %v4134, %v6000
    %v6009 = vadd.f32 %v4135, %v6001
    %v6010 = vadd.f32 %v4136, %v6002
    %v6011 = vadd.f32 %v4137, %v6003
    %vm6012 = vcmp.gt.f32.partialorder %v6004, 0.0
    %vm6013 = vcmp.gt.f32.partialorder %v6005, 0.0
    %vm6014 = vcmp.gt.f32.partialorder %v6006, 0.0
    %vm6015 = vcmp.gt.f32.partialorder %v6007, 0.0
    %vm6016 = vcmp.gt.f32.partialorder %v6008, 0.0
    %vm6017 = vcmp.gt.f32.partialorder %v6009, 0.0
    %vm6018 = vcmp.gt.f32.partialorder %v6010, 0.0
    %vm6019 = vcmp.gt.f32.partialorder %v6011, 0.0
    %v6020 = vmul.f32 %v6004, 0.01
    %v6021 = vmul.f32 %v6005, 0.01
    %v6022 = vmul.f32 %v6006, 0.01
    %v6023 = vmul.f32 %v6007, 0.01
    %v6024 = vmul.f32 %v6008, 0.01
    %v6025 = vmul.f32 %v6009, 0.01
    %v6026 = vmul.f32 %v6010, 0.01
    %v6027 = vmul.f32 %v6011, 0.01
    %v6028 = vsel %vm6012, %v6004, %v6020
    %v6029 = vsel %vm6013, %v6005, %v6021
    %v6030 = vsel %vm6014, %v6006, %v6022
    %v6031 = vsel %vm6015, %v6007, %v6023
    %v6032 = vsel %vm6016, %v6008, %v6024
    %v6033 = vsel %vm6017, %v6009, %v6025
    %v6034 = vsel %vm6018, %v6010, %v6026
    %v6035 = vsel %vm6019, %v6011, %v6027
    %6036 = vrot.lane.b32.xlu0 %v6028, 17
    %v6037 = vpop.permute.xlu0 %6036
    %6038 = vrot.lane.b32.xlu0 %v6032, 17
    %v6039 = vpop.permute.xlu0 %6038
    %6040 = vrot.lane.b32.xlu0 %v6029, 17
    %v6041 = vpop.permute.xlu0 %6040
    %6042 = vrot.lane.b32.xlu0 %v6033, 17
    %v6043 = vpop.permute.xlu0 %6042
    %6044 = vrot.lane.b32.xlu0 %v6030, 17
    %v6045 = vpop.permute.xlu0 %6044
    %6046 = vrot.lane.b32.xlu0 %v6034, 17
    %v6047 = vpop.permute.xlu0 %6046
    %6048 = vrot.lane.b32.xlu0 %v6031, 17
    %v6049 = vpop.permute.xlu0 %6048
    %6050 = vrot.lane.b32.xlu0 %v6035, 17
    %v6051 = vpop.permute.xlu0 %6050
    %v6052 = vsel %vm159, %v6045, %v6049
    %v6053 = vsel %vm159, %v6047, %v6051
    %v6054 = vsel %vm159, %v6041, %v6045
    %v6055 = vsel %vm159, %v6043, %v6047
    %v6056 = vsel %vm159, %v6037, %v6041
    %v6057 = vsel %vm159, %v6039, %v6043
    %v6058 = vsel %vm159, %v6049, %v6037
    %v6059 = vsel %vm159, %v6051, %v6039
    %v6060 = vld [vmem:[#allocation2] sm:$0xff]
    %v6061 = vld [vmem:[#allocation2 + $0x8] sm:$0xff]
    %v6062 = vld [vmem:[#allocation2 + $0x10] sm:$0xff]
    %v6063 = vld [vmem:[#allocation2 + $0x18] sm:$0xff]
    %v6064 = vld [vmem:[#allocation2 + $0x20] sm:$0xff]
    %v6065 = vld [vmem:[#allocation2 + $0x28] sm:$0xff]
    %v6066 = vld [vmem:[#allocation2 + $0x30] sm:$0xff]
    %v6067 = vld [vmem:[#allocation2 + $0x38] sm:$0xff]
    %v6068 = vmul.f32 %v6058, %v6060
    %v6069 = vmul.f32 %v6056, %v6061
    %v6070 = vmul.f32 %v6054, %v6062
    %v6071 = vmul.f32 %v6052, %v6063
    %v6072 = vmul.f32 %v6059, %v6064
    %v6073 = vmul.f32 %v6057, %v6065
    %v6074 = vmul.f32 %v6055, %v6066
    %v6075 = vmul.f32 %v6053, %v6067
    %v6076 = vld [vmem:[%s41] sm:$0xff]
    %v6077 = vld [vmem:[%s41 + $0x8] sm:$0xff]
    %v6078 = vld [vmem:[%s41 + $0x10] sm:$0xff]
    %v6079 = vld [vmem:[%s41 + $0x18] sm:$0xff]
    %6080 = vrot.lane.b32.xlu0 %v6028, 16
    %v6081 = vpop.permute.xlu0 %6080
    %6082 = vrot.lane.b32.xlu0 %v6032, 16
    %v6083 = vpop.permute.xlu0 %6082
    %6084 = vrot.lane.b32.xlu0 %v6029, 16
    %v6085 = vpop.permute.xlu0 %6084
    %6086 = vrot.lane.b32.xlu0 %v6033, 16
    %v6087 = vpop.permute.xlu0 %6086
    %6088 = vrot.lane.b32.xlu0 %v6030, 16
    %v6089 = vpop.permute.xlu0 %6088
    %6090 = vrot.lane.b32.xlu0 %v6034, 16
    %v6091 = vpop.permute.xlu0 %6090
    %6092 = vrot.lane.b32.xlu0 %v6031, 16
    %v6093 = vpop.permute.xlu0 %6092
    %6094 = vrot.lane.b32.xlu0 %v6035, 16
    %v6095 = vpop.permute.xlu0 %6094
    %v6096 = vsel %vm182, %v6089, %v6093
    %v6097 = vsel %vm182, %v6091, %v6095
    %v6098 = vsel %vm182, %v6085, %v6089
    %v6099 = vsel %vm182, %v6087, %v6091
    %v6100 = vsel %vm182, %v6081, %v6085
    %v6101 = vsel %vm182, %v6083, %v6087
    %v6102 = vsel %vm182, %v6093, %v6081
    %v6103 = vsel %vm182, %v6095, %v6083
    %v6104 = vld [vmem:[%s187] sm:$0xff]
    %v6105 = vld [vmem:[%s187 + $0x8] sm:$0xff]
    %v6106 = vld [vmem:[%s187 + $0x10] sm:$0xff]
    %v6107 = vld [vmem:[%s187 + $0x18] sm:$0xff]
    %v6108 = vld [vmem:[%s187 + $0x20] sm:$0xff]
    %v6109 = vld [vmem:[%s187 + $0x28] sm:$0xff]
    %v6110 = vld [vmem:[%s187 + $0x30] sm:$0xff]
    %v6111 = vld [vmem:[%s187 + $0x38] sm:$0xff]
    %v6112 = vmul.f32 %v6102, %v6104
    %v6113 = vmul.f32 %v6100, %v6105
    %v6114 = vmul.f32 %v6098, %v6106
    %v6115 = vmul.f32 %v6096, %v6107
    %v6116 = vmul.f32 %v6103, %v6108
    %v6117 = vmul.f32 %v6101, %v6109
    %v6118 = vmul.f32 %v6099, %v6110
    %v6119 = vmul.f32 %v6097, %v6111
    %s6120 = scalar_lea.vmem %s41, 32
    %v6121 = vld [vmem:[%s6120] sm:$0xff]
    %v6122 = vld [vmem:[%s6120 + $0x8] sm:$0xff]
    %v6123 = vld [vmem:[%s6120 + $0x10] sm:$0xff]
    %v6124 = vld [vmem:[%s6120 + $0x18] sm:$0xff]
    %v6126 = vsel %vm1490, %v6121, 0
    %v6129 = vsel %vm1490, %v6122, 0
    %v6132 = vsel %vm1490, %v6123, 0
    %v6135 = vsel %vm1490, %v6124, 0
    %6137 = vmatpush.msra.mxu0 0.0
    %6138 = vmatpush.msra.mxu0 0.0
    %6139 = vmatpush.msra.mxu0 0.0
    %6140 = vmatpush.msra.mxu0 0.0
    %6141 = vmatpush.msra.mxu0 0.0
    %6142 = vmatpush.msra.mxu0 0.0
    %6143 = vmatpush.msra.mxu0 0.0
    %6144 = vmatpush.msra.mxu0 0.0
    %6145 = vmatpush.msra.mxu0 0.0
    %6146 = vmatpush.msra.mxu0 0.0
    %6147 = vmatpush.msra.mxu0 0.0
    %6148 = vmatpush.msra.mxu0 0.0
    %6149 = vmatpush.msra.mxu0 0.0
    %6150 = vmatpush.msra.mxu0 0.0
    %6151 = vmatpush.msra.mxu0 %v6116
    %6152 = vmatpush.msra.mxu0 %v6112
    %6153 = vmatmul.f32.gmra.mxu0 %v6126
    %v6154 = vpop.f32.mrf.mxu0
    %v6155 = vadd.f32 0.0, %v6154
    %6156 = vmatmul.f32.gmra.mxu0 %v6129
    %v6157 = vpop.f32.mrf.mxu0
    %v6158 = vadd.f32 0.0, %v6157
    %6159 = vmatmul.f32.gmra.mxu0 %v6132
    %v6160 = vpop.f32.mrf.mxu0
    %v6161 = vadd.f32 0.0, %v6160
    %6162 = vmatmul.f32.gmra.mxu0 %v6135
    %v6163 = vpop.f32.mrf.mxu0
    %v6164 = vadd.f32 0.0, %v6163
    %6165 = vdwg.mxu0
    %6166 = vmatpush.msra.mxu0 0.0
    %6167 = vmatpush.msra.mxu0 0.0
    %6168 = vmatpush.msra.mxu0 0.0
    %6169 = vmatpush.msra.mxu0 0.0
    %6170 = vmatpush.msra.mxu0 0.0
    %6171 = vmatpush.msra.mxu0 0.0
    %6172 = vmatpush.msra.mxu0 0.0
    %6173 = vmatpush.msra.mxu0 0.0
    %6174 = vmatpush.msra.mxu0 0.0
    %6175 = vmatpush.msra.mxu0 0.0
    %6176 = vmatpush.msra.mxu0 0.0
    %6177 = vmatpush.msra.mxu0 0.0
    %6178 = vmatpush.msra.mxu0 0.0
    %6179 = vmatpush.msra.mxu0 0.0
    %6180 = vmatpush.msra.mxu0 %v6117
    %6181 = vmatpush.msra.mxu0 %v6113
    %6182 = vmatmul.f32.gmra.mxu0 %v6126
    %v6183 = vpop.f32.mrf.mxu0
    %v6184 = vadd.f32 0.0, %v6183
    %6185 = vmatmul.f32.gmra.mxu0 %v6129
    %v6186 = vpop.f32.mrf.mxu0
    %v6187 = vadd.f32 0.0, %v6186
    %6188 = vmatmul.f32.gmra.mxu0 %v6132
    %v6189 = vpop.f32.mrf.mxu0
    %v6190 = vadd.f32 0.0, %v6189
    %6191 = vmatmul.f32.gmra.mxu0 %v6135
    %v6192 = vpop.f32.mrf.mxu0
    %v6193 = vadd.f32 0.0, %v6192
    %6194 = vdwg.mxu0
    %6195 = vmatpush.msra.mxu0 0.0
    %6196 = vmatpush.msra.mxu0 0.0
    %6197 = vmatpush.msra.mxu0 0.0
    %6198 = vmatpush.msra.mxu0 0.0
    %6199 = vmatpush.msra.mxu0 0.0
    %6200 = vmatpush.msra.mxu0 0.0
    %6201 = vmatpush.msra.mxu0 0.0
    %6202 = vmatpush.msra.mxu0 0.0
    %6203 = vmatpush.msra.mxu0 0.0
    %6204 = vmatpush.msra.mxu0 0.0
    %6205 = vmatpush.msra.mxu0 0.0
    %6206 = vmatpush.msra.mxu0 0.0
    %6207 = vmatpush.msra.mxu0 0.0
    %6208 = vmatpush.msra.mxu0 0.0
    %6209 = vmatpush.msra.mxu0 %v6118
    %6210 = vmatpush.msra.mxu0 %v6114
    %6211 = vmatmul.f32.gmra.mxu0 %v6126
    %v6212 = vpop.f32.mrf.mxu0
    %v6213 = vadd.f32 0.0, %v6212
    %6214 = vmatmul.f32.gmra.mxu0 %v6129
    %v6215 = vpop.f32.mrf.mxu0
    %v6216 = vadd.f32 0.0, %v6215
    %6217 = vmatmul.f32.gmra.mxu0 %v6132
    %v6218 = vpop.f32.mrf.mxu0
    %v6219 = vadd.f32 0.0, %v6218
    %6220 = vmatmul.f32.gmra.mxu0 %v6135
    %v6221 = vpop.f32.mrf.mxu0
    %v6222 = vadd.f32 0.0, %v6221
    %6223 = vdwg.mxu0
    %6224 = vmatpush.msra.mxu0 0.0
    %6225 = vmatpush.msra.mxu0 0.0
    %6226 = vmatpush.msra.mxu0 0.0
    %6227 = vmatpush.msra.mxu0 0.0
    %6228 = vmatpush.msra.mxu0 0.0
    %6229 = vmatpush.msra.mxu0 0.0
    %6230 = vmatpush.msra.mxu0 0.0
    %6231 = vmatpush.msra.mxu0 0.0
    %6232 = vmatpush.msra.mxu0 0.0
    %6233 = vmatpush.msra.mxu0 0.0
    %6234 = vmatpush.msra.mxu0 0.0
    %6235 = vmatpush.msra.mxu0 0.0
    %6236 = vmatpush.msra.mxu0 0.0
    %6237 = vmatpush.msra.mxu0 0.0
    %6238 = vmatpush.msra.mxu0 %v6119
    %6239 = vmatpush.msra.mxu0 %v6115
    %6240 = vmatmul.f32.gmra.mxu0 %v6126
    %v6241 = vpop.f32.mrf.mxu0
    %v6242 = vadd.f32 0.0, %v6241
    %6243 = vmatmul.f32.gmra.mxu0 %v6129
    %v6244 = vpop.f32.mrf.mxu0
    %v6245 = vadd.f32 0.0, %v6244
    %6246 = vmatmul.f32.gmra.mxu0 %v6132
    %v6247 = vpop.f32.mrf.mxu0
    %v6248 = vadd.f32 0.0, %v6247
    %6249 = vmatmul.f32.gmra.mxu0 %v6135
    %v6250 = vpop.f32.mrf.mxu0
    %v6251 = vadd.f32 0.0, %v6250
    %6252 = vdwg.mxu0
    %v6254 = vsel %vm1490, %v6076, 0
    %v6257 = vsel %vm1490, %v6077, 0
    %v6260 = vsel %vm1490, %v6078, 0
    %v6263 = vsel %vm1490, %v6079, 0
    %6265 = vmatpush.msra.mxu0 0.0
    %6266 = vmatpush.msra.mxu0 0.0
    %6267 = vmatpush.msra.mxu0 0.0
    %6268 = vmatpush.msra.mxu0 0.0
    %6269 = vmatpush.msra.mxu0 0.0
    %6270 = vmatpush.msra.mxu0 0.0
    %6271 = vmatpush.msra.mxu0 0.0
    %6272 = vmatpush.msra.mxu0 0.0
    %6273 = vmatpush.msra.mxu0 0.0
    %6274 = vmatpush.msra.mxu0 0.0
    %6275 = vmatpush.msra.mxu0 0.0
    %6276 = vmatpush.msra.mxu0 0.0
    %6277 = vmatpush.msra.mxu0 0.0
    %6278 = vmatpush.msra.mxu0 0.0
    %6279 = vmatpush.msra.mxu0 %v6072
    %6280 = vmatpush.msra.mxu0 %v6068
    %6281 = vmatmul.f32.gmra.mxu0 %v6254
    %v6282 = vpop.f32.mrf.mxu0
    %v6283 = vadd.f32 %v6155, %v6282
    %6284 = vmatmul.f32.gmra.mxu0 %v6257
    %v6285 = vpop.f32.mrf.mxu0
    %v6286 = vadd.f32 %v6158, %v6285
    %6287 = vmatmul.f32.gmra.mxu0 %v6260
    %v6288 = vpop.f32.mrf.mxu0
    %v6289 = vadd.f32 %v6161, %v6288
    %6290 = vmatmul.f32.gmra.mxu0 %v6263
    %v6291 = vpop.f32.mrf.mxu0
    %v6292 = vadd.f32 %v6164, %v6291
    %6293 = vdwg.mxu0
    %6294 = vmatpush.msra.mxu0 0.0
    %6295 = vmatpush.msra.mxu0 0.0
    %6296 = vmatpush.msra.mxu0 0.0
    %6297 = vmatpush.msra.mxu0 0.0
    %6298 = vmatpush.msra.mxu0 0.0
    %6299 = vmatpush.msra.mxu0 0.0
    %6300 = vmatpush.msra.mxu0 0.0
    %6301 = vmatpush.msra.mxu0 0.0
    %6302 = vmatpush.msra.mxu0 0.0
    %6303 = vmatpush.msra.mxu0 0.0
    %6304 = vmatpush.msra.mxu0 0.0
    %6305 = vmatpush.msra.mxu0 0.0
    %6306 = vmatpush.msra.mxu0 0.0
    %6307 = vmatpush.msra.mxu0 0.0
    %6308 = vmatpush.msra.mxu0 %v6073
    %6309 = vmatpush.msra.mxu0 %v6069
    %6310 = vmatmul.f32.gmra.mxu0 %v6254
    %v6311 = vpop.f32.mrf.mxu0
    %v6312 = vadd.f32 %v6184, %v6311
    %6313 = vmatmul.f32.gmra.mxu0 %v6257
    %v6314 = vpop.f32.mrf.mxu0
    %v6315 = vadd.f32 %v6187, %v6314
    %6316 = vmatmul.f32.gmra.mxu0 %v6260
    %v6317 = vpop.f32.mrf.mxu0
    %v6318 = vadd.f32 %v6190, %v6317
    %6319 = vmatmul.f32.gmra.mxu0 %v6263
    %v6320 = vpop.f32.mrf.mxu0
    %v6321 = vadd.f32 %v6193, %v6320
    %6322 = vdwg.mxu0
    %6323 = vmatpush.msra.mxu0 0.0
    %6324 = vmatpush.msra.mxu0 0.0
    %6325 = vmatpush.msra.mxu0 0.0
    %6326 = vmatpush.msra.mxu0 0.0
    %6327 = vmatpush.msra.mxu0 0.0
    %6328 = vmatpush.msra.mxu0 0.0
    %6329 = vmatpush.msra.mxu0 0.0
    %6330 = vmatpush.msra.mxu0 0.0
    %6331 = vmatpush.msra.mxu0 0.0
    %6332 = vmatpush.msra.mxu0 0.0
    %6333 = vmatpush.msra.mxu0 0.0
    %6334 = vmatpush.msra.mxu0 0.0
    %6335 = vmatpush.msra.mxu0 0.0
    %6336 = vmatpush.msra.mxu0 0.0
    %6337 = vmatpush.msra.mxu0 %v6074
    %6338 = vmatpush.msra.mxu0 %v6070
    %6339 = vmatmul.f32.gmra.mxu0 %v6254
    %v6340 = vpop.f32.mrf.mxu0
    %v6341 = vadd.f32 %v6213, %v6340
    %6342 = vmatmul.f32.gmra.mxu0 %v6257
    %v6343 = vpop.f32.mrf.mxu0
    %v6344 = vadd.f32 %v6216, %v6343
    %6345 = vmatmul.f32.gmra.mxu0 %v6260
    %v6346 = vpop.f32.mrf.mxu0
    %v6347 = vadd.f32 %v6219, %v6346
    %6348 = vmatmul.f32.gmra.mxu0 %v6263
    %v6349 = vpop.f32.mrf.mxu0
    %v6350 = vadd.f32 %v6222, %v6349
    %6351 = vdwg.mxu0
    %6352 = vmatpush.msra.mxu0 0.0
    %6353 = vmatpush.msra.mxu0 0.0
    %6354 = vmatpush.msra.mxu0 0.0
    %6355 = vmatpush.msra.mxu0 0.0
    %6356 = vmatpush.msra.mxu0 0.0
    %6357 = vmatpush.msra.mxu0 0.0
    %6358 = vmatpush.msra.mxu0 0.0
    %6359 = vmatpush.msra.mxu0 0.0
    %6360 = vmatpush.msra.mxu0 0.0
    %6361 = vmatpush.msra.mxu0 0.0
    %6362 = vmatpush.msra.mxu0 0.0
    %6363 = vmatpush.msra.mxu0 0.0
    %6364 = vmatpush.msra.mxu0 0.0
    %6365 = vmatpush.msra.mxu0 0.0
    %6366 = vmatpush.msra.mxu0 %v6075
    %6367 = vmatpush.msra.mxu0 %v6071
    %6368 = vmatmul.f32.gmra.mxu0 %v6254
    %v6369 = vpop.f32.mrf.mxu0
    %v6370 = vadd.f32 %v6242, %v6369
    %6371 = vmatmul.f32.gmra.mxu0 %v6257
    %v6372 = vpop.f32.mrf.mxu0
    %v6373 = vadd.f32 %v6245, %v6372
    %6374 = vmatmul.f32.gmra.mxu0 %v6260
    %v6375 = vpop.f32.mrf.mxu0
    %v6376 = vadd.f32 %v6248, %v6375
    %6377 = vmatmul.f32.gmra.mxu0 %v6263
    %v6378 = vpop.f32.mrf.mxu0
    %v6379 = vadd.f32 %v6251, %v6378
    %6380 = vdwg.mxu0
    %6381 = vrot.lane.b32.xlu0 %v6028, 15
    %v6382 = vpop.permute.xlu0 %6381
    %6383 = vrot.lane.b32.xlu0 %v6032, 15
    %v6384 = vpop.permute.xlu0 %6383
    %6385 = vrot.lane.b32.xlu0 %v6029, 15
    %v6386 = vpop.permute.xlu0 %6385
    %6387 = vrot.lane.b32.xlu0 %v6033, 15
    %v6388 = vpop.permute.xlu0 %6387
    %6389 = vrot.lane.b32.xlu0 %v6030, 15
    %v6390 = vpop.permute.xlu0 %6389
    %6391 = vrot.lane.b32.xlu0 %v6034, 15
    %v6392 = vpop.permute.xlu0 %6391
    %6393 = vrot.lane.b32.xlu0 %v6031, 15
    %v6394 = vpop.permute.xlu0 %6393
    %6395 = vrot.lane.b32.xlu0 %v6035, 15
    %v6396 = vpop.permute.xlu0 %6395
    %v6397 = vsel %vm404, %v6390, %v6394
    %v6398 = vsel %vm404, %v6392, %v6396
    %v6399 = vsel %vm404, %v6386, %v6390
    %v6400 = vsel %vm404, %v6388, %v6392
    %v6401 = vsel %vm404, %v6382, %v6386
    %v6402 = vsel %vm404, %v6384, %v6388
    %v6403 = vsel %vm404, %v6394, %v6382
    %v6404 = vsel %vm404, %v6396, %v6384
    %v6405 = vld [vmem:[%s409] sm:$0xff]
    %v6406 = vld [vmem:[%s409 + $0x8] sm:$0xff]
    %v6407 = vld [vmem:[%s409 + $0x10] sm:$0xff]
    %v6408 = vld [vmem:[%s409 + $0x18] sm:$0xff]
    %v6409 = vld [vmem:[%s409 + $0x20] sm:$0xff]
    %v6410 = vld [vmem:[%s409 + $0x28] sm:$0xff]
    %v6411 = vld [vmem:[%s409 + $0x30] sm:$0xff]
    %v6412 = vld [vmem:[%s409 + $0x38] sm:$0xff]
    %v6413 = vmul.f32 %v6403, %v6405
    %v6414 = vmul.f32 %v6401, %v6406
    %v6415 = vmul.f32 %v6399, %v6407
    %v6416 = vmul.f32 %v6397, %v6408
    %v6417 = vmul.f32 %v6404, %v6409
    %v6418 = vmul.f32 %v6402, %v6410
    %v6419 = vmul.f32 %v6400, %v6411
    %v6420 = vmul.f32 %v6398, %v6412
    %s6421 = scalar_lea.vmem %s41, 64
    %v6422 = vld [vmem:[%s6421] sm:$0xff]
    %v6423 = vld [vmem:[%s6421 + $0x8] sm:$0xff]
    %v6424 = vld [vmem:[%s6421 + $0x10] sm:$0xff]
    %v6425 = vld [vmem:[%s6421 + $0x18] sm:$0xff]
    %v6427 = vsel %vm1490, %v6422, 0
    %v6430 = vsel %vm1490, %v6423, 0
    %v6433 = vsel %vm1490, %v6424, 0
    %v6436 = vsel %vm1490, %v6425, 0
    %6438 = vmatpush.msra.mxu0 0.0
    %6439 = vmatpush.msra.mxu0 0.0
    %6440 = vmatpush.msra.mxu0 0.0
    %6441 = vmatpush.msra.mxu0 0.0
    %6442 = vmatpush.msra.mxu0 0.0
    %6443 = vmatpush.msra.mxu0 0.0
    %6444 = vmatpush.msra.mxu0 0.0
    %6445 = vmatpush.msra.mxu0 0.0
    %6446 = vmatpush.msra.mxu0 0.0
    %6447 = vmatpush.msra.mxu0 0.0
    %6448 = vmatpush.msra.mxu0 0.0
    %6449 = vmatpush.msra.mxu0 0.0
    %6450 = vmatpush.msra.mxu0 0.0
    %6451 = vmatpush.msra.mxu0 0.0
    %6452 = vmatpush.msra.mxu0 %v6417
    %6453 = vmatpush.msra.mxu0 %v6413
    %6454 = vmatmul.f32.gmra.mxu0 %v6427
    %v6455 = vpop.f32.mrf.mxu0
    %v6456 = vadd.f32 0.0, %v6455
    %6457 = vmatmul.f32.gmra.mxu0 %v6430
    %v6458 = vpop.f32.mrf.mxu0
    %v6459 = vadd.f32 0.0, %v6458
    %6460 = vmatmul.f32.gmra.mxu0 %v6433
    %v6461 = vpop.f32.mrf.mxu0
    %v6462 = vadd.f32 0.0, %v6461
    %6463 = vmatmul.f32.gmra.mxu0 %v6436
    %v6464 = vpop.f32.mrf.mxu0
    %v6465 = vadd.f32 0.0, %v6464
    %6466 = vdwg.mxu0
    %6467 = vmatpush.msra.mxu0 0.0
    %6468 = vmatpush.msra.mxu0 0.0
    %6469 = vmatpush.msra.mxu0 0.0
    %6470 = vmatpush.msra.mxu0 0.0
    %6471 = vmatpush.msra.mxu0 0.0
    %6472 = vmatpush.msra.mxu0 0.0
    %6473 = vmatpush.msra.mxu0 0.0
    %6474 = vmatpush.msra.mxu0 0.0
    %6475 = vmatpush.msra.mxu0 0.0
    %6476 = vmatpush.msra.mxu0 0.0
    %6477 = vmatpush.msra.mxu0 0.0
    %6478 = vmatpush.msra.mxu0 0.0
    %6479 = vmatpush.msra.mxu0 0.0
    %6480 = vmatpush.msra.mxu0 0.0
    %6481 = vmatpush.msra.mxu0 %v6418
    %6482 = vmatpush.msra.mxu0 %v6414
    %6483 = vmatmul.f32.gmra.mxu0 %v6427
    %v6484 = vpop.f32.mrf.mxu0
    %v6485 = vadd.f32 0.0, %v6484
    %6486 = vmatmul.f32.gmra.mxu0 %v6430
    %v6487 = vpop.f32.mrf.mxu0
    %v6488 = vadd.f32 0.0, %v6487
    %6489 = vmatmul.f32.gmra.mxu0 %v6433
    %v6490 = vpop.f32.mrf.mxu0
    %v6491 = vadd.f32 0.0, %v6490
    %6492 = vmatmul.f32.gmra.mxu0 %v6436
    %v6493 = vpop.f32.mrf.mxu0
    %v6494 = vadd.f32 0.0, %v6493
    %6495 = vdwg.mxu0
    %6496 = vmatpush.msra.mxu0 0.0
    %6497 = vmatpush.msra.mxu0 0.0
    %6498 = vmatpush.msra.mxu0 0.0
    %6499 = vmatpush.msra.mxu0 0.0
    %6500 = vmatpush.msra.mxu0 0.0
    %6501 = vmatpush.msra.mxu0 0.0
    %6502 = vmatpush.msra.mxu0 0.0
    %6503 = vmatpush.msra.mxu0 0.0
    %6504 = vmatpush.msra.mxu0 0.0
    %6505 = vmatpush.msra.mxu0 0.0
    %6506 = vmatpush.msra.mxu0 0.0
    %6507 = vmatpush.msra.mxu0 0.0
    %6508 = vmatpush.msra.mxu0 0.0
    %6509 = vmatpush.msra.mxu0 0.0
    %6510 = vmatpush.msra.mxu0 %v6419
    %6511 = vmatpush.msra.mxu0 %v6415
    %6512 = vmatmul.f32.gmra.mxu0 %v6427
    %v6513 = vpop.f32.mrf.mxu0
    %v6514 = vadd.f32 0.0, %v6513
    %6515 = vmatmul.f32.gmra.mxu0 %v6430
    %v6516 = vpop.f32.mrf.mxu0
    %v6517 = vadd.f32 0.0, %v6516
    %6518 = vmatmul.f32.gmra.mxu0 %v6433
    %v6519 = vpop.f32.mrf.mxu0
    %v6520 = vadd.f32 0.0, %v6519
    %6521 = vmatmul.f32.gmra.mxu0 %v6436
    %v6522 = vpop.f32.mrf.mxu0
    %v6523 = vadd.f32 0.0, %v6522
    %6524 = vdwg.mxu0
    %6525 = vmatpush.msra.mxu0 0.0
    %6526 = vmatpush.msra.mxu0 0.0
    %6527 = vmatpush.msra.mxu0 0.0
    %6528 = vmatpush.msra.mxu0 0.0
    %6529 = vmatpush.msra.mxu0 0.0
    %6530 = vmatpush.msra.mxu0 0.0
    %6531 = vmatpush.msra.mxu0 0.0
    %6532 = vmatpush.msra.mxu0 0.0
    %6533 = vmatpush.msra.mxu0 0.0
    %6534 = vmatpush.msra.mxu0 0.0
    %6535 = vmatpush.msra.mxu0 0.0
    %6536 = vmatpush.msra.mxu0 0.0
    %6537 = vmatpush.msra.mxu0 0.0
    %6538 = vmatpush.msra.mxu0 0.0
    %6539 = vmatpush.msra.mxu0 %v6420
    %6540 = vmatpush.msra.mxu0 %v6416
    %6541 = vmatmul.f32.gmra.mxu0 %v6427
    %v6542 = vpop.f32.mrf.mxu0
    %v6543 = vadd.f32 0.0, %v6542
    %6544 = vmatmul.f32.gmra.mxu0 %v6430
    %v6545 = vpop.f32.mrf.mxu0
    %v6546 = vadd.f32 0.0, %v6545
    %6547 = vmatmul.f32.gmra.mxu0 %v6433
    %v6548 = vpop.f32.mrf.mxu0
    %v6549 = vadd.f32 0.0, %v6548
    %6550 = vmatmul.f32.gmra.mxu0 %v6436
    %v6551 = vpop.f32.mrf.mxu0
    %v6552 = vadd.f32 0.0, %v6551
    %6553 = vdwg.mxu0
    %v6554 = vadd.f32 %v6283, %v6456
    %v6555 = vadd.f32 %v6312, %v6485
    %v6556 = vadd.f32 %v6341, %v6514
    %v6557 = vadd.f32 %v6370, %v6543
    %v6558 = vadd.f32 %v6286, %v6459
    %v6559 = vadd.f32 %v6315, %v6488
    %v6560 = vadd.f32 %v6344, %v6517
    %v6561 = vadd.f32 %v6373, %v6546
    %v6562 = vadd.f32 %v6289, %v6462
    %v6563 = vadd.f32 %v6318, %v6491
    %v6564 = vadd.f32 %v6347, %v6520
    %v6565 = vadd.f32 %v6376, %v6549
    %v6566 = vadd.f32 %v6292, %v6465
    %v6567 = vadd.f32 %v6321, %v6494
    %v6568 = vadd.f32 %v6350, %v6523
    %v6569 = vadd.f32 %v6379, %v6552
    %6570 = vrot.lane.b32.xlu0 %v6028, 1
    %v6571 = vpop.permute.xlu0 %6570
    %6572 = vrot.lane.b32.xlu0 %v6032, 1
    %v6573 = vpop.permute.xlu0 %6572
    %6574 = vrot.lane.b32.xlu0 %v6029, 1
    %v6575 = vpop.permute.xlu0 %6574
    %6576 = vrot.lane.b32.xlu0 %v6033, 1
    %v6577 = vpop.permute.xlu0 %6576
    %6578 = vrot.lane.b32.xlu0 %v6030, 1
    %v6579 = vpop.permute.xlu0 %6578
    %6580 = vrot.lane.b32.xlu0 %v6034, 1
    %v6581 = vpop.permute.xlu0 %6580
    %6582 = vrot.lane.b32.xlu0 %v6031, 1
    %v6583 = vpop.permute.xlu0 %6582
    %6584 = vrot.lane.b32.xlu0 %v6035, 1
    %v6585 = vpop.permute.xlu0 %6584
    %v6586 = vsel %vm535, %v6579, %v6583
    %v6587 = vsel %vm535, %v6581, %v6585
    %v6588 = vsel %vm535, %v6575, %v6579
    %v6589 = vsel %vm535, %v6577, %v6581
    %v6590 = vsel %vm535, %v6571, %v6575
    %v6591 = vsel %vm535, %v6573, %v6577
    %v6592 = vsel %vm535, %v6583, %v6571
    %v6593 = vsel %vm535, %v6585, %v6573
    %v6594 = vld [vmem:[%s540] sm:$0xff]
    %v6595 = vld [vmem:[%s540 + $0x8] sm:$0xff]
    %v6596 = vld [vmem:[%s540 + $0x10] sm:$0xff]
    %v6597 = vld [vmem:[%s540 + $0x18] sm:$0xff]
    %v6598 = vld [vmem:[%s540 + $0x20] sm:$0xff]
    %v6599 = vld [vmem:[%s540 + $0x28] sm:$0xff]
    %v6600 = vld [vmem:[%s540 + $0x30] sm:$0xff]
    %v6601 = vld [vmem:[%s540 + $0x38] sm:$0xff]
    %v6602 = vmul.f32 %v6592, %v6594
    %v6603 = vmul.f32 %v6590, %v6595
    %v6604 = vmul.f32 %v6588, %v6596
    %v6605 = vmul.f32 %v6586, %v6597
    %v6606 = vmul.f32 %v6593, %v6598
    %v6607 = vmul.f32 %v6591, %v6599
    %v6608 = vmul.f32 %v6589, %v6600
    %v6609 = vmul.f32 %v6587, %v6601
    %s6610 = scalar_lea.vmem %s41, 96
    %v6611 = vld [vmem:[%s6610] sm:$0xff]
    %v6612 = vld [vmem:[%s6610 + $0x8] sm:$0xff]
    %v6613 = vld [vmem:[%s6610 + $0x10] sm:$0xff]
    %v6614 = vld [vmem:[%s6610 + $0x18] sm:$0xff]
    %v6616 = vsel %vm1490, %v6611, 0
    %v6619 = vsel %vm1490, %v6612, 0
    %v6622 = vsel %vm1490, %v6613, 0
    %v6625 = vsel %vm1490, %v6614, 0
    %6627 = vmatpush.msra.mxu0 0.0
    %6628 = vmatpush.msra.mxu0 0.0
    %6629 = vmatpush.msra.mxu0 0.0
    %6630 = vmatpush.msra.mxu0 0.0
    %6631 = vmatpush.msra.mxu0 0.0
    %6632 = vmatpush.msra.mxu0 0.0
    %6633 = vmatpush.msra.mxu0 0.0
    %6634 = vmatpush.msra.mxu0 0.0
    %6635 = vmatpush.msra.mxu0 0.0
    %6636 = vmatpush.msra.mxu0 0.0
    %6637 = vmatpush.msra.mxu0 0.0
    %6638 = vmatpush.msra.mxu0 0.0
    %6639 = vmatpush.msra.mxu0 0.0
    %6640 = vmatpush.msra.mxu0 0.0
    %6641 = vmatpush.msra.mxu0 %v6606
    %6642 = vmatpush.msra.mxu0 %v6602
    %6643 = vmatmul.f32.gmra.mxu0 %v6616
    %v6644 = vpop.f32.mrf.mxu0
    %v6645 = vadd.f32 0.0, %v6644
    %6646 = vmatmul.f32.gmra.mxu0 %v6619
    %v6647 = vpop.f32.mrf.mxu0
    %v6648 = vadd.f32 0.0, %v6647
    %6649 = vmatmul.f32.gmra.mxu0 %v6622
    %v6650 = vpop.f32.mrf.mxu0
    %v6651 = vadd.f32 0.0, %v6650
    %6652 = vmatmul.f32.gmra.mxu0 %v6625
    %v6653 = vpop.f32.mrf.mxu0
    %v6654 = vadd.f32 0.0, %v6653
    %6655 = vdwg.mxu0
    %6656 = vmatpush.msra.mxu0 0.0
    %6657 = vmatpush.msra.mxu0 0.0
    %6658 = vmatpush.msra.mxu0 0.0
    %6659 = vmatpush.msra.mxu0 0.0
    %6660 = vmatpush.msra.mxu0 0.0
    %6661 = vmatpush.msra.mxu0 0.0
    %6662 = vmatpush.msra.mxu0 0.0
    %6663 = vmatpush.msra.mxu0 0.0
    %6664 = vmatpush.msra.mxu0 0.0
    %6665 = vmatpush.msra.mxu0 0.0
    %6666 = vmatpush.msra.mxu0 0.0
    %6667 = vmatpush.msra.mxu0 0.0
    %6668 = vmatpush.msra.mxu0 0.0
    %6669 = vmatpush.msra.mxu0 0.0
    %6670 = vmatpush.msra.mxu0 %v6607
    %6671 = vmatpush.msra.mxu0 %v6603
    %6672 = vmatmul.f32.gmra.mxu0 %v6616
    %v6673 = vpop.f32.mrf.mxu0
    %v6674 = vadd.f32 0.0, %v6673
    %6675 = vmatmul.f32.gmra.mxu0 %v6619
    %v6676 = vpop.f32.mrf.mxu0
    %v6677 = vadd.f32 0.0, %v6676
    %6678 = vmatmul.f32.gmra.mxu0 %v6622
    %v6679 = vpop.f32.mrf.mxu0
    %v6680 = vadd.f32 0.0, %v6679
    %6681 = vmatmul.f32.gmra.mxu0 %v6625
    %v6682 = vpop.f32.mrf.mxu0
    %v6683 = vadd.f32 0.0, %v6682
    %6684 = vdwg.mxu0
    %6685 = vmatpush.msra.mxu0 0.0
    %6686 = vmatpush.msra.mxu0 0.0
    %6687 = vmatpush.msra.mxu0 0.0
    %6688 = vmatpush.msra.mxu0 0.0
    %6689 = vmatpush.msra.mxu0 0.0
    %6690 = vmatpush.msra.mxu0 0.0
    %6691 = vmatpush.msra.mxu0 0.0
    %6692 = vmatpush.msra.mxu0 0.0
    %6693 = vmatpush.msra.mxu0 0.0
    %6694 = vmatpush.msra.mxu0 0.0
    %6695 = vmatpush.msra.mxu0 0.0
    %6696 = vmatpush.msra.mxu0 0.0
    %6697 = vmatpush.msra.mxu0 0.0
    %6698 = vmatpush.msra.mxu0 0.0
    %6699 = vmatpush.msra.mxu0 %v6608
    %6700 = vmatpush.msra.mxu0 %v6604
    %6701 = vmatmul.f32.gmra.mxu0 %v6616
    %v6702 = vpop.f32.mrf.mxu0
    %v6703 = vadd.f32 0.0, %v6702
    %6704 = vmatmul.f32.gmra.mxu0 %v6619
    %v6705 = vpop.f32.mrf.mxu0
    %v6706 = vadd.f32 0.0, %v6705
    %6707 = vmatmul.f32.gmra.mxu0 %v6622
    %v6708 = vpop.f32.mrf.mxu0
    %v6709 = vadd.f32 0.0, %v6708
    %6710 = vmatmul.f32.gmra.mxu0 %v6625
    %v6711 = vpop.f32.mrf.mxu0
    %v6712 = vadd.f32 0.0, %v6711
    %6713 = vdwg.mxu0
    %6714 = vmatpush.msra.mxu0 0.0
    %6715 = vmatpush.msra.mxu0 0.0
    %6716 = vmatpush.msra.mxu0 0.0
    %6717 = vmatpush.msra.mxu0 0.0
    %6718 = vmatpush.msra.mxu0 0.0
    %6719 = vmatpush.msra.mxu0 0.0
    %6720 = vmatpush.msra.mxu0 0.0
    %6721 = vmatpush.msra.mxu0 0.0
    %6722 = vmatpush.msra.mxu0 0.0
    %6723 = vmatpush.msra.mxu0 0.0
    %6724 = vmatpush.msra.mxu0 0.0
    %6725 = vmatpush.msra.mxu0 0.0
    %6726 = vmatpush.msra.mxu0 0.0
    %6727 = vmatpush.msra.mxu0 0.0
    %6728 = vmatpush.msra.mxu0 %v6609
    %6729 = vmatpush.msra.mxu0 %v6605
    %6730 = vmatmul.f32.gmra.mxu0 %v6616
    %v6731 = vpop.f32.mrf.mxu0
    %v6732 = vadd.f32 0.0, %v6731
    %6733 = vmatmul.f32.gmra.mxu0 %v6619
    %v6734 = vpop.f32.mrf.mxu0
    %v6735 = vadd.f32 0.0, %v6734
    %6736 = vmatmul.f32.gmra.mxu0 %v6622
    %v6737 = vpop.f32.mrf.mxu0
    %v6738 = vadd.f32 0.0, %v6737
    %6739 = vmatmul.f32.gmra.mxu0 %v6625
    %v6740 = vpop.f32.mrf.mxu0
    %v6741 = vadd.f32 0.0, %v6740
    %6742 = vdwg.mxu0
    %v6743 = vadd.f32 %v6554, %v6645
    %v6744 = vadd.f32 %v6555, %v6674
    %v6745 = vadd.f32 %v6556, %v6703
    %v6746 = vadd.f32 %v6557, %v6732
    %v6747 = vadd.f32 %v6558, %v6648
    %v6748 = vadd.f32 %v6559, %v6677
    %v6749 = vadd.f32 %v6560, %v6706
    %v6750 = vadd.f32 %v6561, %v6735
    %v6751 = vadd.f32 %v6562, %v6651
    %v6752 = vadd.f32 %v6563, %v6680
    %v6753 = vadd.f32 %v6564, %v6709
    %v6754 = vadd.f32 %v6565, %v6738
    %v6755 = vadd.f32 %v6566, %v6654
    %v6756 = vadd.f32 %v6567, %v6683
    %v6757 = vadd.f32 %v6568, %v6712
    %v6758 = vadd.f32 %v6569, %v6741
    %s6759 = scalar_lea.vmem %s41, 128
    %v6760 = vld [vmem:[%s6759] sm:$0xff]
    %v6761 = vld [vmem:[%s6759 + $0x8] sm:$0xff]
    %v6762 = vld [vmem:[%s6759 + $0x10] sm:$0xff]
    %v6763 = vld [vmem:[%s6759 + $0x18] sm:$0xff]
    %v6765 = vsel %vm1490, %v6760, 0
    %v6768 = vsel %vm1490, %v6761, 0
    %v6771 = vsel %vm1490, %v6762, 0
    %v6774 = vsel %vm1490, %v6763, 0
    %6776 = vmatpush.msra.mxu0 0.0
    %6777 = vmatpush.msra.mxu0 0.0
    %6778 = vmatpush.msra.mxu0 0.0
    %6779 = vmatpush.msra.mxu0 0.0
    %6780 = vmatpush.msra.mxu0 0.0
    %6781 = vmatpush.msra.mxu0 0.0
    %6782 = vmatpush.msra.mxu0 0.0
    %6783 = vmatpush.msra.mxu0 0.0
    %6784 = vmatpush.msra.mxu0 0.0
    %6785 = vmatpush.msra.mxu0 0.0
    %6786 = vmatpush.msra.mxu0 0.0
    %6787 = vmatpush.msra.mxu0 0.0
    %6788 = vmatpush.msra.mxu0 0.0
    %6789 = vmatpush.msra.mxu0 0.0
    %6790 = vmatpush.msra.mxu0 %v6032
    %6791 = vmatpush.msra.mxu0 %v6028
    %6792 = vmatmul.f32.gmra.mxu0 %v6765
    %v6793 = vpop.f32.mrf.mxu0
    %v6794 = vadd.f32 0.0, %v6793
    %6795 = vmatmul.f32.gmra.mxu0 %v6768
    %v6796 = vpop.f32.mrf.mxu0
    %v6797 = vadd.f32 0.0, %v6796
    %6798 = vmatmul.f32.gmra.mxu0 %v6771
    %v6799 = vpop.f32.mrf.mxu0
    %v6800 = vadd.f32 0.0, %v6799
    %6801 = vmatmul.f32.gmra.mxu0 %v6774
    %v6802 = vpop.f32.mrf.mxu0
    %v6803 = vadd.f32 0.0, %v6802
    %6804 = vdwg.mxu0
    %6805 = vmatpush.msra.mxu0 0.0
    %6806 = vmatpush.msra.mxu0 0.0
    %6807 = vmatpush.msra.mxu0 0.0
    %6808 = vmatpush.msra.mxu0 0.0
    %6809 = vmatpush.msra.mxu0 0.0
    %6810 = vmatpush.msra.mxu0 0.0
    %6811 = vmatpush.msra.mxu0 0.0
    %6812 = vmatpush.msra.mxu0 0.0
    %6813 = vmatpush.msra.mxu0 0.0
    %6814 = vmatpush.msra.mxu0 0.0
    %6815 = vmatpush.msra.mxu0 0.0
    %6816 = vmatpush.msra.mxu0 0.0
    %6817 = vmatpush.msra.mxu0 0.0
    %6818 = vmatpush.msra.mxu0 0.0
    %6819 = vmatpush.msra.mxu0 %v6033
    %6820 = vmatpush.msra.mxu0 %v6029
    %6821 = vmatmul.f32.gmra.mxu0 %v6765
    %v6822 = vpop.f32.mrf.mxu0
    %v6823 = vadd.f32 0.0, %v6822
    %6824 = vmatmul.f32.gmra.mxu0 %v6768
    %v6825 = vpop.f32.mrf.mxu0
    %v6826 = vadd.f32 0.0, %v6825
    %6827 = vmatmul.f32.gmra.mxu0 %v6771
    %v6828 = vpop.f32.mrf.mxu0
    %v6829 = vadd.f32 0.0, %v6828
    %6830 = vmatmul.f32.gmra.mxu0 %v6774
    %v6831 = vpop.f32.mrf.mxu0
    %v6832 = vadd.f32 0.0, %v6831
    %6833 = vdwg.mxu0
    %6834 = vmatpush.msra.mxu0 0.0
    %6835 = vmatpush.msra.mxu0 0.0
    %6836 = vmatpush.msra.mxu0 0.0
    %6837 = vmatpush.msra.mxu0 0.0
    %6838 = vmatpush.msra.mxu0 0.0
    %6839 = vmatpush.msra.mxu0 0.0
    %6840 = vmatpush.msra.mxu0 0.0
    %6841 = vmatpush.msra.mxu0 0.0
    %6842 = vmatpush.msra.mxu0 0.0
    %6843 = vmatpush.msra.mxu0 0.0
    %6844 = vmatpush.msra.mxu0 0.0
    %6845 = vmatpush.msra.mxu0 0.0
    %6846 = vmatpush.msra.mxu0 0.0
    %6847 = vmatpush.msra.mxu0 0.0
    %6848 = vmatpush.msra.mxu0 %v6034
    %6849 = vmatpush.msra.mxu0 %v6030
    %6850 = vmatmul.f32.gmra.mxu0 %v6765
    %v6851 = vpop.f32.mrf.mxu0
    %v6852 = vadd.f32 0.0, %v6851
    %6853 = vmatmul.f32.gmra.mxu0 %v6768
    %v6854 = vpop.f32.mrf.mxu0
    %v6855 = vadd.f32 0.0, %v6854
    %6856 = vmatmul.f32.gmra.mxu0 %v6771
    %v6857 = vpop.f32.mrf.mxu0
    %v6858 = vadd.f32 0.0, %v6857
    %6859 = vmatmul.f32.gmra.mxu0 %v6774
    %v6860 = vpop.f32.mrf.mxu0
    %v6861 = vadd.f32 0.0, %v6860
    %6862 = vdwg.mxu0
    %6863 = vmatpush.msra.mxu0 0.0
    %6864 = vmatpush.msra.mxu0 0.0
    %6865 = vmatpush.msra.mxu0 0.0
    %6866 = vmatpush.msra.mxu0 0.0
    %6867 = vmatpush.msra.mxu0 0.0
    %6868 = vmatpush.msra.mxu0 0.0
    %6869 = vmatpush.msra.mxu0 0.0
    %6870 = vmatpush.msra.mxu0 0.0
    %6871 = vmatpush.msra.mxu0 0.0
    %6872 = vmatpush.msra.mxu0 0.0
    %6873 = vmatpush.msra.mxu0 0.0
    %6874 = vmatpush.msra.mxu0 0.0
    %6875 = vmatpush.msra.mxu0 0.0
    %6876 = vmatpush.msra.mxu0 0.0
    %6877 = vmatpush.msra.mxu0 %v6035
    %6878 = vmatpush.msra.mxu0 %v6031
    %6879 = vmatmul.f32.gmra.mxu0 %v6765
    %v6880 = vpop.f32.mrf.mxu0
    %v6881 = vadd.f32 0.0, %v6880
    %6882 = vmatmul.f32.gmra.mxu0 %v6768
    %v6883 = vpop.f32.mrf.mxu0
    %v6884 = vadd.f32 0.0, %v6883
    %6885 = vmatmul.f32.gmra.mxu0 %v6771
    %v6886 = vpop.f32.mrf.mxu0
    %v6887 = vadd.f32 0.0, %v6886
    %6888 = vmatmul.f32.gmra.mxu0 %v6774
    %v6889 = vpop.f32.mrf.mxu0
    %v6890 = vadd.f32 0.0, %v6889
    %6891 = vdwg.mxu0
    %v6892 = vadd.f32 %v6743, %v6794
    %v6893 = vadd.f32 %v6744, %v6823
    %v6894 = vadd.f32 %v6745, %v6852
    %v6895 = vadd.f32 %v6746, %v6881
    %v6896 = vadd.f32 %v6747, %v6797
    %v6897 = vadd.f32 %v6748, %v6826
    %v6898 = vadd.f32 %v6749, %v6855
    %v6899 = vadd.f32 %v6750, %v6884
    %v6900 = vadd.f32 %v6751, %v6800
    %v6901 = vadd.f32 %v6752, %v6829
    %v6902 = vadd.f32 %v6753, %v6858
    %v6903 = vadd.f32 %v6754, %v6887
    %v6904 = vadd.f32 %v6755, %v6803
    %v6905 = vadd.f32 %v6756, %v6832
    %v6906 = vadd.f32 %v6757, %v6861
    %v6907 = vadd.f32 %v6758, %v6890
    %6908 = vrot.lane.b32.xlu0 %v6028, 127
    %v6909 = vpop.permute.xlu0 %6908
    %6910 = vrot.lane.b32.xlu0 %v6032, 127
    %v6911 = vpop.permute.xlu0 %6910
    %6912 = vrot.lane.b32.xlu0 %v6029, 127
    %v6913 = vpop.permute.xlu0 %6912
    %6914 = vrot.lane.b32.xlu0 %v6033, 127
    %v6915 = vpop.permute.xlu0 %6914
    %6916 = vrot.lane.b32.xlu0 %v6030, 127
    %v6917 = vpop.permute.xlu0 %6916
    %6918 = vrot.lane.b32.xlu0 %v6034, 127
    %v6919 = vpop.permute.xlu0 %6918
    %6920 = vrot.lane.b32.xlu0 %v6031, 127
    %v6921 = vpop.permute.xlu0 %6920
    %6922 = vrot.lane.b32.xlu0 %v6035, 127
    %v6923 = vpop.permute.xlu0 %6922
    %v6924 = vsel %vm775, %v6917, %v6921
    %v6925 = vsel %vm775, %v6919, %v6923
    %v6926 = vsel %vm775, %v6913, %v6917
    %v6927 = vsel %vm775, %v6915, %v6919
    %v6928 = vsel %vm775, %v6909, %v6913
    %v6929 = vsel %vm775, %v6911, %v6915
    %v6930 = vsel %vm775, %v6921, %v6909
    %v6931 = vsel %vm775, %v6923, %v6911
    %v6932 = vld [vmem:[%s780] sm:$0xff]
    %v6933 = vld [vmem:[%s780 + $0x8] sm:$0xff]
    %v6934 = vld [vmem:[%s780 + $0x10] sm:$0xff]
    %v6935 = vld [vmem:[%s780 + $0x18] sm:$0xff]
    %v6936 = vld [vmem:[%s780 + $0x20] sm:$0xff]
    %v6937 = vld [vmem:[%s780 + $0x28] sm:$0xff]
    %v6938 = vld [vmem:[%s780 + $0x30] sm:$0xff]
    %v6939 = vld [vmem:[%s780 + $0x38] sm:$0xff]
    %v6940 = vmul.f32 %v6928, %v6932
    %v6941 = vmul.f32 %v6926, %v6933
    %v6942 = vmul.f32 %v6924, %v6934
    %v6943 = vmul.f32 %v6930, %v6935
    %v6944 = vmul.f32 %v6929, %v6936
    %v6945 = vmul.f32 %v6927, %v6937
    %v6946 = vmul.f32 %v6925, %v6938
    %v6947 = vmul.f32 %v6931, %v6939
    %s6948 = scalar_lea.vmem %s41, 160
    %v6949 = vld [vmem:[%s6948] sm:$0xff]
    %v6950 = vld [vmem:[%s6948 + $0x8] sm:$0xff]
    %v6951 = vld [vmem:[%s6948 + $0x10] sm:$0xff]
    %v6952 = vld [vmem:[%s6948 + $0x18] sm:$0xff]
    %v6954 = vsel %vm1490, %v6949, 0
    %v6957 = vsel %vm1490, %v6950, 0
    %v6960 = vsel %vm1490, %v6951, 0
    %v6963 = vsel %vm1490, %v6952, 0
    %6965 = vmatpush.msra.mxu0 0.0
    %6966 = vmatpush.msra.mxu0 0.0
    %6967 = vmatpush.msra.mxu0 0.0
    %6968 = vmatpush.msra.mxu0 0.0
    %6969 = vmatpush.msra.mxu0 0.0
    %6970 = vmatpush.msra.mxu0 0.0
    %6971 = vmatpush.msra.mxu0 0.0
    %6972 = vmatpush.msra.mxu0 0.0
    %6973 = vmatpush.msra.mxu0 0.0
    %6974 = vmatpush.msra.mxu0 0.0
    %6975 = vmatpush.msra.mxu0 0.0
    %6976 = vmatpush.msra.mxu0 0.0
    %6977 = vmatpush.msra.mxu0 0.0
    %6978 = vmatpush.msra.mxu0 0.0
    %6979 = vmatpush.msra.mxu0 %v6944
    %6980 = vmatpush.msra.mxu0 %v6940
    %6981 = vmatmul.f32.gmra.mxu0 %v6954
    %v6982 = vpop.f32.mrf.mxu0
    %v6983 = vadd.f32 0.0, %v6982
    %6984 = vmatmul.f32.gmra.mxu0 %v6957
    %v6985 = vpop.f32.mrf.mxu0
    %v6986 = vadd.f32 0.0, %v6985
    %6987 = vmatmul.f32.gmra.mxu0 %v6960
    %v6988 = vpop.f32.mrf.mxu0
    %v6989 = vadd.f32 0.0, %v6988
    %6990 = vmatmul.f32.gmra.mxu0 %v6963
    %v6991 = vpop.f32.mrf.mxu0
    %v6992 = vadd.f32 0.0, %v6991
    %6993 = vdwg.mxu0
    %6994 = vmatpush.msra.mxu0 0.0
    %6995 = vmatpush.msra.mxu0 0.0
    %6996 = vmatpush.msra.mxu0 0.0
    %6997 = vmatpush.msra.mxu0 0.0
    %6998 = vmatpush.msra.mxu0 0.0
    %6999 = vmatpush.msra.mxu0 0.0
    %7000 = vmatpush.msra.mxu0 0.0
    %7001 = vmatpush.msra.mxu0 0.0
    %7002 = vmatpush.msra.mxu0 0.0
    %7003 = vmatpush.msra.mxu0 0.0
    %7004 = vmatpush.msra.mxu0 0.0
    %7005 = vmatpush.msra.mxu0 0.0
    %7006 = vmatpush.msra.mxu0 0.0
    %7007 = vmatpush.msra.mxu0 0.0
    %7008 = vmatpush.msra.mxu0 %v6945
    %7009 = vmatpush.msra.mxu0 %v6941
    %7010 = vmatmul.f32.gmra.mxu0 %v6954
    %v7011 = vpop.f32.mrf.mxu0
    %v7012 = vadd.f32 0.0, %v7011
    %7013 = vmatmul.f32.gmra.mxu0 %v6957
    %v7014 = vpop.f32.mrf.mxu0
    %v7015 = vadd.f32 0.0, %v7014
    %7016 = vmatmul.f32.gmra.mxu0 %v6960
    %v7017 = vpop.f32.mrf.mxu0
    %v7018 = vadd.f32 0.0, %v7017
    %7019 = vmatmul.f32.gmra.mxu0 %v6963
    %v7020 = vpop.f32.mrf.mxu0
    %v7021 = vadd.f32 0.0, %v7020
    %7022 = vdwg.mxu0
    %7023 = vmatpush.msra.mxu0 0.0
    %7024 = vmatpush.msra.mxu0 0.0
    %7025 = vmatpush.msra.mxu0 0.0
    %7026 = vmatpush.msra.mxu0 0.0
    %7027 = vmatpush.msra.mxu0 0.0
    %7028 = vmatpush.msra.mxu0 0.0
    %7029 = vmatpush.msra.mxu0 0.0
    %7030 = vmatpush.msra.mxu0 0.0
    %7031 = vmatpush.msra.mxu0 0.0
    %7032 = vmatpush.msra.mxu0 0.0
    %7033 = vmatpush.msra.mxu0 0.0
    %7034 = vmatpush.msra.mxu0 0.0
    %7035 = vmatpush.msra.mxu0 0.0
    %7036 = vmatpush.msra.mxu0 0.0
    %7037 = vmatpush.msra.mxu0 %v6946
    %7038 = vmatpush.msra.mxu0 %v6942
    %7039 = vmatmul.f32.gmra.mxu0 %v6954
    %v7040 = vpop.f32.mrf.mxu0
    %v7041 = vadd.f32 0.0, %v7040
    %7042 = vmatmul.f32.gmra.mxu0 %v6957
    %v7043 = vpop.f32.mrf.mxu0
    %v7044 = vadd.f32 0.0, %v7043
    %7045 = vmatmul.f32.gmra.mxu0 %v6960
    %v7046 = vpop.f32.mrf.mxu0
    %v7047 = vadd.f32 0.0, %v7046
    %7048 = vmatmul.f32.gmra.mxu0 %v6963
    %v7049 = vpop.f32.mrf.mxu0
    %v7050 = vadd.f32 0.0, %v7049
    %7051 = vdwg.mxu0
    %7052 = vmatpush.msra.mxu0 0.0
    %7053 = vmatpush.msra.mxu0 0.0
    %7054 = vmatpush.msra.mxu0 0.0
    %7055 = vmatpush.msra.mxu0 0.0
    %7056 = vmatpush.msra.mxu0 0.0
    %7057 = vmatpush.msra.mxu0 0.0
    %7058 = vmatpush.msra.mxu0 0.0
    %7059 = vmatpush.msra.mxu0 0.0
    %7060 = vmatpush.msra.mxu0 0.0
    %7061 = vmatpush.msra.mxu0 0.0
    %7062 = vmatpush.msra.mxu0 0.0
    %7063 = vmatpush.msra.mxu0 0.0
    %7064 = vmatpush.msra.mxu0 0.0
    %7065 = vmatpush.msra.mxu0 0.0
    %7066 = vmatpush.msra.mxu0 %v6947
    %7067 = vmatpush.msra.mxu0 %v6943
    %7068 = vmatmul.f32.gmra.mxu0 %v6954
    %v7069 = vpop.f32.mrf.mxu0
    %v7070 = vadd.f32 0.0, %v7069
    %7071 = vmatmul.f32.gmra.mxu0 %v6957
    %v7072 = vpop.f32.mrf.mxu0
    %v7073 = vadd.f32 0.0, %v7072
    %7074 = vmatmul.f32.gmra.mxu0 %v6960
    %v7075 = vpop.f32.mrf.mxu0
    %v7076 = vadd.f32 0.0, %v7075
    %7077 = vmatmul.f32.gmra.mxu0 %v6963
    %v7078 = vpop.f32.mrf.mxu0
    %v7079 = vadd.f32 0.0, %v7078
    %7080 = vdwg.mxu0
    %v7081 = vadd.f32 %v6892, %v6983
    %v7082 = vadd.f32 %v6893, %v7012
    %v7083 = vadd.f32 %v6894, %v7041
    %v7084 = vadd.f32 %v6895, %v7070
    %v7085 = vadd.f32 %v6896, %v6986
    %v7086 = vadd.f32 %v6897, %v7015
    %v7087 = vadd.f32 %v6898, %v7044
    %v7088 = vadd.f32 %v6899, %v7073
    %v7089 = vadd.f32 %v6900, %v6989
    %v7090 = vadd.f32 %v6901, %v7018
    %v7091 = vadd.f32 %v6902, %v7047
    %v7092 = vadd.f32 %v6903, %v7076
    %v7093 = vadd.f32 %v6904, %v6992
    %v7094 = vadd.f32 %v6905, %v7021
    %v7095 = vadd.f32 %v6906, %v7050
    %v7096 = vadd.f32 %v6907, %v7079
    %7097 = vrot.lane.b32.xlu0 %v6028, 113
    %v7098 = vpop.permute.xlu0 %7097
    %7099 = vrot.lane.b32.xlu0 %v6032, 113
    %v7100 = vpop.permute.xlu0 %7099
    %7101 = vrot.lane.b32.xlu0 %v6029, 113
    %v7102 = vpop.permute.xlu0 %7101
    %7103 = vrot.lane.b32.xlu0 %v6033, 113
    %v7104 = vpop.permute.xlu0 %7103
    %7105 = vrot.lane.b32.xlu0 %v6030, 113
    %v7106 = vpop.permute.xlu0 %7105
    %7107 = vrot.lane.b32.xlu0 %v6034, 113
    %v7108 = vpop.permute.xlu0 %7107
    %7109 = vrot.lane.b32.xlu0 %v6031, 113
    %v7110 = vpop.permute.xlu0 %7109
    %7111 = vrot.lane.b32.xlu0 %v6035, 113
    %v7112 = vpop.permute.xlu0 %7111
    %v7113 = vsel %vm906, %v7106, %v7110
    %v7114 = vsel %vm906, %v7108, %v7112
    %v7115 = vsel %vm906, %v7102, %v7106
    %v7116 = vsel %vm906, %v7104, %v7108
    %v7117 = vsel %vm906, %v7098, %v7102
    %v7118 = vsel %vm906, %v7100, %v7104
    %v7119 = vsel %vm906, %v7110, %v7098
    %v7120 = vsel %vm906, %v7112, %v7100
    %v7121 = vld [vmem:[%s911] sm:$0xff]
    %v7122 = vld [vmem:[%s911 + $0x8] sm:$0xff]
    %v7123 = vld [vmem:[%s911 + $0x10] sm:$0xff]
    %v7124 = vld [vmem:[%s911 + $0x18] sm:$0xff]
    %v7125 = vld [vmem:[%s911 + $0x20] sm:$0xff]
    %v7126 = vld [vmem:[%s911 + $0x28] sm:$0xff]
    %v7127 = vld [vmem:[%s911 + $0x30] sm:$0xff]
    %v7128 = vld [vmem:[%s911 + $0x38] sm:$0xff]
    %v7129 = vmul.f32 %v7117, %v7121
    %v7130 = vmul.f32 %v7115, %v7122
    %v7131 = vmul.f32 %v7113, %v7123
    %v7132 = vmul.f32 %v7119, %v7124
    %v7133 = vmul.f32 %v7118, %v7125
    %v7134 = vmul.f32 %v7116, %v7126
    %v7135 = vmul.f32 %v7114, %v7127
    %v7136 = vmul.f32 %v7120, %v7128
    %s7137 = scalar_lea.vmem %s41, 192
    %v7138 = vld [vmem:[%s7137] sm:$0xff]
    %v7139 = vld [vmem:[%s7137 + $0x8] sm:$0xff]
    %v7140 = vld [vmem:[%s7137 + $0x10] sm:$0xff]
    %v7141 = vld [vmem:[%s7137 + $0x18] sm:$0xff]
    %v7143 = vsel %vm1490, %v7138, 0
    %v7146 = vsel %vm1490, %v7139, 0
    %v7149 = vsel %vm1490, %v7140, 0
    %v7152 = vsel %vm1490, %v7141, 0
    %7154 = vmatpush.msra.mxu0 0.0
    %7155 = vmatpush.msra.mxu0 0.0
    %7156 = vmatpush.msra.mxu0 0.0
    %7157 = vmatpush.msra.mxu0 0.0
    %7158 = vmatpush.msra.mxu0 0.0
    %7159 = vmatpush.msra.mxu0 0.0
    %7160 = vmatpush.msra.mxu0 0.0
    %7161 = vmatpush.msra.mxu0 0.0
    %7162 = vmatpush.msra.mxu0 0.0
    %7163 = vmatpush.msra.mxu0 0.0
    %7164 = vmatpush.msra.mxu0 0.0
    %7165 = vmatpush.msra.mxu0 0.0
    %7166 = vmatpush.msra.mxu0 0.0
    %7167 = vmatpush.msra.mxu0 0.0
    %7168 = vmatpush.msra.mxu0 %v7133
    %7169 = vmatpush.msra.mxu0 %v7129
    %7170 = vmatmul.f32.gmra.mxu0 %v7143
    %v7171 = vpop.f32.mrf.mxu0
    %v7172 = vadd.f32 0.0, %v7171
    %7173 = vmatmul.f32.gmra.mxu0 %v7146
    %v7174 = vpop.f32.mrf.mxu0
    %v7175 = vadd.f32 0.0, %v7174
    %7176 = vmatmul.f32.gmra.mxu0 %v7149
    %v7177 = vpop.f32.mrf.mxu0
    %v7178 = vadd.f32 0.0, %v7177
    %7179 = vmatmul.f32.gmra.mxu0 %v7152
    %v7180 = vpop.f32.mrf.mxu0
    %v7181 = vadd.f32 0.0, %v7180
    %7182 = vdwg.mxu0
    %7183 = vmatpush.msra.mxu0 0.0
    %7184 = vmatpush.msra.mxu0 0.0
    %7185 = vmatpush.msra.mxu0 0.0
    %7186 = vmatpush.msra.mxu0 0.0
    %7187 = vmatpush.msra.mxu0 0.0
    %7188 = vmatpush.msra.mxu0 0.0
    %7189 = vmatpush.msra.mxu0 0.0
    %7190 = vmatpush.msra.mxu0 0.0
    %7191 = vmatpush.msra.mxu0 0.0
    %7192 = vmatpush.msra.mxu0 0.0
    %7193 = vmatpush.msra.mxu0 0.0
    %7194 = vmatpush.msra.mxu0 0.0
    %7195 = vmatpush.msra.mxu0 0.0
    %7196 = vmatpush.msra.mxu0 0.0
    %7197 = vmatpush.msra.mxu0 %v7134
    %7198 = vmatpush.msra.mxu0 %v7130
    %7199 = vmatmul.f32.gmra.mxu0 %v7143
    %v7200 = vpop.f32.mrf.mxu0
    %v7201 = vadd.f32 0.0, %v7200
    %7202 = vmatmul.f32.gmra.mxu0 %v7146
    %v7203 = vpop.f32.mrf.mxu0
    %v7204 = vadd.f32 0.0, %v7203
    %7205 = vmatmul.f32.gmra.mxu0 %v7149
    %v7206 = vpop.f32.mrf.mxu0
    %v7207 = vadd.f32 0.0, %v7206
    %7208 = vmatmul.f32.gmra.mxu0 %v7152
    %v7209 = vpop.f32.mrf.mxu0
    %v7210 = vadd.f32 0.0, %v7209
    %7211 = vdwg.mxu0
    %7212 = vmatpush.msra.mxu0 0.0
    %7213 = vmatpush.msra.mxu0 0.0
    %7214 = vmatpush.msra.mxu0 0.0
    %7215 = vmatpush.msra.mxu0 0.0
    %7216 = vmatpush.msra.mxu0 0.0
    %7217 = vmatpush.msra.mxu0 0.0
    %7218 = vmatpush.msra.mxu0 0.0
    %7219 = vmatpush.msra.mxu0 0.0
    %7220 = vmatpush.msra.mxu0 0.0
    %7221 = vmatpush.msra.mxu0 0.0
    %7222 = vmatpush.msra.mxu0 0.0
    %7223 = vmatpush.msra.mxu0 0.0
    %7224 = vmatpush.msra.mxu0 0.0
    %7225 = vmatpush.msra.mxu0 0.0
    %7226 = vmatpush.msra.mxu0 %v7135
    %7227 = vmatpush.msra.mxu0 %v7131
    %7228 = vmatmul.f32.gmra.mxu0 %v7143
    %v7229 = vpop.f32.mrf.mxu0
    %v7230 = vadd.f32 0.0, %v7229
    %7231 = vmatmul.f32.gmra.mxu0 %v7146
    %v7232 = vpop.f32.mrf.mxu0
    %v7233 = vadd.f32 0.0, %v7232
    %7234 = vmatmul.f32.gmra.mxu0 %v7149
    %v7235 = vpop.f32.mrf.mxu0
    %v7236 = vadd.f32 0.0, %v7235
    %7237 = vmatmul.f32.gmra.mxu0 %v7152
    %v7238 = vpop.f32.mrf.mxu0
    %v7239 = vadd.f32 0.0, %v7238
    %7240 = vdwg.mxu0
    %7241 = vmatpush.msra.mxu0 0.0
    %7242 = vmatpush.msra.mxu0 0.0
    %7243 = vmatpush.msra.mxu0 0.0
    %7244 = vmatpush.msra.mxu0 0.0
    %7245 = vmatpush.msra.mxu0 0.0
    %7246 = vmatpush.msra.mxu0 0.0
    %7247 = vmatpush.msra.mxu0 0.0
    %7248 = vmatpush.msra.mxu0 0.0
    %7249 = vmatpush.msra.mxu0 0.0
    %7250 = vmatpush.msra.mxu0 0.0
    %7251 = vmatpush.msra.mxu0 0.0
    %7252 = vmatpush.msra.mxu0 0.0
    %7253 = vmatpush.msra.mxu0 0.0
    %7254 = vmatpush.msra.mxu0 0.0
    %7255 = vmatpush.msra.mxu0 %v7136
    %7256 = vmatpush.msra.mxu0 %v7132
    %7257 = vmatmul.f32.gmra.mxu0 %v7143
    %v7258 = vpop.f32.mrf.mxu0
    %v7259 = vadd.f32 0.0, %v7258
    %7260 = vmatmul.f32.gmra.mxu0 %v7146
    %v7261 = vpop.f32.mrf.mxu0
    %v7262 = vadd.f32 0.0, %v7261
    %7263 = vmatmul.f32.gmra.mxu0 %v7149
    %v7264 = vpop.f32.mrf.mxu0
    %v7265 = vadd.f32 0.0, %v7264
    %7266 = vmatmul.f32.gmra.mxu0 %v7152
    %v7267 = vpop.f32.mrf.mxu0
    %v7268 = vadd.f32 0.0, %v7267
    %7269 = vdwg.mxu0
    %v7270 = vadd.f32 %v7081, %v7172
    %v7271 = vadd.f32 %v7082, %v7201
    %v7272 = vadd.f32 %v7083, %v7230
    %v7273 = vadd.f32 %v7084, %v7259
    %v7274 = vadd.f32 %v7085, %v7175
    %v7275 = vadd.f32 %v7086, %v7204
    %v7276 = vadd.f32 %v7087, %v7233
    %v7277 = vadd.f32 %v7088, %v7262
    %v7278 = vadd.f32 %v7089, %v7178
    %v7279 = vadd.f32 %v7090, %v7207
    %v7280 = vadd.f32 %v7091, %v7236
    %v7281 = vadd.f32 %v7092, %v7265
    %v7282 = vadd.f32 %v7093, %v7181
    %v7283 = vadd.f32 %v7094, %v7210
    %v7284 = vadd.f32 %v7095, %v7239
    %v7285 = vadd.f32 %v7096, %v7268
    %7286 = vrot.lane.b32.xlu0 %v6028, 112
    %v7287 = vpop.permute.xlu0 %7286
    %7288 = vrot.lane.b32.xlu0 %v6032, 112
    %v7289 = vpop.permute.xlu0 %7288
    %7290 = vrot.lane.b32.xlu0 %v6029, 112
    %v7291 = vpop.permute.xlu0 %7290
    %7292 = vrot.lane.b32.xlu0 %v6033, 112
    %v7293 = vpop.permute.xlu0 %7292
    %7294 = vrot.lane.b32.xlu0 %v6030, 112
    %v7295 = vpop.permute.xlu0 %7294
    %7296 = vrot.lane.b32.xlu0 %v6034, 112
    %v7297 = vpop.permute.xlu0 %7296
    %7298 = vrot.lane.b32.xlu0 %v6031, 112
    %v7299 = vpop.permute.xlu0 %7298
    %7300 = vrot.lane.b32.xlu0 %v6035, 112
    %v7301 = vpop.permute.xlu0 %7300
    %v7302 = vsel %vm1037, %v7295, %v7299
    %v7303 = vsel %vm1037, %v7297, %v7301
    %v7304 = vsel %vm1037, %v7291, %v7295
    %v7305 = vsel %vm1037, %v7293, %v7297
    %v7306 = vsel %vm1037, %v7287, %v7291
    %v7307 = vsel %vm1037, %v7289, %v7293
    %v7308 = vsel %vm1037, %v7299, %v7287
    %v7309 = vsel %vm1037, %v7301, %v7289
    %v7310 = vld [vmem:[%s1042] sm:$0xff]
    %v7311 = vld [vmem:[%s1042 + $0x8] sm:$0xff]
    %v7312 = vld [vmem:[%s1042 + $0x10] sm:$0xff]
    %v7313 = vld [vmem:[%s1042 + $0x18] sm:$0xff]
    %v7314 = vld [vmem:[%s1042 + $0x20] sm:$0xff]
    %v7315 = vld [vmem:[%s1042 + $0x28] sm:$0xff]
    %v7316 = vld [vmem:[%s1042 + $0x30] sm:$0xff]
    %v7317 = vld [vmem:[%s1042 + $0x38] sm:$0xff]
    %v7318 = vmul.f32 %v7306, %v7310
    %v7319 = vmul.f32 %v7304, %v7311
    %v7320 = vmul.f32 %v7302, %v7312
    %v7321 = vmul.f32 %v7308, %v7313
    %v7322 = vmul.f32 %v7307, %v7314
    %v7323 = vmul.f32 %v7305, %v7315
    %v7324 = vmul.f32 %v7303, %v7316
    %v7325 = vmul.f32 %v7309, %v7317
    %s7326 = scalar_lea.vmem %s41, 224
    %v7327 = vld [vmem:[%s7326] sm:$0xff]
    %v7328 = vld [vmem:[%s7326 + $0x8] sm:$0xff]
    %v7329 = vld [vmem:[%s7326 + $0x10] sm:$0xff]
    %v7330 = vld [vmem:[%s7326 + $0x18] sm:$0xff]
    %v7332 = vsel %vm1490, %v7327, 0
    %v7335 = vsel %vm1490, %v7328, 0
    %v7338 = vsel %vm1490, %v7329, 0
    %v7341 = vsel %vm1490, %v7330, 0
    %7343 = vmatpush.msra.mxu0 0.0
    %7344 = vmatpush.msra.mxu0 0.0
    %7345 = vmatpush.msra.mxu0 0.0
    %7346 = vmatpush.msra.mxu0 0.0
    %7347 = vmatpush.msra.mxu0 0.0
    %7348 = vmatpush.msra.mxu0 0.0
    %7349 = vmatpush.msra.mxu0 0.0
    %7350 = vmatpush.msra.mxu0 0.0
    %7351 = vmatpush.msra.mxu0 0.0
    %7352 = vmatpush.msra.mxu0 0.0
    %7353 = vmatpush.msra.mxu0 0.0
    %7354 = vmatpush.msra.mxu0 0.0
    %7355 = vmatpush.msra.mxu0 0.0
    %7356 = vmatpush.msra.mxu0 0.0
    %7357 = vmatpush.msra.mxu0 %v7322
    %7358 = vmatpush.msra.mxu0 %v7318
    %7359 = vmatmul.f32.gmra.mxu0 %v7332
    %v7360 = vpop.f32.mrf.mxu0
    %v7361 = vadd.f32 0.0, %v7360
    %7362 = vmatmul.f32.gmra.mxu0 %v7335
    %v7363 = vpop.f32.mrf.mxu0
    %v7364 = vadd.f32 0.0, %v7363
    %7365 = vmatmul.f32.gmra.mxu0 %v7338
    %v7366 = vpop.f32.mrf.mxu0
    %v7367 = vadd.f32 0.0, %v7366
    %7368 = vmatmul.f32.gmra.mxu0 %v7341
    %v7369 = vpop.f32.mrf.mxu0
    %v7370 = vadd.f32 0.0, %v7369
    %7371 = vdwg.mxu0
    %7372 = vmatpush.msra.mxu0 0.0
    %7373 = vmatpush.msra.mxu0 0.0
    %7374 = vmatpush.msra.mxu0 0.0
    %7375 = vmatpush.msra.mxu0 0.0
    %7376 = vmatpush.msra.mxu0 0.0
    %7377 = vmatpush.msra.mxu0 0.0
    %7378 = vmatpush.msra.mxu0 0.0
    %7379 = vmatpush.msra.mxu0 0.0
    %7380 = vmatpush.msra.mxu0 0.0
    %7381 = vmatpush.msra.mxu0 0.0
    %7382 = vmatpush.msra.mxu0 0.0
    %7383 = vmatpush.msra.mxu0 0.0
    %7384 = vmatpush.msra.mxu0 0.0
    %7385 = vmatpush.msra.mxu0 0.0
    %7386 = vmatpush.msra.mxu0 %v7323
    %7387 = vmatpush.msra.mxu0 %v7319
    %7388 = vmatmul.f32.gmra.mxu0 %v7332
    %v7389 = vpop.f32.mrf.mxu0
    %v7390 = vadd.f32 0.0, %v7389
    %7391 = vmatmul.f32.gmra.mxu0 %v7335
    %v7392 = vpop.f32.mrf.mxu0
    %v7393 = vadd.f32 0.0, %v7392
    %7394 = vmatmul.f32.gmra.mxu0 %v7338
    %v7395 = vpop.f32.mrf.mxu0
    %v7396 = vadd.f32 0.0, %v7395
    %7397 = vmatmul.f32.gmra.mxu0 %v7341
    %v7398 = vpop.f32.mrf.mxu0
    %v7399 = vadd.f32 0.0, %v7398
    %7400 = vdwg.mxu0
    %7401 = vmatpush.msra.mxu0 0.0
    %7402 = vmatpush.msra.mxu0 0.0
    %7403 = vmatpush.msra.mxu0 0.0
    %7404 = vmatpush.msra.mxu0 0.0
    %7405 = vmatpush.msra.mxu0 0.0
    %7406 = vmatpush.msra.mxu0 0.0
    %7407 = vmatpush.msra.mxu0 0.0
    %7408 = vmatpush.msra.mxu0 0.0
    %7409 = vmatpush.msra.mxu0 0.0
    %7410 = vmatpush.msra.mxu0 0.0
    %7411 = vmatpush.msra.mxu0 0.0
    %7412 = vmatpush.msra.mxu0 0.0
    %7413 = vmatpush.msra.mxu0 0.0
    %7414 = vmatpush.msra.mxu0 0.0
    %7415 = vmatpush.msra.mxu0 %v7324
    %7416 = vmatpush.msra.mxu0 %v7320
    %7417 = vmatmul.f32.gmra.mxu0 %v7332
    %v7418 = vpop.f32.mrf.mxu0
    %v7419 = vadd.f32 0.0, %v7418
    %7420 = vmatmul.f32.gmra.mxu0 %v7335
    %v7421 = vpop.f32.mrf.mxu0
    %v7422 = vadd.f32 0.0, %v7421
    %7423 = vmatmul.f32.gmra.mxu0 %v7338
    %v7424 = vpop.f32.mrf.mxu0
    %v7425 = vadd.f32 0.0, %v7424
    %7426 = vmatmul.f32.gmra.mxu0 %v7341
    %v7427 = vpop.f32.mrf.mxu0
    %v7428 = vadd.f32 0.0, %v7427
    %7429 = vdwg.mxu0
    %7430 = vmatpush.msra.mxu0 0.0
    %7431 = vmatpush.msra.mxu0 0.0
    %7432 = vmatpush.msra.mxu0 0.0
    %7433 = vmatpush.msra.mxu0 0.0
    %7434 = vmatpush.msra.mxu0 0.0
    %7435 = vmatpush.msra.mxu0 0.0
    %7436 = vmatpush.msra.mxu0 0.0
    %7437 = vmatpush.msra.mxu0 0.0
    %7438 = vmatpush.msra.mxu0 0.0
    %7439 = vmatpush.msra.mxu0 0.0
    %7440 = vmatpush.msra.mxu0 0.0
    %7441 = vmatpush.msra.mxu0 0.0
    %7442 = vmatpush.msra.mxu0 0.0
    %7443 = vmatpush.msra.mxu0 0.0
    %7444 = vmatpush.msra.mxu0 %v7325
    %7445 = vmatpush.msra.mxu0 %v7321
    %7446 = vmatmul.f32.gmra.mxu0 %v7332
    %v7447 = vpop.f32.mrf.mxu0
    %v7448 = vadd.f32 0.0, %v7447
    %7449 = vmatmul.f32.gmra.mxu0 %v7335
    %v7450 = vpop.f32.mrf.mxu0
    %v7451 = vadd.f32 0.0, %v7450
    %7452 = vmatmul.f32.gmra.mxu0 %v7338
    %v7453 = vpop.f32.mrf.mxu0
    %v7454 = vadd.f32 0.0, %v7453
    %7455 = vmatmul.f32.gmra.mxu0 %v7341
    %v7456 = vpop.f32.mrf.mxu0
    %v7457 = vadd.f32 0.0, %v7456
    %7458 = vdwg.mxu0
    %v7459 = vadd.f32 %v7270, %v7361
    %v7460 = vadd.f32 %v7271, %v7390
    %v7461 = vadd.f32 %v7272, %v7419
    %v7462 = vadd.f32 %v7273, %v7448
    %v7463 = vadd.f32 %v7274, %v7364
    %v7464 = vadd.f32 %v7275, %v7393
    %v7465 = vadd.f32 %v7276, %v7422
    %v7466 = vadd.f32 %v7277, %v7451
    %v7467 = vadd.f32 %v7278, %v7367
    %v7468 = vadd.f32 %v7279, %v7396
    %v7469 = vadd.f32 %v7280, %v7425
    %v7470 = vadd.f32 %v7281, %v7454
    %v7471 = vadd.f32 %v7282, %v7370
    %v7472 = vadd.f32 %v7283, %v7399
    %v7473 = vadd.f32 %v7284, %v7428
    %v7474 = vadd.f32 %v7285, %v7457
    %7475 = vrot.lane.b32.xlu0 %v6028, 111
    %v7476 = vpop.permute.xlu0 %7475
    %7477 = vrot.lane.b32.xlu0 %v6032, 111
    %v7478 = vpop.permute.xlu0 %7477
    %7479 = vrot.lane.b32.xlu0 %v6029, 111
    %v7480 = vpop.permute.xlu0 %7479
    %7481 = vrot.lane.b32.xlu0 %v6033, 111
    %v7482 = vpop.permute.xlu0 %7481
    %7483 = vrot.lane.b32.xlu0 %v6030, 111
    %v7484 = vpop.permute.xlu0 %7483
    %7485 = vrot.lane.b32.xlu0 %v6034, 111
    %v7486 = vpop.permute.xlu0 %7485
    %7487 = vrot.lane.b32.xlu0 %v6031, 111
    %v7488 = vpop.permute.xlu0 %7487
    %7489 = vrot.lane.b32.xlu0 %v6035, 111
    %v7490 = vpop.permute.xlu0 %7489
    %v7491 = vsel %vm1168, %v7484, %v7488
    %v7492 = vsel %vm1168, %v7486, %v7490
    %v7493 = vsel %vm1168, %v7480, %v7484
    %v7494 = vsel %vm1168, %v7482, %v7486
    %v7495 = vsel %vm1168, %v7476, %v7480
    %v7496 = vsel %vm1168, %v7478, %v7482
    %v7497 = vsel %vm1168, %v7488, %v7476
    %v7498 = vsel %vm1168, %v7490, %v7478
    %v7499 = vld [vmem:[%s1173] sm:$0xff]
    %v7500 = vld [vmem:[%s1173 + $0x8] sm:$0xff]
    %v7501 = vld [vmem:[%s1173 + $0x10] sm:$0xff]
    %v7502 = vld [vmem:[%s1173 + $0x18] sm:$0xff]
    %v7503 = vld [vmem:[%s1173 + $0x20] sm:$0xff]
    %v7504 = vld [vmem:[%s1173 + $0x28] sm:$0xff]
    %v7505 = vld [vmem:[%s1173 + $0x30] sm:$0xff]
    %v7506 = vld [vmem:[%s1173 + $0x38] sm:$0xff]
    %v7507 = vmul.f32 %v7495, %v7499
    %v7508 = vmul.f32 %v7493, %v7500
    %v7509 = vmul.f32 %v7491, %v7501
    %v7510 = vmul.f32 %v7497, %v7502
    %v7511 = vmul.f32 %v7496, %v7503
    %v7512 = vmul.f32 %v7494, %v7504
    %v7513 = vmul.f32 %v7492, %v7505
    %v7514 = vmul.f32 %v7498, %v7506
    %s7515 = scalar_lea.vmem %s41, 256
    %v7516 = vld [vmem:[%s7515] sm:$0xff]
    %v7517 = vld [vmem:[%s7515 + $0x8] sm:$0xff]
    %v7518 = vld [vmem:[%s7515 + $0x10] sm:$0xff]
    %v7519 = vld [vmem:[%s7515 + $0x18] sm:$0xff]
    %v7521 = vsel %vm1490, %v7516, 0
    %v7524 = vsel %vm1490, %v7517, 0
    %v7527 = vsel %vm1490, %v7518, 0
    %v7530 = vsel %vm1490, %v7519, 0
    %7532 = vmatpush.msra.mxu0 0.0
    %7533 = vmatpush.msra.mxu0 0.0
    %7534 = vmatpush.msra.mxu0 0.0
    %7535 = vmatpush.msra.mxu0 0.0
    %7536 = vmatpush.msra.mxu0 0.0
    %7537 = vmatpush.msra.mxu0 0.0
    %7538 = vmatpush.msra.mxu0 0.0
    %7539 = vmatpush.msra.mxu0 0.0
    %7540 = vmatpush.msra.mxu0 0.0
    %7541 = vmatpush.msra.mxu0 0.0
    %7542 = vmatpush.msra.mxu0 0.0
    %7543 = vmatpush.msra.mxu0 0.0
    %7544 = vmatpush.msra.mxu0 0.0
    %7545 = vmatpush.msra.mxu0 0.0
    %7546 = vmatpush.msra.mxu0 %v7511
    %7547 = vmatpush.msra.mxu0 %v7507
    %7548 = vmatmul.f32.gmra.mxu0 %v7521
    %v7549 = vpop.f32.mrf.mxu0
    %v7550 = vadd.f32 0.0, %v7549
    %7551 = vmatmul.f32.gmra.mxu0 %v7524
    %v7552 = vpop.f32.mrf.mxu0
    %v7553 = vadd.f32 0.0, %v7552
    %7554 = vmatmul.f32.gmra.mxu0 %v7527
    %v7555 = vpop.f32.mrf.mxu0
    %v7556 = vadd.f32 0.0, %v7555
    %7557 = vmatmul.f32.gmra.mxu0 %v7530
    %v7558 = vpop.f32.mrf.mxu0
    %v7559 = vadd.f32 0.0, %v7558
    %7560 = vdwg.mxu0
    %7561 = vmatpush.msra.mxu0 0.0
    %7562 = vmatpush.msra.mxu0 0.0
    %7563 = vmatpush.msra.mxu0 0.0
    %7564 = vmatpush.msra.mxu0 0.0
    %7565 = vmatpush.msra.mxu0 0.0
    %7566 = vmatpush.msra.mxu0 0.0
    %7567 = vmatpush.msra.mxu0 0.0
    %7568 = vmatpush.msra.mxu0 0.0
    %7569 = vmatpush.msra.mxu0 0.0
    %7570 = vmatpush.msra.mxu0 0.0
    %7571 = vmatpush.msra.mxu0 0.0
    %7572 = vmatpush.msra.mxu0 0.0
    %7573 = vmatpush.msra.mxu0 0.0
    %7574 = vmatpush.msra.mxu0 0.0
    %7575 = vmatpush.msra.mxu0 %v7512
    %7576 = vmatpush.msra.mxu0 %v7508
    %7577 = vmatmul.f32.gmra.mxu0 %v7521
    %v7578 = vpop.f32.mrf.mxu0
    %v7579 = vadd.f32 0.0, %v7578
    %7580 = vmatmul.f32.gmra.mxu0 %v7524
    %v7581 = vpop.f32.mrf.mxu0
    %v7582 = vadd.f32 0.0, %v7581
    %7583 = vmatmul.f32.gmra.mxu0 %v7527
    %v7584 = vpop.f32.mrf.mxu0
    %v7585 = vadd.f32 0.0, %v7584
    %7586 = vmatmul.f32.gmra.mxu0 %v7530
    %v7587 = vpop.f32.mrf.mxu0
    %v7588 = vadd.f32 0.0, %v7587
    %7589 = vdwg.mxu0
    %7590 = vmatpush.msra.mxu0 0.0
    %7591 = vmatpush.msra.mxu0 0.0
    %7592 = vmatpush.msra.mxu0 0.0
    %7593 = vmatpush.msra.mxu0 0.0
    %7594 = vmatpush.msra.mxu0 0.0
    %7595 = vmatpush.msra.mxu0 0.0
    %7596 = vmatpush.msra.mxu0 0.0
    %7597 = vmatpush.msra.mxu0 0.0
    %7598 = vmatpush.msra.mxu0 0.0
    %7599 = vmatpush.msra.mxu0 0.0
    %7600 = vmatpush.msra.mxu0 0.0
    %7601 = vmatpush.msra.mxu0 0.0
    %7602 = vmatpush.msra.mxu0 0.0
    %7603 = vmatpush.msra.mxu0 0.0
    %7604 = vmatpush.msra.mxu0 %v7513
    %7605 = vmatpush.msra.mxu0 %v7509
    %7606 = vmatmul.f32.gmra.mxu0 %v7521
    %v7607 = vpop.f32.mrf.mxu0
    %v7608 = vadd.f32 0.0, %v7607
    %7609 = vmatmul.f32.gmra.mxu0 %v7524
    %v7610 = vpop.f32.mrf.mxu0
    %v7611 = vadd.f32 0.0, %v7610
    %7612 = vmatmul.f32.gmra.mxu0 %v7527
    %v7613 = vpop.f32.mrf.mxu0
    %v7614 = vadd.f32 0.0, %v7613
    %7615 = vmatmul.f32.gmra.mxu0 %v7530
    %v7616 = vpop.f32.mrf.mxu0
    %v7617 = vadd.f32 0.0, %v7616
    %7618 = vdwg.mxu0
    %7619 = vmatpush.msra.mxu0 0.0
    %7620 = vmatpush.msra.mxu0 0.0
    %7621 = vmatpush.msra.mxu0 0.0
    %7622 = vmatpush.msra.mxu0 0.0
    %7623 = vmatpush.msra.mxu0 0.0
    %7624 = vmatpush.msra.mxu0 0.0
    %7625 = vmatpush.msra.mxu0 0.0
    %7626 = vmatpush.msra.mxu0 0.0
    %7627 = vmatpush.msra.mxu0 0.0
    %7628 = vmatpush.msra.mxu0 0.0
    %7629 = vmatpush.msra.mxu0 0.0
    %7630 = vmatpush.msra.mxu0 0.0
    %7631 = vmatpush.msra.mxu0 0.0
    %7632 = vmatpush.msra.mxu0 0.0
    %7633 = vmatpush.msra.mxu0 %v7514
    %7634 = vmatpush.msra.mxu0 %v7510
    %7635 = vmatmul.f32.gmra.mxu0 %v7521
    %v7636 = vpop.f32.mrf.mxu0
    %v7637 = vadd.f32 0.0, %v7636
    %7638 = vmatmul.f32.gmra.mxu0 %v7524
    %v7639 = vpop.f32.mrf.mxu0
    %v7640 = vadd.f32 0.0, %v7639
    %7641 = vmatmul.f32.gmra.mxu0 %v7527
    %v7642 = vpop.f32.mrf.mxu0
    %v7643 = vadd.f32 0.0, %v7642
    %7644 = vmatmul.f32.gmra.mxu0 %v7530
    %v7645 = vpop.f32.mrf.mxu0
    %v7646 = vadd.f32 0.0, %v7645
    %7647 = vdwg.mxu0
    %v7648 = vadd.f32 %v7459, %v7550
    %v7649 = vadd.f32 %v7460, %v7579
    %v7650 = vadd.f32 %v7461, %v7608
    %v7651 = vadd.f32 %v7462, %v7637
    %v7652 = vadd.f32 %v7463, %v7553
    %v7653 = vadd.f32 %v7464, %v7582
    %v7654 = vadd.f32 %v7465, %v7611
    %v7655 = vadd.f32 %v7466, %v7640
    %v7656 = vadd.f32 %v7467, %v7556
    %v7657 = vadd.f32 %v7468, %v7585
    %v7658 = vadd.f32 %v7469, %v7614
    %v7659 = vadd.f32 %v7470, %v7643
    %v7660 = vadd.f32 %v7471, %v7559
    %v7661 = vadd.f32 %v7472, %v7588
    %v7662 = vadd.f32 %v7473, %v7617
    %v7663 = vadd.f32 %v7474, %v7646
    %v7664 = vadd.f32 %v7648, %v7649
    %v7665 = vadd.f32 %v7664, %v7650
    %v7666 = vadd.f32 %v7665, %v7651
    %7667 = vadd.xlane.f32.xlu0 %v7666
    %v7668 = vpop.xlane.xlu0 %7667
    %v7669 = vadd.f32 %v7652, %v7653
    %v7670 = vadd.f32 %v7669, %v7654
    %v7671 = vadd.f32 %v7670, %v7655
    %7672 = vadd.xlane.f32.xlu0 %v7671
    %v7673 = vpop.xlane.xlu0 %7672
    %v7674 = vadd.f32 %v7656, %v7657
    %v7675 = vadd.f32 %v7674, %v7658
    %v7676 = vadd.f32 %v7675, %v7659
    %7677 = vadd.xlane.f32.xlu0 %v7676
    %v7678 = vpop.xlane.xlu0 %7677
    %v7679 = vadd.f32 %v7660, %v7661
    %v7680 = vadd.f32 %v7679, %v7662
    %v7681 = vadd.f32 %v7680, %v7663
    %7682 = vadd.xlane.f32.xlu0 %v7681
    %v7683 = vpop.xlane.xlu0 %7682
    %v7684 = vmul.f32 %v7648, %v7648
    %v7685 = vmul.f32 %v7649, %v7649
    %v7686 = vmul.f32 %v7650, %v7650
    %v7687 = vmul.f32 %v7651, %v7651
    %v7688 = vmul.f32 %v7652, %v7652
    %v7689 = vmul.f32 %v7653, %v7653
    %v7690 = vmul.f32 %v7654, %v7654
    %v7691 = vmul.f32 %v7655, %v7655
    %v7692 = vmul.f32 %v7656, %v7656
    %v7693 = vmul.f32 %v7657, %v7657
    %v7694 = vmul.f32 %v7658, %v7658
    %v7695 = vmul.f32 %v7659, %v7659
    %v7696 = vmul.f32 %v7660, %v7660
    %v7697 = vmul.f32 %v7661, %v7661
    %v7698 = vmul.f32 %v7662, %v7662
    %v7699 = vmul.f32 %v7663, %v7663
    %v7700 = vadd.f32 %v7684, %v7685
    %v7701 = vadd.f32 %v7700, %v7686
    %v7702 = vadd.f32 %v7701, %v7687
    %7703 = vadd.xlane.f32.xlu0 %v7702
    %v7704 = vpop.xlane.xlu0 %7703
    %v7705 = vadd.f32 %v7688, %v7689
    %v7706 = vadd.f32 %v7705, %v7690
    %v7707 = vadd.f32 %v7706, %v7691
    %7708 = vadd.xlane.f32.xlu0 %v7707
    %v7709 = vpop.xlane.xlu0 %7708
    %v7710 = vadd.f32 %v7692, %v7693
    %v7711 = vadd.f32 %v7710, %v7694
    %v7712 = vadd.f32 %v7711, %v7695
    %7713 = vadd.xlane.f32.xlu0 %v7712
    %v7714 = vpop.xlane.xlu0 %7713
    %v7715 = vadd.f32 %v7696, %v7697
    %v7716 = vadd.f32 %v7715, %v7698
    %v7717 = vadd.f32 %v7716, %v7699
    %7718 = vadd.xlane.f32.xlu0 %v7717
    %v7719 = vpop.xlane.xlu0 %7718
    %v7720 = vmul.f32 %v7668, 0.001953125
    %v7721 = vmul.f32 %v7673, 0.001953125
    %v7722 = vmul.f32 %v7678, 0.001953125
    %v7723 = vmul.f32 %v7683, 0.001953125
    %v7724 = vmul.f32 %v7704, 0.001953125
    %v7725 = vmul.f32 %v7709, 0.001953125
    %v7726 = vmul.f32 %v7714, 0.001953125
    %v7727 = vmul.f32 %v7719, 0.001953125
    %v7728 = vmul.f32 %v7720, %v7720
    %v7729 = vmul.f32 %v7721, %v7721
    %v7730 = vmul.f32 %v7722, %v7722
    %v7731 = vmul.f32 %v7723, %v7723
    %v7732 = vsub.f32 %v7724, %v7728
    %v7733 = vsub.f32 %v7725, %v7729
    %v7734 = vsub.f32 %v7726, %v7730
    %v7735 = vsub.f32 %v7727, %v7731
    %v7736 = vmax.f32 %v7732, 0.0
    %v7737 = vmax.f32 %v7733, 0.0
    %v7738 = vmax.f32 %v7734, 0.0
    %v7739 = vmax.f32 %v7735, 0.0
    %v7740 = vld [vmem:[%s43] sm:$0xff]
    %v7741 = vld [vmem:[%s43 + $0x8] sm:$0xff]
    %v7742 = vld [vmem:[%s43 + $0x10] sm:$0xff]
    %v7743 = vld [vmem:[%s43 + $0x18] sm:$0xff]
    %v7744 = vadd.f32 %v7736, 1e-05
    %v7745 = vadd.f32 %v7737, 1e-05
    %v7746 = vadd.f32 %v7738, 1e-05
    %v7747 = vadd.f32 %v7739, 1e-05
    %v7748 = vrsqrt.pop %v7744
    %v7749 = vmul.f32 %v7748, %v7744
    %v7750 = vmul.f32 %v7749, %v7748
    %v7751 = vmul.f32 0.5, %v7750
    %v7752 = vsub.f32 1.5, %v7751
    %v7753 = vmul.f32 %v7748, %v7752
    %vm7754 = vweird.f32 %v7744
    %vm7755 = vweird.f32 %v7748
    %vm7756 = vmor %vm7754, %vm7755
    %v7757 = vsel %vm7756, %v7748, %v7753
    %v7758 = vrsqrt.pop %v7745
    %v7759 = vmul.f32 %v7758, %v7745
    %v7760 = vmul.f32 %v7759, %v7758
    %v7761 = vmul.f32 0.5, %v7760
    %v7762 = vsub.f32 1.5, %v7761
    %v7763 = vmul.f32 %v7758, %v7762
    %vm7764 = vweird.f32 %v7745
    %vm7765 = vweird.f32 %v7758
    %vm7766 = vmor %vm7764, %vm7765
    %v7767 = vsel %vm7766, %v7758, %v7763
    %v7768 = vrsqrt.pop %v7746
    %v7769 = vmul.f32 %v7768, %v7746
    %v7770 = vmul.f32 %v7769, %v7768
    %v7771 = vmul.f32 0.5, %v7770
    %v7772 = vsub.f32 1.5, %v7771
    %v7773 = vmul.f32 %v7768, %v7772
    %vm7774 = vweird.f32 %v7746
    %vm7775 = vweird.f32 %v7768
    %vm7776 = vmor %vm7774, %vm7775
    %v7777 = vsel %vm7776, %v7768, %v7773
    %v7778 = vrsqrt.pop %v7747
    %v7779 = vmul.f32 %v7778, %v7747
    %v7780 = vmul.f32 %v7779, %v7778
    %v7781 = vmul.f32 0.5, %v7780
    %v7782 = vsub.f32 1.5, %v7781
    %v7783 = vmul.f32 %v7778, %v7782
    %vm7784 = vweird.f32 %v7747
    %vm7785 = vweird.f32 %v7778
    %vm7786 = vmor %vm7784, %vm7785
    %v7787 = vsel %vm7786, %v7778, %v7783
    %v7788 = vmul.f32 %v7740, %v7757
    %v7789 = vmul.f32 %v7741, %v7767
    %v7790 = vmul.f32 %v7742, %v7777
    %v7791 = vmul.f32 %v7743, %v7787
    %v7792 = vld [vmem:[%s45] sm:$0xff]
    %v7793 = vld [vmem:[%s45 + $0x8] sm:$0xff]
    %v7794 = vld [vmem:[%s45 + $0x10] sm:$0xff]
    %v7795 = vld [vmem:[%s45 + $0x18] sm:$0xff]
    %v7796 = vmul.f32 %v7720, %v7788
    %v7797 = vmul.f32 %v7721, %v7789
    %v7798 = vmul.f32 %v7722, %v7790
    %v7799 = vmul.f32 %v7723, %v7791
    %v7800 = vsub.f32 %v7792, %v7796
    %v7801 = vsub.f32 %v7793, %v7797
    %v7802 = vsub.f32 %v7794, %v7798
    %v7803 = vsub.f32 %v7795, %v7799
    %7805 = vset.pattern.permute.xlu0 0
    %7806 = vperm.xlu0 %7805, %v7788
    %v7807 = vpop.permute.xlu0 %7806
    %7810 = vset.pattern.permute.xlu0 0
    %7811 = vperm.xlu0 %7810, %v7789
    %v7812 = vpop.permute.xlu0 %7811
    %7815 = vset.pattern.permute.xlu0 0
    %7816 = vperm.xlu0 %7815, %v7790
    %v7817 = vpop.permute.xlu0 %7816
    %7820 = vset.pattern.permute.xlu0 0
    %7821 = vperm.xlu0 %7820, %v7791
    %v7822 = vpop.permute.xlu0 %7821
    %v7824 = vmul.f32 %v7648, %v7807
    %v7825 = vmul.f32 %v7649, %v7807
    %v7826 = vmul.f32 %v7650, %v7807
    %v7827 = vmul.f32 %v7651, %v7807
    %v7828 = vmul.f32 %v7652, %v7812
    %v7829 = vmul.f32 %v7653, %v7812
    %v7830 = vmul.f32 %v7654, %v7812
    %v7831 = vmul.f32 %v7655, %v7812
    %v7832 = vmul.f32 %v7656, %v7817
    %v7833 = vmul.f32 %v7657, %v7817
    %v7834 = vmul.f32 %v7658, %v7817
    %v7835 = vmul.f32 %v7659, %v7817
    %v7836 = vmul.f32 %v7660, %v7822
    %v7837 = vmul.f32 %v7661, %v7822
    %v7838 = vmul.f32 %v7662, %v7822
    %v7839 = vmul.f32 %v7663, %v7822
    %7841 = vset.pattern.permute.xlu0 0
    %7842 = vperm.xlu0 %7841, %v7800
    %v7843 = vpop.permute.xlu0 %7842
    %7846 = vset.pattern.permute.xlu0 0
    %7847 = vperm.xlu0 %7846, %v7801
    %v7848 = vpop.permute.xlu0 %7847
    %7851 = vset.pattern.permute.xlu0 0
    %7852 = vperm.xlu0 %7851, %v7802
    %v7853 = vpop.permute.xlu0 %7852
    %7856 = vset.pattern.permute.xlu0 0
    %7857 = vperm.xlu0 %7856, %v7803
    %v7858 = vpop.permute.xlu0 %7857
    %v7860 = vadd.f32 %v7824, %v7843
    %v7861 = vadd.f32 %v7825, %v7843
    %v7862 = vadd.f32 %v7826, %v7843
    %v7863 = vadd.f32 %v7827, %v7843
    %v7864 = vadd.f32 %v7828, %v7848
    %v7865 = vadd.f32 %v7829, %v7848
    %v7866 = vadd.f32 %v7830, %v7848
    %v7867 = vadd.f32 %v7831, %v7848
    %v7868 = vadd.f32 %v7832, %v7853
    %v7869 = vadd.f32 %v7833, %v7853
    %v7870 = vadd.f32 %v7834, %v7853
    %v7871 = vadd.f32 %v7835, %v7853
    %v7872 = vadd.f32 %v7836, %v7858
    %v7873 = vadd.f32 %v7837, %v7858
    %v7874 = vadd.f32 %v7838, %v7858
    %v7875 = vadd.f32 %v7839, %v7858
    %v7876 = vmax.f32 %v7860, 0.0
    %v7877 = vmax.f32 %v7861, 0.0
    %v7878 = vmax.f32 %v7862, 0.0
    %v7879 = vmax.f32 %v7863, 0.0
    %v7880 = vmax.f32 %v7864, 0.0
    %v7881 = vmax.f32 %v7865, 0.0
    %v7882 = vmax.f32 %v7866, 0.0
    %v7883 = vmax.f32 %v7867, 0.0
    %v7884 = vmax.f32 %v7868, 0.0
    %v7885 = vmax.f32 %v7869, 0.0
    %v7886 = vmax.f32 %v7870, 0.0
    %v7887 = vmax.f32 %v7871, 0.0
    %v7888 = vmax.f32 %v7872, 0.0
    %v7889 = vmax.f32 %v7873, 0.0
    %v7890 = vmax.f32 %v7874, 0.0
    %v7891 = vmax.f32 %v7875, 0.0
    %v7892 = vld [vmem:[%s47] sm:$0xff]
    %v7893 = vld [vmem:[%s47 + $0x8] sm:$0xff]
    %v7894 = vld [vmem:[%s47 + $0x10] sm:$0xff]
    %v7895 = vld [vmem:[%s47 + $0x18] sm:$0xff]
    %vm7896 = vcmask 261120
    %v7898 = vsel %vm7896, %v7892, 0
    %v7901 = vsel %vm7896, %v7893, 0
    %v7904 = vsel %vm7896, %v7894, 0
    %v7907 = vsel %vm7896, %v7895, 0
    %7909 = vmatpush.msra.mxu0 0.0
    %7910 = vmatpush.msra.mxu0 0.0
    %7911 = vmatpush.msra.mxu0 0.0
    %7912 = vmatpush.msra.mxu0 0.0
    %7913 = vmatpush.msra.mxu0 0.0
    %7914 = vmatpush.msra.mxu0 0.0
    %7915 = vmatpush.msra.mxu0 0.0
    %7916 = vmatpush.msra.mxu0 0.0
    %7917 = vmatpush.msra.mxu0 0.0
    %7918 = vmatpush.msra.mxu0 0.0
    %7919 = vmatpush.msra.mxu0 0.0
    %7920 = vmatpush.msra.mxu0 0.0
    %7921 = vmatpush.msra.mxu0 %v7888
    %7922 = vmatpush.msra.mxu0 %v7884
    %7923 = vmatpush.msra.mxu0 %v7880
    %7924 = vmatpush.msra.mxu0 %v7876
    %7925 = vmatmul.f32.gmra.mxu0 %v7898
    %v7926 = vpop.f32.mrf.mxu0
    %v7927 = vadd.f32 0.0, %v7926
    %7928 = vmatmul.f32.gmra.mxu0 %v7901
    %v7929 = vpop.f32.mrf.mxu0
    %v7930 = vadd.f32 0.0, %v7929
    %7931 = vmatmul.f32.gmra.mxu0 %v7904
    %v7932 = vpop.f32.mrf.mxu0
    %v7933 = vadd.f32 0.0, %v7932
    %7934 = vmatmul.f32.gmra.mxu0 %v7907
    %v7935 = vpop.f32.mrf.mxu0
    %v7936 = vadd.f32 0.0, %v7935
    %7937 = vdwg.mxu0
    %7938 = vmatpush.msra.mxu0 0.0
    %7939 = vmatpush.msra.mxu0 0.0
    %7940 = vmatpush.msra.mxu0 0.0
    %7941 = vmatpush.msra.mxu0 0.0
    %7942 = vmatpush.msra.mxu0 0.0
    %7943 = vmatpush.msra.mxu0 0.0
    %7944 = vmatpush.msra.mxu0 0.0
    %7945 = vmatpush.msra.mxu0 0.0
    %7946 = vmatpush.msra.mxu0 0.0
    %7947 = vmatpush.msra.mxu0 0.0
    %7948 = vmatpush.msra.mxu0 0.0
    %7949 = vmatpush.msra.mxu0 0.0
    %7950 = vmatpush.msra.mxu0 %v7889
    %7951 = vmatpush.msra.mxu0 %v7885
    %7952 = vmatpush.msra.mxu0 %v7881
    %7953 = vmatpush.msra.mxu0 %v7877
    %7954 = vmatmul.f32.gmra.mxu0 %v7898
    %v7955 = vpop.f32.mrf.mxu0
    %v7956 = vadd.f32 0.0, %v7955
    %7957 = vmatmul.f32.gmra.mxu0 %v7901
    %v7958 = vpop.f32.mrf.mxu0
    %v7959 = vadd.f32 0.0, %v7958
    %7960 = vmatmul.f32.gmra.mxu0 %v7904
    %v7961 = vpop.f32.mrf.mxu0
    %v7962 = vadd.f32 0.0, %v7961
    %7963 = vmatmul.f32.gmra.mxu0 %v7907
    %v7964 = vpop.f32.mrf.mxu0
    %v7965 = vadd.f32 0.0, %v7964
    %7966 = vdwg.mxu0
    %7967 = vmatpush.msra.mxu0 0.0
    %7968 = vmatpush.msra.mxu0 0.0
    %7969 = vmatpush.msra.mxu0 0.0
    %7970 = vmatpush.msra.mxu0 0.0
    %7971 = vmatpush.msra.mxu0 0.0
    %7972 = vmatpush.msra.mxu0 0.0
    %7973 = vmatpush.msra.mxu0 0.0
    %7974 = vmatpush.msra.mxu0 0.0
    %7975 = vmatpush.msra.mxu0 0.0
    %7976 = vmatpush.msra.mxu0 0.0
    %7977 = vmatpush.msra.mxu0 0.0
    %7978 = vmatpush.msra.mxu0 0.0
    %7979 = vmatpush.msra.mxu0 %v7890
    %7980 = vmatpush.msra.mxu0 %v7886
    %7981 = vmatpush.msra.mxu0 %v7882
    %7982 = vmatpush.msra.mxu0 %v7878
    %7983 = vmatmul.f32.gmra.mxu0 %v7898
    %v7984 = vpop.f32.mrf.mxu0
    %v7985 = vadd.f32 0.0, %v7984
    %7986 = vmatmul.f32.gmra.mxu0 %v7901
    %v7987 = vpop.f32.mrf.mxu0
    %v7988 = vadd.f32 0.0, %v7987
    %7989 = vmatmul.f32.gmra.mxu0 %v7904
    %v7990 = vpop.f32.mrf.mxu0
    %v7991 = vadd.f32 0.0, %v7990
    %7992 = vmatmul.f32.gmra.mxu0 %v7907
    %v7993 = vpop.f32.mrf.mxu0
    %v7994 = vadd.f32 0.0, %v7993
    %7995 = vdwg.mxu0
    %7996 = vmatpush.msra.mxu0 0.0
    %7997 = vmatpush.msra.mxu0 0.0
    %7998 = vmatpush.msra.mxu0 0.0
    %7999 = vmatpush.msra.mxu0 0.0
    %8000 = vmatpush.msra.mxu0 0.0
    %8001 = vmatpush.msra.mxu0 0.0
    %8002 = vmatpush.msra.mxu0 0.0
    %8003 = vmatpush.msra.mxu0 0.0
    %8004 = vmatpush.msra.mxu0 0.0
    %8005 = vmatpush.msra.mxu0 0.0
    %8006 = vmatpush.msra.mxu0 0.0
    %8007 = vmatpush.msra.mxu0 0.0
    %8008 = vmatpush.msra.mxu0 %v7891
    %8009 = vmatpush.msra.mxu0 %v7887
    %8010 = vmatpush.msra.mxu0 %v7883
    %8011 = vmatpush.msra.mxu0 %v7879
    %8012 = vmatmul.f32.gmra.mxu0 %v7898
    %v8013 = vpop.f32.mrf.mxu0
    %v8014 = vadd.f32 0.0, %v8013
    %8015 = vmatmul.f32.gmra.mxu0 %v7901
    %v8016 = vpop.f32.mrf.mxu0
    %v8017 = vadd.f32 0.0, %v8016
    %8018 = vmatmul.f32.gmra.mxu0 %v7904
    %v8019 = vpop.f32.mrf.mxu0
    %v8020 = vadd.f32 0.0, %v8019
    %8021 = vmatmul.f32.gmra.mxu0 %v7907
    %v8022 = vpop.f32.mrf.mxu0
    %v8023 = vadd.f32 0.0, %v8022
    %8024 = vdwg.mxu0
    %v8025 = vadd.f32 %v7927, %v7956
    %v8026 = vadd.f32 %v8025, %v7985
    %v8027 = vadd.f32 %v8026, %v8014
    %8028 = vadd.xlane.f32.xlu0 %v8027
    %v8029 = vpop.xlane.xlu0 %8028
    %v8030 = vadd.f32 %v7930, %v7959
    %v8031 = vadd.f32 %v8030, %v7988
    %v8032 = vadd.f32 %v8031, %v8017
    %8033 = vadd.xlane.f32.xlu0 %v8032
    %v8034 = vpop.xlane.xlu0 %8033
    %v8035 = vadd.f32 %v7933, %v7962
    %v8036 = vadd.f32 %v8035, %v7991
    %v8037 = vadd.f32 %v8036, %v8020
    %8038 = vadd.xlane.f32.xlu0 %v8037
    %v8039 = vpop.xlane.xlu0 %8038
    %v8040 = vadd.f32 %v7936, %v7965
    %v8041 = vadd.f32 %v8040, %v7994
    %v8042 = vadd.f32 %v8041, %v8023
    %8043 = vadd.xlane.f32.xlu0 %v8042
    %v8044 = vpop.xlane.xlu0 %8043
    %v8045 = vmul.f32 %v7927, %v7927
    %v8046 = vmul.f32 %v7956, %v7956
    %v8047 = vmul.f32 %v7985, %v7985
    %v8048 = vmul.f32 %v8014, %v8014
    %v8049 = vmul.f32 %v7930, %v7930
    %v8050 = vmul.f32 %v7959, %v7959
    %v8051 = vmul.f32 %v7988, %v7988
    %v8052 = vmul.f32 %v8017, %v8017
    %v8053 = vmul.f32 %v7933, %v7933
    %v8054 = vmul.f32 %v7962, %v7962
    %v8055 = vmul.f32 %v7991, %v7991
    %v8056 = vmul.f32 %v8020, %v8020
    %v8057 = vmul.f32 %v7936, %v7936
    %v8058 = vmul.f32 %v7965, %v7965
    %v8059 = vmul.f32 %v7994, %v7994
    %v8060 = vmul.f32 %v8023, %v8023
    %v8061 = vadd.f32 %v8045, %v8046
    %v8062 = vadd.f32 %v8061, %v8047
    %v8063 = vadd.f32 %v8062, %v8048
    %8064 = vadd.xlane.f32.xlu0 %v8063
    %v8065 = vpop.xlane.xlu0 %8064
    %v8066 = vadd.f32 %v8049, %v8050
    %v8067 = vadd.f32 %v8066, %v8051
    %v8068 = vadd.f32 %v8067, %v8052
    %8069 = vadd.xlane.f32.xlu0 %v8068
    %v8070 = vpop.xlane.xlu0 %8069
    %v8071 = vadd.f32 %v8053, %v8054
    %v8072 = vadd.f32 %v8071, %v8055
    %v8073 = vadd.f32 %v8072, %v8056
    %8074 = vadd.xlane.f32.xlu0 %v8073
    %v8075 = vpop.xlane.xlu0 %8074
    %v8076 = vadd.f32 %v8057, %v8058
    %v8077 = vadd.f32 %v8076, %v8059
    %v8078 = vadd.f32 %v8077, %v8060
    %8079 = vadd.xlane.f32.xlu0 %v8078
    %v8080 = vpop.xlane.xlu0 %8079
    %v8081 = vmul.f32 %v8029, 0.001953125
    %v8082 = vmul.f32 %v8034, 0.001953125
    %v8083 = vmul.f32 %v8039, 0.001953125
    %v8084 = vmul.f32 %v8044, 0.001953125
    %v8085 = vmul.f32 %v8065, 0.001953125
    %v8086 = vmul.f32 %v8070, 0.001953125
    %v8087 = vmul.f32 %v8075, 0.001953125
    %v8088 = vmul.f32 %v8080, 0.001953125
    %v8089 = vmul.f32 %v8081, %v8081
    %v8090 = vmul.f32 %v8082, %v8082
    %v8091 = vmul.f32 %v8083, %v8083
    %v8092 = vmul.f32 %v8084, %v8084
    %v8093 = vsub.f32 %v8085, %v8089
    %v8094 = vsub.f32 %v8086, %v8090
    %v8095 = vsub.f32 %v8087, %v8091
    %v8096 = vsub.f32 %v8088, %v8092
    %v8097 = vmax.f32 %v8093, 0.0
    %v8098 = vmax.f32 %v8094, 0.0
    %v8099 = vmax.f32 %v8095, 0.0
    %v8100 = vmax.f32 %v8096, 0.0
    %v8101 = vld [vmem:[%s49] sm:$0xff]
    %v8102 = vld [vmem:[%s49 + $0x8] sm:$0xff]
    %v8103 = vld [vmem:[%s49 + $0x10] sm:$0xff]
    %v8104 = vld [vmem:[%s49 + $0x18] sm:$0xff]
    %v8105 = vadd.f32 %v8097, 1e-05
    %v8106 = vadd.f32 %v8098, 1e-05
    %v8107 = vadd.f32 %v8099, 1e-05
    %v8108 = vadd.f32 %v8100, 1e-05
    %v8109 = vrsqrt.pop %v8105
    %v8110 = vmul.f32 %v8109, %v8105
    %v8111 = vmul.f32 %v8110, %v8109
    %v8112 = vmul.f32 0.5, %v8111
    %v8113 = vsub.f32 1.5, %v8112
    %v8114 = vmul.f32 %v8109, %v8113
    %vm8115 = vweird.f32 %v8105
    %vm8116 = vweird.f32 %v8109
    %vm8117 = vmor %vm8115, %vm8116
    %v8118 = vsel %vm8117, %v8109, %v8114
    %v8119 = vrsqrt.pop %v8106
    %v8120 = vmul.f32 %v8119, %v8106
    %v8121 = vmul.f32 %v8120, %v8119
    %v8122 = vmul.f32 0.5, %v8121
    %v8123 = vsub.f32 1.5, %v8122
    %v8124 = vmul.f32 %v8119, %v8123
    %vm8125 = vweird.f32 %v8106
    %vm8126 = vweird.f32 %v8119
    %vm8127 = vmor %vm8125, %vm8126
    %v8128 = vsel %vm8127, %v8119, %v8124
    %v8129 = vrsqrt.pop %v8107
    %v8130 = vmul.f32 %v8129, %v8107
    %v8131 = vmul.f32 %v8130, %v8129
    %v8132 = vmul.f32 0.5, %v8131
    %v8133 = vsub.f32 1.5, %v8132
    %v8134 = vmul.f32 %v8129, %v8133
    %vm8135 = vweird.f32 %v8107
    %vm8136 = vweird.f32 %v8129
    %vm8137 = vmor %vm8135, %vm8136
    %v8138 = vsel %vm8137, %v8129, %v8134
    %v8139 = vrsqrt.pop %v8108
    %v8140 = vmul.f32 %v8139, %v8108
    %v8141 = vmul.f32 %v8140, %v8139
    %v8142 = vmul.f32 0.5, %v8141
    %v8143 = vsub.f32 1.5, %v8142
    %v8144 = vmul.f32 %v8139, %v8143
    %vm8145 = vweird.f32 %v8108
    %vm8146 = vweird.f32 %v8139
    %vm8147 = vmor %vm8145, %vm8146
    %v8148 = vsel %vm8147, %v8139, %v8144
    %v8149 = vmul.f32 %v8101, %v8118
    %v8150 = vmul.f32 %v8102, %v8128
    %v8151 = vmul.f32 %v8103, %v8138
    %v8152 = vmul.f32 %v8104, %v8148
    %v8153 = vld [vmem:[%s51] sm:$0xff]
    %v8154 = vld [vmem:[%s51 + $0x8] sm:$0xff]
    %v8155 = vld [vmem:[%s51 + $0x10] sm:$0xff]
    %v8156 = vld [vmem:[%s51 + $0x18] sm:$0xff]
    %v8157 = vmul.f32 %v8081, %v8149
    %v8158 = vmul.f32 %v8082, %v8150
    %v8159 = vmul.f32 %v8083, %v8151
    %v8160 = vmul.f32 %v8084, %v8152
    %v8161 = vsub.f32 %v8153, %v8157
    %v8162 = vsub.f32 %v8154, %v8158
    %v8163 = vsub.f32 %v8155, %v8159
    %v8164 = vsub.f32 %v8156, %v8160
    %8166 = vset.pattern.permute.xlu0 0
    %8167 = vperm.xlu0 %8166, %v8149
    %v8168 = vpop.permute.xlu0 %8167
    %8171 = vset.pattern.permute.xlu0 0
    %8172 = vperm.xlu0 %8171, %v8150
    %v8173 = vpop.permute.xlu0 %8172
    %8176 = vset.pattern.permute.xlu0 0
    %8177 = vperm.xlu0 %8176, %v8151
    %v8178 = vpop.permute.xlu0 %8177
    %8181 = vset.pattern.permute.xlu0 0
    %8182 = vperm.xlu0 %8181, %v8152
    %v8183 = vpop.permute.xlu0 %8182
    %v8185 = vmul.f32 %v7927, %v8168
    %v8186 = vmul.f32 %v7956, %v8168
    %v8187 = vmul.f32 %v7985, %v8168
    %v8188 = vmul.f32 %v8014, %v8168
    %v8189 = vmul.f32 %v7930, %v8173
    %v8190 = vmul.f32 %v7959, %v8173
    %v8191 = vmul.f32 %v7988, %v8173
    %v8192 = vmul.f32 %v8017, %v8173
    %v8193 = vmul.f32 %v7933, %v8178
    %v8194 = vmul.f32 %v7962, %v8178
    %v8195 = vmul.f32 %v7991, %v8178
    %v8196 = vmul.f32 %v8020, %v8178
    %v8197 = vmul.f32 %v7936, %v8183
    %v8198 = vmul.f32 %v7965, %v8183
    %v8199 = vmul.f32 %v7994, %v8183
    %v8200 = vmul.f32 %v8023, %v8183
    %8202 = vset.pattern.permute.xlu0 0
    %8203 = vperm.xlu0 %8202, %v8161
    %v8204 = vpop.permute.xlu0 %8203
    %8207 = vset.pattern.permute.xlu0 0
    %8208 = vperm.xlu0 %8207, %v8162
    %v8209 = vpop.permute.xlu0 %8208
    %8212 = vset.pattern.permute.xlu0 0
    %8213 = vperm.xlu0 %8212, %v8163
    %v8214 = vpop.permute.xlu0 %8213
    %8217 = vset.pattern.permute.xlu0 0
    %8218 = vperm.xlu0 %8217, %v8164
    %v8219 = vpop.permute.xlu0 %8218
    %v8221 = vadd.f32 %v8185, %v8204
    %v8222 = vadd.f32 %v8186, %v8204
    %v8223 = vadd.f32 %v8187, %v8204
    %v8224 = vadd.f32 %v8188, %v8204
    %v8225 = vadd.f32 %v8189, %v8209
    %v8226 = vadd.f32 %v8190, %v8209
    %v8227 = vadd.f32 %v8191, %v8209
    %v8228 = vadd.f32 %v8192, %v8209
    %v8229 = vadd.f32 %v8193, %v8214
    %v8230 = vadd.f32 %v8194, %v8214
    %v8231 = vadd.f32 %v8195, %v8214
    %v8232 = vadd.f32 %v8196, %v8214
    %v8233 = vadd.f32 %v8197, %v8219
    %v8234 = vadd.f32 %v8198, %v8219
    %v8235 = vadd.f32 %v8199, %v8219
    %v8236 = vadd.f32 %v8200, %v8219
    %vm8237 = vcmp.gt.f32.partialorder %v8221, 0.0
    %vm8238 = vcmp.gt.f32.partialorder %v8222, 0.0
    %vm8239 = vcmp.gt.f32.partialorder %v8223, 0.0
    %vm8240 = vcmp.gt.f32.partialorder %v8224, 0.0
    %vm8241 = vcmp.gt.f32.partialorder %v8225, 0.0
    %vm8242 = vcmp.gt.f32.partialorder %v8226, 0.0
    %vm8243 = vcmp.gt.f32.partialorder %v8227, 0.0
    %vm8244 = vcmp.gt.f32.partialorder %v8228, 0.0
    %vm8245 = vcmp.gt.f32.partialorder %v8229, 0.0
    %vm8246 = vcmp.gt.f32.partialorder %v8230, 0.0
    %vm8247 = vcmp.gt.f32.partialorder %v8231, 0.0
    %vm8248 = vcmp.gt.f32.partialorder %v8232, 0.0
    %vm8249 = vcmp.gt.f32.partialorder %v8233, 0.0
    %vm8250 = vcmp.gt.f32.partialorder %v8234, 0.0
    %vm8251 = vcmp.gt.f32.partialorder %v8235, 0.0
    %vm8252 = vcmp.gt.f32.partialorder %v8236, 0.0
    %v8253 = vmul.f32 %v8221, 0.01
    %v8254 = vmul.f32 %v8222, 0.01
    %v8255 = vmul.f32 %v8223, 0.01
    %v8256 = vmul.f32 %v8224, 0.01
    %v8257 = vmul.f32 %v8225, 0.01
    %v8258 = vmul.f32 %v8226, 0.01
    %v8259 = vmul.f32 %v8227, 0.01
    %v8260 = vmul.f32 %v8228, 0.01
    %v8261 = vmul.f32 %v8229, 0.01
    %v8262 = vmul.f32 %v8230, 0.01
    %v8263 = vmul.f32 %v8231, 0.01
    %v8264 = vmul.f32 %v8232, 0.01
    %v8265 = vmul.f32 %v8233, 0.01
    %v8266 = vmul.f32 %v8234, 0.01
    %v8267 = vmul.f32 %v8235, 0.01
    %v8268 = vmul.f32 %v8236, 0.01
    %v8269 = vsel %vm8237, %v8221, %v8253
    %v8270 = vsel %vm8238, %v8222, %v8254
    %v8271 = vsel %vm8239, %v8223, %v8255
    %v8272 = vsel %vm8240, %v8224, %v8256
    %v8273 = vsel %vm8241, %v8225, %v8257
    %v8274 = vsel %vm8242, %v8226, %v8258
    %v8275 = vsel %vm8243, %v8227, %v8259
    %v8276 = vsel %vm8244, %v8228, %v8260
    %v8277 = vsel %vm8245, %v8229, %v8261
    %v8278 = vsel %vm8246, %v8230, %v8262
    %v8279 = vsel %vm8247, %v8231, %v8263
    %v8280 = vsel %vm8248, %v8232, %v8264
    %v8281 = vsel %vm8249, %v8233, %v8265
    %v8282 = vsel %vm8250, %v8234, %v8266
    %v8283 = vsel %vm8251, %v8235, %v8267
    %v8284 = vsel %vm8252, %v8236, %v8268
    %8285 = vst [vmem:[%s63] sm:$0xff] %v8269
    %8286 = vst [vmem:[%s63 + $0x8] sm:$0xff] %v8270
    %8287 = vst [vmem:[%s63 + $0x10] sm:$0xff] %v8271
    %8288 = vst [vmem:[%s63 + $0x18] sm:$0xff] %v8272
    %8289 = vst [vmem:[%s63 + $0x20] sm:$0xff] %v8273
    %8290 = vst [vmem:[%s63 + $0x28] sm:$0xff] %v8274
    %8291 = vst [vmem:[%s63 + $0x30] sm:$0xff] %v8275
    %8292 = vst [vmem:[%s63 + $0x38] sm:$0xff] %v8276
    %8293 = vst [vmem:[%s63 + $0x40] sm:$0xff] %v8277
    %8294 = vst [vmem:[%s63 + $0x48] sm:$0xff] %v8278
    %8295 = vst [vmem:[%s63 + $0x50] sm:$0xff] %v8279
    %8296 = vst [vmem:[%s63 + $0x58] sm:$0xff] %v8280
    %8297 = vst [vmem:[%s63 + $0x60] sm:$0xff] %v8281
    %8298 = vst [vmem:[%s63 + $0x68] sm:$0xff] %v8282
    %8299 = vst [vmem:[%s63 + $0x70] sm:$0xff] %v8283
    %8300 = vst [vmem:[%s63 + $0x78] sm:$0xff] %v8284
    %8301 = vrot.lane.b32.xlu0 %v8269, 17
    %v8302 = vpop.permute.xlu0 %8301
    %8303 = vrot.lane.b32.xlu0 %v8273, 17
    %v8304 = vpop.permute.xlu0 %8303
    %8305 = vrot.lane.b32.xlu0 %v8277, 17
    %v8306 = vpop.permute.xlu0 %8305
    %8307 = vrot.lane.b32.xlu0 %v8281, 17
    %v8308 = vpop.permute.xlu0 %8307
    %8309 = vrot.lane.b32.xlu0 %v8270, 17
    %v8310 = vpop.permute.xlu0 %8309
    %8311 = vrot.lane.b32.xlu0 %v8274, 17
    %v8312 = vpop.permute.xlu0 %8311
    %8313 = vrot.lane.b32.xlu0 %v8278, 17
    %v8314 = vpop.permute.xlu0 %8313
    %8315 = vrot.lane.b32.xlu0 %v8282, 17
    %v8316 = vpop.permute.xlu0 %8315
    %8317 = vrot.lane.b32.xlu0 %v8271, 17
    %v8318 = vpop.permute.xlu0 %8317
    %8319 = vrot.lane.b32.xlu0 %v8275, 17
    %v8320 = vpop.permute.xlu0 %8319
    %8321 = vrot.lane.b32.xlu0 %v8279, 17
    %v8322 = vpop.permute.xlu0 %8321
    %8323 = vrot.lane.b32.xlu0 %v8283, 17
    %v8324 = vpop.permute.xlu0 %8323
    %8325 = vrot.lane.b32.xlu0 %v8272, 17
    %v8326 = vpop.permute.xlu0 %8325
    %8327 = vrot.lane.b32.xlu0 %v8276, 17
    %v8328 = vpop.permute.xlu0 %8327
    %8329 = vrot.lane.b32.xlu0 %v8280, 17
    %v8330 = vpop.permute.xlu0 %8329
    %8331 = vrot.lane.b32.xlu0 %v8284, 17
    %v8332 = vpop.permute.xlu0 %8331
    %v8333 = vsel %vm159, %v8318, %v8326
    %v8334 = vsel %vm159, %v8320, %v8328
    %v8335 = vsel %vm159, %v8322, %v8330
    %v8336 = vsel %vm159, %v8324, %v8332
    %v8337 = vsel %vm159, %v8310, %v8318
    %v8338 = vsel %vm159, %v8312, %v8320
    %v8339 = vsel %vm159, %v8314, %v8322
    %v8340 = vsel %vm159, %v8316, %v8324
    %v8341 = vsel %vm159, %v8302, %v8310
    %v8342 = vsel %vm159, %v8304, %v8312
    %v8343 = vsel %vm159, %v8306, %v8314
    %v8344 = vsel %vm159, %v8308, %v8316
    %v8345 = vsel %vm159, %v8326, %v8302
    %v8346 = vsel %vm159, %v8328, %v8304
    %v8347 = vsel %vm159, %v8330, %v8306
    %v8348 = vsel %vm159, %v8332, %v8308
    %v8349 = vld [vmem:[#allocation2] sm:$0xff]
    %v8350 = vld [vmem:[#allocation2 + $0x8] sm:$0xff]
    %v8351 = vld [vmem:[#allocation2 + $0x10] sm:$0xff]
    %v8352 = vld [vmem:[#allocation2 + $0x18] sm:$0xff]
    %v8353 = vld [vmem:[#allocation2 + $0x20] sm:$0xff]
    %v8354 = vld [vmem:[#allocation2 + $0x28] sm:$0xff]
    %v8355 = vld [vmem:[#allocation2 + $0x30] sm:$0xff]
    %v8356 = vld [vmem:[#allocation2 + $0x38] sm:$0xff]
    %v8357 = vld [vmem:[#allocation2 + $0x40] sm:$0xff]
    %v8358 = vld [vmem:[#allocation2 + $0x48] sm:$0xff]
    %v8359 = vld [vmem:[#allocation2 + $0x50] sm:$0xff]
    %v8360 = vld [vmem:[#allocation2 + $0x58] sm:$0xff]
    %v8361 = vld [vmem:[#allocation2 + $0x60] sm:$0xff]
    %v8362 = vld [vmem:[#allocation2 + $0x68] sm:$0xff]
    %v8363 = vld [vmem:[#allocation2 + $0x70] sm:$0xff]
    %v8364 = vld [vmem:[#allocation2 + $0x78] sm:$0xff]
    %v8365 = vmul.f32 %v8345, %v8349
    %v8366 = vmul.f32 %v8341, %v8350
    %v8367 = vmul.f32 %v8337, %v8351
    %v8368 = vmul.f32 %v8333, %v8352
    %v8369 = vmul.f32 %v8346, %v8353
    %v8370 = vmul.f32 %v8342, %v8354
    %v8371 = vmul.f32 %v8338, %v8355
    %v8372 = vmul.f32 %v8334, %v8356
    %v8373 = vmul.f32 %v8347, %v8357
    %v8374 = vmul.f32 %v8343, %v8358
    %v8375 = vmul.f32 %v8339, %v8359
    %v8376 = vmul.f32 %v8335, %v8360
    %v8377 = vmul.f32 %v8348, %v8361
    %v8378 = vmul.f32 %v8344, %v8362
    %v8379 = vmul.f32 %v8340, %v8363
    %v8380 = vmul.f32 %v8336, %v8364
    %v8381 = vld [vmem:[%s53] sm:$0xff]
    %v8382 = vld [vmem:[%s53 + $0x8] sm:$0xff]
    %v8383 = vld [vmem:[%s53 + $0x10] sm:$0xff]
    %v8384 = vld [vmem:[%s53 + $0x18] sm:$0xff]
    %8385 = vrot.lane.b32.xlu0 %v8269, 16
    %v8386 = vpop.permute.xlu0 %8385
    %8387 = vrot.lane.b32.xlu0 %v8273, 16
    %v8388 = vpop.permute.xlu0 %8387
    %8389 = vrot.lane.b32.xlu0 %v8277, 16
    %v8390 = vpop.permute.xlu0 %8389
    %8391 = vrot.lane.b32.xlu0 %v8281, 16
    %v8392 = vpop.permute.xlu0 %8391
    %8393 = vrot.lane.b32.xlu0 %v8270, 16
    %v8394 = vpop.permute.xlu0 %8393
    %8395 = vrot.lane.b32.xlu0 %v8274, 16
    %v8396 = vpop.permute.xlu0 %8395
    %8397 = vrot.lane.b32.xlu0 %v8278, 16
    %v8398 = vpop.permute.xlu0 %8397
    %8399 = vrot.lane.b32.xlu0 %v8282, 16
    %v8400 = vpop.permute.xlu0 %8399
    %8401 = vrot.lane.b32.xlu0 %v8271, 16
    %v8402 = vpop.permute.xlu0 %8401
    %8403 = vrot.lane.b32.xlu0 %v8275, 16
    %v8404 = vpop.permute.xlu0 %8403
    %8405 = vrot.lane.b32.xlu0 %v8279, 16
    %v8406 = vpop.permute.xlu0 %8405
    %8407 = vrot.lane.b32.xlu0 %v8283, 16
    %v8408 = vpop.permute.xlu0 %8407
    %8409 = vrot.lane.b32.xlu0 %v8272, 16
    %v8410 = vpop.permute.xlu0 %8409
    %8411 = vrot.lane.b32.xlu0 %v8276, 16
    %v8412 = vpop.permute.xlu0 %8411
    %8413 = vrot.lane.b32.xlu0 %v8280, 16
    %v8414 = vpop.permute.xlu0 %8413
    %8415 = vrot.lane.b32.xlu0 %v8284, 16
    %v8416 = vpop.permute.xlu0 %8415
    %v8417 = vsel %vm182, %v8402, %v8410
    %v8418 = vsel %vm182, %v8404, %v8412
    %v8419 = vsel %vm182, %v8406, %v8414
    %v8420 = vsel %vm182, %v8408, %v8416
    %v8421 = vsel %vm182, %v8394, %v8402
    %v8422 = vsel %vm182, %v8396, %v8404
    %v8423 = vsel %vm182, %v8398, %v8406
    %v8424 = vsel %vm182, %v8400, %v8408
    %v8425 = vsel %vm182, %v8386, %v8394
    %v8426 = vsel %vm182, %v8388, %v8396
    %v8427 = vsel %vm182, %v8390, %v8398
    %v8428 = vsel %vm182, %v8392, %v8400
    %v8429 = vsel %vm182, %v8410, %v8386
    %v8430 = vsel %vm182, %v8412, %v8388
    %v8431 = vsel %vm182, %v8414, %v8390
    %v8432 = vsel %vm182, %v8416, %v8392
    %v8433 = vld [vmem:[%s187] sm:$0xff]
    %v8434 = vld [vmem:[%s187 + $0x8] sm:$0xff]
    %v8435 = vld [vmem:[%s187 + $0x10] sm:$0xff]
    %v8436 = vld [vmem:[%s187 + $0x18] sm:$0xff]
    %v8437 = vld [vmem:[%s187 + $0x20] sm:$0xff]
    %v8438 = vld [vmem:[%s187 + $0x28] sm:$0xff]
    %v8439 = vld [vmem:[%s187 + $0x30] sm:$0xff]
    %v8440 = vld [vmem:[%s187 + $0x38] sm:$0xff]
    %v8441 = vld [vmem:[%s187 + $0x40] sm:$0xff]
    %v8442 = vld [vmem:[%s187 + $0x48] sm:$0xff]
    %v8443 = vld [vmem:[%s187 + $0x50] sm:$0xff]
    %v8444 = vld [vmem:[%s187 + $0x58] sm:$0xff]
    %v8445 = vld [vmem:[%s187 + $0x60] sm:$0xff]
    %v8446 = vld [vmem:[%s187 + $0x68] sm:$0xff]
    %v8447 = vld [vmem:[%s187 + $0x70] sm:$0xff]
    %v8448 = vld [vmem:[%s187 + $0x78] sm:$0xff]
    %v8449 = vmul.f32 %v8429, %v8433
    %v8450 = vmul.f32 %v8425, %v8434
    %v8451 = vmul.f32 %v8421, %v8435
    %v8452 = vmul.f32 %v8417, %v8436
    %v8453 = vmul.f32 %v8430, %v8437
    %v8454 = vmul.f32 %v8426, %v8438
    %v8455 = vmul.f32 %v8422, %v8439
    %v8456 = vmul.f32 %v8418, %v8440
    %v8457 = vmul.f32 %v8431, %v8441
    %v8458 = vmul.f32 %v8427, %v8442
    %v8459 = vmul.f32 %v8423, %v8443
    %v8460 = vmul.f32 %v8419, %v8444
    %v8461 = vmul.f32 %v8432, %v8445
    %v8462 = vmul.f32 %v8428, %v8446
    %v8463 = vmul.f32 %v8424, %v8447
    %v8464 = vmul.f32 %v8420, %v8448
    %s8465 = scalar_lea.vmem %s53, 32
    %v8466 = vld [vmem:[%s8465] sm:$0xff]
    %v8467 = vld [vmem:[%s8465 + $0x8] sm:$0xff]
    %v8468 = vld [vmem:[%s8465 + $0x10] sm:$0xff]
    %v8469 = vld [vmem:[%s8465 + $0x18] sm:$0xff]
    %v8471 = vsel %vm7896, %v8466, 0
    %v8474 = vsel %vm7896, %v8467, 0
    %v8477 = vsel %vm7896, %v8468, 0
    %v8480 = vsel %vm7896, %v8469, 0
    %8482 = vmatpush.msra.mxu0 0.0
    %8483 = vmatpush.msra.mxu0 0.0
    %8484 = vmatpush.msra.mxu0 0.0
    %8485 = vmatpush.msra.mxu0 0.0
    %8486 = vmatpush.msra.mxu0 0.0
    %8487 = vmatpush.msra.mxu0 0.0
    %8488 = vmatpush.msra.mxu0 0.0
    %8489 = vmatpush.msra.mxu0 0.0
    %8490 = vmatpush.msra.mxu0 0.0
    %8491 = vmatpush.msra.mxu0 0.0
    %8492 = vmatpush.msra.mxu0 0.0
    %8493 = vmatpush.msra.mxu0 0.0
    %8494 = vmatpush.msra.mxu0 %v8461
    %8495 = vmatpush.msra.mxu0 %v8457
    %8496 = vmatpush.msra.mxu0 %v8453
    %8497 = vmatpush.msra.mxu0 %v8449
    %8498 = vmatmul.f32.gmra.mxu0 %v8471
    %v8499 = vpop.f32.mrf.mxu0
    %v8500 = vadd.f32 0.0, %v8499
    %8501 = vmatmul.f32.gmra.mxu0 %v8474
    %v8502 = vpop.f32.mrf.mxu0
    %v8503 = vadd.f32 0.0, %v8502
    %8504 = vmatmul.f32.gmra.mxu0 %v8477
    %v8505 = vpop.f32.mrf.mxu0
    %v8506 = vadd.f32 0.0, %v8505
    %8507 = vmatmul.f32.gmra.mxu0 %v8480
    %v8508 = vpop.f32.mrf.mxu0
    %v8509 = vadd.f32 0.0, %v8508
    %8510 = vdwg.mxu0
    %8511 = vmatpush.msra.mxu0 0.0
    %8512 = vmatpush.msra.mxu0 0.0
    %8513 = vmatpush.msra.mxu0 0.0
    %8514 = vmatpush.msra.mxu0 0.0
    %8515 = vmatpush.msra.mxu0 0.0
    %8516 = vmatpush.msra.mxu0 0.0
    %8517 = vmatpush.msra.mxu0 0.0
    %8518 = vmatpush.msra.mxu0 0.0
    %8519 = vmatpush.msra.mxu0 0.0
    %8520 = vmatpush.msra.mxu0 0.0
    %8521 = vmatpush.msra.mxu0 0.0
    %8522 = vmatpush.msra.mxu0 0.0
    %8523 = vmatpush.msra.mxu0 %v8462
    %8524 = vmatpush.msra.mxu0 %v8458
    %8525 = vmatpush.msra.mxu0 %v8454
    %8526 = vmatpush.msra.mxu0 %v8450
    %8527 = vmatmul.f32.gmra.mxu0 %v8471
    %v8528 = vpop.f32.mrf.mxu0
    %v8529 = vadd.f32 0.0, %v8528
    %8530 = vmatmul.f32.gmra.mxu0 %v8474
    %v8531 = vpop.f32.mrf.mxu0
    %v8532 = vadd.f32 0.0, %v8531
    %8533 = vmatmul.f32.gmra.mxu0 %v8477
    %v8534 = vpop.f32.mrf.mxu0
    %v8535 = vadd.f32 0.0, %v8534
    %8536 = vmatmul.f32.gmra.mxu0 %v8480
    %v8537 = vpop.f32.mrf.mxu0
    %v8538 = vadd.f32 0.0, %v8537
    %8539 = vdwg.mxu0
    %8540 = vmatpush.msra.mxu0 0.0
    %8541 = vmatpush.msra.mxu0 0.0
    %8542 = vmatpush.msra.mxu0 0.0
    %8543 = vmatpush.msra.mxu0 0.0
    %8544 = vmatpush.msra.mxu0 0.0
    %8545 = vmatpush.msra.mxu0 0.0
    %8546 = vmatpush.msra.mxu0 0.0
    %8547 = vmatpush.msra.mxu0 0.0
    %8548 = vmatpush.msra.mxu0 0.0
    %8549 = vmatpush.msra.mxu0 0.0
    %8550 = vmatpush.msra.mxu0 0.0
    %8551 = vmatpush.msra.mxu0 0.0
    %8552 = vmatpush.msra.mxu0 %v8463
    %8553 = vmatpush.msra.mxu0 %v8459
    %8554 = vmatpush.msra.mxu0 %v8455
    %8555 = vmatpush.msra.mxu0 %v8451
    %8556 = vmatmul.f32.gmra.mxu0 %v8471
    %v8557 = vpop.f32.mrf.mxu0
    %v8558 = vadd.f32 0.0, %v8557
    %8559 = vmatmul.f32.gmra.mxu0 %v8474
    %v8560 = vpop.f32.mrf.mxu0
    %v8561 = vadd.f32 0.0, %v8560
    %8562 = vmatmul.f32.gmra.mxu0 %v8477
    %v8563 = vpop.f32.mrf.mxu0
    %v8564 = vadd.f32 0.0, %v8563
    %8565 = vmatmul.f32.gmra.mxu0 %v8480
    %v8566 = vpop.f32.mrf.mxu0
    %v8567 = vadd.f32 0.0, %v8566
    %8568 = vdwg.mxu0
    %8569 = vmatpush.msra.mxu0 0.0
    %8570 = vmatpush.msra.mxu0 0.0
    %8571 = vmatpush.msra.mxu0 0.0
    %8572 = vmatpush.msra.mxu0 0.0
    %8573 = vmatpush.msra.mxu0 0.0
    %8574 = vmatpush.msra.mxu0 0.0
    %8575 = vmatpush.msra.mxu0 0.0
    %8576 = vmatpush.msra.mxu0 0.0
    %8577 = vmatpush.msra.mxu0 0.0
    %8578 = vmatpush.msra.mxu0 0.0
    %8579 = vmatpush.msra.mxu0 0.0
    %8580 = vmatpush.msra.mxu0 0.0
    %8581 = vmatpush.msra.mxu0 %v8464
    %8582 = vmatpush.msra.mxu0 %v8460
    %8583 = vmatpush.msra.mxu0 %v8456
    %8584 = vmatpush.msra.mxu0 %v8452
    %8585 = vmatmul.f32.gmra.mxu0 %v8471
    %v8586 = vpop.f32.mrf.mxu0
    %v8587 = vadd.f32 0.0, %v8586
    %8588 = vmatmul.f32.gmra.mxu0 %v8474
    %v8589 = vpop.f32.mrf.mxu0
    %v8590 = vadd.f32 0.0, %v8589
    %8591 = vmatmul.f32.gmra.mxu0 %v8477
    %v8592 = vpop.f32.mrf.mxu0
    %v8593 = vadd.f32 0.0, %v8592
    %8594 = vmatmul.f32.gmra.mxu0 %v8480
    %v8595 = vpop.f32.mrf.mxu0
    %v8596 = vadd.f32 0.0, %v8595
    %8597 = vdwg.mxu0
    %v8599 = vsel %vm7896, %v8381, 0
    %v8602 = vsel %vm7896, %v8382, 0
    %v8605 = vsel %vm7896, %v8383, 0
    %v8608 = vsel %vm7896, %v8384, 0
    %8610 = vmatpush.msra.mxu0 0.0
    %8611 = vmatpush.msra.mxu0 0.0
    %8612 = vmatpush.msra.mxu0 0.0
    %8613 = vmatpush.msra.mxu0 0.0
    %8614 = vmatpush.msra.mxu0 0.0
    %8615 = vmatpush.msra.mxu0 0.0
    %8616 = vmatpush.msra.mxu0 0.0
    %8617 = vmatpush.msra.mxu0 0.0
    %8618 = vmatpush.msra.mxu0 0.0
    %8619 = vmatpush.msra.mxu0 0.0
    %8620 = vmatpush.msra.mxu0 0.0
    %8621 = vmatpush.msra.mxu0 0.0
    %8622 = vmatpush.msra.mxu0 %v8377
    %8623 = vmatpush.msra.mxu0 %v8373
    %8624 = vmatpush.msra.mxu0 %v8369
    %8625 = vmatpush.msra.mxu0 %v8365
    %8626 = vmatmul.f32.gmra.mxu0 %v8599
    %v8627 = vpop.f32.mrf.mxu0
    %v8628 = vadd.f32 %v8500, %v8627
    %8629 = vmatmul.f32.gmra.mxu0 %v8602
    %v8630 = vpop.f32.mrf.mxu0
    %v8631 = vadd.f32 %v8503, %v8630
    %8632 = vmatmul.f32.gmra.mxu0 %v8605
    %v8633 = vpop.f32.mrf.mxu0
    %v8634 = vadd.f32 %v8506, %v8633
    %8635 = vmatmul.f32.gmra.mxu0 %v8608
    %v8636 = vpop.f32.mrf.mxu0
    %v8637 = vadd.f32 %v8509, %v8636
    %8638 = vdwg.mxu0
    %8639 = vmatpush.msra.mxu0 0.0
    %8640 = vmatpush.msra.mxu0 0.0
    %8641 = vmatpush.msra.mxu0 0.0
    %8642 = vmatpush.msra.mxu0 0.0
    %8643 = vmatpush.msra.mxu0 0.0
    %8644 = vmatpush.msra.mxu0 0.0
    %8645 = vmatpush.msra.mxu0 0.0
    %8646 = vmatpush.msra.mxu0 0.0
    %8647 = vmatpush.msra.mxu0 0.0
    %8648 = vmatpush.msra.mxu0 0.0
    %8649 = vmatpush.msra.mxu0 0.0
    %8650 = vmatpush.msra.mxu0 0.0
    %8651 = vmatpush.msra.mxu0 %v8378
    %8652 = vmatpush.msra.mxu0 %v8374
    %8653 = vmatpush.msra.mxu0 %v8370
    %8654 = vmatpush.msra.mxu0 %v8366
    %8655 = vmatmul.f32.gmra.mxu0 %v8599
    %v8656 = vpop.f32.mrf.mxu0
    %v8657 = vadd.f32 %v8529, %v8656
    %8658 = vmatmul.f32.gmra.mxu0 %v8602
    %v8659 = vpop.f32.mrf.mxu0
    %v8660 = vadd.f32 %v8532, %v8659
    %8661 = vmatmul.f32.gmra.mxu0 %v8605
    %v8662 = vpop.f32.mrf.mxu0
    %v8663 = vadd.f32 %v8535, %v8662
    %8664 = vmatmul.f32.gmra.mxu0 %v8608
    %v8665 = vpop.f32.mrf.mxu0
    %v8666 = vadd.f32 %v8538, %v8665
    %8667 = vdwg.mxu0
    %8668 = vmatpush.msra.mxu0 0.0
    %8669 = vmatpush.msra.mxu0 0.0
    %8670 = vmatpush.msra.mxu0 0.0
    %8671 = vmatpush.msra.mxu0 0.0
    %8672 = vmatpush.msra.mxu0 0.0
    %8673 = vmatpush.msra.mxu0 0.0
    %8674 = vmatpush.msra.mxu0 0.0
    %8675 = vmatpush.msra.mxu0 0.0
    %8676 = vmatpush.msra.mxu0 0.0
    %8677 = vmatpush.msra.mxu0 0.0
    %8678 = vmatpush.msra.mxu0 0.0
    %8679 = vmatpush.msra.mxu0 0.0
    %8680 = vmatpush.msra.mxu0 %v8379
    %8681 = vmatpush.msra.mxu0 %v8375
    %8682 = vmatpush.msra.mxu0 %v8371
    %8683 = vmatpush.msra.mxu0 %v8367
    %8684 = vmatmul.f32.gmra.mxu0 %v8599
    %v8685 = vpop.f32.mrf.mxu0
    %v8686 = vadd.f32 %v8558, %v8685
    %8687 = vmatmul.f32.gmra.mxu0 %v8602
    %v8688 = vpop.f32.mrf.mxu0
    %v8689 = vadd.f32 %v8561, %v8688
    %8690 = vmatmul.f32.gmra.mxu0 %v8605
    %v8691 = vpop.f32.mrf.mxu0
    %v8692 = vadd.f32 %v8564, %v8691
    %8693 = vmatmul.f32.gmra.mxu0 %v8608
    %v8694 = vpop.f32.mrf.mxu0
    %v8695 = vadd.f32 %v8567, %v8694
    %8696 = vdwg.mxu0
    %8697 = vmatpush.msra.mxu0 0.0
    %8698 = vmatpush.msra.mxu0 0.0
    %8699 = vmatpush.msra.mxu0 0.0
    %8700 = vmatpush.msra.mxu0 0.0
    %8701 = vmatpush.msra.mxu0 0.0
    %8702 = vmatpush.msra.mxu0 0.0
    %8703 = vmatpush.msra.mxu0 0.0
    %8704 = vmatpush.msra.mxu0 0.0
    %8705 = vmatpush.msra.mxu0 0.0
    %8706 = vmatpush.msra.mxu0 0.0
    %8707 = vmatpush.msra.mxu0 0.0
    %8708 = vmatpush.msra.mxu0 0.0
    %8709 = vmatpush.msra.mxu0 %v8380
    %8710 = vmatpush.msra.mxu0 %v8376
    %8711 = vmatpush.msra.mxu0 %v8372
    %8712 = vmatpush.msra.mxu0 %v8368
    %8713 = vmatmul.f32.gmra.mxu0 %v8599
    %v8714 = vpop.f32.mrf.mxu0
    %v8715 = vadd.f32 %v8587, %v8714
    %8716 = vmatmul.f32.gmra.mxu0 %v8602
    %v8717 = vpop.f32.mrf.mxu0
    %v8718 = vadd.f32 %v8590, %v8717
    %8719 = vmatmul.f32.gmra.mxu0 %v8605
    %v8720 = vpop.f32.mrf.mxu0
    %v8721 = vadd.f32 %v8593, %v8720
    %8722 = vmatmul.f32.gmra.mxu0 %v8608
    %v8723 = vpop.f32.mrf.mxu0
    %v8724 = vadd.f32 %v8596, %v8723
    %8725 = vdwg.mxu0
    %8726 = vrot.lane.b32.xlu0 %v8269, 15
    %v8727 = vpop.permute.xlu0 %8726
    %8728 = vrot.lane.b32.xlu0 %v8273, 15
    %v8729 = vpop.permute.xlu0 %8728
    %8730 = vrot.lane.b32.xlu0 %v8277, 15
    %v8731 = vpop.permute.xlu0 %8730
    %8732 = vrot.lane.b32.xlu0 %v8281, 15
    %v8733 = vpop.permute.xlu0 %8732
    %8734 = vrot.lane.b32.xlu0 %v8270, 15
    %v8735 = vpop.permute.xlu0 %8734
    %8736 = vrot.lane.b32.xlu0 %v8274, 15
    %v8737 = vpop.permute.xlu0 %8736
    %8738 = vrot.lane.b32.xlu0 %v8278, 15
    %v8739 = vpop.permute.xlu0 %8738
    %8740 = vrot.lane.b32.xlu0 %v8282, 15
    %v8741 = vpop.permute.xlu0 %8740
    %8742 = vrot.lane.b32.xlu0 %v8271, 15
    %v8743 = vpop.permute.xlu0 %8742
    %8744 = vrot.lane.b32.xlu0 %v8275, 15
    %v8745 = vpop.permute.xlu0 %8744
    %8746 = vrot.lane.b32.xlu0 %v8279, 15
    %v8747 = vpop.permute.xlu0 %8746
    %8748 = vrot.lane.b32.xlu0 %v8283, 15
    %v8749 = vpop.permute.xlu0 %8748
    %8750 = vrot.lane.b32.xlu0 %v8272, 15
    %v8751 = vpop.permute.xlu0 %8750
    %8752 = vrot.lane.b32.xlu0 %v8276, 15
    %v8753 = vpop.permute.xlu0 %8752
    %8754 = vrot.lane.b32.xlu0 %v8280, 15
    %v8755 = vpop.permute.xlu0 %8754
    %8756 = vrot.lane.b32.xlu0 %v8284, 15
    %v8757 = vpop.permute.xlu0 %8756
    %v8758 = vsel %vm404, %v8743, %v8751
    %v8759 = vsel %vm404, %v8745, %v8753
    %v8760 = vsel %vm404, %v8747, %v8755
    %v8761 = vsel %vm404, %v8749, %v8757
    %v8762 = vsel %vm404, %v8735, %v8743
    %v8763 = vsel %vm404, %v8737, %v8745
    %v8764 = vsel %vm404, %v8739, %v8747
    %v8765 = vsel %vm404, %v8741, %v8749
    %v8766 = vsel %vm404, %v8727, %v8735
    %v8767 = vsel %vm404, %v8729, %v8737
    %v8768 = vsel %vm404, %v8731, %v8739
    %v8769 = vsel %vm404, %v8733, %v8741
    %v8770 = vsel %vm404, %v8751, %v8727
    %v8771 = vsel %vm404, %v8753, %v8729
    %v8772 = vsel %vm404, %v8755, %v8731
    %v8773 = vsel %vm404, %v8757, %v8733
    %v8774 = vld [vmem:[%s409] sm:$0xff]
    %v8775 = vld [vmem:[%s409 + $0x8] sm:$0xff]
    %v8776 = vld [vmem:[%s409 + $0x10] sm:$0xff]
    %v8777 = vld [vmem:[%s409 + $0x18] sm:$0xff]
    %v8778 = vld [vmem:[%s409 + $0x20] sm:$0xff]
    %v8779 = vld [vmem:[%s409 + $0x28] sm:$0xff]
    %v8780 = vld [vmem:[%s409 + $0x30] sm:$0xff]
    %v8781 = vld [vmem:[%s409 + $0x38] sm:$0xff]
    %v8782 = vld [vmem:[%s409 + $0x40] sm:$0xff]
    %v8783 = vld [vmem:[%s409 + $0x48] sm:$0xff]
    %v8784 = vld [vmem:[%s409 + $0x50] sm:$0xff]
    %v8785 = vld [vmem:[%s409 + $0x58] sm:$0xff]
    %v8786 = vld [vmem:[%s409 + $0x60] sm:$0xff]
    %v8787 = vld [vmem:[%s409 + $0x68] sm:$0xff]
    %v8788 = vld [vmem:[%s409 + $0x70] sm:$0xff]
    %v8789 = vld [vmem:[%s409 + $0x78] sm:$0xff]
    %v8790 = vmul.f32 %v8770, %v8774
    %v8791 = vmul.f32 %v8766, %v8775
    %v8792 = vmul.f32 %v8762, %v8776
    %v8793 = vmul.f32 %v8758, %v8777
    %v8794 = vmul.f32 %v8771, %v8778
    %v8795 = vmul.f32 %v8767, %v8779
    %v8796 = vmul.f32 %v8763, %v8780
    %v8797 = vmul.f32 %v8759, %v8781
    %v8798 = vmul.f32 %v8772, %v8782
    %v8799 = vmul.f32 %v8768, %v8783
    %v8800 = vmul.f32 %v8764, %v8784
    %v8801 = vmul.f32 %v8760, %v8785
    %v8802 = vmul.f32 %v8773, %v8786
    %v8803 = vmul.f32 %v8769, %v8787
    %v8804 = vmul.f32 %v8765, %v8788
    %v8805 = vmul.f32 %v8761, %v8789
    %s8806 = scalar_lea.vmem %s53, 64
    %v8807 = vld [vmem:[%s8806] sm:$0xff]
    %v8808 = vld [vmem:[%s8806 + $0x8] sm:$0xff]
    %v8809 = vld [vmem:[%s8806 + $0x10] sm:$0xff]
    %v8810 = vld [vmem:[%s8806 + $0x18] sm:$0xff]
    %v8812 = vsel %vm7896, %v8807, 0
    %v8815 = vsel %vm7896, %v8808, 0
    %v8818 = vsel %vm7896, %v8809, 0
    %v8821 = vsel %vm7896, %v8810, 0
    %8823 = vmatpush.msra.mxu0 0.0
    %8824 = vmatpush.msra.mxu0 0.0
    %8825 = vmatpush.msra.mxu0 0.0
    %8826 = vmatpush.msra.mxu0 0.0
    %8827 = vmatpush.msra.mxu0 0.0
    %8828 = vmatpush.msra.mxu0 0.0
    %8829 = vmatpush.msra.mxu0 0.0
    %8830 = vmatpush.msra.mxu0 0.0
    %8831 = vmatpush.msra.mxu0 0.0
    %8832 = vmatpush.msra.mxu0 0.0
    %8833 = vmatpush.msra.mxu0 0.0
    %8834 = vmatpush.msra.mxu0 0.0
    %8835 = vmatpush.msra.mxu0 %v8802
    %8836 = vmatpush.msra.mxu0 %v8798
    %8837 = vmatpush.msra.mxu0 %v8794
    %8838 = vmatpush.msra.mxu0 %v8790
    %8839 = vmatmul.f32.gmra.mxu0 %v8812
    %v8840 = vpop.f32.mrf.mxu0
    %v8841 = vadd.f32 0.0, %v8840
    %8842 = vmatmul.f32.gmra.mxu0 %v8815
    %v8843 = vpop.f32.mrf.mxu0
    %v8844 = vadd.f32 0.0, %v8843
    %8845 = vmatmul.f32.gmra.mxu0 %v8818
    %v8846 = vpop.f32.mrf.mxu0
    %v8847 = vadd.f32 0.0, %v8846
    %8848 = vmatmul.f32.gmra.mxu0 %v8821
    %v8849 = vpop.f32.mrf.mxu0
    %v8850 = vadd.f32 0.0, %v8849
    %8851 = vdwg.mxu0
    %8852 = vmatpush.msra.mxu0 0.0
    %8853 = vmatpush.msra.mxu0 0.0
    %8854 = vmatpush.msra.mxu0 0.0
    %8855 = vmatpush.msra.mxu0 0.0
    %8856 = vmatpush.msra.mxu0 0.0
    %8857 = vmatpush.msra.mxu0 0.0
    %8858 = vmatpush.msra.mxu0 0.0
    %8859 = vmatpush.msra.mxu0 0.0
    %8860 = vmatpush.msra.mxu0 0.0
    %8861 = vmatpush.msra.mxu0 0.0
    %8862 = vmatpush.msra.mxu0 0.0
    %8863 = vmatpush.msra.mxu0 0.0
    %8864 = vmatpush.msra.mxu0 %v8803
    %8865 = vmatpush.msra.mxu0 %v8799
    %8866 = vmatpush.msra.mxu0 %v8795
    %8867 = vmatpush.msra.mxu0 %v8791
    %8868 = vmatmul.f32.gmra.mxu0 %v8812
    %v8869 = vpop.f32.mrf.mxu0
    %v8870 = vadd.f32 0.0, %v8869
    %8871 = vmatmul.f32.gmra.mxu0 %v8815
    %v8872 = vpop.f32.mrf.mxu0
    %v8873 = vadd.f32 0.0, %v8872
    %8874 = vmatmul.f32.gmra.mxu0 %v8818
    %v8875 = vpop.f32.mrf.mxu0
    %v8876 = vadd.f32 0.0, %v8875
    %8877 = vmatmul.f32.gmra.mxu0 %v8821
    %v8878 = vpop.f32.mrf.mxu0
    %v8879 = vadd.f32 0.0, %v8878
    %8880 = vdwg.mxu0
    %8881 = vmatpush.msra.mxu0 0.0
    %8882 = vmatpush.msra.mxu0 0.0
    %8883 = vmatpush.msra.mxu0 0.0
    %8884 = vmatpush.msra.mxu0 0.0
    %8885 = vmatpush.msra.mxu0 0.0
    %8886 = vmatpush.msra.mxu0 0.0
    %8887 = vmatpush.msra.mxu0 0.0
    %8888 = vmatpush.msra.mxu0 0.0
    %8889 = vmatpush.msra.mxu0 0.0
    %8890 = vmatpush.msra.mxu0 0.0
    %8891 = vmatpush.msra.mxu0 0.0
    %8892 = vmatpush.msra.mxu0 0.0
    %8893 = vmatpush.msra.mxu0 %v8804
    %8894 = vmatpush.msra.mxu0 %v8800
    %8895 = vmatpush.msra.mxu0 %v8796
    %8896 = vmatpush.msra.mxu0 %v8792
    %8897 = vmatmul.f32.gmra.mxu0 %v8812
    %v8898 = vpop.f32.mrf.mxu0
    %v8899 = vadd.f32 0.0, %v8898
    %8900 = vmatmul.f32.gmra.mxu0 %v8815
    %v8901 = vpop.f32.mrf.mxu0
    %v8902 = vadd.f32 0.0, %v8901
    %8903 = vmatmul.f32.gmra.mxu0 %v8818
    %v8904 = vpop.f32.mrf.mxu0
    %v8905 = vadd.f32 0.0, %v8904
    %8906 = vmatmul.f32.gmra.mxu0 %v8821
    %v8907 = vpop.f32.mrf.mxu0
    %v8908 = vadd.f32 0.0, %v8907
    %8909 = vdwg.mxu0
    %8910 = vmatpush.msra.mxu0 0.0
    %8911 = vmatpush.msra.mxu0 0.0
    %8912 = vmatpush.msra.mxu0 0.0
    %8913 = vmatpush.msra.mxu0 0.0
    %8914 = vmatpush.msra.mxu0 0.0
    %8915 = vmatpush.msra.mxu0 0.0
    %8916 = vmatpush.msra.mxu0 0.0
    %8917 = vmatpush.msra.mxu0 0.0
    %8918 = vmatpush.msra.mxu0 0.0
    %8919 = vmatpush.msra.mxu0 0.0
    %8920 = vmatpush.msra.mxu0 0.0
    %8921 = vmatpush.msra.mxu0 0.0
    %8922 = vmatpush.msra.mxu0 %v8805
    %8923 = vmatpush.msra.mxu0 %v8801
    %8924 = vmatpush.msra.mxu0 %v8797
    %8925 = vmatpush.msra.mxu0 %v8793
    %8926 = vmatmul.f32.gmra.mxu0 %v8812
    %v8927 = vpop.f32.mrf.mxu0
    %v8928 = vadd.f32 0.0, %v8927
    %8929 = vmatmul.f32.gmra.mxu0 %v8815
    %v8930 = vpop.f32.mrf.mxu0
    %v8931 = vadd.f32 0.0, %v8930
    %8932 = vmatmul.f32.gmra.mxu0 %v8818
    %v8933 = vpop.f32.mrf.mxu0
    %v8934 = vadd.f32 0.0, %v8933
    %8935 = vmatmul.f32.gmra.mxu0 %v8821
    %v8936 = vpop.f32.mrf.mxu0
    %v8937 = vadd.f32 0.0, %v8936
    %8938 = vdwg.mxu0
    %v8939 = vadd.f32 %v8628, %v8841
    %v8940 = vadd.f32 %v8657, %v8870
    %v8941 = vadd.f32 %v8686, %v8899
    %v8942 = vadd.f32 %v8715, %v8928
    %v8943 = vadd.f32 %v8631, %v8844
    %v8944 = vadd.f32 %v8660, %v8873
    %v8945 = vadd.f32 %v8689, %v8902
    %v8946 = vadd.f32 %v8718, %v8931
    %v8947 = vadd.f32 %v8634, %v8847
    %v8948 = vadd.f32 %v8663, %v8876
    %v8949 = vadd.f32 %v8692, %v8905
    %v8950 = vadd.f32 %v8721, %v8934
    %v8951 = vadd.f32 %v8637, %v8850
    %v8952 = vadd.f32 %v8666, %v8879
    %v8953 = vadd.f32 %v8695, %v8908
    %v8954 = vadd.f32 %v8724, %v8937
    %8955 = vrot.lane.b32.xlu0 %v8269, 1
    %v8956 = vpop.permute.xlu0 %8955
    %8957 = vrot.lane.b32.xlu0 %v8273, 1
    %v8958 = vpop.permute.xlu0 %8957
    %8959 = vrot.lane.b32.xlu0 %v8277, 1
    %v8960 = vpop.permute.xlu0 %8959
    %8961 = vrot.lane.b32.xlu0 %v8281, 1
    %v8962 = vpop.permute.xlu0 %8961
    %8963 = vrot.lane.b32.xlu0 %v8270, 1
    %v8964 = vpop.permute.xlu0 %8963
    %8965 = vrot.lane.b32.xlu0 %v8274, 1
    %v8966 = vpop.permute.xlu0 %8965
    %8967 = vrot.lane.b32.xlu0 %v8278, 1
    %v8968 = vpop.permute.xlu0 %8967
    %8969 = vrot.lane.b32.xlu0 %v8282, 1
    %v8970 = vpop.permute.xlu0 %8969
    %8971 = vrot.lane.b32.xlu0 %v8271, 1
    %v8972 = vpop.permute.xlu0 %8971
    %8973 = vrot.lane.b32.xlu0 %v8275, 1
    %v8974 = vpop.permute.xlu0 %8973
    %8975 = vrot.lane.b32.xlu0 %v8279, 1
    %v8976 = vpop.permute.xlu0 %8975
    %8977 = vrot.lane.b32.xlu0 %v8283, 1
    %v8978 = vpop.permute.xlu0 %8977
    %8979 = vrot.lane.b32.xlu0 %v8272, 1
    %v8980 = vpop.permute.xlu0 %8979
    %8981 = vrot.lane.b32.xlu0 %v8276, 1
    %v8982 = vpop.permute.xlu0 %8981
    %8983 = vrot.lane.b32.xlu0 %v8280, 1
    %v8984 = vpop.permute.xlu0 %8983
    %8985 = vrot.lane.b32.xlu0 %v8284, 1
    %v8986 = vpop.permute.xlu0 %8985
    %v8987 = vsel %vm535, %v8972, %v8980
    %v8988 = vsel %vm535, %v8974, %v8982
    %v8989 = vsel %vm535, %v8976, %v8984
    %v8990 = vsel %vm535, %v8978, %v8986
    %v8991 = vsel %vm535, %v8964, %v8972
    %v8992 = vsel %vm535, %v8966, %v8974
    %v8993 = vsel %vm535, %v8968, %v8976
    %v8994 = vsel %vm535, %v8970, %v8978
    %v8995 = vsel %vm535, %v8956, %v8964
    %v8996 = vsel %vm535, %v8958, %v8966
    %v8997 = vsel %vm535, %v8960, %v8968
    %v8998 = vsel %vm535, %v8962, %v8970
    %v8999 = vsel %vm535, %v8980, %v8956
    %v9000 = vsel %vm535, %v8982, %v8958
    %v9001 = vsel %vm535, %v8984, %v8960
    %v9002 = vsel %vm535, %v8986, %v8962
    %v9003 = vld [vmem:[%s540] sm:$0xff]
    %v9004 = vld [vmem:[%s540 + $0x8] sm:$0xff]
    %v9005 = vld [vmem:[%s540 + $0x10] sm:$0xff]
    %v9006 = vld [vmem:[%s540 + $0x18] sm:$0xff]
    %v9007 = vld [vmem:[%s540 + $0x20] sm:$0xff]
    %v9008 = vld [vmem:[%s540 + $0x28] sm:$0xff]
    %v9009 = vld [vmem:[%s540 + $0x30] sm:$0xff]
    %v9010 = vld [vmem:[%s540 + $0x38] sm:$0xff]
    %v9011 = vld [vmem:[%s540 + $0x40] sm:$0xff]
    %v9012 = vld [vmem:[%s540 + $0x48] sm:$0xff]
    %v9013 = vld [vmem:[%s540 + $0x50] sm:$0xff]
    %v9014 = vld [vmem:[%s540 + $0x58] sm:$0xff]
    %v9015 = vld [vmem:[%s540 + $0x60] sm:$0xff]
    %v9016 = vld [vmem:[%s540 + $0x68] sm:$0xff]
    %v9017 = vld [vmem:[%s540 + $0x70] sm:$0xff]
    %v9018 = vld [vmem:[%s540 + $0x78] sm:$0xff]
    %v9019 = vmul.f32 %v8999, %v9003
    %v9020 = vmul.f32 %v8995, %v9004
    %v9021 = vmul.f32 %v8991, %v9005
    %v9022 = vmul.f32 %v8987, %v9006
    %v9023 = vmul.f32 %v9000, %v9007
    %v9024 = vmul.f32 %v8996, %v9008
    %v9025 = vmul.f32 %v8992, %v9009
    %v9026 = vmul.f32 %v8988, %v9010
    %v9027 = vmul.f32 %v9001, %v9011
    %v9028 = vmul.f32 %v8997, %v9012
    %v9029 = vmul.f32 %v8993, %v9013
    %v9030 = vmul.f32 %v8989, %v9014
    %v9031 = vmul.f32 %v9002, %v9015
    %v9032 = vmul.f32 %v8998, %v9016
    %v9033 = vmul.f32 %v8994, %v9017
    %v9034 = vmul.f32 %v8990, %v9018
    %s9035 = scalar_lea.vmem %s53, 96
    %v9036 = vld [vmem:[%s9035] sm:$0xff]
    %v9037 = vld [vmem:[%s9035 + $0x8] sm:$0xff]
    %v9038 = vld [vmem:[%s9035 + $0x10] sm:$0xff]
    %v9039 = vld [vmem:[%s9035 + $0x18] sm:$0xff]
    %v9041 = vsel %vm7896, %v9036, 0
    %v9044 = vsel %vm7896, %v9037, 0
    %v9047 = vsel %vm7896, %v9038, 0
    %v9050 = vsel %vm7896, %v9039, 0
    %9052 = vmatpush.msra.mxu0 0.0
    %9053 = vmatpush.msra.mxu0 0.0
    %9054 = vmatpush.msra.mxu0 0.0
    %9055 = vmatpush.msra.mxu0 0.0
    %9056 = vmatpush.msra.mxu0 0.0
    %9057 = vmatpush.msra.mxu0 0.0
    %9058 = vmatpush.msra.mxu0 0.0
    %9059 = vmatpush.msra.mxu0 0.0
    %9060 = vmatpush.msra.mxu0 0.0
    %9061 = vmatpush.msra.mxu0 0.0
    %9062 = vmatpush.msra.mxu0 0.0
    %9063 = vmatpush.msra.mxu0 0.0
    %9064 = vmatpush.msra.mxu0 %v9031
    %9065 = vmatpush.msra.mxu0 %v9027
    %9066 = vmatpush.msra.mxu0 %v9023
    %9067 = vmatpush.msra.mxu0 %v9019
    %9068 = vmatmul.f32.gmra.mxu0 %v9041
    %v9069 = vpop.f32.mrf.mxu0
    %v9070 = vadd.f32 0.0, %v9069
    %9071 = vmatmul.f32.gmra.mxu0 %v9044
    %v9072 = vpop.f32.mrf.mxu0
    %v9073 = vadd.f32 0.0, %v9072
    %9074 = vmatmul.f32.gmra.mxu0 %v9047
    %v9075 = vpop.f32.mrf.mxu0
    %v9076 = vadd.f32 0.0, %v9075
    %9077 = vmatmul.f32.gmra.mxu0 %v9050
    %v9078 = vpop.f32.mrf.mxu0
    %v9079 = vadd.f32 0.0, %v9078
    %9080 = vdwg.mxu0
    %9081 = vmatpush.msra.mxu0 0.0
    %9082 = vmatpush.msra.mxu0 0.0
    %9083 = vmatpush.msra.mxu0 0.0
    %9084 = vmatpush.msra.mxu0 0.0
    %9085 = vmatpush.msra.mxu0 0.0
    %9086 = vmatpush.msra.mxu0 0.0
    %9087 = vmatpush.msra.mxu0 0.0
    %9088 = vmatpush.msra.mxu0 0.0
    %9089 = vmatpush.msra.mxu0 0.0
    %9090 = vmatpush.msra.mxu0 0.0
    %9091 = vmatpush.msra.mxu0 0.0
    %9092 = vmatpush.msra.mxu0 0.0
    %9093 = vmatpush.msra.mxu0 %v9032
    %9094 = vmatpush.msra.mxu0 %v9028
    %9095 = vmatpush.msra.mxu0 %v9024
    %9096 = vmatpush.msra.mxu0 %v9020
    %9097 = vmatmul.f32.gmra.mxu0 %v9041
    %v9098 = vpop.f32.mrf.mxu0
    %v9099 = vadd.f32 0.0, %v9098
    %9100 = vmatmul.f32.gmra.mxu0 %v9044
    %v9101 = vpop.f32.mrf.mxu0
    %v9102 = vadd.f32 0.0, %v9101
    %9103 = vmatmul.f32.gmra.mxu0 %v9047
    %v9104 = vpop.f32.mrf.mxu0
    %v9105 = vadd.f32 0.0, %v9104
    %9106 = vmatmul.f32.gmra.mxu0 %v9050
    %v9107 = vpop.f32.mrf.mxu0
    %v9108 = vadd.f32 0.0, %v9107
    %9109 = vdwg.mxu0
    %9110 = vmatpush.msra.mxu0 0.0
    %9111 = vmatpush.msra.mxu0 0.0
    %9112 = vmatpush.msra.mxu0 0.0
    %9113 = vmatpush.msra.mxu0 0.0
    %9114 = vmatpush.msra.mxu0 0.0
    %9115 = vmatpush.msra.mxu0 0.0
    %9116 = vmatpush.msra.mxu0 0.0
    %9117 = vmatpush.msra.mxu0 0.0
    %9118 = vmatpush.msra.mxu0 0.0
    %9119 = vmatpush.msra.mxu0 0.0
    %9120 = vmatpush.msra.mxu0 0.0
    %9121 = vmatpush.msra.mxu0 0.0
    %9122 = vmatpush.msra.mxu0 %v9033
    %9123 = vmatpush.msra.mxu0 %v9029
    %9124 = vmatpush.msra.mxu0 %v9025
    %9125 = vmatpush.msra.mxu0 %v9021
    %9126 = vmatmul.f32.gmra.mxu0 %v9041
    %v9127 = vpop.f32.mrf.mxu0
    %v9128 = vadd.f32 0.0, %v9127
    %9129 = vmatmul.f32.gmra.mxu0 %v9044
    %v9130 = vpop.f32.mrf.mxu0
    %v9131 = vadd.f32 0.0, %v9130
    %9132 = vmatmul.f32.gmra.mxu0 %v9047
    %v9133 = vpop.f32.mrf.mxu0
    %v9134 = vadd.f32 0.0, %v9133
    %9135 = vmatmul.f32.gmra.mxu0 %v9050
    %v9136 = vpop.f32.mrf.mxu0
    %v9137 = vadd.f32 0.0, %v9136
    %9138 = vdwg.mxu0
    %9139 = vmatpush.msra.mxu0 0.0
    %9140 = vmatpush.msra.mxu0 0.0
    %9141 = vmatpush.msra.mxu0 0.0
    %9142 = vmatpush.msra.mxu0 0.0
    %9143 = vmatpush.msra.mxu0 0.0
    %9144 = vmatpush.msra.mxu0 0.0
    %9145 = vmatpush.msra.mxu0 0.0
    %9146 = vmatpush.msra.mxu0 0.0
    %9147 = vmatpush.msra.mxu0 0.0
    %9148 = vmatpush.msra.mxu0 0.0
    %9149 = vmatpush.msra.mxu0 0.0
    %9150 = vmatpush.msra.mxu0 0.0
    %9151 = vmatpush.msra.mxu0 %v9034
    %9152 = vmatpush.msra.mxu0 %v9030
    %9153 = vmatpush.msra.mxu0 %v9026
    %9154 = vmatpush.msra.mxu0 %v9022
    %9155 = vmatmul.f32.gmra.mxu0 %v9041
    %v9156 = vpop.f32.mrf.mxu0
    %v9157 = vadd.f32 0.0, %v9156
    %9158 = vmatmul.f32.gmra.mxu0 %v9044
    %v9159 = vpop.f32.mrf.mxu0
    %v9160 = vadd.f32 0.0, %v9159
    %9161 = vmatmul.f32.gmra.mxu0 %v9047
    %v9162 = vpop.f32.mrf.mxu0
    %v9163 = vadd.f32 0.0, %v9162
    %9164 = vmatmul.f32.gmra.mxu0 %v9050
    %v9165 = vpop.f32.mrf.mxu0
    %v9166 = vadd.f32 0.0, %v9165
    %9167 = vdwg.mxu0
    %v9168 = vadd.f32 %v8939, %v9070
    %v9169 = vadd.f32 %v8940, %v9099
    %v9170 = vadd.f32 %v8941, %v9128
    %v9171 = vadd.f32 %v8942, %v9157
    %v9172 = vadd.f32 %v8943, %v9073
    %v9173 = vadd.f32 %v8944, %v9102
    %v9174 = vadd.f32 %v8945, %v9131
    %v9175 = vadd.f32 %v8946, %v9160
    %v9176 = vadd.f32 %v8947, %v9076
    %v9177 = vadd.f32 %v8948, %v9105
    %v9178 = vadd.f32 %v8949, %v9134
    %v9179 = vadd.f32 %v8950, %v9163
    %v9180 = vadd.f32 %v8951, %v9079
    %v9181 = vadd.f32 %v8952, %v9108
    %v9182 = vadd.f32 %v8953, %v9137
    %v9183 = vadd.f32 %v8954, %v9166
    %s9184 = scalar_lea.vmem %s53, 128
    %v9185 = vld [vmem:[%s9184] sm:$0xff]
    %v9186 = vld [vmem:[%s9184 + $0x8] sm:$0xff]
    %v9187 = vld [vmem:[%s9184 + $0x10] sm:$0xff]
    %v9188 = vld [vmem:[%s9184 + $0x18] sm:$0xff]
    %v9190 = vsel %vm7896, %v9185, 0
    %v9193 = vsel %vm7896, %v9186, 0
    %v9196 = vsel %vm7896, %v9187, 0
    %v9199 = vsel %vm7896, %v9188, 0
    %9201 = vmatpush.msra.mxu0 0.0
    %9202 = vmatpush.msra.mxu0 0.0
    %9203 = vmatpush.msra.mxu0 0.0
    %9204 = vmatpush.msra.mxu0 0.0
    %9205 = vmatpush.msra.mxu0 0.0
    %9206 = vmatpush.msra.mxu0 0.0
    %9207 = vmatpush.msra.mxu0 0.0
    %9208 = vmatpush.msra.mxu0 0.0
    %9209 = vmatpush.msra.mxu0 0.0
    %9210 = vmatpush.msra.mxu0 0.0
    %9211 = vmatpush.msra.mxu0 0.0
    %9212 = vmatpush.msra.mxu0 0.0
    %9213 = vmatpush.msra.mxu0 %v8281
    %9214 = vmatpush.msra.mxu0 %v8277
    %9215 = vmatpush.msra.mxu0 %v8273
    %9216 = vmatpush.msra.mxu0 %v8269
    %9217 = vmatmul.f32.gmra.mxu0 %v9190
    %v9218 = vpop.f32.mrf.mxu0
    %v9219 = vadd.f32 0.0, %v9218
    %9220 = vmatmul.f32.gmra.mxu0 %v9193
    %v9221 = vpop.f32.mrf.mxu0
    %v9222 = vadd.f32 0.0, %v9221
    %9223 = vmatmul.f32.gmra.mxu0 %v9196
    %v9224 = vpop.f32.mrf.mxu0
    %v9225 = vadd.f32 0.0, %v9224
    %9226 = vmatmul.f32.gmra.mxu0 %v9199
    %v9227 = vpop.f32.mrf.mxu0
    %v9228 = vadd.f32 0.0, %v9227
    %9229 = vdwg.mxu0
    %9230 = vmatpush.msra.mxu0 0.0
    %9231 = vmatpush.msra.mxu0 0.0
    %9232 = vmatpush.msra.mxu0 0.0
    %9233 = vmatpush.msra.mxu0 0.0
    %9234 = vmatpush.msra.mxu0 0.0
    %9235 = vmatpush.msra.mxu0 0.0
    %9236 = vmatpush.msra.mxu0 0.0
    %9237 = vmatpush.msra.mxu0 0.0
    %9238 = vmatpush.msra.mxu0 0.0
    %9239 = vmatpush.msra.mxu0 0.0
    %9240 = vmatpush.msra.mxu0 0.0
    %9241 = vmatpush.msra.mxu0 0.0
    %9242 = vmatpush.msra.mxu0 %v8282
    %9243 = vmatpush.msra.mxu0 %v8278
    %9244 = vmatpush.msra.mxu0 %v8274
    %9245 = vmatpush.msra.mxu0 %v8270
    %9246 = vmatmul.f32.gmra.mxu0 %v9190
    %v9247 = vpop.f32.mrf.mxu0
    %v9248 = vadd.f32 0.0, %v9247
    %9249 = vmatmul.f32.gmra.mxu0 %v9193
    %v9250 = vpop.f32.mrf.mxu0
    %v9251 = vadd.f32 0.0, %v9250
    %9252 = vmatmul.f32.gmra.mxu0 %v9196
    %v9253 = vpop.f32.mrf.mxu0
    %v9254 = vadd.f32 0.0, %v9253
    %9255 = vmatmul.f32.gmra.mxu0 %v9199
    %v9256 = vpop.f32.mrf.mxu0
    %v9257 = vadd.f32 0.0, %v9256
    %9258 = vdwg.mxu0
    %9259 = vmatpush.msra.mxu0 0.0
    %9260 = vmatpush.msra.mxu0 0.0
    %9261 = vmatpush.msra.mxu0 0.0
    %9262 = vmatpush.msra.mxu0 0.0
    %9263 = vmatpush.msra.mxu0 0.0
    %9264 = vmatpush.msra.mxu0 0.0
    %9265 = vmatpush.msra.mxu0 0.0
    %9266 = vmatpush.msra.mxu0 0.0
    %9267 = vmatpush.msra.mxu0 0.0
    %9268 = vmatpush.msra.mxu0 0.0
    %9269 = vmatpush.msra.mxu0 0.0
    %9270 = vmatpush.msra.mxu0 0.0
    %9271 = vmatpush.msra.mxu0 %v8283
    %9272 = vmatpush.msra.mxu0 %v8279
    %9273 = vmatpush.msra.mxu0 %v8275
    %9274 = vmatpush.msra.mxu0 %v8271
    %9275 = vmatmul.f32.gmra.mxu0 %v9190
    %v9276 = vpop.f32.mrf.mxu0
    %v9277 = vadd.f32 0.0, %v9276
    %9278 = vmatmul.f32.gmra.mxu0 %v9193
    %v9279 = vpop.f32.mrf.mxu0
    %v9280 = vadd.f32 0.0, %v9279
    %9281 = vmatmul.f32.gmra.mxu0 %v9196
    %v9282 = vpop.f32.mrf.mxu0
    %v9283 = vadd.f32 0.0, %v9282
    %9284 = vmatmul.f32.gmra.mxu0 %v9199
    %v9285 = vpop.f32.mrf.mxu0
    %v9286 = vadd.f32 0.0, %v9285
    %9287 = vdwg.mxu0
    %9288 = vmatpush.msra.mxu0 0.0
    %9289 = vmatpush.msra.mxu0 0.0
    %9290 = vmatpush.msra.mxu0 0.0
    %9291 = vmatpush.msra.mxu0 0.0
    %9292 = vmatpush.msra.mxu0 0.0
    %9293 = vmatpush.msra.mxu0 0.0
    %9294 = vmatpush.msra.mxu0 0.0
    %9295 = vmatpush.msra.mxu0 0.0
    %9296 = vmatpush.msra.mxu0 0.0
    %9297 = vmatpush.msra.mxu0 0.0
    %9298 = vmatpush.msra.mxu0 0.0
    %9299 = vmatpush.msra.mxu0 0.0
    %9300 = vmatpush.msra.mxu0 %v8284
    %9301 = vmatpush.msra.mxu0 %v8280
    %9302 = vmatpush.msra.mxu0 %v8276
    %9303 = vmatpush.msra.mxu0 %v8272
    %9304 = vmatmul.f32.gmra.mxu0 %v9190
    %v9305 = vpop.f32.mrf.mxu0
    %v9306 = vadd.f32 0.0, %v9305
    %9307 = vmatmul.f32.gmra.mxu0 %v9193
    %v9308 = vpop.f32.mrf.mxu0
    %v9309 = vadd.f32 0.0, %v9308
    %9310 = vmatmul.f32.gmra.mxu0 %v9196
    %v9311 = vpop.f32.mrf.mxu0
    %v9312 = vadd.f32 0.0, %v9311
    %9313 = vmatmul.f32.gmra.mxu0 %v9199
    %v9314 = vpop.f32.mrf.mxu0
    %v9315 = vadd.f32 0.0, %v9314
    %9316 = vdwg.mxu0
    %v9317 = vadd.f32 %v9168, %v9219
    %v9318 = vadd.f32 %v9169, %v9248
    %v9319 = vadd.f32 %v9170, %v9277
    %v9320 = vadd.f32 %v9171, %v9306
    %v9321 = vadd.f32 %v9172, %v9222
    %v9322 = vadd.f32 %v9173, %v9251
    %v9323 = vadd.f32 %v9174, %v9280
    %v9324 = vadd.f32 %v9175, %v9309
    %v9325 = vadd.f32 %v9176, %v9225
    %v9326 = vadd.f32 %v9177, %v9254
    %v9327 = vadd.f32 %v9178, %v9283
    %v9328 = vadd.f32 %v9179, %v9312
    %v9329 = vadd.f32 %v9180, %v9228
    %v9330 = vadd.f32 %v9181, %v9257
    %v9331 = vadd.f32 %v9182, %v9286
    %v9332 = vadd.f32 %v9183, %v9315
    %9333 = vrot.lane.b32.xlu0 %v8269, 127
    %v9334 = vpop.permute.xlu0 %9333
    %9335 = vrot.lane.b32.xlu0 %v8273, 127
    %v9336 = vpop.permute.xlu0 %9335
    %9337 = vrot.lane.b32.xlu0 %v8277, 127
    %v9338 = vpop.permute.xlu0 %9337
    %9339 = vrot.lane.b32.xlu0 %v8281, 127
    %v9340 = vpop.permute.xlu0 %9339
    %9341 = vrot.lane.b32.xlu0 %v8270, 127
    %v9342 = vpop.permute.xlu0 %9341
    %9343 = vrot.lane.b32.xlu0 %v8274, 127
    %v9344 = vpop.permute.xlu0 %9343
    %9345 = vrot.lane.b32.xlu0 %v8278, 127
    %v9346 = vpop.permute.xlu0 %9345
    %9347 = vrot.lane.b32.xlu0 %v8282, 127
    %v9348 = vpop.permute.xlu0 %9347
    %9349 = vrot.lane.b32.xlu0 %v8271, 127
    %v9350 = vpop.permute.xlu0 %9349
    %9351 = vrot.lane.b32.xlu0 %v8275, 127
    %v9352 = vpop.permute.xlu0 %9351
    %9353 = vrot.lane.b32.xlu0 %v8279, 127
    %v9354 = vpop.permute.xlu0 %9353
    %9355 = vrot.lane.b32.xlu0 %v8283, 127
    %v9356 = vpop.permute.xlu0 %9355
    %9357 = vrot.lane.b32.xlu0 %v8272, 127
    %v9358 = vpop.permute.xlu0 %9357
    %9359 = vrot.lane.b32.xlu0 %v8276, 127
    %v9360 = vpop.permute.xlu0 %9359
    %9361 = vrot.lane.b32.xlu0 %v8280, 127
    %v9362 = vpop.permute.xlu0 %9361
    %9363 = vrot.lane.b32.xlu0 %v8284, 127
    %v9364 = vpop.permute.xlu0 %9363
    %v9365 = vsel %vm775, %v9350, %v9358
    %v9366 = vsel %vm775, %v9352, %v9360
    %v9367 = vsel %vm775, %v9354, %v9362
    %v9368 = vsel %vm775, %v9356, %v9364
    %v9369 = vsel %vm775, %v9342, %v9350
    %v9370 = vsel %vm775, %v9344, %v9352
    %v9371 = vsel %vm775, %v9346, %v9354
    %v9372 = vsel %vm775, %v9348, %v9356
    %v9373 = vsel %vm775, %v9334, %v9342
    %v9374 = vsel %vm775, %v9336, %v9344
    %v9375 = vsel %vm775, %v9338, %v9346
    %v9376 = vsel %vm775, %v9340, %v9348
    %v9377 = vsel %vm775, %v9358, %v9334
    %v9378 = vsel %vm775, %v9360, %v9336
    %v9379 = vsel %vm775, %v9362, %v9338
    %v9380 = vsel %vm775, %v9364, %v9340
    %v9381 = vld [vmem:[%s780] sm:$0xff]
    %v9382 = vld [vmem:[%s780 + $0x8] sm:$0xff]
    %v9383 = vld [vmem:[%s780 + $0x10] sm:$0xff]
    %v9384 = vld [vmem:[%s780 + $0x18] sm:$0xff]
    %v9385 = vld [vmem:[%s780 + $0x20] sm:$0xff]
    %v9386 = vld [vmem:[%s780 + $0x28] sm:$0xff]
    %v9387 = vld [vmem:[%s780 + $0x30] sm:$0xff]
    %v9388 = vld [vmem:[%s780 + $0x38] sm:$0xff]
    %v9389 = vld [vmem:[%s780 + $0x40] sm:$0xff]
    %v9390 = vld [vmem:[%s780 + $0x48] sm:$0xff]
    %v9391 = vld [vmem:[%s780 + $0x50] sm:$0xff]
    %v9392 = vld [vmem:[%s780 + $0x58] sm:$0xff]
    %v9393 = vld [vmem:[%s780 + $0x60] sm:$0xff]
    %v9394 = vld [vmem:[%s780 + $0x68] sm:$0xff]
    %v9395 = vld [vmem:[%s780 + $0x70] sm:$0xff]
    %v9396 = vld [vmem:[%s780 + $0x78] sm:$0xff]
    %v9397 = vmul.f32 %v9373, %v9381
    %v9398 = vmul.f32 %v9369, %v9382
    %v9399 = vmul.f32 %v9365, %v9383
    %v9400 = vmul.f32 %v9377, %v9384
    %v9401 = vmul.f32 %v9374, %v9385
    %v9402 = vmul.f32 %v9370, %v9386
    %v9403 = vmul.f32 %v9366, %v9387
    %v9404 = vmul.f32 %v9378, %v9388
    %v9405 = vmul.f32 %v9375, %v9389
    %v9406 = vmul.f32 %v9371, %v9390
    %v9407 = vmul.f32 %v9367, %v9391
    %v9408 = vmul.f32 %v9379, %v9392
    %v9409 = vmul.f32 %v9376, %v9393
    %v9410 = vmul.f32 %v9372, %v9394
    %v9411 = vmul.f32 %v9368, %v9395
    %v9412 = vmul.f32 %v9380, %v9396
    %s9413 = scalar_lea.vmem %s53, 160
    %v9414 = vld [vmem:[%s9413] sm:$0xff]
    %v9415 = vld [vmem:[%s9413 + $0x8] sm:$0xff]
    %v9416 = vld [vmem:[%s9413 + $0x10] sm:$0xff]
    %v9417 = vld [vmem:[%s9413 + $0x18] sm:$0xff]
    %v9419 = vsel %vm7896, %v9414, 0
    %v9422 = vsel %vm7896, %v9415, 0
    %v9425 = vsel %vm7896, %v9416, 0
    %v9428 = vsel %vm7896, %v9417, 0
    %9430 = vmatpush.msra.mxu0 0.0
    %9431 = vmatpush.msra.mxu0 0.0
    %9432 = vmatpush.msra.mxu0 0.0
    %9433 = vmatpush.msra.mxu0 0.0
    %9434 = vmatpush.msra.mxu0 0.0
    %9435 = vmatpush.msra.mxu0 0.0
    %9436 = vmatpush.msra.mxu0 0.0
    %9437 = vmatpush.msra.mxu0 0.0
    %9438 = vmatpush.msra.mxu0 0.0
    %9439 = vmatpush.msra.mxu0 0.0
    %9440 = vmatpush.msra.mxu0 0.0
    %9441 = vmatpush.msra.mxu0 0.0
    %9442 = vmatpush.msra.mxu0 %v9409
    %9443 = vmatpush.msra.mxu0 %v9405
    %9444 = vmatpush.msra.mxu0 %v9401
    %9445 = vmatpush.msra.mxu0 %v9397
    %9446 = vmatmul.f32.gmra.mxu0 %v9419
    %v9447 = vpop.f32.mrf.mxu0
    %v9448 = vadd.f32 0.0, %v9447
    %9449 = vmatmul.f32.gmra.mxu0 %v9422
    %v9450 = vpop.f32.mrf.mxu0
    %v9451 = vadd.f32 0.0, %v9450
    %9452 = vmatmul.f32.gmra.mxu0 %v9425
    %v9453 = vpop.f32.mrf.mxu0
    %v9454 = vadd.f32 0.0, %v9453
    %9455 = vmatmul.f32.gmra.mxu0 %v9428
    %v9456 = vpop.f32.mrf.mxu0
    %v9457 = vadd.f32 0.0, %v9456
    %9458 = vdwg.mxu0
    %9459 = vmatpush.msra.mxu0 0.0
    %9460 = vmatpush.msra.mxu0 0.0
    %9461 = vmatpush.msra.mxu0 0.0
    %9462 = vmatpush.msra.mxu0 0.0
    %9463 = vmatpush.msra.mxu0 0.0
    %9464 = vmatpush.msra.mxu0 0.0
    %9465 = vmatpush.msra.mxu0 0.0
    %9466 = vmatpush.msra.mxu0 0.0
    %9467 = vmatpush.msra.mxu0 0.0
    %9468 = vmatpush.msra.mxu0 0.0
    %9469 = vmatpush.msra.mxu0 0.0
    %9470 = vmatpush.msra.mxu0 0.0
    %9471 = vmatpush.msra.mxu0 %v9410
    %9472 = vmatpush.msra.mxu0 %v9406
    %9473 = vmatpush.msra.mxu0 %v9402
    %9474 = vmatpush.msra.mxu0 %v9398
    %9475 = vmatmul.f32.gmra.mxu0 %v9419
    %v9476 = vpop.f32.mrf.mxu0
    %v9477 = vadd.f32 0.0, %v9476
    %9478 = vmatmul.f32.gmra.mxu0 %v9422
    %v9479 = vpop.f32.mrf.mxu0
    %v9480 = vadd.f32 0.0, %v9479
    %9481 = vmatmul.f32.gmra.mxu0 %v9425
    %v9482 = vpop.f32.mrf.mxu0
    %v9483 = vadd.f32 0.0, %v9482
    %9484 = vmatmul.f32.gmra.mxu0 %v9428
    %v9485 = vpop.f32.mrf.mxu0
    %v9486 = vadd.f32 0.0, %v9485
    %9487 = vdwg.mxu0
    %9488 = vmatpush.msra.mxu0 0.0
    %9489 = vmatpush.msra.mxu0 0.0
    %9490 = vmatpush.msra.mxu0 0.0
    %9491 = vmatpush.msra.mxu0 0.0
    %9492 = vmatpush.msra.mxu0 0.0
    %9493 = vmatpush.msra.mxu0 0.0
    %9494 = vmatpush.msra.mxu0 0.0
    %9495 = vmatpush.msra.mxu0 0.0
    %9496 = vmatpush.msra.mxu0 0.0
    %9497 = vmatpush.msra.mxu0 0.0
    %9498 = vmatpush.msra.mxu0 0.0
    %9499 = vmatpush.msra.mxu0 0.0
    %9500 = vmatpush.msra.mxu0 %v9411
    %9501 = vmatpush.msra.mxu0 %v9407
    %9502 = vmatpush.msra.mxu0 %v9403
    %9503 = vmatpush.msra.mxu0 %v9399
    %9504 = vmatmul.f32.gmra.mxu0 %v9419
    %v9505 = vpop.f32.mrf.mxu0
    %v9506 = vadd.f32 0.0, %v9505
    %9507 = vmatmul.f32.gmra.mxu0 %v9422
    %v9508 = vpop.f32.mrf.mxu0
    %v9509 = vadd.f32 0.0, %v9508
    %9510 = vmatmul.f32.gmra.mxu0 %v9425
    %v9511 = vpop.f32.mrf.mxu0
    %v9512 = vadd.f32 0.0, %v9511
    %9513 = vmatmul.f32.gmra.mxu0 %v9428
    %v9514 = vpop.f32.mrf.mxu0
    %v9515 = vadd.f32 0.0, %v9514
    %9516 = vdwg.mxu0
    %9517 = vmatpush.msra.mxu0 0.0
    %9518 = vmatpush.msra.mxu0 0.0
    %9519 = vmatpush.msra.mxu0 0.0
    %9520 = vmatpush.msra.mxu0 0.0
    %9521 = vmatpush.msra.mxu0 0.0
    %9522 = vmatpush.msra.mxu0 0.0
    %9523 = vmatpush.msra.mxu0 0.0
    %9524 = vmatpush.msra.mxu0 0.0
    %9525 = vmatpush.msra.mxu0 0.0
    %9526 = vmatpush.msra.mxu0 0.0
    %9527 = vmatpush.msra.mxu0 0.0
    %9528 = vmatpush.msra.mxu0 0.0
    %9529 = vmatpush.msra.mxu0 %v9412
    %9530 = vmatpush.msra.mxu0 %v9408
    %9531 = vmatpush.msra.mxu0 %v9404
    %9532 = vmatpush.msra.mxu0 %v9400
    %9533 = vmatmul.f32.gmra.mxu0 %v9419
    %v9534 = vpop.f32.mrf.mxu0
    %v9535 = vadd.f32 0.0, %v9534
    %9536 = vmatmul.f32.gmra.mxu0 %v9422
    %v9537 = vpop.f32.mrf.mxu0
    %v9538 = vadd.f32 0.0, %v9537
    %9539 = vmatmul.f32.gmra.mxu0 %v9425
    %v9540 = vpop.f32.mrf.mxu0
    %v9541 = vadd.f32 0.0, %v9540
    %9542 = vmatmul.f32.gmra.mxu0 %v9428
    %v9543 = vpop.f32.mrf.mxu0
    %v9544 = vadd.f32 0.0, %v9543
    %9545 = vdwg.mxu0
    %v9546 = vadd.f32 %v9317, %v9448
    %v9547 = vadd.f32 %v9318, %v9477
    %v9548 = vadd.f32 %v9319, %v9506
    %v9549 = vadd.f32 %v9320, %v9535
    %v9550 = vadd.f32 %v9321, %v9451
    %v9551 = vadd.f32 %v9322, %v9480
    %v9552 = vadd.f32 %v9323, %v9509
    %v9553 = vadd.f32 %v9324, %v9538
    %v9554 = vadd.f32 %v9325, %v9454
    %v9555 = vadd.f32 %v9326, %v9483
    %v9556 = vadd.f32 %v9327, %v9512
    %v9557 = vadd.f32 %v9328, %v9541
    %v9558 = vadd.f32 %v9329, %v9457
    %v9559 = vadd.f32 %v9330, %v9486
    %v9560 = vadd.f32 %v9331, %v9515
    %v9561 = vadd.f32 %v9332, %v9544
    %9562 = vrot.lane.b32.xlu0 %v8269, 113
    %v9563 = vpop.permute.xlu0 %9562
    %9564 = vrot.lane.b32.xlu0 %v8273, 113
    %v9565 = vpop.permute.xlu0 %9564
    %9566 = vrot.lane.b32.xlu0 %v8277, 113
    %v9567 = vpop.permute.xlu0 %9566
    %9568 = vrot.lane.b32.xlu0 %v8281, 113
    %v9569 = vpop.permute.xlu0 %9568
    %9570 = vrot.lane.b32.xlu0 %v8270, 113
    %v9571 = vpop.permute.xlu0 %9570
    %9572 = vrot.lane.b32.xlu0 %v8274, 113
    %v9573 = vpop.permute.xlu0 %9572
    %9574 = vrot.lane.b32.xlu0 %v8278, 113
    %v9575 = vpop.permute.xlu0 %9574
    %9576 = vrot.lane.b32.xlu0 %v8282, 113
    %v9577 = vpop.permute.xlu0 %9576
    %9578 = vrot.lane.b32.xlu0 %v8271, 113
    %v9579 = vpop.permute.xlu0 %9578
    %9580 = vrot.lane.b32.xlu0 %v8275, 113
    %v9581 = vpop.permute.xlu0 %9580
    %9582 = vrot.lane.b32.xlu0 %v8279, 113
    %v9583 = vpop.permute.xlu0 %9582
    %9584 = vrot.lane.b32.xlu0 %v8283, 113
    %v9585 = vpop.permute.xlu0 %9584
    %9586 = vrot.lane.b32.xlu0 %v8272, 113
    %v9587 = vpop.permute.xlu0 %9586
    %9588 = vrot.lane.b32.xlu0 %v8276, 113
    %v9589 = vpop.permute.xlu0 %9588
    %9590 = vrot.lane.b32.xlu0 %v8280, 113
    %v9591 = vpop.permute.xlu0 %9590
    %9592 = vrot.lane.b32.xlu0 %v8284, 113
    %v9593 = vpop.permute.xlu0 %9592
    %v9594 = vsel %vm906, %v9579, %v9587
    %v9595 = vsel %vm906, %v9581, %v9589
    %v9596 = vsel %vm906, %v9583, %v9591
    %v9597 = vsel %vm906, %v9585, %v9593
    %v9598 = vsel %vm906, %v9571, %v9579
    %v9599 = vsel %vm906, %v9573, %v9581
    %v9600 = vsel %vm906, %v9575, %v9583
    %v9601 = vsel %vm906, %v9577, %v9585
    %v9602 = vsel %vm906, %v9563, %v9571
    %v9603 = vsel %vm906, %v9565, %v9573
    %v9604 = vsel %vm906, %v9567, %v9575
    %v9605 = vsel %vm906, %v9569, %v9577
    %v9606 = vsel %vm906, %v9587, %v9563
    %v9607 = vsel %vm906, %v9589, %v9565
    %v9608 = vsel %vm906, %v9591, %v9567
    %v9609 = vsel %vm906, %v9593, %v9569
    %v9610 = vld [vmem:[%s911] sm:$0xff]
    %v9611 = vld [vmem:[%s911 + $0x8] sm:$0xff]
    %v9612 = vld [vmem:[%s911 + $0x10] sm:$0xff]
    %v9613 = vld [vmem:[%s911 + $0x18] sm:$0xff]
    %v9614 = vld [vmem:[%s911 + $0x20] sm:$0xff]
    %v9615 = vld [vmem:[%s911 + $0x28] sm:$0xff]
    %v9616 = vld [vmem:[%s911 + $0x30] sm:$0xff]
    %v9617 = vld [vmem:[%s911 + $0x38] sm:$0xff]
    %v9618 = vld [vmem:[%s911 + $0x40] sm:$0xff]
    %v9619 = vld [vmem:[%s911 + $0x48] sm:$0xff]
    %v9620 = vld [vmem:[%s911 + $0x50] sm:$0xff]
    %v9621 = vld [vmem:[%s911 + $0x58] sm:$0xff]
    %v9622 = vld [vmem:[%s911 + $0x60] sm:$0xff]
    %v9623 = vld [vmem:[%s911 + $0x68] sm:$0xff]
    %v9624 = vld [vmem:[%s911 + $0x70] sm:$0xff]
    %v9625 = vld [vmem:[%s911 + $0x78] sm:$0xff]
    %v9626 = vmul.f32 %v9602, %v9610
    %v9627 = vmul.f32 %v9598, %v9611
    %v9628 = vmul.f32 %v9594, %v9612
    %v9629 = vmul.f32 %v9606, %v9613
    %v9630 = vmul.f32 %v9603, %v9614
    %v9631 = vmul.f32 %v9599, %v9615
    %v9632 = vmul.f32 %v9595, %v9616
    %v9633 = vmul.f32 %v9607, %v9617
    %v9634 = vmul.f32 %v9604, %v9618
    %v9635 = vmul.f32 %v9600, %v9619
    %v9636 = vmul.f32 %v9596, %v9620
    %v9637 = vmul.f32 %v9608, %v9621
    %v9638 = vmul.f32 %v9605, %v9622
    %v9639 = vmul.f32 %v9601, %v9623
    %v9640 = vmul.f32 %v9597, %v9624
    %v9641 = vmul.f32 %v9609, %v9625
    %s9642 = scalar_lea.vmem %s53, 192
    %v9643 = vld [vmem:[%s9642] sm:$0xff]
    %v9644 = vld [vmem:[%s9642 + $0x8] sm:$0xff]
    %v9645 = vld [vmem:[%s9642 + $0x10] sm:$0xff]
    %v9646 = vld [vmem:[%s9642 + $0x18] sm:$0xff]
    %v9648 = vsel %vm7896, %v9643, 0
    %v9651 = vsel %vm7896, %v9644, 0
    %v9654 = vsel %vm7896, %v9645, 0
    %v9657 = vsel %vm7896, %v9646, 0
    %9659 = vmatpush.msra.mxu0 0.0
    %9660 = vmatpush.msra.mxu0 0.0
    %9661 = vmatpush.msra.mxu0 0.0
    %9662 = vmatpush.msra.mxu0 0.0
    %9663 = vmatpush.msra.mxu0 0.0
    %9664 = vmatpush.msra.mxu0 0.0
    %9665 = vmatpush.msra.mxu0 0.0
    %9666 = vmatpush.msra.mxu0 0.0
    %9667 = vmatpush.msra.mxu0 0.0
    %9668 = vmatpush.msra.mxu0 0.0
    %9669 = vmatpush.msra.mxu0 0.0
    %9670 = vmatpush.msra.mxu0 0.0
    %9671 = vmatpush.msra.mxu0 %v9638
    %9672 = vmatpush.msra.mxu0 %v9634
    %9673 = vmatpush.msra.mxu0 %v9630
    %9674 = vmatpush.msra.mxu0 %v9626
    %9675 = vmatmul.f32.gmra.mxu0 %v9648
    %v9676 = vpop.f32.mrf.mxu0
    %v9677 = vadd.f32 0.0, %v9676
    %9678 = vmatmul.f32.gmra.mxu0 %v9651
    %v9679 = vpop.f32.mrf.mxu0
    %v9680 = vadd.f32 0.0, %v9679
    %9681 = vmatmul.f32.gmra.mxu0 %v9654
    %v9682 = vpop.f32.mrf.mxu0
    %v9683 = vadd.f32 0.0, %v9682
    %9684 = vmatmul.f32.gmra.mxu0 %v9657
    %v9685 = vpop.f32.mrf.mxu0
    %v9686 = vadd.f32 0.0, %v9685
    %9687 = vdwg.mxu0
    %9688 = vmatpush.msra.mxu0 0.0
    %9689 = vmatpush.msra.mxu0 0.0
    %9690 = vmatpush.msra.mxu0 0.0
    %9691 = vmatpush.msra.mxu0 0.0
    %9692 = vmatpush.msra.mxu0 0.0
    %9693 = vmatpush.msra.mxu0 0.0
    %9694 = vmatpush.msra.mxu0 0.0
    %9695 = vmatpush.msra.mxu0 0.0
    %9696 = vmatpush.msra.mxu0 0.0
    %9697 = vmatpush.msra.mxu0 0.0
    %9698 = vmatpush.msra.mxu0 0.0
    %9699 = vmatpush.msra.mxu0 0.0
    %9700 = vmatpush.msra.mxu0 %v9639
    %9701 = vmatpush.msra.mxu0 %v9635
    %9702 = vmatpush.msra.mxu0 %v9631
    %9703 = vmatpush.msra.mxu0 %v9627
    %9704 = vmatmul.f32.gmra.mxu0 %v9648
    %v9705 = vpop.f32.mrf.mxu0
    %v9706 = vadd.f32 0.0, %v9705
    %9707 = vmatmul.f32.gmra.mxu0 %v9651
    %v9708 = vpop.f32.mrf.mxu0
    %v9709 = vadd.f32 0.0, %v9708
    %9710 = vmatmul.f32.gmra.mxu0 %v9654
    %v9711 = vpop.f32.mrf.mxu0
    %v9712 = vadd.f32 0.0, %v9711
    %9713 = vmatmul.f32.gmra.mxu0 %v9657
    %v9714 = vpop.f32.mrf.mxu0
    %v9715 = vadd.f32 0.0, %v9714
    %9716 = vdwg.mxu0
    %9717 = vmatpush.msra.mxu0 0.0
    %9718 = vmatpush.msra.mxu0 0.0
    %9719 = vmatpush.msra.mxu0 0.0
    %9720 = vmatpush.msra.mxu0 0.0
    %9721 = vmatpush.msra.mxu0 0.0
    %9722 = vmatpush.msra.mxu0 0.0
    %9723 = vmatpush.msra.mxu0 0.0
    %9724 = vmatpush.msra.mxu0 0.0
    %9725 = vmatpush.msra.mxu0 0.0
    %9726 = vmatpush.msra.mxu0 0.0
    %9727 = vmatpush.msra.mxu0 0.0
    %9728 = vmatpush.msra.mxu0 0.0
    %9729 = vmatpush.msra.mxu0 %v9640
    %9730 = vmatpush.msra.mxu0 %v9636
    %9731 = vmatpush.msra.mxu0 %v9632
    %9732 = vmatpush.msra.mxu0 %v9628
    %9733 = vmatmul.f32.gmra.mxu0 %v9648
    %v9734 = vpop.f32.mrf.mxu0
    %v9735 = vadd.f32 0.0, %v9734
    %9736 = vmatmul.f32.gmra.mxu0 %v9651
    %v9737 = vpop.f32.mrf.mxu0
    %v9738 = vadd.f32 0.0, %v9737
    %9739 = vmatmul.f32.gmra.mxu0 %v9654
    %v9740 = vpop.f32.mrf.mxu0
    %v9741 = vadd.f32 0.0, %v9740
    %9742 = vmatmul.f32.gmra.mxu0 %v9657
    %v9743 = vpop.f32.mrf.mxu0
    %v9744 = vadd.f32 0.0, %v9743
    %9745 = vdwg.mxu0
    %9746 = vmatpush.msra.mxu0 0.0
    %9747 = vmatpush.msra.mxu0 0.0
    %9748 = vmatpush.msra.mxu0 0.0
    %9749 = vmatpush.msra.mxu0 0.0
    %9750 = vmatpush.msra.mxu0 0.0
    %9751 = vmatpush.msra.mxu0 0.0
    %9752 = vmatpush.msra.mxu0 0.0
    %9753 = vmatpush.msra.mxu0 0.0
    %9754 = vmatpush.msra.mxu0 0.0
    %9755 = vmatpush.msra.mxu0 0.0
    %9756 = vmatpush.msra.mxu0 0.0
    %9757 = vmatpush.msra.mxu0 0.0
    %9758 = vmatpush.msra.mxu0 %v9641
    %9759 = vmatpush.msra.mxu0 %v9637
    %9760 = vmatpush.msra.mxu0 %v9633
    %9761 = vmatpush.msra.mxu0 %v9629
    %9762 = vmatmul.f32.gmra.mxu0 %v9648
    %v9763 = vpop.f32.mrf.mxu0
    %v9764 = vadd.f32 0.0, %v9763
    %9765 = vmatmul.f32.gmra.mxu0 %v9651
    %v9766 = vpop.f32.mrf.mxu0
    %v9767 = vadd.f32 0.0, %v9766
    %9768 = vmatmul.f32.gmra.mxu0 %v9654
    %v9769 = vpop.f32.mrf.mxu0
    %v9770 = vadd.f32 0.0, %v9769
    %9771 = vmatmul.f32.gmra.mxu0 %v9657
    %v9772 = vpop.f32.mrf.mxu0
    %v9773 = vadd.f32 0.0, %v9772
    %9774 = vdwg.mxu0
    %v9775 = vadd.f32 %v9546, %v9677
    %v9776 = vadd.f32 %v9547, %v9706
    %v9777 = vadd.f32 %v9548, %v9735
    %v9778 = vadd.f32 %v9549, %v9764
    %v9779 = vadd.f32 %v9550, %v9680
    %v9780 = vadd.f32 %v9551, %v9709
    %v9781 = vadd.f32 %v9552, %v9738
    %v9782 = vadd.f32 %v9553, %v9767
    %v9783 = vadd.f32 %v9554, %v9683
    %v9784 = vadd.f32 %v9555, %v9712
    %v9785 = vadd.f32 %v9556, %v9741
    %v9786 = vadd.f32 %v9557, %v9770
    %v9787 = vadd.f32 %v9558, %v9686
    %v9788 = vadd.f32 %v9559, %v9715
    %v9789 = vadd.f32 %v9560, %v9744
    %v9790 = vadd.f32 %v9561, %v9773
    %9791 = vrot.lane.b32.xlu0 %v8269, 112
    %v9792 = vpop.permute.xlu0 %9791
    %9793 = vrot.lane.b32.xlu0 %v8273, 112
    %v9794 = vpop.permute.xlu0 %9793
    %9795 = vrot.lane.b32.xlu0 %v8277, 112
    %v9796 = vpop.permute.xlu0 %9795
    %9797 = vrot.lane.b32.xlu0 %v8281, 112
    %v9798 = vpop.permute.xlu0 %9797
    %9799 = vrot.lane.b32.xlu0 %v8270, 112
    %v9800 = vpop.permute.xlu0 %9799
    %9801 = vrot.lane.b32.xlu0 %v8274, 112
    %v9802 = vpop.permute.xlu0 %9801
    %9803 = vrot.lane.b32.xlu0 %v8278, 112
    %v9804 = vpop.permute.xlu0 %9803
    %9805 = vrot.lane.b32.xlu0 %v8282, 112
    %v9806 = vpop.permute.xlu0 %9805
    %9807 = vrot.lane.b32.xlu0 %v8271, 112
    %v9808 = vpop.permute.xlu0 %9807
    %9809 = vrot.lane.b32.xlu0 %v8275, 112
    %v9810 = vpop.permute.xlu0 %9809
    %9811 = vrot.lane.b32.xlu0 %v8279, 112
    %v9812 = vpop.permute.xlu0 %9811
    %9813 = vrot.lane.b32.xlu0 %v8283, 112
    %v9814 = vpop.permute.xlu0 %9813
    %9815 = vrot.lane.b32.xlu0 %v8272, 112
    %v9816 = vpop.permute.xlu0 %9815
    %9817 = vrot.lane.b32.xlu0 %v8276, 112
    %v9818 = vpop.permute.xlu0 %9817
    %9819 = vrot.lane.b32.xlu0 %v8280, 112
    %v9820 = vpop.permute.xlu0 %9819
    %9821 = vrot.lane.b32.xlu0 %v8284, 112
    %v9822 = vpop.permute.xlu0 %9821
    %v9823 = vsel %vm1037, %v9808, %v9816
    %v9824 = vsel %vm1037, %v9810, %v9818
    %v9825 = vsel %vm1037, %v9812, %v9820
    %v9826 = vsel %vm1037, %v9814, %v9822
    %v9827 = vsel %vm1037, %v9800, %v9808
    %v9828 = vsel %vm1037, %v9802, %v9810
    %v9829 = vsel %vm1037, %v9804, %v9812
    %v9830 = vsel %vm1037, %v9806, %v9814
    %v9831 = vsel %vm1037, %v9792, %v9800
    %v9832 = vsel %vm1037, %v9794, %v9802
    %v9833 = vsel %vm1037, %v9796, %v9804
    %v9834 = vsel %vm1037, %v9798, %v9806
    %v9835 = vsel %vm1037, %v9816, %v9792
    %v9836 = vsel %vm1037, %v9818, %v9794
    %v9837 = vsel %vm1037, %v9820, %v9796
    %v9838 = vsel %vm1037, %v9822, %v9798
    %v9839 = vld [vmem:[%s1042] sm:$0xff]
    %v9840 = vld [vmem:[%s1042 + $0x8] sm:$0xff]
    %v9841 = vld [vmem:[%s1042 + $0x10] sm:$0xff]
    %v9842 = vld [vmem:[%s1042 + $0x18] sm:$0xff]
    %v9843 = vld [vmem:[%s1042 + $0x20] sm:$0xff]
    %v9844 = vld [vmem:[%s1042 + $0x28] sm:$0xff]
    %v9845 = vld [vmem:[%s1042 + $0x30] sm:$0xff]
    %v9846 = vld [vmem:[%s1042 + $0x38] sm:$0xff]
    %v9847 = vld [vmem:[%s1042 + $0x40] sm:$0xff]
    %v9848 = vld [vmem:[%s1042 + $0x48] sm:$0xff]
    %v9849 = vld [vmem:[%s1042 + $0x50] sm:$0xff]
    %v9850 = vld [vmem:[%s1042 + $0x58] sm:$0xff]
    %v9851 = vld [vmem:[%s1042 + $0x60] sm:$0xff]
    %v9852 = vld [vmem:[%s1042 + $0x68] sm:$0xff]
    %v9853 = vld [vmem:[%s1042 + $0x70] sm:$0xff]
    %v9854 = vld [vmem:[%s1042 + $0x78] sm:$0xff]
    %v9855 = vmul.f32 %v9831, %v9839
    %v9856 = vmul.f32 %v9827, %v9840
    %v9857 = vmul.f32 %v9823, %v9841
    %v9858 = vmul.f32 %v9835, %v9842
    %v9859 = vmul.f32 %v9832, %v9843
    %v9860 = vmul.f32 %v9828, %v9844
    %v9861 = vmul.f32 %v9824, %v9845
    %v9862 = vmul.f32 %v9836, %v9846
    %v9863 = vmul.f32 %v9833, %v9847
    %v9864 = vmul.f32 %v9829, %v9848
    %v9865 = vmul.f32 %v9825, %v9849
    %v9866 = vmul.f32 %v9837, %v9850
    %v9867 = vmul.f32 %v9834, %v9851
    %v9868 = vmul.f32 %v9830, %v9852
    %v9869 = vmul.f32 %v9826, %v9853
    %v9870 = vmul.f32 %v9838, %v9854
    %s9871 = scalar_lea.vmem %s53, 224
    %v9872 = vld [vmem:[%s9871] sm:$0xff]
    %v9873 = vld [vmem:[%s9871 + $0x8] sm:$0xff]
    %v9874 = vld [vmem:[%s9871 + $0x10] sm:$0xff]
    %v9875 = vld [vmem:[%s9871 + $0x18] sm:$0xff]
    %v9877 = vsel %vm7896, %v9872, 0
    %v9880 = vsel %vm7896, %v9873, 0
    %v9883 = vsel %vm7896, %v9874, 0
    %v9886 = vsel %vm7896, %v9875, 0
    %9888 = vmatpush.msra.mxu0 0.0
    %9889 = vmatpush.msra.mxu0 0.0
    %9890 = vmatpush.msra.mxu0 0.0
    %9891 = vmatpush.msra.mxu0 0.0
    %9892 = vmatpush.msra.mxu0 0.0
    %9893 = vmatpush.msra.mxu0 0.0
    %9894 = vmatpush.msra.mxu0 0.0
    %9895 = vmatpush.msra.mxu0 0.0
    %9896 = vmatpush.msra.mxu0 0.0
    %9897 = vmatpush.msra.mxu0 0.0
    %9898 = vmatpush.msra.mxu0 0.0
    %9899 = vmatpush.msra.mxu0 0.0
    %9900 = vmatpush.msra.mxu0 %v9867
    %9901 = vmatpush.msra.mxu0 %v9863
    %9902 = vmatpush.msra.mxu0 %v9859
    %9903 = vmatpush.msra.mxu0 %v9855
    %9904 = vmatmul.f32.gmra.mxu0 %v9877
    %v9905 = vpop.f32.mrf.mxu0
    %v9906 = vadd.f32 0.0, %v9905
    %9907 = vmatmul.f32.gmra.mxu0 %v9880
    %v9908 = vpop.f32.mrf.mxu0
    %v9909 = vadd.f32 0.0, %v9908
    %9910 = vmatmul.f32.gmra.mxu0 %v9883
    %v9911 = vpop.f32.mrf.mxu0
    %v9912 = vadd.f32 0.0, %v9911
    %9913 = vmatmul.f32.gmra.mxu0 %v9886
    %v9914 = vpop.f32.mrf.mxu0
    %v9915 = vadd.f32 0.0, %v9914
    %9916 = vdwg.mxu0
    %9917 = vmatpush.msra.mxu0 0.0
    %9918 = vmatpush.msra.mxu0 0.0
    %9919 = vmatpush.msra.mxu0 0.0
    %9920 = vmatpush.msra.mxu0 0.0
    %9921 = vmatpush.msra.mxu0 0.0
    %9922 = vmatpush.msra.mxu0 0.0
    %9923 = vmatpush.msra.mxu0 0.0
    %9924 = vmatpush.msra.mxu0 0.0
    %9925 = vmatpush.msra.mxu0 0.0
    %9926 = vmatpush.msra.mxu0 0.0
    %9927 = vmatpush.msra.mxu0 0.0
    %9928 = vmatpush.msra.mxu0 0.0
    %9929 = vmatpush.msra.mxu0 %v9868
    %9930 = vmatpush.msra.mxu0 %v9864
    %9931 = vmatpush.msra.mxu0 %v9860
    %9932 = vmatpush.msra.mxu0 %v9856
    %9933 = vmatmul.f32.gmra.mxu0 %v9877
    %v9934 = vpop.f32.mrf.mxu0
    %v9935 = vadd.f32 0.0, %v9934
    %9936 = vmatmul.f32.gmra.mxu0 %v9880
    %v9937 = vpop.f32.mrf.mxu0
    %v9938 = vadd.f32 0.0, %v9937
    %9939 = vmatmul.f32.gmra.mxu0 %v9883
    %v9940 = vpop.f32.mrf.mxu0
    %v9941 = vadd.f32 0.0, %v9940
    %9942 = vmatmul.f32.gmra.mxu0 %v9886
    %v9943 = vpop.f32.mrf.mxu0
    %v9944 = vadd.f32 0.0, %v9943
    %9945 = vdwg.mxu0
    %9946 = vmatpush.msra.mxu0 0.0
    %9947 = vmatpush.msra.mxu0 0.0
    %9948 = vmatpush.msra.mxu0 0.0
    %9949 = vmatpush.msra.mxu0 0.0
    %9950 = vmatpush.msra.mxu0 0.0
    %9951 = vmatpush.msra.mxu0 0.0
    %9952 = vmatpush.msra.mxu0 0.0
    %9953 = vmatpush.msra.mxu0 0.0
    %9954 = vmatpush.msra.mxu0 0.0
    %9955 = vmatpush.msra.mxu0 0.0
    %9956 = vmatpush.msra.mxu0 0.0
    %9957 = vmatpush.msra.mxu0 0.0
    %9958 = vmatpush.msra.mxu0 %v9869
    %9959 = vmatpush.msra.mxu0 %v9865
    %9960 = vmatpush.msra.mxu0 %v9861
    %9961 = vmatpush.msra.mxu0 %v9857
    %9962 = vmatmul.f32.gmra.mxu0 %v9877
    %v9963 = vpop.f32.mrf.mxu0
    %v9964 = vadd.f32 0.0, %v9963
    %9965 = vmatmul.f32.gmra.mxu0 %v9880
    %v9966 = vpop.f32.mrf.mxu0
    %v9967 = vadd.f32 0.0, %v9966
    %9968 = vmatmul.f32.gmra.mxu0 %v9883
    %v9969 = vpop.f32.mrf.mxu0
    %v9970 = vadd.f32 0.0, %v9969
    %9971 = vmatmul.f32.gmra.mxu0 %v9886
    %v9972 = vpop.f32.mrf.mxu0
    %v9973 = vadd.f32 0.0, %v9972
    %9974 = vdwg.mxu0
    %9975 = vmatpush.msra.mxu0 0.0
    %9976 = vmatpush.msra.mxu0 0.0
    %9977 = vmatpush.msra.mxu0 0.0
    %9978 = vmatpush.msra.mxu0 0.0
    %9979 = vmatpush.msra.mxu0 0.0
    %9980 = vmatpush.msra.mxu0 0.0
    %9981 = vmatpush.msra.mxu0 0.0
    %9982 = vmatpush.msra.mxu0 0.0
    %9983 = vmatpush.msra.mxu0 0.0
    %9984 = vmatpush.msra.mxu0 0.0
    %9985 = vmatpush.msra.mxu0 0.0
    %9986 = vmatpush.msra.mxu0 0.0
    %9987 = vmatpush.msra.mxu0 %v9870
    %9988 = vmatpush.msra.mxu0 %v9866
    %9989 = vmatpush.msra.mxu0 %v9862
    %9990 = vmatpush.msra.mxu0 %v9858
    %9991 = vmatmul.f32.gmra.mxu0 %v9877
    %v9992 = vpop.f32.mrf.mxu0
    %v9993 = vadd.f32 0.0, %v9992
    %9994 = vmatmul.f32.gmra.mxu0 %v9880
    %v9995 = vpop.f32.mrf.mxu0
    %v9996 = vadd.f32 0.0, %v9995
    %9997 = vmatmul.f32.gmra.mxu0 %v9883
    %v9998 = vpop.f32.mrf.mxu0
    %v9999 = vadd.f32 0.0, %v9998
    %10000 = vmatmul.f32.gmra.mxu0 %v9886
    %v10001 = vpop.f32.mrf.mxu0
    %v10002 = vadd.f32 0.0, %v10001
    %10003 = vdwg.mxu0
    %v10004 = vadd.f32 %v9775, %v9906
    %v10005 = vadd.f32 %v9776, %v9935
    %v10006 = vadd.f32 %v9777, %v9964
    %v10007 = vadd.f32 %v9778, %v9993
    %v10008 = vadd.f32 %v9779, %v9909
    %v10009 = vadd.f32 %v9780, %v9938
    %v10010 = vadd.f32 %v9781, %v9967
    %v10011 = vadd.f32 %v9782, %v9996
    %v10012 = vadd.f32 %v9783, %v9912
    %v10013 = vadd.f32 %v9784, %v9941
    %v10014 = vadd.f32 %v9785, %v9970
    %v10015 = vadd.f32 %v9786, %v9999
    %v10016 = vadd.f32 %v9787, %v9915
    %v10017 = vadd.f32 %v9788, %v9944
    %v10018 = vadd.f32 %v9789, %v9973
    %v10019 = vadd.f32 %v9790, %v10002
    %10020 = vrot.lane.b32.xlu0 %v8269, 111
    %v10021 = vpop.permute.xlu0 %10020
    %10022 = vrot.lane.b32.xlu0 %v8273, 111
    %v10023 = vpop.permute.xlu0 %10022
    %10024 = vrot.lane.b32.xlu0 %v8277, 111
    %v10025 = vpop.permute.xlu0 %10024
    %10026 = vrot.lane.b32.xlu0 %v8281, 111
    %v10027 = vpop.permute.xlu0 %10026
    %10028 = vrot.lane.b32.xlu0 %v8270, 111
    %v10029 = vpop.permute.xlu0 %10028
    %10030 = vrot.lane.b32.xlu0 %v8274, 111
    %v10031 = vpop.permute.xlu0 %10030
    %10032 = vrot.lane.b32.xlu0 %v8278, 111
    %v10033 = vpop.permute.xlu0 %10032
    %10034 = vrot.lane.b32.xlu0 %v8282, 111
    %v10035 = vpop.permute.xlu0 %10034
    %10036 = vrot.lane.b32.xlu0 %v8271, 111
    %v10037 = vpop.permute.xlu0 %10036
    %10038 = vrot.lane.b32.xlu0 %v8275, 111
    %v10039 = vpop.permute.xlu0 %10038
    %10040 = vrot.lane.b32.xlu0 %v8279, 111
    %v10041 = vpop.permute.xlu0 %10040
    %10042 = vrot.lane.b32.xlu0 %v8283, 111
    %v10043 = vpop.permute.xlu0 %10042
    %10044 = vrot.lane.b32.xlu0 %v8272, 111
    %v10045 = vpop.permute.xlu0 %10044
    %10046 = vrot.lane.b32.xlu0 %v8276, 111
    %v10047 = vpop.permute.xlu0 %10046
    %10048 = vrot.lane.b32.xlu0 %v8280, 111
    %v10049 = vpop.permute.xlu0 %10048
    %10050 = vrot.lane.b32.xlu0 %v8284, 111
    %v10051 = vpop.permute.xlu0 %10050
    %v10052 = vsel %vm1168, %v10037, %v10045
    %v10053 = vsel %vm1168, %v10039, %v10047
    %v10054 = vsel %vm1168, %v10041, %v10049
    %v10055 = vsel %vm1168, %v10043, %v10051
    %v10056 = vsel %vm1168, %v10029, %v10037
    %v10057 = vsel %vm1168, %v10031, %v10039
    %v10058 = vsel %vm1168, %v10033, %v10041
    %v10059 = vsel %vm1168, %v10035, %v10043
    %v10060 = vsel %vm1168, %v10021, %v10029
    %v10061 = vsel %vm1168, %v10023, %v10031
    %v10062 = vsel %vm1168, %v10025, %v10033
    %v10063 = vsel %vm1168, %v10027, %v10035
    %v10064 = vsel %vm1168, %v10045, %v10021
    %v10065 = vsel %vm1168, %v10047, %v10023
    %v10066 = vsel %vm1168, %v10049, %v10025
    %v10067 = vsel %vm1168, %v10051, %v10027
    %v10068 = vld [vmem:[%s1173] sm:$0xff]
    %v10069 = vld [vmem:[%s1173 + $0x8] sm:$0xff]
    %v10070 = vld [vmem:[%s1173 + $0x10] sm:$0xff]
    %v10071 = vld [vmem:[%s1173 + $0x18] sm:$0xff]
    %v10072 = vld [vmem:[%s1173 + $0x20] sm:$0xff]
    %v10073 = vld [vmem:[%s1173 + $0x28] sm:$0xff]
    %v10074 = vld [vmem:[%s1173 + $0x30] sm:$0xff]
    %v10075 = vld [vmem:[%s1173 + $0x38] sm:$0xff]
    %v10076 = vld [vmem:[%s1173 + $0x40] sm:$0xff]
    %v10077 = vld [vmem:[%s1173 + $0x48] sm:$0xff]
    %v10078 = vld [vmem:[%s1173 + $0x50] sm:$0xff]
    %v10079 = vld [vmem:[%s1173 + $0x58] sm:$0xff]
    %v10080 = vld [vmem:[%s1173 + $0x60] sm:$0xff]
    %v10081 = vld [vmem:[%s1173 + $0x68] sm:$0xff]
    %v10082 = vld [vmem:[%s1173 + $0x70] sm:$0xff]
    %v10083 = vld [vmem:[%s1173 + $0x78] sm:$0xff]
    %v10084 = vmul.f32 %v10060, %v10068
    %v10085 = vmul.f32 %v10056, %v10069
    %v10086 = vmul.f32 %v10052, %v10070
    %v10087 = vmul.f32 %v10064, %v10071
    %v10088 = vmul.f32 %v10061, %v10072
    %v10089 = vmul.f32 %v10057, %v10073
    %v10090 = vmul.f32 %v10053, %v10074
    %v10091 = vmul.f32 %v10065, %v10075
    %v10092 = vmul.f32 %v10062, %v10076
    %v10093 = vmul.f32 %v10058, %v10077
    %v10094 = vmul.f32 %v10054, %v10078
    %v10095 = vmul.f32 %v10066, %v10079
    %v10096 = vmul.f32 %v10063, %v10080
    %v10097 = vmul.f32 %v10059, %v10081
    %v10098 = vmul.f32 %v10055, %v10082
    %v10099 = vmul.f32 %v10067, %v10083
    %s10100 = scalar_lea.vmem %s53, 256
    %v10101 = vld [vmem:[%s10100] sm:$0xff]
    %v10102 = vld [vmem:[%s10100 + $0x8] sm:$0xff]
    %v10103 = vld [vmem:[%s10100 + $0x10] sm:$0xff]
    %v10104 = vld [vmem:[%s10100 + $0x18] sm:$0xff]
    %v10106 = vsel %vm7896, %v10101, 0
    %v10109 = vsel %vm7896, %v10102, 0
    %v10112 = vsel %vm7896, %v10103, 0
    %v10115 = vsel %vm7896, %v10104, 0
    %10117 = vmatpush.msra.mxu0 0.0
    %10118 = vmatpush.msra.mxu0 0.0
    %10119 = vmatpush.msra.mxu0 0.0
    %10120 = vmatpush.msra.mxu0 0.0
    %10121 = vmatpush.msra.mxu0 0.0
    %10122 = vmatpush.msra.mxu0 0.0
    %10123 = vmatpush.msra.mxu0 0.0
    %10124 = vmatpush.msra.mxu0 0.0
    %10125 = vmatpush.msra.mxu0 0.0
    %10126 = vmatpush.msra.mxu0 0.0
    %10127 = vmatpush.msra.mxu0 0.0
    %10128 = vmatpush.msra.mxu0 0.0
    %10129 = vmatpush.msra.mxu0 %v10096
    %10130 = vmatpush.msra.mxu0 %v10092
    %10131 = vmatpush.msra.mxu0 %v10088
    %10132 = vmatpush.msra.mxu0 %v10084
    %10133 = vmatmul.f32.gmra.mxu0 %v10106
    %v10134 = vpop.f32.mrf.mxu0
    %v10135 = vadd.f32 0.0, %v10134
    %10136 = vmatmul.f32.gmra.mxu0 %v10109
    %v10137 = vpop.f32.mrf.mxu0
    %v10138 = vadd.f32 0.0, %v10137
    %10139 = vmatmul.f32.gmra.mxu0 %v10112
    %v10140 = vpop.f32.mrf.mxu0
    %v10141 = vadd.f32 0.0, %v10140
    %10142 = vmatmul.f32.gmra.mxu0 %v10115
    %v10143 = vpop.f32.mrf.mxu0
    %v10144 = vadd.f32 0.0, %v10143
    %10145 = vdwg.mxu0
    %10146 = vmatpush.msra.mxu0 0.0
    %10147 = vmatpush.msra.mxu0 0.0
    %10148 = vmatpush.msra.mxu0 0.0
    %10149 = vmatpush.msra.mxu0 0.0
    %10150 = vmatpush.msra.mxu0 0.0
    %10151 = vmatpush.msra.mxu0 0.0
    %10152 = vmatpush.msra.mxu0 0.0
    %10153 = vmatpush.msra.mxu0 0.0
    %10154 = vmatpush.msra.mxu0 0.0
    %10155 = vmatpush.msra.mxu0 0.0
    %10156 = vmatpush.msra.mxu0 0.0
    %10157 = vmatpush.msra.mxu0 0.0
    %10158 = vmatpush.msra.mxu0 %v10097
    %10159 = vmatpush.msra.mxu0 %v10093
    %10160 = vmatpush.msra.mxu0 %v10089
    %10161 = vmatpush.msra.mxu0 %v10085
    %10162 = vmatmul.f32.gmra.mxu0 %v10106
    %v10163 = vpop.f32.mrf.mxu0
    %v10164 = vadd.f32 0.0, %v10163
    %10165 = vmatmul.f32.gmra.mxu0 %v10109
    %v10166 = vpop.f32.mrf.mxu0
    %v10167 = vadd.f32 0.0, %v10166
    %10168 = vmatmul.f32.gmra.mxu0 %v10112
    %v10169 = vpop.f32.mrf.mxu0
    %v10170 = vadd.f32 0.0, %v10169
    %10171 = vmatmul.f32.gmra.mxu0 %v10115
    %v10172 = vpop.f32.mrf.mxu0
    %v10173 = vadd.f32 0.0, %v10172
    %10174 = vdwg.mxu0
    %10175 = vmatpush.msra.mxu0 0.0
    %10176 = vmatpush.msra.mxu0 0.0
    %10177 = vmatpush.msra.mxu0 0.0
    %10178 = vmatpush.msra.mxu0 0.0
    %10179 = vmatpush.msra.mxu0 0.0
    %10180 = vmatpush.msra.mxu0 0.0
    %10181 = vmatpush.msra.mxu0 0.0
    %10182 = vmatpush.msra.mxu0 0.0
    %10183 = vmatpush.msra.mxu0 0.0
    %10184 = vmatpush.msra.mxu0 0.0
    %10185 = vmatpush.msra.mxu0 0.0
    %10186 = vmatpush.msra.mxu0 0.0
    %10187 = vmatpush.msra.mxu0 %v10098
    %10188 = vmatpush.msra.mxu0 %v10094
    %10189 = vmatpush.msra.mxu0 %v10090
    %10190 = vmatpush.msra.mxu0 %v10086
    %10191 = vmatmul.f32.gmra.mxu0 %v10106
    %v10192 = vpop.f32.mrf.mxu0
    %v10193 = vadd.f32 0.0, %v10192
    %10194 = vmatmul.f32.gmra.mxu0 %v10109
    %v10195 = vpop.f32.mrf.mxu0
    %v10196 = vadd.f32 0.0, %v10195
    %10197 = vmatmul.f32.gmra.mxu0 %v10112
    %v10198 = vpop.f32.mrf.mxu0
    %v10199 = vadd.f32 0.0, %v10198
    %10200 = vmatmul.f32.gmra.mxu0 %v10115
    %v10201 = vpop.f32.mrf.mxu0
    %v10202 = vadd.f32 0.0, %v10201
    %10203 = vdwg.mxu0
    %10204 = vmatpush.msra.mxu0 0.0
    %10205 = vmatpush.msra.mxu0 0.0
    %10206 = vmatpush.msra.mxu0 0.0
    %10207 = vmatpush.msra.mxu0 0.0
    %10208 = vmatpush.msra.mxu0 0.0
    %10209 = vmatpush.msra.mxu0 0.0
    %10210 = vmatpush.msra.mxu0 0.0
    %10211 = vmatpush.msra.mxu0 0.0
    %10212 = vmatpush.msra.mxu0 0.0
    %10213 = vmatpush.msra.mxu0 0.0
    %10214 = vmatpush.msra.mxu0 0.0
    %10215 = vmatpush.msra.mxu0 0.0
    %10216 = vmatpush.msra.mxu0 %v10099
    %10217 = vmatpush.msra.mxu0 %v10095
    %10218 = vmatpush.msra.mxu0 %v10091
    %10219 = vmatpush.msra.mxu0 %v10087
    %10220 = vmatmul.f32.gmra.mxu0 %v10106
    %v10221 = vpop.f32.mrf.mxu0
    %v10222 = vadd.f32 0.0, %v10221
    %10223 = vmatmul.f32.gmra.mxu0 %v10109
    %v10224 = vpop.f32.mrf.mxu0
    %v10225 = vadd.f32 0.0, %v10224
    %10226 = vmatmul.f32.gmra.mxu0 %v10112
    %v10227 = vpop.f32.mrf.mxu0
    %v10228 = vadd.f32 0.0, %v10227
    %10229 = vmatmul.f32.gmra.mxu0 %v10115
    %v10230 = vpop.f32.mrf.mxu0
    %v10231 = vadd.f32 0.0, %v10230
    %10232 = vdwg.mxu0
    %v10233 = vadd.f32 %v10004, %v10135
    %v10234 = vadd.f32 %v10005, %v10164
    %v10235 = vadd.f32 %v10006, %v10193
    %v10236 = vadd.f32 %v10007, %v10222
    %v10237 = vadd.f32 %v10008, %v10138
    %v10238 = vadd.f32 %v10009, %v10167
    %v10239 = vadd.f32 %v10010, %v10196
    %v10240 = vadd.f32 %v10011, %v10225
    %v10241 = vadd.f32 %v10012, %v10141
    %v10242 = vadd.f32 %v10013, %v10170
    %v10243 = vadd.f32 %v10014, %v10199
    %v10244 = vadd.f32 %v10015, %v10228
    %v10245 = vadd.f32 %v10016, %v10144
    %v10246 = vadd.f32 %v10017, %v10173
    %v10247 = vadd.f32 %v10018, %v10202
    %v10248 = vadd.f32 %v10019, %v10231
    %v10249 = vadd.f32 %v10233, %v10234
    %v10250 = vadd.f32 %v10249, %v10235
    %v10251 = vadd.f32 %v10250, %v10236
    %10252 = vadd.xlane.f32.xlu0 %v10251
    %v10253 = vpop.xlane.xlu0 %10252
    %v10254 = vadd.f32 %v10237, %v10238
    %v10255 = vadd.f32 %v10254, %v10239
    %v10256 = vadd.f32 %v10255, %v10240
    %10257 = vadd.xlane.f32.xlu0 %v10256
    %v10258 = vpop.xlane.xlu0 %10257
    %v10259 = vadd.f32 %v10241, %v10242
    %v10260 = vadd.f32 %v10259, %v10243
    %v10261 = vadd.f32 %v10260, %v10244
    %10262 = vadd.xlane.f32.xlu0 %v10261
    %v10263 = vpop.xlane.xlu0 %10262
    %v10264 = vadd.f32 %v10245, %v10246
    %v10265 = vadd.f32 %v10264, %v10247
    %v10266 = vadd.f32 %v10265, %v10248
    %10267 = vadd.xlane.f32.xlu0 %v10266
    %v10268 = vpop.xlane.xlu0 %10267
    %v10269 = vmul.f32 %v10233, %v10233
    %v10270 = vmul.f32 %v10234, %v10234
    %v10271 = vmul.f32 %v10235, %v10235
    %v10272 = vmul.f32 %v10236, %v10236
    %v10273 = vmul.f32 %v10237, %v10237
    %v10274 = vmul.f32 %v10238, %v10238
    %v10275 = vmul.f32 %v10239, %v10239
    %v10276 = vmul.f32 %v10240, %v10240
    %v10277 = vmul.f32 %v10241, %v10241
    %v10278 = vmul.f32 %v10242, %v10242
    %v10279 = vmul.f32 %v10243, %v10243
    %v10280 = vmul.f32 %v10244, %v10244
    %v10281 = vmul.f32 %v10245, %v10245
    %v10282 = vmul.f32 %v10246, %v10246
    %v10283 = vmul.f32 %v10247, %v10247
    %v10284 = vmul.f32 %v10248, %v10248
    %v10285 = vadd.f32 %v10269, %v10270
    %v10286 = vadd.f32 %v10285, %v10271
    %v10287 = vadd.f32 %v10286, %v10272
    %10288 = vadd.xlane.f32.xlu0 %v10287
    %v10289 = vpop.xlane.xlu0 %10288
    %v10290 = vadd.f32 %v10273, %v10274
    %v10291 = vadd.f32 %v10290, %v10275
    %v10292 = vadd.f32 %v10291, %v10276
    %10293 = vadd.xlane.f32.xlu0 %v10292
    %v10294 = vpop.xlane.xlu0 %10293
    %v10295 = vadd.f32 %v10277, %v10278
    %v10296 = vadd.f32 %v10295, %v10279
    %v10297 = vadd.f32 %v10296, %v10280
    %10298 = vadd.xlane.f32.xlu0 %v10297
    %v10299 = vpop.xlane.xlu0 %10298
    %v10300 = vadd.f32 %v10281, %v10282
    %v10301 = vadd.f32 %v10300, %v10283
    %v10302 = vadd.f32 %v10301, %v10284
    %10303 = vadd.xlane.f32.xlu0 %v10302
    %v10304 = vpop.xlane.xlu0 %10303
    %v10305 = vmul.f32 %v10253, 0.001953125
    %v10306 = vmul.f32 %v10258, 0.001953125
    %v10307 = vmul.f32 %v10263, 0.001953125
    %v10308 = vmul.f32 %v10268, 0.001953125
    %v10309 = vmul.f32 %v10289, 0.001953125
    %v10310 = vmul.f32 %v10294, 0.001953125
    %v10311 = vmul.f32 %v10299, 0.001953125
    %v10312 = vmul.f32 %v10304, 0.001953125
    %v10313 = vmul.f32 %v10305, %v10305
    %v10314 = vmul.f32 %v10306, %v10306
    %v10315 = vmul.f32 %v10307, %v10307
    %v10316 = vmul.f32 %v10308, %v10308
    %v10317 = vsub.f32 %v10309, %v10313
    %v10318 = vsub.f32 %v10310, %v10314
    %v10319 = vsub.f32 %v10311, %v10315
    %v10320 = vsub.f32 %v10312, %v10316
    %v10321 = vmax.f32 %v10317, 0.0
    %v10322 = vmax.f32 %v10318, 0.0
    %v10323 = vmax.f32 %v10319, 0.0
    %v10324 = vmax.f32 %v10320, 0.0
    %v10325 = vld [vmem:[%s55] sm:$0xff]
    %v10326 = vld [vmem:[%s55 + $0x8] sm:$0xff]
    %v10327 = vld [vmem:[%s55 + $0x10] sm:$0xff]
    %v10328 = vld [vmem:[%s55 + $0x18] sm:$0xff]
    %v10329 = vadd.f32 %v10321, 1e-05
    %v10330 = vadd.f32 %v10322, 1e-05
    %v10331 = vadd.f32 %v10323, 1e-05
    %v10332 = vadd.f32 %v10324, 1e-05
    %v10333 = vrsqrt.pop %v10329
    %v10334 = vmul.f32 %v10333, %v10329
    %v10335 = vmul.f32 %v10334, %v10333
    %v10336 = vmul.f32 0.5, %v10335
    %v10337 = vsub.f32 1.5, %v10336
    %v10338 = vmul.f32 %v10333, %v10337
    %vm10339 = vweird.f32 %v10329
    %vm10340 = vweird.f32 %v10333
    %vm10341 = vmor %vm10339, %vm10340
    %v10342 = vsel %vm10341, %v10333, %v10338
    %v10343 = vrsqrt.pop %v10330
    %v10344 = vmul.f32 %v10343, %v10330
    %v10345 = vmul.f32 %v10344, %v10343
    %v10346 = vmul.f32 0.5, %v10345
    %v10347 = vsub.f32 1.5, %v10346
    %v10348 = vmul.f32 %v10343, %v10347
    %vm10349 = vweird.f32 %v10330
    %vm10350 = vweird.f32 %v10343
    %vm10351 = vmor %vm10349, %vm10350
    %v10352 = vsel %vm10351, %v10343, %v10348
    %v10353 = vrsqrt.pop %v10331
    %v10354 = vmul.f32 %v10353, %v10331
    %v10355 = vmul.f32 %v10354, %v10353
    %v10356 = vmul.f32 0.5, %v10355
    %v10357 = vsub.f32 1.5, %v10356
    %v10358 = vmul.f32 %v10353, %v10357
    %vm10359 = vweird.f32 %v10331
    %vm10360 = vweird.f32 %v10353
    %vm10361 = vmor %vm10359, %vm10360
    %v10362 = vsel %vm10361, %v10353, %v10358
    %v10363 = vrsqrt.pop %v10332
    %v10364 = vmul.f32 %v10363, %v10332
    %v10365 = vmul.f32 %v10364, %v10363
    %v10366 = vmul.f32 0.5, %v10365
    %v10367 = vsub.f32 1.5, %v10366
    %v10368 = vmul.f32 %v10363, %v10367
    %vm10369 = vweird.f32 %v10332
    %vm10370 = vweird.f32 %v10363
    %vm10371 = vmor %vm10369, %vm10370
    %v10372 = vsel %vm10371, %v10363, %v10368
    %v10373 = vmul.f32 %v10325, %v10342
    %v10374 = vmul.f32 %v10326, %v10352
    %v10375 = vmul.f32 %v10327, %v10362
    %v10376 = vmul.f32 %v10328, %v10372
    %v10377 = vld [vmem:[%s57] sm:$0xff]
    %v10378 = vld [vmem:[%s57 + $0x8] sm:$0xff]
    %v10379 = vld [vmem:[%s57 + $0x10] sm:$0xff]
    %v10380 = vld [vmem:[%s57 + $0x18] sm:$0xff]
    %v10381 = vmul.f32 %v10305, %v10373
    %v10382 = vmul.f32 %v10306, %v10374
    %v10383 = vmul.f32 %v10307, %v10375
    %v10384 = vmul.f32 %v10308, %v10376
    %v10385 = vsub.f32 %v10377, %v10381
    %v10386 = vsub.f32 %v10378, %v10382
    %v10387 = vsub.f32 %v10379, %v10383
    %v10388 = vsub.f32 %v10380, %v10384
    %10390 = vset.pattern.permute.xlu0 0
    %10391 = vperm.xlu0 %10390, %v10373
    %v10392 = vpop.permute.xlu0 %10391
    %10395 = vset.pattern.permute.xlu0 0
    %10396 = vperm.xlu0 %10395, %v10374
    %v10397 = vpop.permute.xlu0 %10396
    %10400 = vset.pattern.permute.xlu0 0
    %10401 = vperm.xlu0 %10400, %v10375
    %v10402 = vpop.permute.xlu0 %10401
    %10405 = vset.pattern.permute.xlu0 0
    %10406 = vperm.xlu0 %10405, %v10376
    %v10407 = vpop.permute.xlu0 %10406
    %v10409 = vmul.f32 %v10233, %v10392
    %v10410 = vmul.f32 %v10234, %v10392
    %v10411 = vmul.f32 %v10235, %v10392
    %v10412 = vmul.f32 %v10236, %v10392
    %v10413 = vmul.f32 %v10237, %v10397
    %v10414 = vmul.f32 %v10238, %v10397
    %v10415 = vmul.f32 %v10239, %v10397
    %v10416 = vmul.f32 %v10240, %v10397
    %v10417 = vmul.f32 %v10241, %v10402
    %v10418 = vmul.f32 %v10242, %v10402
    %v10419 = vmul.f32 %v10243, %v10402
    %v10420 = vmul.f32 %v10244, %v10402
    %v10421 = vmul.f32 %v10245, %v10407
    %v10422 = vmul.f32 %v10246, %v10407
    %v10423 = vmul.f32 %v10247, %v10407
    %v10424 = vmul.f32 %v10248, %v10407
    %10426 = vset.pattern.permute.xlu0 0
    %10427 = vperm.xlu0 %10426, %v10385
    %v10428 = vpop.permute.xlu0 %10427
    %10431 = vset.pattern.permute.xlu0 0
    %10432 = vperm.xlu0 %10431, %v10386
    %v10433 = vpop.permute.xlu0 %10432
    %10436 = vset.pattern.permute.xlu0 0
    %10437 = vperm.xlu0 %10436, %v10387
    %v10438 = vpop.permute.xlu0 %10437
    %10441 = vset.pattern.permute.xlu0 0
    %10442 = vperm.xlu0 %10441, %v10388
    %v10443 = vpop.permute.xlu0 %10442
    %v10445 = vadd.f32 %v10409, %v10428
    %v10446 = vadd.f32 %v10410, %v10428
    %v10447 = vadd.f32 %v10411, %v10428
    %v10448 = vadd.f32 %v10412, %v10428
    %v10449 = vadd.f32 %v10413, %v10433
    %v10450 = vadd.f32 %v10414, %v10433
    %v10451 = vadd.f32 %v10415, %v10433
    %v10452 = vadd.f32 %v10416, %v10433
    %v10453 = vadd.f32 %v10417, %v10438
    %v10454 = vadd.f32 %v10418, %v10438
    %v10455 = vadd.f32 %v10419, %v10438
    %v10456 = vadd.f32 %v10420, %v10438
    %v10457 = vadd.f32 %v10421, %v10443
    %v10458 = vadd.f32 %v10422, %v10443
    %v10459 = vadd.f32 %v10423, %v10443
    %v10460 = vadd.f32 %v10424, %v10443
    %vm10461 = vcmp.gt.f32.partialorder %v10445, 0.0
    %vm10462 = vcmp.gt.f32.partialorder %v10446, 0.0
    %vm10463 = vcmp.gt.f32.partialorder %v10447, 0.0
    %vm10464 = vcmp.gt.f32.partialorder %v10448, 0.0
    %vm10465 = vcmp.gt.f32.partialorder %v10449, 0.0
    %vm10466 = vcmp.gt.f32.partialorder %v10450, 0.0
    %vm10467 = vcmp.gt.f32.partialorder %v10451, 0.0
    %vm10468 = vcmp.gt.f32.partialorder %v10452, 0.0
    %vm10469 = vcmp.gt.f32.partialorder %v10453, 0.0
    %vm10470 = vcmp.gt.f32.partialorder %v10454, 0.0
    %vm10471 = vcmp.gt.f32.partialorder %v10455, 0.0
    %vm10472 = vcmp.gt.f32.partialorder %v10456, 0.0
    %vm10473 = vcmp.gt.f32.partialorder %v10457, 0.0
    %vm10474 = vcmp.gt.f32.partialorder %v10458, 0.0
    %vm10475 = vcmp.gt.f32.partialorder %v10459, 0.0
    %vm10476 = vcmp.gt.f32.partialorder %v10460, 0.0
    %v10477 = vmul.f32 %v10445, 0.01
    %v10478 = vmul.f32 %v10446, 0.01
    %v10479 = vmul.f32 %v10447, 0.01
    %v10480 = vmul.f32 %v10448, 0.01
    %v10481 = vmul.f32 %v10449, 0.01
    %v10482 = vmul.f32 %v10450, 0.01
    %v10483 = vmul.f32 %v10451, 0.01
    %v10484 = vmul.f32 %v10452, 0.01
    %v10485 = vmul.f32 %v10453, 0.01
    %v10486 = vmul.f32 %v10454, 0.01
    %v10487 = vmul.f32 %v10455, 0.01
    %v10488 = vmul.f32 %v10456, 0.01
    %v10489 = vmul.f32 %v10457, 0.01
    %v10490 = vmul.f32 %v10458, 0.01
    %v10491 = vmul.f32 %v10459, 0.01
    %v10492 = vmul.f32 %v10460, 0.01
    %v10493 = vsel %vm10461, %v10445, %v10477
    %v10494 = vsel %vm10462, %v10446, %v10478
    %v10495 = vsel %vm10463, %v10447, %v10479
    %v10496 = vsel %vm10464, %v10448, %v10480
    %v10497 = vsel %vm10465, %v10449, %v10481
    %v10498 = vsel %vm10466, %v10450, %v10482
    %v10499 = vsel %vm10467, %v10451, %v10483
    %v10500 = vsel %vm10468, %v10452, %v10484
    %v10501 = vsel %vm10469, %v10453, %v10485
    %v10502 = vsel %vm10470, %v10454, %v10486
    %v10503 = vsel %vm10471, %v10455, %v10487
    %v10504 = vsel %vm10472, %v10456, %v10488
    %v10505 = vsel %vm10473, %v10457, %v10489
    %v10506 = vsel %vm10474, %v10458, %v10490
    %v10507 = vsel %vm10475, %v10459, %v10491
    %v10508 = vsel %vm10476, %v10460, %v10492
    %10509 = vst [vmem:[%s65] sm:$0xff] %v10493
    %10510 = vst [vmem:[%s65 + $0x8] sm:$0xff] %v10494
    %10511 = vst [vmem:[%s65 + $0x10] sm:$0xff] %v10495
    %10512 = vst [vmem:[%s65 + $0x18] sm:$0xff] %v10496
    %10513 = vst [vmem:[%s65 + $0x20] sm:$0xff] %v10497
    %10514 = vst [vmem:[%s65 + $0x28] sm:$0xff] %v10498
    %10515 = vst [vmem:[%s65 + $0x30] sm:$0xff] %v10499
    %10516 = vst [vmem:[%s65 + $0x38] sm:$0xff] %v10500
    %10517 = vst [vmem:[%s65 + $0x40] sm:$0xff] %v10501
    %10518 = vst [vmem:[%s65 + $0x48] sm:$0xff] %v10502
    %10519 = vst [vmem:[%s65 + $0x50] sm:$0xff] %v10503
    %10520 = vst [vmem:[%s65 + $0x58] sm:$0xff] %v10504
    %10521 = vst [vmem:[%s65 + $0x60] sm:$0xff] %v10505
    %10522 = vst [vmem:[%s65 + $0x68] sm:$0xff] %v10506
    %10523 = vst [vmem:[%s65 + $0x70] sm:$0xff] %v10507
    %10524 = vst [vmem:[%s65 + $0x78] sm:$0xff] %v10508
    // Predicated region
    $region122: #{feature_extract_forward.1} parent=1 // pred_check
      _
    $region123: #{feature_extract_forward.1} parent=1 // pred_check_branch
      %10526 = sbr.rel (0) target = $region125
    $region124: #{feature_extract_forward.1} parent=1 // pred_region
      _
    $region125: #{feature_extract_forward.1} parent=1 // pred_fallthru
      _
    // Predicated region
    $region126: #{feature_extract_forward.1} parent=1 // pred_check
      _
    $region127: #{feature_extract_forward.1} parent=1 // pred_check_branch
      %10528 = sbr.rel (0) target = $region129
    $region128: #{feature_extract_forward.1} parent=1 // pred_region
      _
    $region129: #{feature_extract_forward.1} parent=1 // pred_fallthru
      _
    // Predicated region
    $region130: #{feature_extract_forward.1} parent=1 // pred_check
      _
    $region131: #{feature_extract_forward.1} parent=1 // pred_check_branch
      %10530 = sbr.rel (0) target = $region133
    $region132: #{feature_extract_forward.1} parent=1 // pred_region
      _
    $region133: #{feature_extract_forward.1} parent=1 // pred_fallthru
      _
    // Predicated region
    $region134: #{feature_extract_forward.1} parent=1 // pred_check
      _
    $region135: #{feature_extract_forward.1} parent=1 // pred_check_branch
      %10532 = sbr.rel (0) target = $region137
    $region136: #{feature_extract_forward.1} parent=1 // pred_region
      _
    $region137: #{feature_extract_forward.1} parent=1 // pred_fallthru
      _
    // Predicated region
    $region138: #{feature_extract_forward.1} parent=1 // pred_check
      _
    $region139: #{feature_extract_forward.1} parent=1 // pred_check_branch
      %10534 = sbr.rel (0) target = $region141
    $region140: #{feature_extract_forward.1} parent=1 // pred_region
      _
    $region141: #{feature_extract_forward.1} parent=1 // pred_fallthru
      _
    // Predicated region
    $region142: #{feature_extract_forward.1} parent=1 // pred_check
      _
    $region143: #{feature_extract_forward.1} parent=1 // pred_check_branch
      %10536 = sbr.rel (0) target = $region145
    $region144: #{feature_extract_forward.1} parent=1 // pred_region
      _
    $region145: #{feature_extract_forward.1} parent=1 // pred_fallthru
      _
    // Predicated region
    $region146: #{feature_extract_forward.1} parent=1 // pred_check
      _
    $region147: #{feature_extract_forward.1} parent=1 // pred_check_branch
      %10538 = sbr.rel (0) target = $region149
    $region148: #{feature_extract_forward.1} parent=1 // pred_region
      _
    $region149: #{feature_extract_forward.1} parent=1 // pred_fallthru
      _
    // Predicated region
    $region150: #{feature_extract_forward.1} parent=1 // pred_check
      _
    $region151: #{feature_extract_forward.1} parent=1 // pred_check_branch
      %10540 = sbr.rel (0) target = $region153
    $region152: #{feature_extract_forward.1} parent=1 // pred_region
      _
    $region153: #{feature_extract_forward.1} parent=1 // pred_fallthru
      _
    %10541 = vsyncpa [#allocation3], 1

</llo_original>
